<compile_context>
chip_gen: v5e
topology: v5e:2x2
jax: 0.10.0
libtpu: 0.0.40
codegen_flags: <defaults>
</compile_context>

<pallas_src>
import jax
import jax.numpy as jnp
from jax.experimental import pallas as pl
from jax.experimental.pallas import tpu as pltpu

# ---- module hyper-parameters (mirrors the PyTorch file) ----
EMBED_DIM = 20
HIDDEN_DIM = 100                  # nn.LSTMCell(..., 100)
HP = 128                          # hidden padded to a lane multiple
NUM_ATTS = 4
NUM_TYPES = 2
TARGET_EMBED_DIM = 20
VOCAB_SIZE = 4
TOTAL_ATTRIBUTES = NUM_ATTS * NUM_TYPES          # 8
NUM_GUESSES = NUM_ATTS ** NUM_TYPES              # 16
A_LISTEN_DIM = NUM_TYPES * TARGET_EMBED_DIM + EMBED_DIM   # 60
Q_LISTEN_DIM = NUM_TYPES * EMBED_DIM                      # 40
FUSED_ROWS = 16                   # fused gate tables padded to 16 rows (bf16 sublane tile)

BATCH = 256                       # small demo batch (module uses 1000)


def trainer_fwd_kernel(
    targets_ref, u_ab_ref, u_qb_ref,
    a_tgt_ref, a_tok_ref, a_b_ref,
    a_out_w_ref, a_out_b_ref, a_cdf0_ref,
    q_tok_ref, q_b_ref, q_pred_w_ref, q_pred_b_ref,
    guess_ref, dist_ref):
  f32 = jnp.float32
  bf16 = jnp.bfloat16
  B = targets_ref.shape[0]

  # --- hoisted constants (built once per trace; JAX does not CSE iota) ---
  def upper_tri(V):                 # (V,V) with 1 where row <= col (cumsum via matmul)
    r = jax.lax.broadcasted_iota(jnp.int32, (V, V), 0)
    c = jax.lax.broadcasted_iota(jnp.int32, (V, V), 1)
    return (r <= c).astype(f32)
  upper_v = upper_tri(VOCAB_SIZE)
  upper_g = upper_tri(NUM_GUESSES)

  def onehot(idx_col, num):         # idx_col: (B,1) int32 -> (B,num) f32
    iota = jax.lax.broadcasted_iota(jnp.int32, (B, num), 1)
    return (idx_col == iota).astype(f32)

  def zero_state_lstm_h(mh_bf, tab_ref, b_ref, extra=None):
    # LSTMCell step from (h=0, c=0): gates = x-part only (no Whh matmul), the
    # forget gate multiplies c==0 so it is skipped entirely.  Computed one
    # 128-lane gate block at a time to keep live vregs small (no (B,512) array).
    def gate(g):
      cols = slice(g * HP, (g + 1) * HP)
      acc = (jnp.dot(mh_bf, tab_ref[:, cols], preferred_element_type=f32)
             + b_ref[:, cols])
      if extra is not None:
        acc = acc + extra(cols)
      return acc
    i_t = jax.nn.sigmoid(gate(0))
    g_t = jnp.tanh(gate(2))
    o_t = jax.nn.sigmoid(gate(3))
    return o_t * jnp.tanh(i_t * g_t)          # h_new ; c_new = i*g not needed downstream

  targets = targets_ref[...]                  # (B,2) int32
  u_ab = u_ab_ref[...]                        # (B,2)

  # ABot target embedding + input->gate projection, fused into ONE multihot matmul
  # (color id hits rows [0,4), shape id hits rows [4,8) of the fused table).
  mh_tgt = (onehot(targets[:, 0:1], FUSED_ROWS)
            + onehot(targets[:, 1:2], FUSED_ROWS)).astype(bf16)

  # ---- round 0: ABot.speak from zero state -> CDF is a parameter-only row ----
  cdf0 = a_cdf0_ref[...]                                           # (1, VOCAB)
  tok0 = jnp.minimum(
      jnp.sum((u_ab[:, 0:1] >= cdf0).astype(jnp.int32), axis=-1, keepdims=True),
      VOCAB_SIZE - 1)                                              # (B,1)

  # ---- round 0: ABot.listen (zero state).  Token gate rows added on the VPU
  #      (masked accumulate), keeping the sampled token off any MXU round-trip.
  masks0 = [(tok0 == v).astype(f32) for v in range(VOCAB_SIZE)]    # (B,1) each
  def tok_contrib(cols):
    acc = masks0[0] * a_tok_ref[0:1, cols]
    for v in range(1, VOCAB_SIZE):
      acc = acc + masks0[v] * a_tok_ref[v:v + 1, cols]
    return acc
  h_a = zero_state_lstm_h(mh_tgt, a_tgt_ref, a_b_ref, tok_contrib)   # (B, HP) f32

  # ---- round 1: ABot.speak (bf16 MXU feed; unnormalized inverse-CDF sample) ----
  h_a_bf = h_a.astype(bf16)
  logits1 = (jnp.dot(h_a_bf, a_out_w_ref[...], preferred_element_type=f32)
             + a_out_b_ref[...])                                   # (B, VOCAB)
  e1 = jnp.exp(logits1 - jnp.max(logits1, axis=-1, keepdims=True))
  s1 = jnp.sum(e1, axis=-1, keepdims=True)
  cum1 = jnp.dot(e1, upper_v, preferred_element_type=f32)          # unnormalized CDF
  tok1 = jnp.minimum(
      jnp.sum((u_ab[:, 1:2] * s1 >= cum1).astype(jnp.int32), axis=-1, keepdims=True),
      VOCAB_SIZE - 1)

  # NOTE: ABot.listen(round 1) only updates ABot's internal (h, c).  The returned
  # (guess, guess_distribution) are independent of it -- QBot sees only the two
  # sampled tokens -- so it is omitted (it would be dead-code-eliminated anyway)
  # and no recurrent Whh weight is ever DMA'd into the kernel.

  # ---- QBot.listen (single zero-state LSTM step) + predict ----
  mh_q = (onehot(tok0, FUSED_ROWS)
          + onehot(tok1 + VOCAB_SIZE, FUSED_ROWS)).astype(bf16)    # tok0 -> rows [0,4), tok1 -> [4,8)
  h_q = zero_state_lstm_h(mh_q, q_tok_ref, q_b_ref)

  logits_q = (jnp.dot(h_q.astype(bf16), q_pred_w_ref[...], preferred_element_type=f32)
              + q_pred_b_ref[...])                                 # (B, 16)
  e_q = jnp.exp(logits_q - jnp.max(logits_q, axis=-1, keepdims=True))
  s_q = jnp.sum(e_q, axis=-1, keepdims=True)
  cum_q = jnp.dot(e_q, upper_g, preferred_element_type=f32)
  guess = jnp.minimum(
      jnp.sum((u_qb_ref[...] * s_q >= cum_q).astype(jnp.int32), axis=-1, keepdims=True),
      NUM_GUESSES - 1)

  guess_ref[...] = guess
  dist_ref[...] = e_q / s_q        # EXACT normalization for the returned distribution


# ----------------------- parameter setup (glue, plain JAX) -----------------------
def _pad_gate_cols(w_t, h=HIDDEN_DIM, hp=HP):
  # w_t: (in_dim, 4*h) -> (in_dim, 4*hp), each gate block zero-padded independently.
  in_dim = w_t.shape[0]
  w = w_t.reshape(in_dim, 4, h)
  w = jnp.pad(w, ((0, 0), (0, 0), (0, hp - h)))
  return w.reshape(in_dim, 4 * hp)


def _pad_gate_bias(b, h=HIDDEN_DIM, hp=HP):
  b = b.reshape(4, h)
  b = jnp.pad(b, ((0, 0), (0, hp - h)))
  return b.reshape(1, 4 * hp)


def init_params(key):
  ks = jax.random.split(key, 13)
  u = lambda k, shape, bound: jax.random.uniform(k, shape, jnp.float32, -bound, bound)
  inv_sqrt_h = 1.0 / (HIDDEN_DIM ** 0.5)
  bf16 = jnp.bfloat16

  p = {}
  # embedding tables (nn.Embedding default: N(0,1)) -- folded into gate projections below
  tgt_tab = jax.random.normal(ks[0], (TOTAL_ATTRIBUTES, TARGET_EMBED_DIM), jnp.float32)
  a_emb = jax.random.normal(ks[1], (VOCAB_SIZE, EMBED_DIM), jnp.float32)
  q_emb = jax.random.normal(ks[2], (VOCAB_SIZE, EMBED_DIM), jnp.float32)

  # ABot LSTMCell(60, 100).  Whh is never drawn/passed: the only h@Whh with a
  # nonzero h (round-1 listen) cannot influence (guess, guess_distribution).
  a_wih = u(ks[3], (4 * HIDDEN_DIM, A_LISTEN_DIM), inv_sqrt_h)
  a_bih = u(ks[4], (4 * HIDDEN_DIM,), inv_sqrt_h)
  a_bhh = u(ks[5], (4 * HIDDEN_DIM,), inv_sqrt_h)
  a_wih_t = _pad_gate_cols(a_wih.T)                      # (60, 512)
  a_wih_tok = a_wih_t[0:EMBED_DIM]                       # token slice
  a_wih_t0 = a_wih_t[EMBED_DIM:EMBED_DIM + TARGET_EMBED_DIM]
  a_wih_t1 = a_wih_t[EMBED_DIM + TARGET_EMBED_DIM:A_LISTEN_DIM]

  # Fused target table: row i<4 (color ids) -> tgt_tab[i]@Wih_t0,
  #                     row i>=4 (shape ids) -> tgt_tab[i]@Wih_t1;  pad to 16 rows, bf16.
  tgt_proj0 = tgt_tab @ a_wih_t0
  tgt_proj1 = tgt_tab @ a_wih_t1
  row_is_color = (jnp.arange(TOTAL_ATTRIBUTES) < NUM_ATTS)[:, None]
  a_tgt_fused = jnp.where(row_is_color, tgt_proj0, tgt_proj1)               # (8, 512)
  p["a_tgt_fused"] = jnp.pad(
      a_tgt_fused, ((0, FUSED_ROWS - TOTAL_ATTRIBUTES), (0, 0))).astype(bf16)  # (16, 512) bf16

  # Fused ABot token rows (embedding @ token slice of Wih), f32 for the VPU masked accumulate.
  a_tok_rows = a_emb @ a_wih_tok                                            # (4, 512)
  p["a_tok_rows"] = jnp.pad(a_tok_rows, ((0, 8 - VOCAB_SIZE), (0, 0)))      # (8, 512) f32

  p["a_b"] = _pad_gate_bias(a_bih + a_bhh)                                  # (1, 512) f32

  # ABot output Linear(100, 4)
  a_out_w = u(ks[6], (VOCAB_SIZE, HIDDEN_DIM), inv_sqrt_h)
  a_out_b = u(ks[7], (VOCAB_SIZE,), inv_sqrt_h)
  p["a_out_w"] = jnp.pad(a_out_w.T, ((0, HP - HIDDEN_DIM), (0, 0))).astype(bf16)  # (128, 4) bf16
  p["a_out_b"] = a_out_b.reshape(1, VOCAB_SIZE)
  # Round-0 ABot.speak has h == 0: its categorical CDF depends only on the output
  # bias, so fold it offline (parameter-only math, like the embedding fusion).
  p["a_cdf0"] = jnp.cumsum(jax.nn.softmax(a_out_b)).reshape(1, VOCAB_SIZE)  # (1, 4) f32

  # QBot LSTMCell(40, 100).  q_whh only ever multiplies the zero initial state -> dropped.
  q_wih = u(ks[8], (4 * HIDDEN_DIM, Q_LISTEN_DIM), inv_sqrt_h)
  q_bih = u(ks[9], (4 * HIDDEN_DIM,), inv_sqrt_h)
  q_bhh = u(ks[10], (4 * HIDDEN_DIM,), inv_sqrt_h)
  q_wih_t = _pad_gate_cols(q_wih.T)                      # (40, 512)
  q_tok_fused = jnp.concatenate(
      [q_emb @ q_wih_t[0:EMBED_DIM], q_emb @ q_wih_t[EMBED_DIM:Q_LISTEN_DIM]], axis=0)  # (8, 512)
  p["q_tok_fused"] = jnp.pad(
      q_tok_fused, ((0, FUSED_ROWS - 2 * VOCAB_SIZE), (0, 0))).astype(bf16)  # (16, 512) bf16
  p["q_b"] = _pad_gate_bias(q_bih + q_bhh)                                   # (1, 512) f32

  # QBot predict_net Linear(100, 16)
  q_pred_w = u(ks[11], (NUM_GUESSES, HIDDEN_DIM), inv_sqrt_h)
  q_pred_b = u(ks[12], (NUM_GUESSES,), inv_sqrt_h)
  p["q_pred_w"] = jnp.pad(q_pred_w.T, ((0, HP - HIDDEN_DIM), (0, 0))).astype(bf16)  # (128, 16) bf16
  p["q_pred_b"] = q_pred_b.reshape(1, NUM_GUESSES)
  return p


def _pick_tile(batch):
  """One big tile on single-TC chips (v5e/v6e); exactly two parallel tiles on dual-TC v7x."""
  n_tiles = 1
  try:
    if "v7" in jax.devices()[0].device_kind.lower():
      n_tiles = 2                      # v7x: shard the "parallel" grid axis across both TensorCores
  except Exception:
    pass
  tile = -(-batch // n_tiles)          # ceil
  tile = -(-tile // 8) * 8             # round up to a sublane multiple
  return max(8, min(tile, 1024))       # cap keeps per-tile intermediates well inside scoped VMEM


def trainer_forward(params, targets, u_abot, u_qbot, tile=None):
  B = targets.shape[0]
  if tile is None:
    tile = _pick_tile(B)
  n_blocks = pl.cdiv(B, tile)
  Bp = n_blocks * tile
  if Bp != B:                          # pad batch to a tile multiple; padded rows are discarded
    targets = jnp.pad(targets, ((0, Bp - B), (0, 0)))
    u_abot = jnp.pad(u_abot, ((0, Bp - B), (0, 0)))
    u_qbot = jnp.pad(u_qbot, ((0, Bp - B), (0, 0)))

  weights = [
      params["a_tgt_fused"], params["a_tok_rows"], params["a_b"],
      params["a_out_w"], params["a_out_b"], params["a_cdf0"],
      params["q_tok_fused"], params["q_b"],
      params["q_pred_w"], params["q_pred_b"],
  ]

  batch_spec = lambda ncols: pl.BlockSpec((tile, ncols), lambda i: (i, 0))
  # Weights: full array as the block, constant index_map -> VMEM-resident across grid steps.
  weight_spec = lambda w: pl.BlockSpec(w.shape, lambda i: (0, 0))

  guess, dist = pl.pallas_call(
      trainer_fwd_kernel,
      out_shape=(jax.ShapeDtypeStruct((Bp, 1), jnp.int32),
                 jax.ShapeDtypeStruct((Bp, NUM_GUESSES), jnp.float32)),
      grid=(n_blocks,),
      in_specs=[batch_spec(NUM_TYPES), batch_spec(2), batch_spec(1)]
               + [weight_spec(w) for w in weights],
      out_specs=(batch_spec(1), batch_spec(NUM_GUESSES)),
      compiler_params=pltpu.CompilerParams(
          dimension_semantics=("parallel",)),      # megacore sharding on v7x
  )(targets.astype(jnp.int32), u_abot, u_qbot, *weights)
  return guess[:B, 0], dist[:B]   # self.guess[0], self.guess_distribution[0]


if __name__ == "__main__":
  key = jax.random.PRNGKey(0)
  k_par, k_t0, k_t1, k_ua, k_uq = jax.random.split(key, 5)

  params = init_params(k_par)

  # targets: column 0 = color id in [0,4), column 1 = shape id in [4,8)
  col0 = jax.random.randint(k_t0, (BATCH, 1), 0, NUM_ATTS).astype(jnp.int32)
  col1 = jax.random.randint(k_t1, (BATCH, 1), NUM_ATTS, 2 * NUM_ATTS).astype(jnp.int32)
  targets = jnp.concatenate([col0, col1], axis=1)          # (BATCH, 2) int32

  # uniforms driving the Categorical samples (2 ABot speak rounds, 1 QBot guess)
  u_abot = jax.random.uniform(k_ua, (BATCH, 2), jnp.float32)
  u_qbot = jax.random.uniform(k_uq, (BATCH, 1), jnp.float32)

  guess, guess_dist = trainer_forward(params, targets, u_abot, u_qbot)
  guess = jax.block_until_ready(guess)
  guess_dist = jax.block_until_ready(guess_dist)

  # light sanity checks (distribution rows are now exactly normalized)
  assert guess.shape == (BATCH,) and guess_dist.shape == (BATCH, NUM_GUESSES)
  assert bool(jnp.all((guess >= 0) & (guess < NUM_GUESSES)))
  assert bool(jnp.all(jnp.abs(jnp.sum(guess_dist, axis=1) - 1.0) < 1e-5))

  # TODO(synk): backward()/reinforce()/Adam step are training-time and outside forward().
  print("KERNEL_OK")
</pallas_src>

<mosaic_0001>
module attributes {stable_mosaic.version = 11 : i64} {
  func.func @trainer_fwd_kernel(%arg0: i32, %arg1: memref<256x2xi32, #tpu.memory_space<vmem>>, %arg2: memref<256x2xf32, #tpu.memory_space<vmem>>, %arg3: memref<256x1xf32, #tpu.memory_space<vmem>>, %arg4: memref<16x512xbf16, #tpu.memory_space<vmem>>, %arg5: memref<8x512xf32, #tpu.memory_space<vmem>>, %arg6: memref<1x512xf32, #tpu.memory_space<vmem>>, %arg7: memref<128x4xbf16, #tpu.memory_space<vmem>>, %arg8: memref<1x4xf32, #tpu.memory_space<vmem>>, %arg9: memref<1x4xf32, #tpu.memory_space<vmem>>, %arg10: memref<16x512xbf16, #tpu.memory_space<vmem>>, %arg11: memref<1x512xf32, #tpu.memory_space<vmem>>, %arg12: memref<128x16xbf16, #tpu.memory_space<vmem>>, %arg13: memref<1x16xf32, #tpu.memory_space<vmem>>, %arg14: memref<256x1xi32, #tpu.memory_space<vmem>>, %arg15: memref<256x16xf32, #tpu.memory_space<vmem>>) attributes {dimension_semantics = [#tpu.dimension_semantics<parallel>], iteration_bounds = array<i64: 1>, scalar_prefetch = 0 : i64, scratch_operands = 0 : i64, tpu.core_type = #tpu.core_type<tc>, window_params = [{transform_indices = @transform_0, window_bounds = array<i64: 256, 2>}, {transform_indices = @transform_1, window_bounds = array<i64: 256, 2>}, {transform_indices = @transform_2, window_bounds = array<i64: 256, 1>}, {pipeline_mode = #tpu.pipeline_mode<synchronous>, transform_indices = @transform_3, window_bounds = array<i64: 16, 512>}, {pipeline_mode = #tpu.pipeline_mode<synchronous>, transform_indices = @transform_4, window_bounds = array<i64: 8, 512>}, {pipeline_mode = #tpu.pipeline_mode<synchronous>, transform_indices = @transform_5, window_bounds = array<i64: 1, 512>}, {pipeline_mode = #tpu.pipeline_mode<synchronous>, transform_indices = @transform_6, window_bounds = array<i64: 128, 4>}, {pipeline_mode = #tpu.pipeline_mode<synchronous>, transform_indices = @transform_7, window_bounds = array<i64: 1, 4>}, {pipeline_mode = #tpu.pipeline_mode<synchronous>, transform_indices = @transform_8, window_bounds = array<i64: 1, 4>}, {pipeline_mode = #tpu.pipeline_mode<synchronous>, transform_indices = @transform_9, window_bounds = array<i64: 16, 512>}, {pipeline_mode = #tpu.pipeline_mode<synchronous>, transform_indices = @transform_10, window_bounds = array<i64: 1, 512>}, {pipeline_mode = #tpu.pipeline_mode<synchronous>, transform_indices = @transform_11, window_bounds = array<i64: 128, 16>}, {pipeline_mode = #tpu.pipeline_mode<synchronous>, transform_indices = @transform_12, window_bounds = array<i64: 1, 16>}, {transform_indices = @transform_13, window_bounds = array<i64: 256, 1>}, {transform_indices = @transform_14, window_bounds = array<i64: 256, 16>}]} {
    %0 = tpu.iota {dimensions = array<i32: 0>} : vector<4x4xi32>
    %1 = tpu.iota {dimensions = array<i32: 1>} : vector<4x4xi32>
    %2 = arith.cmpi sle, %0, %1 : vector<4x4xi32>
    %3 = arith.extui %2 : vector<4x4xi1> to vector<4x4xi32>
    %4 = arith.sitofp %3 : vector<4x4xi32> to vector<4x4xf32>
    %5 = tpu.iota {dimensions = array<i32: 0>} : vector<16x16xi32>
    %6 = tpu.iota {dimensions = array<i32: 1>} : vector<16x16xi32>
    %7 = arith.cmpi sle, %5, %6 : vector<16x16xi32>
    %8 = arith.extui %7 : vector<16x16xi1> to vector<16x16xi32>
    %9 = arith.sitofp %8 : vector<16x16xi32> to vector<16x16xf32>
    %c0 = arith.constant 0 : index
    %c0_0 = arith.constant 0 : index
    %10 = vector.load %arg1[%c0, %c0_0] : memref<256x2xi32, #tpu.memory_space<vmem>>, vector<256x2xi32>
    %c0_1 = arith.constant 0 : index
    %c0_2 = arith.constant 0 : index
    %11 = vector.load %arg2[%c0_1, %c0_2] : memref<256x2xf32, #tpu.memory_space<vmem>>, vector<256x2xf32>
    %12 = vector.extract_strided_slice %10 {offsets = [0, 0], sizes = [256, 1], strides = [1, 1]} : vector<256x2xi32> to vector<256x1xi32>
    %13 = tpu.iota {dimensions = array<i32: 1>} : vector<256x16xi32>
    %14 = vector.broadcast %12 : vector<256x1xi32> to vector<256x16xi32>
    %15 = arith.cmpi eq, %14, %13 : vector<256x16xi32>
    %16 = arith.extui %15 : vector<256x16xi1> to vector<256x16xi32>
    %17 = arith.sitofp %16 : vector<256x16xi32> to vector<256x16xf32>
    %18 = vector.extract_strided_slice %10 {offsets = [0, 1], sizes = [256, 1], strides = [1, 1]} : vector<256x2xi32> to vector<256x1xi32>
    %19 = tpu.iota {dimensions = array<i32: 1>} : vector<256x16xi32>
    %20 = vector.broadcast %18 : vector<256x1xi32> to vector<256x16xi32>
    %21 = arith.cmpi eq, %20, %19 : vector<256x16xi32>
    %22 = arith.extui %21 : vector<256x16xi1> to vector<256x16xi32>
    %23 = arith.sitofp %22 : vector<256x16xi32> to vector<256x16xf32>
    %24 = arith.addf %17, %23 : vector<256x16xf32>
    %25 = arith.truncf %24 : vector<256x16xf32> to vector<256x16xbf16>
    %c0_3 = arith.constant 0 : index
    %c0_4 = arith.constant 0 : index
    %26 = vector.load %arg9[%c0_3, %c0_4] : memref<1x4xf32, #tpu.memory_space<vmem>>, vector<1x4xf32>
    %27 = vector.extract_strided_slice %11 {offsets = [0, 0], sizes = [256, 1], strides = [1, 1]} : vector<256x2xf32> to vector<256x1xf32>
    %28 = vector.broadcast %27 : vector<256x1xf32> to vector<256x4xf32>
    %29 = vector.broadcast %26 : vector<1x4xf32> to vector<256x4xf32>
    %30 = arith.cmpf oge, %28, %29 : vector<256x4xf32>
    %31 = arith.extui %30 : vector<256x4xi1> to vector<256x4xi32>
    %cst = arith.constant dense<0> : vector<256xi32>
    %32 = vector.multi_reduction <add>, %31, %cst [1] : vector<256x4xi32> to vector<256xi32>
    %33 = vector.shape_cast %32 : vector<256xi32> to vector<256x1xi32>
    %c3_i32 = arith.constant 3 : i32
    %34 = vector.broadcast %c3_i32 : i32 to vector<256x1xi32>
    %35 = arith.minsi %33, %34 : vector<256x1xi32>
    %c0_i32 = arith.constant 0 : i32
    %36 = vector.broadcast %c0_i32 : i32 to vector<256x1xi32>
    %37 = arith.cmpi eq, %35, %36 : vector<256x1xi32>
    %38 = arith.extui %37 : vector<256x1xi1> to vector<256x1xi32>
    %39 = arith.sitofp %38 : vector<256x1xi32> to vector<256x1xf32>
    %c1_i32 = arith.constant 1 : i32
    %40 = vector.broadcast %c1_i32 : i32 to vector<256x1xi32>
    %41 = arith.cmpi eq, %35, %40 : vector<256x1xi32>
    %42 = arith.extui %41 : vector<256x1xi1> to vector<256x1xi32>
    %43 = arith.sitofp %42 : vector<256x1xi32> to vector<256x1xf32>
    %c2_i32 = arith.constant 2 : i32
    %44 = vector.broadcast %c2_i32 : i32 to vector<256x1xi32>
    %45 = arith.cmpi eq, %35, %44 : vector<256x1xi32>
    %46 = arith.extui %45 : vector<256x1xi1> to vector<256x1xi32>
    %47 = arith.sitofp %46 : vector<256x1xi32> to vector<256x1xf32>
    %c3_i32_5 = arith.constant 3 : i32
    %48 = vector.broadcast %c3_i32_5 : i32 to vector<256x1xi32>
    %49 = arith.cmpi eq, %35, %48 : vector<256x1xi32>
    %50 = arith.extui %49 : vector<256x1xi1> to vector<256x1xi32>
    %51 = arith.sitofp %50 : vector<256x1xi32> to vector<256x1xf32>
    %c0_6 = arith.constant 0 : index
    %c0_7 = arith.constant 0 : index
    %52 = vector.load %arg4[%c0_6, %c0_7] : memref<16x512xbf16, #tpu.memory_space<vmem>>, vector<16x128xbf16>
    %cst_8 = arith.constant dense<0.000000e+00> : vector<256x128xf32>
    %53 = tpu.matmul %25, %52, %cst_8 {dimension_numbers = #tpu.dot_dimension_numbers<[1], [0], [0], [1], [0, 0, 1, 1], [], []>} : vector<256x16xbf16>, vector<16x128xbf16>, vector<256x128xf32> -> vector<256x128xf32>
    %c0_9 = arith.constant 0 : index
    %c0_10 = arith.constant 0 : index
    %54 = vector.load %arg6[%c0_9, %c0_10] : memref<1x512xf32, #tpu.memory_space<vmem>>, vector<1x128xf32>
    %55 = vector.broadcast %54 : vector<1x128xf32> to vector<256x128xf32>
    %56 = arith.addf %53, %55 : vector<256x128xf32>
    %c0_11 = arith.constant 0 : index
    %c0_12 = arith.constant 0 : index
    %57 = vector.load %arg5[%c0_11, %c0_12] : memref<8x512xf32, #tpu.memory_space<vmem>>, vector<1x128xf32>
    %58 = vector.broadcast %39 : vector<256x1xf32> to vector<256x128xf32>
    %59 = vector.broadcast %57 : vector<1x128xf32> to vector<256x128xf32>
    %60 = arith.mulf %58, %59 : vector<256x128xf32>
    %c1 = arith.constant 1 : index
    %c0_13 = arith.constant 0 : index
    %61 = vector.load %arg5[%c1, %c0_13] : memref<8x512xf32, #tpu.memory_space<vmem>>, vector<1x128xf32>
    %62 = vector.broadcast %43 : vector<256x1xf32> to vector<256x128xf32>
    %63 = vector.broadcast %61 : vector<1x128xf32> to vector<256x128xf32>
    %64 = arith.mulf %62, %63 : vector<256x128xf32>
    %65 = arith.addf %60, %64 : vector<256x128xf32>
    %c2 = arith.constant 2 : index
    %c0_14 = arith.constant 0 : index
    %66 = vector.load %arg5[%c2, %c0_14] : memref<8x512xf32, #tpu.memory_space<vmem>>, vector<1x128xf32>
    %67 = vector.broadcast %47 : vector<256x1xf32> to vector<256x128xf32>
    %68 = vector.broadcast %66 : vector<1x128xf32> to vector<256x128xf32>
    %69 = arith.mulf %67, %68 : vector<256x128xf32>
    %70 = arith.addf %65, %69 : vector<256x128xf32>
    %c3 = arith.constant 3 : index
    %c0_15 = arith.constant 0 : index
    %71 = vector.load %arg5[%c3, %c0_15] : memref<8x512xf32, #tpu.memory_space<vmem>>, vector<1x128xf32>
    %72 = vector.broadcast %51 : vector<256x1xf32> to vector<256x128xf32>
    %73 = vector.broadcast %71 : vector<1x128xf32> to vector<256x128xf32>
    %74 = arith.mulf %72, %73 : vector<256x128xf32>
    %75 = arith.addf %70, %74 : vector<256x128xf32>
    %76 = arith.addf %56, %75 : vector<256x128xf32>
    %77 = arith.negf %76 : vector<256x128xf32>
    %78 = math.exp %77 : vector<256x128xf32>
    %cst_16 = arith.constant 1.000000e+00 : f32
    %79 = vector.broadcast %cst_16 : f32 to vector<256x128xf32>
    %80 = arith.addf %79, %78 : vector<256x128xf32>
    %81 = arith.divf %79, %80 : vector<256x128xf32>
    %c0_17 = arith.constant 0 : index
    %c256 = arith.constant 256 : index
    %82 = vector.load %arg4[%c0_17, %c256] : memref<16x512xbf16, #tpu.memory_space<vmem>>, vector<16x128xbf16>
    %cst_18 = arith.constant dense<0.000000e+00> : vector<256x128xf32>
    %83 = tpu.matmul %25, %82, %cst_18 {dimension_numbers = #tpu.dot_dimension_numbers<[1], [0], [0], [1], [0, 0, 1, 1], [], []>} : vector<256x16xbf16>, vector<16x128xbf16>, vector<256x128xf32> -> vector<256x128xf32>
    %c0_19 = arith.constant 0 : index
    %c256_20 = arith.constant 256 : index
    %84 = vector.load %arg6[%c0_19, %c256_20] : memref<1x512xf32, #tpu.memory_space<vmem>>, vector<1x128xf32>
    %85 = vector.broadcast %84 : vector<1x128xf32> to vector<256x128xf32>
    %86 = arith.addf %83, %85 : vector<256x128xf32>
    %c0_21 = arith.constant 0 : index
    %c256_22 = arith.constant 256 : index
    %87 = vector.load %arg5[%c0_21, %c256_22] : memref<8x512xf32, #tpu.memory_space<vmem>>, vector<1x128xf32>
    %88 = vector.broadcast %39 : vector<256x1xf32> to vector<256x128xf32>
    %89 = vector.broadcast %87 : vector<1x128xf32> to vector<256x128xf32>
    %90 = arith.mulf %88, %89 : vector<256x128xf32>
    %c1_23 = arith.constant 1 : index
    %c256_24 = arith.constant 256 : index
    %91 = vector.load %arg5[%c1_23, %c256_24] : memref<8x512xf32, #tpu.memory_space<vmem>>, vector<1x128xf32>
    %92 = vector.broadcast %43 : vector<256x1xf32> to vector<256x128xf32>
    %93 = vector.broadcast %91 : vector<1x128xf32> to vector<256x128xf32>
    %94 = arith.mulf %92, %93 : vector<256x128xf32>
    %95 = arith.addf %90, %94 : vector<256x128xf32>
    %c2_25 = arith.constant 2 : index
    %c256_26 = arith.constant 256 : index
    %96 = vector.load %arg5[%c2_25, %c256_26] : memref<8x512xf32, #tpu.memory_space<vmem>>, vector<1x128xf32>
    %97 = vector.broadcast %47 : vector<256x1xf32> to vector<256x128xf32>
    %98 = vector.broadcast %96 : vector<1x128xf32> to vector<256x128xf32>
    %99 = arith.mulf %97, %98 : vector<256x128xf32>
    %100 = arith.addf %95, %99 : vector<256x128xf32>
    %c3_27 = arith.constant 3 : index
    %c256_28 = arith.constant 256 : index
    %101 = vector.load %arg5[%c3_27, %c256_28] : memref<8x512xf32, #tpu.memory_space<vmem>>, vector<1x128xf32>
    %102 = vector.broadcast %51 : vector<256x1xf32> to vector<256x128xf32>
    %103 = vector.broadcast %101 : vector<1x128xf32> to vector<256x128xf32>
    %104 = arith.mulf %102, %103 : vector<256x128xf32>
    %105 = arith.addf %100, %104 : vector<256x128xf32>
    %106 = arith.addf %86, %105 : vector<256x128xf32>
    %107 = math.tanh %106 : vector<256x128xf32>
    %c0_29 = arith.constant 0 : index
    %c384 = arith.constant 384 : index
    %108 = vector.load %arg4[%c0_29, %c384] : memref<16x512xbf16, #tpu.memory_space<vmem>>, vector<16x128xbf16>
    %cst_30 = arith.constant dense<0.000000e+00> : vector<256x128xf32>
    %109 = tpu.matmul %25, %108, %cst_30 {dimension_numbers = #tpu.dot_dimension_numbers<[1], [0], [0], [1], [0, 0, 1, 1], [], []>} : vector<256x16xbf16>, vector<16x128xbf16>, vector<256x128xf32> -> vector<256x128xf32>
    %c0_31 = arith.constant 0 : index
    %c384_32 = arith.constant 384 : index
    %110 = vector.load %arg6[%c0_31, %c384_32] : memref<1x512xf32, #tpu.memory_space<vmem>>, vector<1x128xf32>
    %111 = vector.broadcast %110 : vector<1x128xf32> to vector<256x128xf32>
    %112 = arith.addf %109, %111 : vector<256x128xf32>
    %c0_33 = arith.constant 0 : index
    %c384_34 = arith.constant 384 : index
    %113 = vector.load %arg5[%c0_33, %c384_34] : memref<8x512xf32, #tpu.memory_space<vmem>>, vector<1x128xf32>
    %114 = vector.broadcast %39 : vector<256x1xf32> to vector<256x128xf32>
    %115 = vector.broadcast %113 : vector<1x128xf32> to vector<256x128xf32>
    %116 = arith.mulf %114, %115 : vector<256x128xf32>
    %c1_35 = arith.constant 1 : index
    %c384_36 = arith.constant 384 : index
    %117 = vector.load %arg5[%c1_35, %c384_36] : memref<8x512xf32, #tpu.memory_space<vmem>>, vector<1x128xf32>
    %118 = vector.broadcast %43 : vector<256x1xf32> to vector<256x128xf32>
    %119 = vector.broadcast %117 : vector<1x128xf32> to vector<256x128xf32>
    %120 = arith.mulf %118, %119 : vector<256x128xf32>
    %121 = arith.addf %116, %120 : vector<256x128xf32>
    %c2_37 = arith.constant 2 : index
    %c384_38 = arith.constant 384 : index
    %122 = vector.load %arg5[%c2_37, %c384_38] : memref<8x512xf32, #tpu.memory_space<vmem>>, vector<1x128xf32>
    %123 = vector.broadcast %47 : vector<256x1xf32> to vector<256x128xf32>
    %124 = vector.broadcast %122 : vector<1x128xf32> to vector<256x128xf32>
    %125 = arith.mulf %123, %124 : vector<256x128xf32>
    %126 = arith.addf %121, %125 : vector<256x128xf32>
    %c3_39 = arith.constant 3 : index
    %c384_40 = arith.constant 384 : index
    %127 = vector.load %arg5[%c3_39, %c384_40] : memref<8x512xf32, #tpu.memory_space<vmem>>, vector<1x128xf32>
    %128 = vector.broadcast %51 : vector<256x1xf32> to vector<256x128xf32>
    %129 = vector.broadcast %127 : vector<1x128xf32> to vector<256x128xf32>
    %130 = arith.mulf %128, %129 : vector<256x128xf32>
    %131 = arith.addf %126, %130 : vector<256x128xf32>
    %132 = arith.addf %112, %131 : vector<256x128xf32>
    %133 = arith.negf %132 : vector<256x128xf32>
    %134 = math.exp %133 : vector<256x128xf32>
    %cst_41 = arith.constant 1.000000e+00 : f32
    %135 = vector.broadcast %cst_41 : f32 to vector<256x128xf32>
    %136 = arith.addf %135, %134 : vector<256x128xf32>
    %137 = arith.divf %135, %136 : vector<256x128xf32>
    %138 = arith.mulf %81, %107 : vector<256x128xf32>
    %139 = math.tanh %138 : vector<256x128xf32>
    %140 = arith.mulf %137, %139 : vector<256x128xf32>
    %141 = arith.truncf %140 : vector<256x128xf32> to vector<256x128xbf16>
    %c0_42 = arith.constant 0 : index
    %c0_43 = arith.constant 0 : index
    %142 = vector.load %arg7[%c0_42, %c0_43] : memref<128x4xbf16, #tpu.memory_space<vmem>>, vector<128x4xbf16>
    %cst_44 = arith.constant dense<0.000000e+00> : vector<256x4xf32>
    %143 = tpu.matmul %141, %142, %cst_44 {dimension_numbers = #tpu.dot_dimension_numbers<[1], [0], [0], [1], [0, 0, 1, 1], [], []>} : vector<256x128xbf16>, vector<128x4xbf16>, vector<256x4xf32> -> vector<256x4xf32>
    %c0_45 = arith.constant 0 : index
    %c0_46 = arith.constant 0 : index
    %144 = vector.load %arg8[%c0_45, %c0_46] : memref<1x4xf32, #tpu.memory_space<vmem>>, vector<1x4xf32>
    %145 = vector.broadcast %144 : vector<1x4xf32> to vector<256x4xf32>
    %146 = arith.addf %143, %145 : vector<256x4xf32>
    %cst_47 = arith.constant dense<0xFF800000> : vector<256xf32>
    %147 = vector.multi_reduction <maximumf>, %146, %cst_47 [1] : vector<256x4xf32> to vector<256xf32>
    %148 = vector.shape_cast %147 : vector<256xf32> to vector<256x1xf32>
    %149 = vector.broadcast %148 : vector<256x1xf32> to vector<256x4xf32>
    %150 = arith.subf %146, %149 : vector<256x4xf32>
    %151 = math.exp %150 : vector<256x4xf32>
    %cst_48 = arith.constant dense<0.000000e+00> : vector<256xf32>
    %152 = vector.multi_reduction <add>, %151, %cst_48 [1] : vector<256x4xf32> to vector<256xf32>
    %153 = vector.shape_cast %152 : vector<256xf32> to vector<256x1xf32>
    %cst_49 = arith.constant dense<0.000000e+00> : vector<256x4xf32>
    %154 = tpu.matmul %151, %4, %cst_49 {dimension_numbers = #tpu.dot_dimension_numbers<[1], [0], [0], [1], [0, 0, 1, 1], [], []>} : vector<256x4xf32>, vector<4x4xf32>, vector<256x4xf32> -> vector<256x4xf32>
    %155 = vector.extract_strided_slice %11 {offsets = [0, 1], sizes = [256, 1], strides = [1, 1]} : vector<256x2xf32> to vector<256x1xf32>
    %156 = arith.mulf %155, %153 : vector<256x1xf32>
    %157 = vector.broadcast %156 : vector<256x1xf32> to vector<256x4xf32>
    %158 = arith.cmpf oge, %157, %154 : vector<256x4xf32>
    %159 = arith.extui %158 : vector<256x4xi1> to vector<256x4xi32>
    %cst_50 = arith.constant dense<0> : vector<256xi32>
    %160 = vector.multi_reduction <add>, %159, %cst_50 [1] : vector<256x4xi32> to vector<256xi32>
    %161 = vector.shape_cast %160 : vector<256xi32> to vector<256x1xi32>
    %c3_i32_51 = arith.constant 3 : i32
    %162 = vector.broadcast %c3_i32_51 : i32 to vector<256x1xi32>
    %163 = arith.minsi %161, %162 : vector<256x1xi32>
    %164 = tpu.iota {dimensions = array<i32: 1>} : vector<256x16xi32>
    %165 = vector.broadcast %35 : vector<256x1xi32> to vector<256x16xi32>
    %166 = arith.cmpi eq, %165, %164 : vector<256x16xi32>
    %167 = arith.extui %166 : vector<256x16xi1> to vector<256x16xi32>
    %168 = arith.sitofp %167 : vector<256x16xi32> to vector<256x16xf32>
    %c4_i32 = arith.constant 4 : i32
    %169 = vector.broadcast %c4_i32 : i32 to vector<256x1xi32>
    %170 = arith.addi %163, %169 : vector<256x1xi32>
    %171 = tpu.iota {dimensions = array<i32: 1>} : vector<256x16xi32>
    %172 = vector.broadcast %170 : vector<256x1xi32> to vector<256x16xi32>
    %173 = arith.cmpi eq, %172, %171 : vector<256x16xi32>
    %174 = arith.extui %173 : vector<256x16xi1> to vector<256x16xi32>
    %175 = arith.sitofp %174 : vector<256x16xi32> to vector<256x16xf32>
    %176 = arith.addf %168, %175 : vector<256x16xf32>
    %177 = arith.truncf %176 : vector<256x16xf32> to vector<256x16xbf16>
    %c0_52 = arith.constant 0 : index
    %c0_53 = arith.constant 0 : index
    %178 = vector.load %arg10[%c0_52, %c0_53] : memref<16x512xbf16, #tpu.memory_space<vmem>>, vector<16x128xbf16>
    %cst_54 = arith.constant dense<0.000000e+00> : vector<256x128xf32>
    %179 = tpu.matmul %177, %178, %cst_54 {dimension_numbers = #tpu.dot_dimension_numbers<[1], [0], [0], [1], [0, 0, 1, 1], [], []>} : vector<256x16xbf16>, vector<16x128xbf16>, vector<256x128xf32> -> vector<256x128xf32>
    %c0_55 = arith.constant 0 : index
    %c0_56 = arith.constant 0 : index
    %180 = vector.load %arg11[%c0_55, %c0_56] : memref<1x512xf32, #tpu.memory_space<vmem>>, vector<1x128xf32>
    %181 = vector.broadcast %180 : vector<1x128xf32> to vector<256x128xf32>
    %182 = arith.addf %179, %181 : vector<256x128xf32>
    %183 = arith.negf %182 : vector<256x128xf32>
    %184 = math.exp %183 : vector<256x128xf32>
    %cst_57 = arith.constant 1.000000e+00 : f32
    %185 = vector.broadcast %cst_57 : f32 to vector<256x128xf32>
    %186 = arith.addf %185, %184 : vector<256x128xf32>
    %187 = arith.divf %185, %186 : vector<256x128xf32>
    %c0_58 = arith.constant 0 : index
    %c256_59 = arith.constant 256 : index
    %188 = vector.load %arg10[%c0_58, %c256_59] : memref<16x512xbf16, #tpu.memory_space<vmem>>, vector<16x128xbf16>
    %cst_60 = arith.constant dense<0.000000e+00> : vector<256x128xf32>
    %189 = tpu.matmul %177, %188, %cst_60 {dimension_numbers = #tpu.dot_dimension_numbers<[1], [0], [0], [1], [0, 0, 1, 1], [], []>} : vector<256x16xbf16>, vector<16x128xbf16>, vector<256x128xf32> -> vector<256x128xf32>
    %c0_61 = arith.constant 0 : index
    %c256_62 = arith.constant 256 : index
    %190 = vector.load %arg11[%c0_61, %c256_62] : memref<1x512xf32, #tpu.memory_space<vmem>>, vector<1x128xf32>
    %191 = vector.broadcast %190 : vector<1x128xf32> to vector<256x128xf32>
    %192 = arith.addf %189, %191 : vector<256x128xf32>
    %193 = math.tanh %192 : vector<256x128xf32>
    %c0_63 = arith.constant 0 : index
    %c384_64 = arith.constant 384 : index
    %194 = vector.load %arg10[%c0_63, %c384_64] : memref<16x512xbf16, #tpu.memory_space<vmem>>, vector<16x128xbf16>
    %cst_65 = arith.constant dense<0.000000e+00> : vector<256x128xf32>
    %195 = tpu.matmul %177, %194, %cst_65 {dimension_numbers = #tpu.dot_dimension_numbers<[1], [0], [0], [1], [0, 0, 1, 1], [], []>} : vector<256x16xbf16>, vector<16x128xbf16>, vector<256x128xf32> -> vector<256x128xf32>
    %c0_66 = arith.constant 0 : index
    %c384_67 = arith.constant 384 : index
    %196 = vector.load %arg11[%c0_66, %c384_67] : memref<1x512xf32, #tpu.memory_space<vmem>>, vector<1x128xf32>
    %197 = vector.broadcast %196 : vector<1x128xf32> to vector<256x128xf32>
    %198 = arith.addf %195, %197 : vector<256x128xf32>
    %199 = arith.negf %198 : vector<256x128xf32>
    %200 = math.exp %199 : vector<256x128xf32>
    %cst_68 = arith.constant 1.000000e+00 : f32
    %201 = vector.broadcast %cst_68 : f32 to vector<256x128xf32>
    %202 = arith.addf %201, %200 : vector<256x128xf32>
    %203 = arith.divf %201, %202 : vector<256x128xf32>
    %204 = arith.mulf %187, %193 : vector<256x128xf32>
    %205 = math.tanh %204 : vector<256x128xf32>
    %206 = arith.mulf %203, %205 : vector<256x128xf32>
    %207 = arith.truncf %206 : vector<256x128xf32> to vector<256x128xbf16>
    %c0_69 = arith.constant 0 : index
    %c0_70 = arith.constant 0 : index
    %208 = vector.load %arg12[%c0_69, %c0_70] : memref<128x16xbf16, #tpu.memory_space<vmem>>, vector<128x16xbf16>
    %cst_71 = arith.constant dense<0.000000e+00> : vector<256x16xf32>
    %209 = tpu.matmul %207, %208, %cst_71 {dimension_numbers = #tpu.dot_dimension_numbers<[1], [0], [0], [1], [0, 0, 1, 1], [], []>} : vector<256x128xbf16>, vector<128x16xbf16>, vector<256x16xf32> -> vector<256x16xf32>
    %c0_72 = arith.constant 0 : index
    %c0_73 = arith.constant 0 : index
    %210 = vector.load %arg13[%c0_72, %c0_73] : memref<1x16xf32, #tpu.memory_space<vmem>>, vector<1x16xf32>
    %211 = vector.broadcast %210 : vector<1x16xf32> to vector<256x16xf32>
    %212 = arith.addf %209, %211 : vector<256x16xf32>
    %cst_74 = arith.constant dense<0xFF800000> : vector<256xf32>
    %213 = vector.multi_reduction <maximumf>, %212, %cst_74 [1] : vector<256x16xf32> to vector<256xf32>
    %214 = vector.shape_cast %213 : vector<256xf32> to vector<256x1xf32>
    %215 = vector.broadcast %214 : vector<256x1xf32> to vector<256x16xf32>
    %216 = arith.subf %212, %215 : vector<256x16xf32>
    %217 = math.exp %216 : vector<256x16xf32>
    %cst_75 = arith.constant dense<0.000000e+00> : vector<256xf32>
    %218 = vector.multi_reduction <add>, %217, %cst_75 [1] : vector<256x16xf32> to vector<256xf32>
    %219 = vector.shape_cast %218 : vector<256xf32> to vector<256x1xf32>
    %cst_76 = arith.constant dense<0.000000e+00> : vector<256x16xf32>
    %220 = tpu.matmul %217, %9, %cst_76 {dimension_numbers = #tpu.dot_dimension_numbers<[1], [0], [0], [1], [0, 0, 1, 1], [], []>} : vector<256x16xf32>, vector<16x16xf32>, vector<256x16xf32> -> vector<256x16xf32>
    %c0_77 = arith.constant 0 : index
    %c0_78 = arith.constant 0 : index
    %221 = vector.load %arg3[%c0_77, %c0_78] : memref<256x1xf32, #tpu.memory_space<vmem>>, vector<256x1xf32>
    %222 = arith.mulf %221, %219 : vector<256x1xf32>
    %223 = vector.broadcast %222 : vector<256x1xf32> to vector<256x16xf32>
    %224 = arith.cmpf oge, %223, %220 : vector<256x16xf32>
    %225 = arith.extui %224 : vector<256x16xi1> to vector<256x16xi32>
    %cst_79 = arith.constant dense<0> : vector<256xi32>
    %226 = vector.multi_reduction <add>, %225, %cst_79 [1] : vector<256x16xi32> to vector<256xi32>
    %227 = vector.shape_cast %226 : vector<256xi32> to vector<256x1xi32>
    %c15_i32 = arith.constant 15 : i32
    %228 = vector.broadcast %c15_i32 : i32 to vector<256x1xi32>
    %229 = arith.minsi %227, %228 : vector<256x1xi32>
    %c0_80 = arith.constant 0 : index
    %c0_81 = arith.constant 0 : index
    %230 = vector.load %arg14[%c0_80, %c0_81] : memref<256x1xi32, #tpu.memory_space<vmem>>, vector<256x1xi32>
    tpu.vector_store %arg14[%c0_80, %c0_81], %229 {strides = array<i32>} : memref<256x1xi32, #tpu.memory_space<vmem>>, vector<256x1xi32>,
    %231 = vector.broadcast %219 : vector<256x1xf32> to vector<256x16xf32>
    %232 = arith.divf %217, %231 : vector<256x16xf32>
    %c0_82 = arith.constant 0 : index
    %c0_83 = arith.constant 0 : index
    %233 = vector.load %arg15[%c0_82, %c0_83] : memref<256x16xf32, #tpu.memory_space<vmem>>, vector<256x16xf32>
    tpu.vector_store %arg15[%c0_82, %c0_83], %232 {strides = array<i32>} : memref<256x16xf32, #tpu.memory_space<vmem>>, vector<256x16xf32>,
    return
  }
  func.func @transform_0(%arg0: i32) -> (i32, i32) {
    %c0_i32 = arith.constant 0 : i32
    %c0_i32_0 = arith.constant 0 : i32
    return %arg0, %c0_i32 : i32, i32
  }
  func.func @transform_1(%arg0: i32) -> (i32, i32) {
    %c0_i32 = arith.constant 0 : i32
    %c0_i32_0 = arith.constant 0 : i32
    return %arg0, %c0_i32 : i32, i32
  }
  func.func @transform_2(%arg0: i32) -> (i32, i32) {
    %c0_i32 = arith.constant 0 : i32
    %c0_i32_0 = arith.constant 0 : i32
    return %arg0, %c0_i32 : i32, i32
  }
  func.func @transform_3(%arg0: i32) -> (i32, i32) {
    %c0_i32 = arith.constant 0 : i32
    %c0_i32_0 = arith.constant 0 : i32
    %c0_i32_1 = arith.constant 0 : i32
    return %c0_i32, %c0_i32_0 : i32, i32
  }
  func.func @transform_4(%arg0: i32) -> (i32, i32) {
    %c0_i32 = arith.constant 0 : i32
    %c0_i32_0 = arith.constant 0 : i32
    %c0_i32_1 = arith.constant 0 : i32
    return %c0_i32, %c0_i32_0 : i32, i32
  }
  func.func @transform_5(%arg0: i32) -> (i32, i32) {
    %c0_i32 = arith.constant 0 : i32
    %c0_i32_0 = arith.constant 0 : i32
    %c0_i32_1 = arith.constant 0 : i32
    return %c0_i32, %c0_i32_0 : i32, i32
  }
  func.func @transform_6(%arg0: i32) -> (i32, i32) {
    %c0_i32 = arith.constant 0 : i32
    %c0_i32_0 = arith.constant 0 : i32
    %c0_i32_1 = arith.constant 0 : i32
    return %c0_i32, %c0_i32_0 : i32, i32
  }
  func.func @transform_7(%arg0: i32) -> (i32, i32) {
    %c0_i32 = arith.constant 0 : i32
    %c0_i32_0 = arith.constant 0 : i32
    %c0_i32_1 = arith.constant 0 : i32
    return %c0_i32, %c0_i32_0 : i32, i32
  }
  func.func @transform_8(%arg0: i32) -> (i32, i32) {
    %c0_i32 = arith.constant 0 : i32
    %c0_i32_0 = arith.constant 0 : i32
    %c0_i32_1 = arith.constant 0 : i32
    return %c0_i32, %c0_i32_0 : i32, i32
  }
  func.func @transform_9(%arg0: i32) -> (i32, i32) {
    %c0_i32 = arith.constant 0 : i32
    %c0_i32_0 = arith.constant 0 : i32
    %c0_i32_1 = arith.constant 0 : i32
    return %c0_i32, %c0_i32_0 : i32, i32
  }
  func.func @transform_10(%arg0: i32) -> (i32, i32) {
    %c0_i32 = arith.constant 0 : i32
    %c0_i32_0 = arith.constant 0 : i32
    %c0_i32_1 = arith.constant 0 : i32
    return %c0_i32, %c0_i32_0 : i32, i32
  }
  func.func @transform_11(%arg0: i32) -> (i32, i32) {
    %c0_i32 = arith.constant 0 : i32
    %c0_i32_0 = arith.constant 0 : i32
    %c0_i32_1 = arith.constant 0 : i32
    return %c0_i32, %c0_i32_0 : i32, i32
  }
  func.func @transform_12(%arg0: i32) -> (i32, i32) {
    %c0_i32 = arith.constant 0 : i32
    %c0_i32_0 = arith.constant 0 : i32
    %c0_i32_1 = arith.constant 0 : i32
    return %c0_i32, %c0_i32_0 : i32, i32
  }
  func.func @transform_13(%arg0: i32) -> (i32, i32) {
    %c0_i32 = arith.constant 0 : i32
    %c0_i32_0 = arith.constant 0 : i32
    return %arg0, %c0_i32 : i32, i32
  }
  func.func @transform_14(%arg0: i32) -> (i32, i32) {
    %c0_i32 = arith.constant 0 : i32
    %c0_i32_0 = arith.constant 0 : i32
    return %arg0, %c0_i32 : i32, i32
  }
}

</mosaic_0001>

<llo_original>
// kernel: tpu_custom_call.1
$region0: #{tpu_custom_call.1}
  #allocation0 [shape = 'u32[]', space=smem, size = 0x4, offset = 0x4, fixed_abs, tag = 'smem constant byte address 0x4 - core index']
  #allocation1 [shape = 'u32[72,128]{1,0:T(1,128)}', space=vmem, size = 0x9000, scoped, tag = 'internal scratch']
  %s0 = inlined_call_operand.vmem [shape: s32[256,2], index: 0, kind: input, shape index: {}]
  %s1 = inlined_call_operand.vmem [shape: f32[256,2], index: 1, kind: input, shape index: {}]
  %s2 = inlined_call_operand.vmem [shape: f32[256,1], index: 2, kind: input, shape index: {}]
  %s3 = inlined_call_operand.vmem [shape: bf16[16,512], index: 3, kind: input, shape index: {}]
  %s4 = inlined_call_operand.vmem [shape: f32[8,512], index: 4, kind: input, shape index: {}]
  %s5 = inlined_call_operand.vmem [shape: f32[1,512], index: 5, kind: input, shape index: {}]
  %s6 = inlined_call_operand.vmem [shape: bf16[128,4], index: 6, kind: input, shape index: {}]
  %s7 = inlined_call_operand.vmem [shape: f32[1,4], index: 7, kind: input, shape index: {}]
  %s8 = inlined_call_operand.vmem [shape: f32[1,4], index: 8, kind: input, shape index: {}]
  %s9 = inlined_call_operand.vmem [shape: bf16[16,512], index: 9, kind: input, shape index: {}]
  %s10 = inlined_call_operand.vmem [shape: f32[1,512], index: 10, kind: input, shape index: {}]
  %s11 = inlined_call_operand.vmem [shape: bf16[128,16], index: 11, kind: input, shape index: {}]
  %s12 = inlined_call_operand.vmem [shape: f32[1,16], index: 12, kind: input, shape index: {}]
  %s13 = inlined_call_operand.vmem [shape: s32[256,1], index: 13, kind: output, shape index: {0}]
  %s14 = inlined_call_operand.vmem [shape: f32[256,16], index: 14, kind: output, shape index: {1}]
  %15 = xla_tuple %s13, %s14
  %s16 = sld [smem:[#allocation0]]
  $region70: #{tpu_custom_call.1} parent=0
    _
  %s18 = ssub.s32 1, %s16
  %s19 = scalar_select 0, %s18, %s16
  // Predicated region
  $region2: #{tpu_custom_call.1} parent=0 // pred_check
    _
  $region3: #{tpu_custom_call.1} parent=0 // pred_check_branch
    %21 = sbr.rel (0) target = $region5
  $region4: #{tpu_custom_call.1} parent=0 // pred_region
    _
  $region5: #{tpu_custom_call.1} parent=0 // pred_fallthru
    _
  // Predicated region
  $region6: #{tpu_custom_call.1} parent=0 // pred_check
    _
  $region7: #{tpu_custom_call.1} parent=0 // pred_check_branch
    %23 = sbr.rel (0) target = $region9
  $region8: #{tpu_custom_call.1} parent=0 // pred_region
    _
  $region9: #{tpu_custom_call.1} parent=0 // pred_fallthru
    _
  // Predicated region
  $region10: #{tpu_custom_call.1} parent=0 // pred_check
    _
  $region11: #{tpu_custom_call.1} parent=0 // pred_check_branch
    %25 = sbr.rel (0) target = $region13
  $region12: #{tpu_custom_call.1} parent=0 // pred_region
    _
  $region13: #{tpu_custom_call.1} parent=0 // pred_fallthru
    _
  // Predicated region
  $region14: #{tpu_custom_call.1} parent=0 // pred_check
    _
  $region15: #{tpu_custom_call.1} parent=0 // pred_check_branch
    %27 = sbr.rel (0) target = $region17
  $region16: #{tpu_custom_call.1} parent=0 // pred_region
    _
  $region17: #{tpu_custom_call.1} parent=0 // pred_fallthru
    _
  // Predicated region
  $region18: #{tpu_custom_call.1} parent=0 // pred_check
    _
  $region19: #{tpu_custom_call.1} parent=0 // pred_check_branch
    %29 = sbr.rel (0) target = $region21
  $region20: #{tpu_custom_call.1} parent=0 // pred_region
    _
  $region21: #{tpu_custom_call.1} parent=0 // pred_fallthru
    _
  // Predicated region
  $region22: #{tpu_custom_call.1} parent=0 // pred_check
    _
  $region23: #{tpu_custom_call.1} parent=0 // pred_check_branch
    %31 = sbr.rel (0) target = $region25
  $region24: #{tpu_custom_call.1} parent=0 // pred_region
    _
  $region25: #{tpu_custom_call.1} parent=0 // pred_fallthru
    _
  // Predicated region
  $region26: #{tpu_custom_call.1} parent=0 // pred_check
    _
  $region27: #{tpu_custom_call.1} parent=0 // pred_check_branch
    %33 = sbr.rel (0) target = $region29
  $region28: #{tpu_custom_call.1} parent=0 // pred_region
    _
  $region29: #{tpu_custom_call.1} parent=0 // pred_fallthru
    _
  // Predicated region
  $region30: #{tpu_custom_call.1} parent=0 // pred_check
    _
  $region31: #{tpu_custom_call.1} parent=0 // pred_check_branch
    %35 = sbr.rel (0) target = $region33
  $region32: #{tpu_custom_call.1} parent=0 // pred_region
    _
  $region33: #{tpu_custom_call.1} parent=0 // pred_fallthru
    _
  // Predicated region
  $region34: #{tpu_custom_call.1} parent=0 // pred_check
    _
  $region35: #{tpu_custom_call.1} parent=0 // pred_check_branch
    %37 = sbr.rel (0) target = $region37
  $region36: #{tpu_custom_call.1} parent=0 // pred_region
    _
  $region37: #{tpu_custom_call.1} parent=0 // pred_fallthru
    _
  // Predicated region
  $region38: #{tpu_custom_call.1} parent=0 // pred_check
    _
  $region39: #{tpu_custom_call.1} parent=0 // pred_check_branch
    %39 = sbr.rel (0) target = $region41
  $region40: #{tpu_custom_call.1} parent=0 // pred_region
    _
  $region41: #{tpu_custom_call.1} parent=0 // pred_fallthru
    _
  // Predicated region
  $region42: #{tpu_custom_call.1} parent=0 // pred_check
    _
  $region43: #{tpu_custom_call.1} parent=0 // pred_check_branch
    %41 = sbr.rel (0) target = $region45
  $region44: #{tpu_custom_call.1} parent=0 // pred_region
    _
  $region45: #{tpu_custom_call.1} parent=0 // pred_fallthru
    _
  // Predicated region
  $region46: #{tpu_custom_call.1} parent=0 // pred_check
    _
  $region47: #{tpu_custom_call.1} parent=0 // pred_check_branch
    %43 = sbr.rel (0) target = $region49
  $region48: #{tpu_custom_call.1} parent=0 // pred_region
    _
  $region49: #{tpu_custom_call.1} parent=0 // pred_fallthru
    _
  // Predicated region
  $region50: #{tpu_custom_call.1} parent=0 // pred_check
    _
  $region51: #{tpu_custom_call.1} parent=0 // pred_check_branch
    %45 = sbr.rel (0) target = $region53
  $region52: #{tpu_custom_call.1} parent=0 // pred_region
    _
  $region53: #{tpu_custom_call.1} parent=0 // pred_fallthru
    _
  %v47 = vlaneseq
  %v48 = vshrl.u32 %v47, 7
  %v49 = vlaneseq
  %v50 = vand.u32 %v49, 127
  %vm51 = vcmp.le.s32.totalorder %v48, %v50
  %v52 = vsel %vm51, 1, 0
  %v53 = vcvt.s32.f32 %v52
  %v54 = vadd.s32 %v48, 8
  %vm55 = vcmp.le.s32.totalorder %v54, %v50
  %v56 = vsel %vm55, 1, 0
  %v57 = vcvt.s32.f32 %v56
  %v58 = vld [vmem:[%s0] sm:$0xff]
  %v59 = vld [vmem:[%s0 + $0x8] sm:$0xff]
  %v60 = vld [vmem:[%s0 + $0x10] sm:$0xff]
  %v61 = vld [vmem:[%s0 + $0x18] sm:$0xff]
  %v62 = vld [vmem:[%s0 + $0x20] sm:$0xff]
  %v63 = vld [vmem:[%s0 + $0x28] sm:$0xff]
  %v64 = vld [vmem:[%s0 + $0x30] sm:$0xff]
  %v65 = vld [vmem:[%s0 + $0x38] sm:$0xff]
  %v66 = vld [vmem:[%s0 + $0x40] sm:$0xff]
  %v67 = vld [vmem:[%s0 + $0x48] sm:$0xff]
  %v68 = vld [vmem:[%s0 + $0x50] sm:$0xff]
  %v69 = vld [vmem:[%s0 + $0x58] sm:$0xff]
  %v70 = vld [vmem:[%s0 + $0x60] sm:$0xff]
  %v71 = vld [vmem:[%s0 + $0x68] sm:$0xff]
  %v72 = vld [vmem:[%s0 + $0x70] sm:$0xff]
  %v73 = vld [vmem:[%s0 + $0x78] sm:$0xff]
  %v74 = vld [vmem:[%s0 + $0x80] sm:$0xff]
  %v75 = vld [vmem:[%s0 + $0x88] sm:$0xff]
  %v76 = vld [vmem:[%s0 + $0x90] sm:$0xff]
  %v77 = vld [vmem:[%s0 + $0x98] sm:$0xff]
  %v78 = vld [vmem:[%s0 + $0xa0] sm:$0xff]
  %v79 = vld [vmem:[%s0 + $0xa8] sm:$0xff]
  %v80 = vld [vmem:[%s0 + $0xb0] sm:$0xff]
  %v81 = vld [vmem:[%s0 + $0xb8] sm:$0xff]
  %v82 = vld [vmem:[%s0 + $0xc0] sm:$0xff]
  %v83 = vld [vmem:[%s0 + $0xc8] sm:$0xff]
  %v84 = vld [vmem:[%s0 + $0xd0] sm:$0xff]
  %v85 = vld [vmem:[%s0 + $0xd8] sm:$0xff]
  %v86 = vld [vmem:[%s0 + $0xe0] sm:$0xff]
  %v87 = vld [vmem:[%s0 + $0xe8] sm:$0xff]
  %v88 = vld [vmem:[%s0 + $0xf0] sm:$0xff]
  %v89 = vld [vmem:[%s0 + $0xf8] sm:$0xff]
  %v90 = vld [vmem:[%s1] sm:$0xff]
  %v91 = vld [vmem:[%s1 + $0x8] sm:$0xff]
  %v92 = vld [vmem:[%s1 + $0x10] sm:$0xff]
  %v93 = vld [vmem:[%s1 + $0x18] sm:$0xff]
  %v94 = vld [vmem:[%s1 + $0x20] sm:$0xff]
  %v95 = vld [vmem:[%s1 + $0x28] sm:$0xff]
  %v96 = vld [vmem:[%s1 + $0x30] sm:$0xff]
  %v97 = vld [vmem:[%s1 + $0x38] sm:$0xff]
  %v98 = vld [vmem:[%s1 + $0x40] sm:$0xff]
  %v99 = vld [vmem:[%s1 + $0x48] sm:$0xff]
  %v100 = vld [vmem:[%s1 + $0x50] sm:$0xff]
  %v101 = vld [vmem:[%s1 + $0x58] sm:$0xff]
  %v102 = vld [vmem:[%s1 + $0x60] sm:$0xff]
  %v103 = vld [vmem:[%s1 + $0x68] sm:$0xff]
  %v104 = vld [vmem:[%s1 + $0x70] sm:$0xff]
  %v105 = vld [vmem:[%s1 + $0x78] sm:$0xff]
  %v106 = vld [vmem:[%s1 + $0x80] sm:$0xff]
  %v107 = vld [vmem:[%s1 + $0x88] sm:$0xff]
  %v108 = vld [vmem:[%s1 + $0x90] sm:$0xff]
  %v109 = vld [vmem:[%s1 + $0x98] sm:$0xff]
  %v110 = vld [vmem:[%s1 + $0xa0] sm:$0xff]
  %v111 = vld [vmem:[%s1 + $0xa8] sm:$0xff]
  %v112 = vld [vmem:[%s1 + $0xb0] sm:$0xff]
  %v113 = vld [vmem:[%s1 + $0xb8] sm:$0xff]
  %v114 = vld [vmem:[%s1 + $0xc0] sm:$0xff]
  %v115 = vld [vmem:[%s1 + $0xc8] sm:$0xff]
  %v116 = vld [vmem:[%s1 + $0xd0] sm:$0xff]
  %v117 = vld [vmem:[%s1 + $0xd8] sm:$0xff]
  %v118 = vld [vmem:[%s1 + $0xe0] sm:$0xff]
  %v119 = vld [vmem:[%s1 + $0xe8] sm:$0xff]
  %v120 = vld [vmem:[%s1 + $0xf0] sm:$0xff]
  %v121 = vld [vmem:[%s1 + $0xf8] sm:$0xff]
  %122 = vset.pattern.permute.xlu0 0
  %123 = vperm.xlu0 %122, %v58
  %v124 = vpop.permute.xlu0 %123
  %125 = vset.pattern.permute.xlu0 0
  %126 = vperm.xlu0 %125, %v59
  %v127 = vpop.permute.xlu0 %126
  %128 = vset.pattern.permute.xlu0 0
  %129 = vperm.xlu0 %128, %v60
  %v130 = vpop.permute.xlu0 %129
  %131 = vset.pattern.permute.xlu0 0
  %132 = vperm.xlu0 %131, %v61
  %v133 = vpop.permute.xlu0 %132
  %134 = vset.pattern.permute.xlu0 0
  %135 = vperm.xlu0 %134, %v62
  %v136 = vpop.permute.xlu0 %135
  %137 = vset.pattern.permute.xlu0 0
  %138 = vperm.xlu0 %137, %v63
  %v139 = vpop.permute.xlu0 %138
  %140 = vset.pattern.permute.xlu0 0
  %141 = vperm.xlu0 %140, %v64
  %v142 = vpop.permute.xlu0 %141
  %143 = vset.pattern.permute.xlu0 0
  %144 = vperm.xlu0 %143, %v65
  %v145 = vpop.permute.xlu0 %144
  %146 = vset.pattern.permute.xlu0 0
  %147 = vperm.xlu0 %146, %v66
  %v148 = vpop.permute.xlu0 %147
  %149 = vset.pattern.permute.xlu0 0
  %150 = vperm.xlu0 %149, %v67
  %v151 = vpop.permute.xlu0 %150
  %152 = vset.pattern.permute.xlu0 0
  %153 = vperm.xlu0 %152, %v68
  %v154 = vpop.permute.xlu0 %153
  %155 = vset.pattern.permute.xlu0 0
  %156 = vperm.xlu0 %155, %v69
  %v157 = vpop.permute.xlu0 %156
  %158 = vset.pattern.permute.xlu0 0
  %159 = vperm.xlu0 %158, %v70
  %v160 = vpop.permute.xlu0 %159
  %161 = vset.pattern.permute.xlu0 0
  %162 = vperm.xlu0 %161, %v71
  %v163 = vpop.permute.xlu0 %162
  %164 = vset.pattern.permute.xlu0 0
  %165 = vperm.xlu0 %164, %v72
  %v166 = vpop.permute.xlu0 %165
  %167 = vset.pattern.permute.xlu0 0
  %168 = vperm.xlu0 %167, %v73
  %v169 = vpop.permute.xlu0 %168
  %170 = vset.pattern.permute.xlu0 0
  %171 = vperm.xlu0 %170, %v74
  %v172 = vpop.permute.xlu0 %171
  %173 = vset.pattern.permute.xlu0 0
  %174 = vperm.xlu0 %173, %v75
  %v175 = vpop.permute.xlu0 %174
  %176 = vset.pattern.permute.xlu0 0
  %177 = vperm.xlu0 %176, %v76
  %v178 = vpop.permute.xlu0 %177
  %179 = vset.pattern.permute.xlu0 0
  %180 = vperm.xlu0 %179, %v77
  %v181 = vpop.permute.xlu0 %180
  %182 = vset.pattern.permute.xlu0 0
  %183 = vperm.xlu0 %182, %v78
  %v184 = vpop.permute.xlu0 %183
  %185 = vset.pattern.permute.xlu0 0
  %186 = vperm.xlu0 %185, %v79
  %v187 = vpop.permute.xlu0 %186
  %188 = vset.pattern.permute.xlu0 0
  %189 = vperm.xlu0 %188, %v80
  %v190 = vpop.permute.xlu0 %189
  %191 = vset.pattern.permute.xlu0 0
  %192 = vperm.xlu0 %191, %v81
  %v193 = vpop.permute.xlu0 %192
  %194 = vset.pattern.permute.xlu0 0
  %195 = vperm.xlu0 %194, %v82
  %v196 = vpop.permute.xlu0 %195
  %197 = vset.pattern.permute.xlu0 0
  %198 = vperm.xlu0 %197, %v83
  %v199 = vpop.permute.xlu0 %198
  %200 = vset.pattern.permute.xlu0 0
  %201 = vperm.xlu0 %200, %v84
  %v202 = vpop.permute.xlu0 %201
  %203 = vset.pattern.permute.xlu0 0
  %204 = vperm.xlu0 %203, %v85
  %v205 = vpop.permute.xlu0 %204
  %206 = vset.pattern.permute.xlu0 0
  %207 = vperm.xlu0 %206, %v86
  %v208 = vpop.permute.xlu0 %207
  %209 = vset.pattern.permute.xlu0 0
  %210 = vperm.xlu0 %209, %v87
  %v211 = vpop.permute.xlu0 %210
  %212 = vset.pattern.permute.xlu0 0
  %213 = vperm.xlu0 %212, %v88
  %v214 = vpop.permute.xlu0 %213
  %215 = vset.pattern.permute.xlu0 0
  %216 = vperm.xlu0 %215, %v89
  %v217 = vpop.permute.xlu0 %216
  %vm218 = vcmp.eq.s32.totalorder %v124, %v50
  %vm219 = vcmp.eq.s32.totalorder %v127, %v50
  %vm220 = vcmp.eq.s32.totalorder %v130, %v50
  %vm221 = vcmp.eq.s32.totalorder %v133, %v50
  %vm222 = vcmp.eq.s32.totalorder %v136, %v50
  %vm223 = vcmp.eq.s32.totalorder %v139, %v50
  %vm224 = vcmp.eq.s32.totalorder %v142, %v50
  %vm225 = vcmp.eq.s32.totalorder %v145, %v50
  %vm226 = vcmp.eq.s32.totalorder %v148, %v50
  %vm227 = vcmp.eq.s32.totalorder %v151, %v50
  %vm228 = vcmp.eq.s32.totalorder %v154, %v50
  %vm229 = vcmp.eq.s32.totalorder %v157, %v50
  %vm230 = vcmp.eq.s32.totalorder %v160, %v50
  %vm231 = vcmp.eq.s32.totalorder %v163, %v50
  %vm232 = vcmp.eq.s32.totalorder %v166, %v50
  %vm233 = vcmp.eq.s32.totalorder %v169, %v50
  %vm234 = vcmp.eq.s32.totalorder %v172, %v50
  %vm235 = vcmp.eq.s32.totalorder %v175, %v50
  %vm236 = vcmp.eq.s32.totalorder %v178, %v50
  %vm237 = vcmp.eq.s32.totalorder %v181, %v50
  %vm238 = vcmp.eq.s32.totalorder %v184, %v50
  %vm239 = vcmp.eq.s32.totalorder %v187, %v50
  %vm240 = vcmp.eq.s32.totalorder %v190, %v50
  %vm241 = vcmp.eq.s32.totalorder %v193, %v50
  %vm242 = vcmp.eq.s32.totalorder %v196, %v50
  %vm243 = vcmp.eq.s32.totalorder %v199, %v50
  %vm244 = vcmp.eq.s32.totalorder %v202, %v50
  %vm245 = vcmp.eq.s32.totalorder %v205, %v50
  %vm246 = vcmp.eq.s32.totalorder %v208, %v50
  %vm247 = vcmp.eq.s32.totalorder %v211, %v50
  %vm248 = vcmp.eq.s32.totalorder %v214, %v50
  %vm249 = vcmp.eq.s32.totalorder %v217, %v50
  %v250 = vsel %vm218, 1, 0
  %v251 = vsel %vm219, 1, 0
  %v252 = vsel %vm220, 1, 0
  %v253 = vsel %vm221, 1, 0
  %v254 = vsel %vm222, 1, 0
  %v255 = vsel %vm223, 1, 0
  %v256 = vsel %vm224, 1, 0
  %v257 = vsel %vm225, 1, 0
  %v258 = vsel %vm226, 1, 0
  %v259 = vsel %vm227, 1, 0
  %v260 = vsel %vm228, 1, 0
  %v261 = vsel %vm229, 1, 0
  %v262 = vsel %vm230, 1, 0
  %v263 = vsel %vm231, 1, 0
  %v264 = vsel %vm232, 1, 0
  %v265 = vsel %vm233, 1, 0
  %v266 = vsel %vm234, 1, 0
  %v267 = vsel %vm235, 1, 0
  %v268 = vsel %vm236, 1, 0
  %v269 = vsel %vm237, 1, 0
  %v270 = vsel %vm238, 1, 0
  %v271 = vsel %vm239, 1, 0
  %v272 = vsel %vm240, 1, 0
  %v273 = vsel %vm241, 1, 0
  %v274 = vsel %vm242, 1, 0
  %v275 = vsel %vm243, 1, 0
  %v276 = vsel %vm244, 1, 0
  %v277 = vsel %vm245, 1, 0
  %v278 = vsel %vm246, 1, 0
  %v279 = vsel %vm247, 1, 0
  %v280 = vsel %vm248, 1, 0
  %v281 = vsel %vm249, 1, 0
  %v282 = vcvt.s32.f32 %v250
  %v283 = vcvt.s32.f32 %v251
  %v284 = vcvt.s32.f32 %v252
  %v285 = vcvt.s32.f32 %v253
  %v286 = vcvt.s32.f32 %v254
  %v287 = vcvt.s32.f32 %v255
  %v288 = vcvt.s32.f32 %v256
  %v289 = vcvt.s32.f32 %v257
  %v290 = vcvt.s32.f32 %v258
  %v291 = vcvt.s32.f32 %v259
  %v292 = vcvt.s32.f32 %v260
  %v293 = vcvt.s32.f32 %v261
  %v294 = vcvt.s32.f32 %v262
  %v295 = vcvt.s32.f32 %v263
  %v296 = vcvt.s32.f32 %v264
  %v297 = vcvt.s32.f32 %v265
  %v298 = vcvt.s32.f32 %v266
  %v299 = vcvt.s32.f32 %v267
  %v300 = vcvt.s32.f32 %v268
  %v301 = vcvt.s32.f32 %v269
  %v302 = vcvt.s32.f32 %v270
  %v303 = vcvt.s32.f32 %v271
  %v304 = vcvt.s32.f32 %v272
  %v305 = vcvt.s32.f32 %v273
  %v306 = vcvt.s32.f32 %v274
  %v307 = vcvt.s32.f32 %v275
  %v308 = vcvt.s32.f32 %v276
  %v309 = vcvt.s32.f32 %v277
  %v310 = vcvt.s32.f32 %v278
  %v311 = vcvt.s32.f32 %v279
  %v312 = vcvt.s32.f32 %v280
  %v313 = vcvt.s32.f32 %v281
  %314 = vset.pattern.permute.xlu0 1
  %315 = vperm.xlu0 %314, %v58
  %v316 = vpop.permute.xlu0 %315
  %317 = vset.pattern.permute.xlu0 1
  %318 = vperm.xlu0 %317, %v59
  %v319 = vpop.permute.xlu0 %318
  %320 = vset.pattern.permute.xlu0 1
  %321 = vperm.xlu0 %320, %v60
  %v322 = vpop.permute.xlu0 %321
  %323 = vset.pattern.permute.xlu0 1
  %324 = vperm.xlu0 %323, %v61
  %v325 = vpop.permute.xlu0 %324
  %326 = vset.pattern.permute.xlu0 1
  %327 = vperm.xlu0 %326, %v62
  %v328 = vpop.permute.xlu0 %327
  %329 = vset.pattern.permute.xlu0 1
  %330 = vperm.xlu0 %329, %v63
  %v331 = vpop.permute.xlu0 %330
  %332 = vset.pattern.permute.xlu0 1
  %333 = vperm.xlu0 %332, %v64
  %v334 = vpop.permute.xlu0 %333
  %335 = vset.pattern.permute.xlu0 1
  %336 = vperm.xlu0 %335, %v65
  %v337 = vpop.permute.xlu0 %336
  %338 = vset.pattern.permute.xlu0 1
  %339 = vperm.xlu0 %338, %v66
  %v340 = vpop.permute.xlu0 %339
  %341 = vset.pattern.permute.xlu0 1
  %342 = vperm.xlu0 %341, %v67
  %v343 = vpop.permute.xlu0 %342
  %344 = vset.pattern.permute.xlu0 1
  %345 = vperm.xlu0 %344, %v68
  %v346 = vpop.permute.xlu0 %345
  %347 = vset.pattern.permute.xlu0 1
  %348 = vperm.xlu0 %347, %v69
  %v349 = vpop.permute.xlu0 %348
  %350 = vset.pattern.permute.xlu0 1
  %351 = vperm.xlu0 %350, %v70
  %v352 = vpop.permute.xlu0 %351
  %353 = vset.pattern.permute.xlu0 1
  %354 = vperm.xlu0 %353, %v71
  %v355 = vpop.permute.xlu0 %354
  %356 = vset.pattern.permute.xlu0 1
  %357 = vperm.xlu0 %356, %v72
  %v358 = vpop.permute.xlu0 %357
  %359 = vset.pattern.permute.xlu0 1
  %360 = vperm.xlu0 %359, %v73
  %v361 = vpop.permute.xlu0 %360
  %362 = vset.pattern.permute.xlu0 1
  %363 = vperm.xlu0 %362, %v74
  %v364 = vpop.permute.xlu0 %363
  %365 = vset.pattern.permute.xlu0 1
  %366 = vperm.xlu0 %365, %v75
  %v367 = vpop.permute.xlu0 %366
  %368 = vset.pattern.permute.xlu0 1
  %369 = vperm.xlu0 %368, %v76
  %v370 = vpop.permute.xlu0 %369
  %371 = vset.pattern.permute.xlu0 1
  %372 = vperm.xlu0 %371, %v77
  %v373 = vpop.permute.xlu0 %372
  %374 = vset.pattern.permute.xlu0 1
  %375 = vperm.xlu0 %374, %v78
  %v376 = vpop.permute.xlu0 %375
  %377 = vset.pattern.permute.xlu0 1
  %378 = vperm.xlu0 %377, %v79
  %v379 = vpop.permute.xlu0 %378
  %380 = vset.pattern.permute.xlu0 1
  %381 = vperm.xlu0 %380, %v80
  %v382 = vpop.permute.xlu0 %381
  %383 = vset.pattern.permute.xlu0 1
  %384 = vperm.xlu0 %383, %v81
  %v385 = vpop.permute.xlu0 %384
  %386 = vset.pattern.permute.xlu0 1
  %387 = vperm.xlu0 %386, %v82
  %v388 = vpop.permute.xlu0 %387
  %389 = vset.pattern.permute.xlu0 1
  %390 = vperm.xlu0 %389, %v83
  %v391 = vpop.permute.xlu0 %390
  %392 = vset.pattern.permute.xlu0 1
  %393 = vperm.xlu0 %392, %v84
  %v394 = vpop.permute.xlu0 %393
  %395 = vset.pattern.permute.xlu0 1
  %396 = vperm.xlu0 %395, %v85
  %v397 = vpop.permute.xlu0 %396
  %398 = vset.pattern.permute.xlu0 1
  %399 = vperm.xlu0 %398, %v86
  %v400 = vpop.permute.xlu0 %399
  %401 = vset.pattern.permute.xlu0 1
  %402 = vperm.xlu0 %401, %v87
  %v403 = vpop.permute.xlu0 %402
  %404 = vset.pattern.permute.xlu0 1
  %405 = vperm.xlu0 %404, %v88
  %v406 = vpop.permute.xlu0 %405
  %407 = vset.pattern.permute.xlu0 1
  %408 = vperm.xlu0 %407, %v89
  %v409 = vpop.permute.xlu0 %408
  %vm410 = vcmp.eq.s32.totalorder %v316, %v50
  %vm411 = vcmp.eq.s32.totalorder %v319, %v50
  %vm412 = vcmp.eq.s32.totalorder %v322, %v50
  %vm413 = vcmp.eq.s32.totalorder %v325, %v50
  %vm414 = vcmp.eq.s32.totalorder %v328, %v50
  %vm415 = vcmp.eq.s32.totalorder %v331, %v50
  %vm416 = vcmp.eq.s32.totalorder %v334, %v50
  %vm417 = vcmp.eq.s32.totalorder %v337, %v50
  %vm418 = vcmp.eq.s32.totalorder %v340, %v50
  %vm419 = vcmp.eq.s32.totalorder %v343, %v50
  %vm420 = vcmp.eq.s32.totalorder %v346, %v50
  %vm421 = vcmp.eq.s32.totalorder %v349, %v50
  %vm422 = vcmp.eq.s32.totalorder %v352, %v50
  %vm423 = vcmp.eq.s32.totalorder %v355, %v50
  %vm424 = vcmp.eq.s32.totalorder %v358, %v50
  %vm425 = vcmp.eq.s32.totalorder %v361, %v50
  %vm426 = vcmp.eq.s32.totalorder %v364, %v50
  %vm427 = vcmp.eq.s32.totalorder %v367, %v50
  %vm428 = vcmp.eq.s32.totalorder %v370, %v50
  %vm429 = vcmp.eq.s32.totalorder %v373, %v50
  %vm430 = vcmp.eq.s32.totalorder %v376, %v50
  %vm431 = vcmp.eq.s32.totalorder %v379, %v50
  %vm432 = vcmp.eq.s32.totalorder %v382, %v50
  %vm433 = vcmp.eq.s32.totalorder %v385, %v50
  %vm434 = vcmp.eq.s32.totalorder %v388, %v50
  %vm435 = vcmp.eq.s32.totalorder %v391, %v50
  %vm436 = vcmp.eq.s32.totalorder %v394, %v50
  %vm437 = vcmp.eq.s32.totalorder %v397, %v50
  %vm438 = vcmp.eq.s32.totalorder %v400, %v50
  %vm439 = vcmp.eq.s32.totalorder %v403, %v50
  %vm440 = vcmp.eq.s32.totalorder %v406, %v50
  %vm441 = vcmp.eq.s32.totalorder %v409, %v50
  %v442 = vsel %vm410, 1, 0
  %v443 = vsel %vm411, 1, 0
  %v444 = vsel %vm412, 1, 0
  %v445 = vsel %vm413, 1, 0
  %v446 = vsel %vm414, 1, 0
  %v447 = vsel %vm415, 1, 0
  %v448 = vsel %vm416, 1, 0
  %v449 = vsel %vm417, 1, 0
  %v450 = vsel %vm418, 1, 0
  %v451 = vsel %vm419, 1, 0
  %v452 = vsel %vm420, 1, 0
  %v453 = vsel %vm421, 1, 0
  %v454 = vsel %vm422, 1, 0
  %v455 = vsel %vm423, 1, 0
  %v456 = vsel %vm424, 1, 0
  %v457 = vsel %vm425, 1, 0
  %v458 = vsel %vm426, 1, 0
  %v459 = vsel %vm427, 1, 0
  %v460 = vsel %vm428, 1, 0
  %v461 = vsel %vm429, 1, 0
  %v462 = vsel %vm430, 1, 0
  %v463 = vsel %vm431, 1, 0
  %v464 = vsel %vm432, 1, 0
  %v465 = vsel %vm433, 1, 0
  %v466 = vsel %vm434, 1, 0
  %v467 = vsel %vm435, 1, 0
  %v468 = vsel %vm436, 1, 0
  %v469 = vsel %vm437, 1, 0
  %v470 = vsel %vm438, 1, 0
  %v471 = vsel %vm439, 1, 0
  %v472 = vsel %vm440, 1, 0
  %v473 = vsel %vm441, 1, 0
  %v474 = vcvt.s32.f32 %v442
  %v475 = vcvt.s32.f32 %v443
  %v476 = vcvt.s32.f32 %v444
  %v477 = vcvt.s32.f32 %v445
  %v478 = vcvt.s32.f32 %v446
  %v479 = vcvt.s32.f32 %v447
  %v480 = vcvt.s32.f32 %v448
  %v481 = vcvt.s32.f32 %v449
  %v482 = vcvt.s32.f32 %v450
  %v483 = vcvt.s32.f32 %v451
  %v484 = vcvt.s32.f32 %v452
  %v485 = vcvt.s32.f32 %v453
  %v486 = vcvt.s32.f32 %v454
  %v487 = vcvt.s32.f32 %v455
  %v488 = vcvt.s32.f32 %v456
  %v489 = vcvt.s32.f32 %v457
  %v490 = vcvt.s32.f32 %v458
  %v491 = vcvt.s32.f32 %v459
  %v492 = vcvt.s32.f32 %v460
  %v493 = vcvt.s32.f32 %v461
  %v494 = vcvt.s32.f32 %v462
  %v495 = vcvt.s32.f32 %v463
  %v496 = vcvt.s32.f32 %v464
  %v497 = vcvt.s32.f32 %v465
  %v498 = vcvt.s32.f32 %v466
  %v499 = vcvt.s32.f32 %v467
  %v500 = vcvt.s32.f32 %v468
  %v501 = vcvt.s32.f32 %v469
  %v502 = vcvt.s32.f32 %v470
  %v503 = vcvt.s32.f32 %v471
  %v504 = vcvt.s32.f32 %v472
  %v505 = vcvt.s32.f32 %v473
  %v506 = vadd.f32 %v282, %v474
  %v507 = vadd.f32 %v283, %v475
  %v508 = vadd.f32 %v284, %v476
  %v509 = vadd.f32 %v285, %v477
  %v510 = vadd.f32 %v286, %v478
  %v511 = vadd.f32 %v287, %v479
  %v512 = vadd.f32 %v288, %v480
  %v513 = vadd.f32 %v289, %v481
  %v514 = vadd.f32 %v290, %v482
  %v515 = vadd.f32 %v291, %v483
  %v516 = vadd.f32 %v292, %v484
  %v517 = vadd.f32 %v293, %v485
  %v518 = vadd.f32 %v294, %v486
  %v519 = vadd.f32 %v295, %v487
  %v520 = vadd.f32 %v296, %v488
  %v521 = vadd.f32 %v297, %v489
  %v522 = vadd.f32 %v298, %v490
  %v523 = vadd.f32 %v299, %v491
  %v524 = vadd.f32 %v300, %v492
  %v525 = vadd.f32 %v301, %v493
  %v526 = vadd.f32 %v302, %v494
  %v527 = vadd.f32 %v303, %v495
  %v528 = vadd.f32 %v304, %v496
  %v529 = vadd.f32 %v305, %v497
  %v530 = vadd.f32 %v306, %v498
  %v531 = vadd.f32 %v307, %v499
  %v532 = vadd.f32 %v308, %v500
  %v533 = vadd.f32 %v309, %v501
  %v534 = vadd.f32 %v310, %v502
  %v535 = vadd.f32 %v311, %v503
  %v536 = vadd.f32 %v312, %v504
  %v537 = vadd.f32 %v313, %v505
  %v538 = vpack.c.bf16 %v507, %v506
  %v539 = vpack.c.bf16 %v509, %v508
  %v540 = vpack.c.bf16 %v511, %v510
  %v541 = vpack.c.bf16 %v513, %v512
  %v542 = vpack.c.bf16 %v515, %v514
  %v543 = vpack.c.bf16 %v517, %v516
  %v544 = vpack.c.bf16 %v519, %v518
  %v545 = vpack.c.bf16 %v521, %v520
  %v546 = vpack.c.bf16 %v523, %v522
  %v547 = vpack.c.bf16 %v525, %v524
  %v548 = vpack.c.bf16 %v527, %v526
  %v549 = vpack.c.bf16 %v529, %v528
  %v550 = vpack.c.bf16 %v531, %v530
  %v551 = vpack.c.bf16 %v533, %v532
  %v552 = vpack.c.bf16 %v535, %v534
  %v553 = vpack.c.bf16 %v537, %v536
  %v554 = vld [vmem:[%s8] sm:$0x1]
  %556 = vset.pattern.permute.xlu0 0
  %557 = vperm.xlu0 %556, %v90
  %v558 = vpop.permute.xlu0 %557
  %561 = vset.pattern.permute.xlu0 0
  %562 = vperm.xlu0 %561, %v91
  %v563 = vpop.permute.xlu0 %562
  %566 = vset.pattern.permute.xlu0 0
  %567 = vperm.xlu0 %566, %v92
  %v568 = vpop.permute.xlu0 %567
  %571 = vset.pattern.permute.xlu0 0
  %572 = vperm.xlu0 %571, %v93
  %v573 = vpop.permute.xlu0 %572
  %576 = vset.pattern.permute.xlu0 0
  %577 = vperm.xlu0 %576, %v94
  %v578 = vpop.permute.xlu0 %577
  %581 = vset.pattern.permute.xlu0 0
  %582 = vperm.xlu0 %581, %v95
  %v583 = vpop.permute.xlu0 %582
  %586 = vset.pattern.permute.xlu0 0
  %587 = vperm.xlu0 %586, %v96
  %v588 = vpop.permute.xlu0 %587
  %591 = vset.pattern.permute.xlu0 0
  %592 = vperm.xlu0 %591, %v97
  %v593 = vpop.permute.xlu0 %592
  %596 = vset.pattern.permute.xlu0 0
  %597 = vperm.xlu0 %596, %v98
  %v598 = vpop.permute.xlu0 %597
  %601 = vset.pattern.permute.xlu0 0
  %602 = vperm.xlu0 %601, %v99
  %v603 = vpop.permute.xlu0 %602
  %606 = vset.pattern.permute.xlu0 0
  %607 = vperm.xlu0 %606, %v100
  %v608 = vpop.permute.xlu0 %607
  %611 = vset.pattern.permute.xlu0 0
  %612 = vperm.xlu0 %611, %v101
  %v613 = vpop.permute.xlu0 %612
  %616 = vset.pattern.permute.xlu0 0
  %617 = vperm.xlu0 %616, %v102
  %v618 = vpop.permute.xlu0 %617
  %621 = vset.pattern.permute.xlu0 0
  %622 = vperm.xlu0 %621, %v103
  %v623 = vpop.permute.xlu0 %622
  %626 = vset.pattern.permute.xlu0 0
  %627 = vperm.xlu0 %626, %v104
  %v628 = vpop.permute.xlu0 %627
  %631 = vset.pattern.permute.xlu0 0
  %632 = vperm.xlu0 %631, %v105
  %v633 = vpop.permute.xlu0 %632
  %636 = vset.pattern.permute.xlu0 0
  %637 = vperm.xlu0 %636, %v106
  %v638 = vpop.permute.xlu0 %637
  %641 = vset.pattern.permute.xlu0 0
  %642 = vperm.xlu0 %641, %v107
  %v643 = vpop.permute.xlu0 %642
  %646 = vset.pattern.permute.xlu0 0
  %647 = vperm.xlu0 %646, %v108
  %v648 = vpop.permute.xlu0 %647
  %651 = vset.pattern.permute.xlu0 0
  %652 = vperm.xlu0 %651, %v109
  %v653 = vpop.permute.xlu0 %652
  %656 = vset.pattern.permute.xlu0 0
  %657 = vperm.xlu0 %656, %v110
  %v658 = vpop.permute.xlu0 %657
  %661 = vset.pattern.permute.xlu0 0
  %662 = vperm.xlu0 %661, %v111
  %v663 = vpop.permute.xlu0 %662
  %666 = vset.pattern.permute.xlu0 0
  %667 = vperm.xlu0 %666, %v112
  %v668 = vpop.permute.xlu0 %667
  %671 = vset.pattern.permute.xlu0 0
  %672 = vperm.xlu0 %671, %v113
  %v673 = vpop.permute.xlu0 %672
  %676 = vset.pattern.permute.xlu0 0
  %677 = vperm.xlu0 %676, %v114
  %v678 = vpop.permute.xlu0 %677
  %681 = vset.pattern.permute.xlu0 0
  %682 = vperm.xlu0 %681, %v115
  %v683 = vpop.permute.xlu0 %682
  %686 = vset.pattern.permute.xlu0 0
  %687 = vperm.xlu0 %686, %v116
  %v688 = vpop.permute.xlu0 %687
  %691 = vset.pattern.permute.xlu0 0
  %692 = vperm.xlu0 %691, %v117
  %v693 = vpop.permute.xlu0 %692
  %696 = vset.pattern.permute.xlu0 0
  %697 = vperm.xlu0 %696, %v118
  %v698 = vpop.permute.xlu0 %697
  %701 = vset.pattern.permute.xlu0 0
  %702 = vperm.xlu0 %701, %v119
  %v703 = vpop.permute.xlu0 %702
  %706 = vset.pattern.permute.xlu0 0
  %707 = vperm.xlu0 %706, %v120
  %v708 = vpop.permute.xlu0 %707
  %711 = vset.pattern.permute.xlu0 0
  %712 = vperm.xlu0 %711, %v121
  %v713 = vpop.permute.xlu0 %712
  %v716 = vperm.slane %v554, 0
  %vm718 = vcmp.ge.f32.partialorder %v558, %v716
  %vm719 = vcmp.ge.f32.partialorder %v563, %v716
  %vm720 = vcmp.ge.f32.partialorder %v568, %v716
  %vm721 = vcmp.ge.f32.partialorder %v573, %v716
  %vm722 = vcmp.ge.f32.partialorder %v578, %v716
  %vm723 = vcmp.ge.f32.partialorder %v583, %v716
  %vm724 = vcmp.ge.f32.partialorder %v588, %v716
  %vm725 = vcmp.ge.f32.partialorder %v593, %v716
  %vm726 = vcmp.ge.f32.partialorder %v598, %v716
  %vm727 = vcmp.ge.f32.partialorder %v603, %v716
  %vm728 = vcmp.ge.f32.partialorder %v608, %v716
  %vm729 = vcmp.ge.f32.partialorder %v613, %v716
  %vm730 = vcmp.ge.f32.partialorder %v618, %v716
  %vm731 = vcmp.ge.f32.partialorder %v623, %v716
  %vm732 = vcmp.ge.f32.partialorder %v628, %v716
  %vm733 = vcmp.ge.f32.partialorder %v633, %v716
  %vm734 = vcmp.ge.f32.partialorder %v638, %v716
  %vm735 = vcmp.ge.f32.partialorder %v643, %v716
  %vm736 = vcmp.ge.f32.partialorder %v648, %v716
  %vm737 = vcmp.ge.f32.partialorder %v653, %v716
  %vm738 = vcmp.ge.f32.partialorder %v658, %v716
  %vm739 = vcmp.ge.f32.partialorder %v663, %v716
  %vm740 = vcmp.ge.f32.partialorder %v668, %v716
  %vm741 = vcmp.ge.f32.partialorder %v673, %v716
  %vm742 = vcmp.ge.f32.partialorder %v678, %v716
  %vm743 = vcmp.ge.f32.partialorder %v683, %v716
  %vm744 = vcmp.ge.f32.partialorder %v688, %v716
  %vm745 = vcmp.ge.f32.partialorder %v693, %v716
  %vm746 = vcmp.ge.f32.partialorder %v698, %v716
  %vm747 = vcmp.ge.f32.partialorder %v703, %v716
  %vm748 = vcmp.ge.f32.partialorder %v708, %v716
  %vm749 = vcmp.ge.f32.partialorder %v713, %v716
  %v750 = vsel %vm718, 1, 0
  %v751 = vsel %vm719, 1, 0
  %v752 = vsel %vm720, 1, 0
  %v753 = vsel %vm721, 1, 0
  %v754 = vsel %vm722, 1, 0
  %v755 = vsel %vm723, 1, 0
  %v756 = vsel %vm724, 1, 0
  %v757 = vsel %vm725, 1, 0
  %v758 = vsel %vm726, 1, 0
  %v759 = vsel %vm727, 1, 0
  %v760 = vsel %vm728, 1, 0
  %v761 = vsel %vm729, 1, 0
  %v762 = vsel %vm730, 1, 0
  %v763 = vsel %vm731, 1, 0
  %v764 = vsel %vm732, 1, 0
  %v765 = vsel %vm733, 1, 0
  %v766 = vsel %vm734, 1, 0
  %v767 = vsel %vm735, 1, 0
  %v768 = vsel %vm736, 1, 0
  %v769 = vsel %vm737, 1, 0
  %v770 = vsel %vm738, 1, 0
  %v771 = vsel %vm739, 1, 0
  %v772 = vsel %vm740, 1, 0
  %v773 = vsel %vm741, 1, 0
  %v774 = vsel %vm742, 1, 0
  %v775 = vsel %vm743, 1, 0
  %v776 = vsel %vm744, 1, 0
  %v777 = vsel %vm745, 1, 0
  %v778 = vsel %vm746, 1, 0
  %v779 = vsel %vm747, 1, 0
  %v780 = vsel %vm748, 1, 0
  %v781 = vsel %vm749, 1, 0
  %vm782 = vcmask 31744
  %v783 = vsel %vm782, %v750, 0
  %v784 = vand.u32 %v783, 65535
  %v785 = vshrl.u32 %v783, 16
  %v786 = vcvt.s32.f32 %v784
  %v787 = vcvt.s32.f32 %v785
  %788 = vadd.xlane.f32.xlu0 %v786
  %v789 = vpop.xlane.xlu0 %788
  %790 = vadd.xlane.f32.xlu0 %v787
  %v791 = vpop.xlane.xlu0 %790
  %v792 = vcvt.f32.s32 %v789
  %v793 = vcvt.f32.s32 %v791
  %v794 = vshll.u32 %v793, 16
  %v795 = vadd.s32 %v794, %v792
  %v796 = vsel %vm782, %v751, 0
  %v797 = vand.u32 %v796, 65535
  %v798 = vshrl.u32 %v796, 16
  %v799 = vcvt.s32.f32 %v797
  %v800 = vcvt.s32.f32 %v798
  %801 = vadd.xlane.f32.xlu0 %v799
  %v802 = vpop.xlane.xlu0 %801
  %803 = vadd.xlane.f32.xlu0 %v800
  %v804 = vpop.xlane.xlu0 %803
  %v805 = vcvt.f32.s32 %v802
  %v806 = vcvt.f32.s32 %v804
  %v807 = vshll.u32 %v806, 16
  %v808 = vadd.s32 %v807, %v805
  %v809 = vsel %vm782, %v752, 0
  %v810 = vand.u32 %v809, 65535
  %v811 = vshrl.u32 %v809, 16
  %v812 = vcvt.s32.f32 %v810
  %v813 = vcvt.s32.f32 %v811
  %814 = vadd.xlane.f32.xlu0 %v812
  %v815 = vpop.xlane.xlu0 %814
  %816 = vadd.xlane.f32.xlu0 %v813
  %v817 = vpop.xlane.xlu0 %816
  %v818 = vcvt.f32.s32 %v815
  %v819 = vcvt.f32.s32 %v817
  %v820 = vshll.u32 %v819, 16
  %v821 = vadd.s32 %v820, %v818
  %v822 = vsel %vm782, %v753, 0
  %v823 = vand.u32 %v822, 65535
  %v824 = vshrl.u32 %v822, 16
  %v825 = vcvt.s32.f32 %v823
  %v826 = vcvt.s32.f32 %v824
  %827 = vadd.xlane.f32.xlu0 %v825
  %v828 = vpop.xlane.xlu0 %827
  %829 = vadd.xlane.f32.xlu0 %v826
  %v830 = vpop.xlane.xlu0 %829
  %v831 = vcvt.f32.s32 %v828
  %v832 = vcvt.f32.s32 %v830
  %v833 = vshll.u32 %v832, 16
  %v834 = vadd.s32 %v833, %v831
  %v835 = vsel %vm782, %v754, 0
  %v836 = vand.u32 %v835, 65535
  %v837 = vshrl.u32 %v835, 16
  %v838 = vcvt.s32.f32 %v836
  %v839 = vcvt.s32.f32 %v837
  %840 = vadd.xlane.f32.xlu0 %v838
  %v841 = vpop.xlane.xlu0 %840
  %842 = vadd.xlane.f32.xlu0 %v839
  %v843 = vpop.xlane.xlu0 %842
  %v844 = vcvt.f32.s32 %v841
  %v845 = vcvt.f32.s32 %v843
  %v846 = vshll.u32 %v845, 16
  %v847 = vadd.s32 %v846, %v844
  %v848 = vsel %vm782, %v755, 0
  %v849 = vand.u32 %v848, 65535
  %v850 = vshrl.u32 %v848, 16
  %v851 = vcvt.s32.f32 %v849
  %v852 = vcvt.s32.f32 %v850
  %853 = vadd.xlane.f32.xlu0 %v851
  %v854 = vpop.xlane.xlu0 %853
  %855 = vadd.xlane.f32.xlu0 %v852
  %v856 = vpop.xlane.xlu0 %855
  %v857 = vcvt.f32.s32 %v854
  %v858 = vcvt.f32.s32 %v856
  %v859 = vshll.u32 %v858, 16
  %v860 = vadd.s32 %v859, %v857
  %v861 = vsel %vm782, %v756, 0
  %v862 = vand.u32 %v861, 65535
  %v863 = vshrl.u32 %v861, 16
  %v864 = vcvt.s32.f32 %v862
  %v865 = vcvt.s32.f32 %v863
  %866 = vadd.xlane.f32.xlu0 %v864
  %v867 = vpop.xlane.xlu0 %866
  %868 = vadd.xlane.f32.xlu0 %v865
  %v869 = vpop.xlane.xlu0 %868
  %v870 = vcvt.f32.s32 %v867
  %v871 = vcvt.f32.s32 %v869
  %v872 = vshll.u32 %v871, 16
  %v873 = vadd.s32 %v872, %v870
  %v874 = vsel %vm782, %v757, 0
  %v875 = vand.u32 %v874, 65535
  %v876 = vshrl.u32 %v874, 16
  %v877 = vcvt.s32.f32 %v875
  %v878 = vcvt.s32.f32 %v876
  %879 = vadd.xlane.f32.xlu0 %v877
  %v880 = vpop.xlane.xlu0 %879
  %881 = vadd.xlane.f32.xlu0 %v878
  %v882 = vpop.xlane.xlu0 %881
  %v883 = vcvt.f32.s32 %v880
  %v884 = vcvt.f32.s32 %v882
  %v885 = vshll.u32 %v884, 16
  %v886 = vadd.s32 %v885, %v883
  %v887 = vsel %vm782, %v758, 0
  %v888 = vand.u32 %v887, 65535
  %v889 = vshrl.u32 %v887, 16
  %v890 = vcvt.s32.f32 %v888
  %v891 = vcvt.s32.f32 %v889
  %892 = vadd.xlane.f32.xlu0 %v890
  %v893 = vpop.xlane.xlu0 %892
  %894 = vadd.xlane.f32.xlu0 %v891
  %v895 = vpop.xlane.xlu0 %894
  %v896 = vcvt.f32.s32 %v893
  %v897 = vcvt.f32.s32 %v895
  %v898 = vshll.u32 %v897, 16
  %v899 = vadd.s32 %v898, %v896
  %v900 = vsel %vm782, %v759, 0
  %v901 = vand.u32 %v900, 65535
  %v902 = vshrl.u32 %v900, 16
  %v903 = vcvt.s32.f32 %v901
  %v904 = vcvt.s32.f32 %v902
  %905 = vadd.xlane.f32.xlu0 %v903
  %v906 = vpop.xlane.xlu0 %905
  %907 = vadd.xlane.f32.xlu0 %v904
  %v908 = vpop.xlane.xlu0 %907
  %v909 = vcvt.f32.s32 %v906
  %v910 = vcvt.f32.s32 %v908
  %v911 = vshll.u32 %v910, 16
  %v912 = vadd.s32 %v911, %v909
  %v913 = vsel %vm782, %v760, 0
  %v914 = vand.u32 %v913, 65535
  %v915 = vshrl.u32 %v913, 16
  %v916 = vcvt.s32.f32 %v914
  %v917 = vcvt.s32.f32 %v915
  %918 = vadd.xlane.f32.xlu0 %v916
  %v919 = vpop.xlane.xlu0 %918
  %920 = vadd.xlane.f32.xlu0 %v917
  %v921 = vpop.xlane.xlu0 %920
  %v922 = vcvt.f32.s32 %v919
  %v923 = vcvt.f32.s32 %v921
  %v924 = vshll.u32 %v923, 16
  %v925 = vadd.s32 %v924, %v922
  %v926 = vsel %vm782, %v761, 0
  %v927 = vand.u32 %v926, 65535
  %v928 = vshrl.u32 %v926, 16
  %v929 = vcvt.s32.f32 %v927
  %v930 = vcvt.s32.f32 %v928
  %931 = vadd.xlane.f32.xlu0 %v929
  %v932 = vpop.xlane.xlu0 %931
  %933 = vadd.xlane.f32.xlu0 %v930
  %v934 = vpop.xlane.xlu0 %933
  %v935 = vcvt.f32.s32 %v932
  %v936 = vcvt.f32.s32 %v934
  %v937 = vshll.u32 %v936, 16
  %v938 = vadd.s32 %v937, %v935
  %v939 = vsel %vm782, %v762, 0
  %v940 = vand.u32 %v939, 65535
  %v941 = vshrl.u32 %v939, 16
  %v942 = vcvt.s32.f32 %v940
  %v943 = vcvt.s32.f32 %v941
  %944 = vadd.xlane.f32.xlu0 %v942
  %v945 = vpop.xlane.xlu0 %944
  %946 = vadd.xlane.f32.xlu0 %v943
  %v947 = vpop.xlane.xlu0 %946
  %v948 = vcvt.f32.s32 %v945
  %v949 = vcvt.f32.s32 %v947
  %v950 = vshll.u32 %v949, 16
  %v951 = vadd.s32 %v950, %v948
  %v952 = vsel %vm782, %v763, 0
  %v953 = vand.u32 %v952, 65535
  %v954 = vshrl.u32 %v952, 16
  %v955 = vcvt.s32.f32 %v953
  %v956 = vcvt.s32.f32 %v954
  %957 = vadd.xlane.f32.xlu0 %v955
  %v958 = vpop.xlane.xlu0 %957
  %959 = vadd.xlane.f32.xlu0 %v956
  %v960 = vpop.xlane.xlu0 %959
  %v961 = vcvt.f32.s32 %v958
  %v962 = vcvt.f32.s32 %v960
  %v963 = vshll.u32 %v962, 16
  %v964 = vadd.s32 %v963, %v961
  %v965 = vsel %vm782, %v764, 0
  %v966 = vand.u32 %v965, 65535
  %v967 = vshrl.u32 %v965, 16
  %v968 = vcvt.s32.f32 %v966
  %v969 = vcvt.s32.f32 %v967
  %970 = vadd.xlane.f32.xlu0 %v968
  %v971 = vpop.xlane.xlu0 %970
  %972 = vadd.xlane.f32.xlu0 %v969
  %v973 = vpop.xlane.xlu0 %972
  %v974 = vcvt.f32.s32 %v971
  %v975 = vcvt.f32.s32 %v973
  %v976 = vshll.u32 %v975, 16
  %v977 = vadd.s32 %v976, %v974
  %v978 = vsel %vm782, %v765, 0
  %v979 = vand.u32 %v978, 65535
  %v980 = vshrl.u32 %v978, 16
  %v981 = vcvt.s32.f32 %v979
  %v982 = vcvt.s32.f32 %v980
  %983 = vadd.xlane.f32.xlu0 %v981
  %v984 = vpop.xlane.xlu0 %983
  %985 = vadd.xlane.f32.xlu0 %v982
  %v986 = vpop.xlane.xlu0 %985
  %v987 = vcvt.f32.s32 %v984
  %v988 = vcvt.f32.s32 %v986
  %v989 = vshll.u32 %v988, 16
  %v990 = vadd.s32 %v989, %v987
  %v991 = vsel %vm782, %v766, 0
  %v992 = vand.u32 %v991, 65535
  %v993 = vshrl.u32 %v991, 16
  %v994 = vcvt.s32.f32 %v992
  %v995 = vcvt.s32.f32 %v993
  %996 = vadd.xlane.f32.xlu0 %v994
  %v997 = vpop.xlane.xlu0 %996
  %998 = vadd.xlane.f32.xlu0 %v995
  %v999 = vpop.xlane.xlu0 %998
  %v1000 = vcvt.f32.s32 %v997
  %v1001 = vcvt.f32.s32 %v999
  %v1002 = vshll.u32 %v1001, 16
  %v1003 = vadd.s32 %v1002, %v1000
  %v1004 = vsel %vm782, %v767, 0
  %v1005 = vand.u32 %v1004, 65535
  %v1006 = vshrl.u32 %v1004, 16
  %v1007 = vcvt.s32.f32 %v1005
  %v1008 = vcvt.s32.f32 %v1006
  %1009 = vadd.xlane.f32.xlu0 %v1007
  %v1010 = vpop.xlane.xlu0 %1009
  %1011 = vadd.xlane.f32.xlu0 %v1008
  %v1012 = vpop.xlane.xlu0 %1011
  %v1013 = vcvt.f32.s32 %v1010
  %v1014 = vcvt.f32.s32 %v1012
  %v1015 = vshll.u32 %v1014, 16
  %v1016 = vadd.s32 %v1015, %v1013
  %v1017 = vsel %vm782, %v768, 0
  %v1018 = vand.u32 %v1017, 65535
  %v1019 = vshrl.u32 %v1017, 16
  %v1020 = vcvt.s32.f32 %v1018
  %v1021 = vcvt.s32.f32 %v1019
  %1022 = vadd.xlane.f32.xlu0 %v1020
  %v1023 = vpop.xlane.xlu0 %1022
  %1024 = vadd.xlane.f32.xlu0 %v1021
  %v1025 = vpop.xlane.xlu0 %1024
  %v1026 = vcvt.f32.s32 %v1023
  %v1027 = vcvt.f32.s32 %v1025
  %v1028 = vshll.u32 %v1027, 16
  %v1029 = vadd.s32 %v1028, %v1026
  %v1030 = vsel %vm782, %v769, 0
  %v1031 = vand.u32 %v1030, 65535
  %v1032 = vshrl.u32 %v1030, 16
  %v1033 = vcvt.s32.f32 %v1031
  %v1034 = vcvt.s32.f32 %v1032
  %1035 = vadd.xlane.f32.xlu0 %v1033
  %v1036 = vpop.xlane.xlu0 %1035
  %1037 = vadd.xlane.f32.xlu0 %v1034
  %v1038 = vpop.xlane.xlu0 %1037
  %v1039 = vcvt.f32.s32 %v1036
  %v1040 = vcvt.f32.s32 %v1038
  %v1041 = vshll.u32 %v1040, 16
  %v1042 = vadd.s32 %v1041, %v1039
  %v1043 = vsel %vm782, %v770, 0
  %v1044 = vand.u32 %v1043, 65535
  %v1045 = vshrl.u32 %v1043, 16
  %v1046 = vcvt.s32.f32 %v1044
  %v1047 = vcvt.s32.f32 %v1045
  %1048 = vadd.xlane.f32.xlu0 %v1046
  %v1049 = vpop.xlane.xlu0 %1048
  %1050 = vadd.xlane.f32.xlu0 %v1047
  %v1051 = vpop.xlane.xlu0 %1050
  %v1052 = vcvt.f32.s32 %v1049
  %v1053 = vcvt.f32.s32 %v1051
  %v1054 = vshll.u32 %v1053, 16
  %v1055 = vadd.s32 %v1054, %v1052
  %v1056 = vsel %vm782, %v771, 0
  %v1057 = vand.u32 %v1056, 65535
  %v1058 = vshrl.u32 %v1056, 16
  %v1059 = vcvt.s32.f32 %v1057
  %v1060 = vcvt.s32.f32 %v1058
  %1061 = vadd.xlane.f32.xlu0 %v1059
  %v1062 = vpop.xlane.xlu0 %1061
  %1063 = vadd.xlane.f32.xlu0 %v1060
  %v1064 = vpop.xlane.xlu0 %1063
  %v1065 = vcvt.f32.s32 %v1062
  %v1066 = vcvt.f32.s32 %v1064
  %v1067 = vshll.u32 %v1066, 16
  %v1068 = vadd.s32 %v1067, %v1065
  %v1069 = vsel %vm782, %v772, 0
  %v1070 = vand.u32 %v1069, 65535
  %v1071 = vshrl.u32 %v1069, 16
  %v1072 = vcvt.s32.f32 %v1070
  %v1073 = vcvt.s32.f32 %v1071
  %1074 = vadd.xlane.f32.xlu0 %v1072
  %v1075 = vpop.xlane.xlu0 %1074
  %1076 = vadd.xlane.f32.xlu0 %v1073
  %v1077 = vpop.xlane.xlu0 %1076
  %v1078 = vcvt.f32.s32 %v1075
  %v1079 = vcvt.f32.s32 %v1077
  %v1080 = vshll.u32 %v1079, 16
  %v1081 = vadd.s32 %v1080, %v1078
  %v1082 = vsel %vm782, %v773, 0
  %v1083 = vand.u32 %v1082, 65535
  %v1084 = vshrl.u32 %v1082, 16
  %v1085 = vcvt.s32.f32 %v1083
  %v1086 = vcvt.s32.f32 %v1084
  %1087 = vadd.xlane.f32.xlu0 %v1085
  %v1088 = vpop.xlane.xlu0 %1087
  %1089 = vadd.xlane.f32.xlu0 %v1086
  %v1090 = vpop.xlane.xlu0 %1089
  %v1091 = vcvt.f32.s32 %v1088
  %v1092 = vcvt.f32.s32 %v1090
  %v1093 = vshll.u32 %v1092, 16
  %v1094 = vadd.s32 %v1093, %v1091
  %v1095 = vsel %vm782, %v774, 0
  %v1096 = vand.u32 %v1095, 65535
  %v1097 = vshrl.u32 %v1095, 16
  %v1098 = vcvt.s32.f32 %v1096
  %v1099 = vcvt.s32.f32 %v1097
  %1100 = vadd.xlane.f32.xlu0 %v1098
  %v1101 = vpop.xlane.xlu0 %1100
  %1102 = vadd.xlane.f32.xlu0 %v1099
  %v1103 = vpop.xlane.xlu0 %1102
  %v1104 = vcvt.f32.s32 %v1101
  %v1105 = vcvt.f32.s32 %v1103
  %v1106 = vshll.u32 %v1105, 16
  %v1107 = vadd.s32 %v1106, %v1104
  %v1108 = vsel %vm782, %v775, 0
  %v1109 = vand.u32 %v1108, 65535
  %v1110 = vshrl.u32 %v1108, 16
  %v1111 = vcvt.s32.f32 %v1109
  %v1112 = vcvt.s32.f32 %v1110
  %1113 = vadd.xlane.f32.xlu0 %v1111
  %v1114 = vpop.xlane.xlu0 %1113
  %1115 = vadd.xlane.f32.xlu0 %v1112
  %v1116 = vpop.xlane.xlu0 %1115
  %v1117 = vcvt.f32.s32 %v1114
  %v1118 = vcvt.f32.s32 %v1116
  %v1119 = vshll.u32 %v1118, 16
  %v1120 = vadd.s32 %v1119, %v1117
  %v1121 = vsel %vm782, %v776, 0
  %v1122 = vand.u32 %v1121, 65535
  %v1123 = vshrl.u32 %v1121, 16
  %v1124 = vcvt.s32.f32 %v1122
  %v1125 = vcvt.s32.f32 %v1123
  %1126 = vadd.xlane.f32.xlu0 %v1124
  %v1127 = vpop.xlane.xlu0 %1126
  %1128 = vadd.xlane.f32.xlu0 %v1125
  %v1129 = vpop.xlane.xlu0 %1128
  %v1130 = vcvt.f32.s32 %v1127
  %v1131 = vcvt.f32.s32 %v1129
  %v1132 = vshll.u32 %v1131, 16
  %v1133 = vadd.s32 %v1132, %v1130
  %v1134 = vsel %vm782, %v777, 0
  %v1135 = vand.u32 %v1134, 65535
  %v1136 = vshrl.u32 %v1134, 16
  %v1137 = vcvt.s32.f32 %v1135
  %v1138 = vcvt.s32.f32 %v1136
  %1139 = vadd.xlane.f32.xlu0 %v1137
  %v1140 = vpop.xlane.xlu0 %1139
  %1141 = vadd.xlane.f32.xlu0 %v1138
  %v1142 = vpop.xlane.xlu0 %1141
  %v1143 = vcvt.f32.s32 %v1140
  %v1144 = vcvt.f32.s32 %v1142
  %v1145 = vshll.u32 %v1144, 16
  %v1146 = vadd.s32 %v1145, %v1143
  %v1147 = vsel %vm782, %v778, 0
  %v1148 = vand.u32 %v1147, 65535
  %v1149 = vshrl.u32 %v1147, 16
  %v1150 = vcvt.s32.f32 %v1148
  %v1151 = vcvt.s32.f32 %v1149
  %1152 = vadd.xlane.f32.xlu0 %v1150
  %v1153 = vpop.xlane.xlu0 %1152
  %1154 = vadd.xlane.f32.xlu0 %v1151
  %v1155 = vpop.xlane.xlu0 %1154
  %v1156 = vcvt.f32.s32 %v1153
  %v1157 = vcvt.f32.s32 %v1155
  %v1158 = vshll.u32 %v1157, 16
  %v1159 = vadd.s32 %v1158, %v1156
  %v1160 = vsel %vm782, %v779, 0
  %v1161 = vand.u32 %v1160, 65535
  %v1162 = vshrl.u32 %v1160, 16
  %v1163 = vcvt.s32.f32 %v1161
  %v1164 = vcvt.s32.f32 %v1162
  %1165 = vadd.xlane.f32.xlu0 %v1163
  %v1166 = vpop.xlane.xlu0 %1165
  %1167 = vadd.xlane.f32.xlu0 %v1164
  %v1168 = vpop.xlane.xlu0 %1167
  %v1169 = vcvt.f32.s32 %v1166
  %v1170 = vcvt.f32.s32 %v1168
  %v1171 = vshll.u32 %v1170, 16
  %v1172 = vadd.s32 %v1171, %v1169
  %v1173 = vsel %vm782, %v780, 0
  %v1174 = vand.u32 %v1173, 65535
  %v1175 = vshrl.u32 %v1173, 16
  %v1176 = vcvt.s32.f32 %v1174
  %v1177 = vcvt.s32.f32 %v1175
  %1178 = vadd.xlane.f32.xlu0 %v1176
  %v1179 = vpop.xlane.xlu0 %1178
  %1180 = vadd.xlane.f32.xlu0 %v1177
  %v1181 = vpop.xlane.xlu0 %1180
  %v1182 = vcvt.f32.s32 %v1179
  %v1183 = vcvt.f32.s32 %v1181
  %v1184 = vshll.u32 %v1183, 16
  %v1185 = vadd.s32 %v1184, %v1182
  %v1186 = vsel %vm782, %v781, 0
  %v1187 = vand.u32 %v1186, 65535
  %v1188 = vshrl.u32 %v1186, 16
  %v1189 = vcvt.s32.f32 %v1187
  %v1190 = vcvt.s32.f32 %v1188
  %1191 = vadd.xlane.f32.xlu0 %v1189
  %v1192 = vpop.xlane.xlu0 %1191
  %1193 = vadd.xlane.f32.xlu0 %v1190
  %v1194 = vpop.xlane.xlu0 %1193
  %v1195 = vcvt.f32.s32 %v1192
  %v1196 = vcvt.f32.s32 %v1194
  %v1197 = vshll.u32 %v1196, 16
  %v1198 = vadd.s32 %v1197, %v1195
  %vm1199 = vcmp.lt.s32.totalorder %v795, 3
  %v1200 = vsel %vm1199, %v795, 3
  %vm1201 = vcmp.lt.s32.totalorder %v808, 3
  %v1202 = vsel %vm1201, %v808, 3
  %vm1203 = vcmp.lt.s32.totalorder %v821, 3
  %v1204 = vsel %vm1203, %v821, 3
  %vm1205 = vcmp.lt.s32.totalorder %v834, 3
  %v1206 = vsel %vm1205, %v834, 3
  %vm1207 = vcmp.lt.s32.totalorder %v847, 3
  %v1208 = vsel %vm1207, %v847, 3
  %vm1209 = vcmp.lt.s32.totalorder %v860, 3
  %v1210 = vsel %vm1209, %v860, 3
  %vm1211 = vcmp.lt.s32.totalorder %v873, 3
  %v1212 = vsel %vm1211, %v873, 3
  %vm1213 = vcmp.lt.s32.totalorder %v886, 3
  %v1214 = vsel %vm1213, %v886, 3
  %vm1215 = vcmp.lt.s32.totalorder %v899, 3
  %v1216 = vsel %vm1215, %v899, 3
  %vm1217 = vcmp.lt.s32.totalorder %v912, 3
  %v1218 = vsel %vm1217, %v912, 3
  %vm1219 = vcmp.lt.s32.totalorder %v925, 3
  %v1220 = vsel %vm1219, %v925, 3
  %vm1221 = vcmp.lt.s32.totalorder %v938, 3
  %v1222 = vsel %vm1221, %v938, 3
  %vm1223 = vcmp.lt.s32.totalorder %v951, 3
  %v1224 = vsel %vm1223, %v951, 3
  %vm1225 = vcmp.lt.s32.totalorder %v964, 3
  %v1226 = vsel %vm1225, %v964, 3
  %vm1227 = vcmp.lt.s32.totalorder %v977, 3
  %v1228 = vsel %vm1227, %v977, 3
  %vm1229 = vcmp.lt.s32.totalorder %v990, 3
  %v1230 = vsel %vm1229, %v990, 3
  %vm1231 = vcmp.lt.s32.totalorder %v1003, 3
  %v1232 = vsel %vm1231, %v1003, 3
  %vm1233 = vcmp.lt.s32.totalorder %v1016, 3
  %v1234 = vsel %vm1233, %v1016, 3
  %vm1235 = vcmp.lt.s32.totalorder %v1029, 3
  %v1236 = vsel %vm1235, %v1029, 3
  %vm1237 = vcmp.lt.s32.totalorder %v1042, 3
  %v1238 = vsel %vm1237, %v1042, 3
  %vm1239 = vcmp.lt.s32.totalorder %v1055, 3
  %v1240 = vsel %vm1239, %v1055, 3
  %vm1241 = vcmp.lt.s32.totalorder %v1068, 3
  %v1242 = vsel %vm1241, %v1068, 3
  %vm1243 = vcmp.lt.s32.totalorder %v1081, 3
  %v1244 = vsel %vm1243, %v1081, 3
  %vm1245 = vcmp.lt.s32.totalorder %v1094, 3
  %v1246 = vsel %vm1245, %v1094, 3
  %vm1247 = vcmp.lt.s32.totalorder %v1107, 3
  %v1248 = vsel %vm1247, %v1107, 3
  %vm1249 = vcmp.lt.s32.totalorder %v1120, 3
  %v1250 = vsel %vm1249, %v1120, 3
  %vm1251 = vcmp.lt.s32.totalorder %v1133, 3
  %v1252 = vsel %vm1251, %v1133, 3
  %vm1253 = vcmp.lt.s32.totalorder %v1146, 3
  %v1254 = vsel %vm1253, %v1146, 3
  %vm1255 = vcmp.lt.s32.totalorder %v1159, 3
  %v1256 = vsel %vm1255, %v1159, 3
  %vm1257 = vcmp.lt.s32.totalorder %v1172, 3
  %v1258 = vsel %vm1257, %v1172, 3
  %vm1259 = vcmp.lt.s32.totalorder %v1185, 3
  %v1260 = vsel %vm1259, %v1185, 3
  %vm1261 = vcmp.lt.s32.totalorder %v1198, 3
  %v1262 = vsel %vm1261, %v1198, 3
  %vm1263 = vcmp.eq.s32.totalorder %v1200, 0
  %vm1264 = vcmp.eq.s32.totalorder %v1202, 0
  %vm1265 = vcmp.eq.s32.totalorder %v1204, 0
  %vm1266 = vcmp.eq.s32.totalorder %v1206, 0
  %vm1267 = vcmp.eq.s32.totalorder %v1208, 0
  %vm1268 = vcmp.eq.s32.totalorder %v1210, 0
  %vm1269 = vcmp.eq.s32.totalorder %v1212, 0
  %vm1270 = vcmp.eq.s32.totalorder %v1214, 0
  %vm1271 = vcmp.eq.s32.totalorder %v1216, 0
  %vm1272 = vcmp.eq.s32.totalorder %v1218, 0
  %vm1273 = vcmp.eq.s32.totalorder %v1220, 0
  %vm1274 = vcmp.eq.s32.totalorder %v1222, 0
  %vm1275 = vcmp.eq.s32.totalorder %v1224, 0
  %vm1276 = vcmp.eq.s32.totalorder %v1226, 0
  %vm1277 = vcmp.eq.s32.totalorder %v1228, 0
  %vm1278 = vcmp.eq.s32.totalorder %v1230, 0
  %vm1279 = vcmp.eq.s32.totalorder %v1232, 0
  %vm1280 = vcmp.eq.s32.totalorder %v1234, 0
  %vm1281 = vcmp.eq.s32.totalorder %v1236, 0
  %vm1282 = vcmp.eq.s32.totalorder %v1238, 0
  %vm1283 = vcmp.eq.s32.totalorder %v1240, 0
  %vm1284 = vcmp.eq.s32.totalorder %v1242, 0
  %vm1285 = vcmp.eq.s32.totalorder %v1244, 0
  %vm1286 = vcmp.eq.s32.totalorder %v1246, 0
  %vm1287 = vcmp.eq.s32.totalorder %v1248, 0
  %vm1288 = vcmp.eq.s32.totalorder %v1250, 0
  %vm1289 = vcmp.eq.s32.totalorder %v1252, 0
  %vm1290 = vcmp.eq.s32.totalorder %v1254, 0
  %vm1291 = vcmp.eq.s32.totalorder %v1256, 0
  %vm1292 = vcmp.eq.s32.totalorder %v1258, 0
  %vm1293 = vcmp.eq.s32.totalorder %v1260, 0
  %vm1294 = vcmp.eq.s32.totalorder %v1262, 0
  %v1295 = vsel %vm1263, 1, 0
  %v1296 = vsel %vm1264, 1, 0
  %v1297 = vsel %vm1265, 1, 0
  %v1298 = vsel %vm1266, 1, 0
  %v1299 = vsel %vm1267, 1, 0
  %v1300 = vsel %vm1268, 1, 0
  %v1301 = vsel %vm1269, 1, 0
  %v1302 = vsel %vm1270, 1, 0
  %v1303 = vsel %vm1271, 1, 0
  %v1304 = vsel %vm1272, 1, 0
  %v1305 = vsel %vm1273, 1, 0
  %v1306 = vsel %vm1274, 1, 0
  %v1307 = vsel %vm1275, 1, 0
  %v1308 = vsel %vm1276, 1, 0
  %v1309 = vsel %vm1277, 1, 0
  %v1310 = vsel %vm1278, 1, 0
  %v1311 = vsel %vm1279, 1, 0
  %v1312 = vsel %vm1280, 1, 0
  %v1313 = vsel %vm1281, 1, 0
  %v1314 = vsel %vm1282, 1, 0
  %v1315 = vsel %vm1283, 1, 0
  %v1316 = vsel %vm1284, 1, 0
  %v1317 = vsel %vm1285, 1, 0
  %v1318 = vsel %vm1286, 1, 0
  %v1319 = vsel %vm1287, 1, 0
  %v1320 = vsel %vm1288, 1, 0
  %v1321 = vsel %vm1289, 1, 0
  %v1322 = vsel %vm1290, 1, 0
  %v1323 = vsel %vm1291, 1, 0
  %v1324 = vsel %vm1292, 1, 0
  %v1325 = vsel %vm1293, 1, 0
  %v1326 = vsel %vm1294, 1, 0
  %v1327 = vcvt.s32.f32 %v1295
  %v1328 = vcvt.s32.f32 %v1296
  %v1329 = vcvt.s32.f32 %v1297
  %v1330 = vcvt.s32.f32 %v1298
  %v1331 = vcvt.s32.f32 %v1299
  %v1332 = vcvt.s32.f32 %v1300
  %v1333 = vcvt.s32.f32 %v1301
  %v1334 = vcvt.s32.f32 %v1302
  %v1335 = vcvt.s32.f32 %v1303
  %v1336 = vcvt.s32.f32 %v1304
  %v1337 = vcvt.s32.f32 %v1305
  %v1338 = vcvt.s32.f32 %v1306
  %v1339 = vcvt.s32.f32 %v1307
  %v1340 = vcvt.s32.f32 %v1308
  %v1341 = vcvt.s32.f32 %v1309
  %v1342 = vcvt.s32.f32 %v1310
  %v1343 = vcvt.s32.f32 %v1311
  %v1344 = vcvt.s32.f32 %v1312
  %v1345 = vcvt.s32.f32 %v1313
  %v1346 = vcvt.s32.f32 %v1314
  %v1347 = vcvt.s32.f32 %v1315
  %v1348 = vcvt.s32.f32 %v1316
  %v1349 = vcvt.s32.f32 %v1317
  %v1350 = vcvt.s32.f32 %v1318
  %v1351 = vcvt.s32.f32 %v1319
  %v1352 = vcvt.s32.f32 %v1320
  %v1353 = vcvt.s32.f32 %v1321
  %v1354 = vcvt.s32.f32 %v1322
  %v1355 = vcvt.s32.f32 %v1323
  %v1356 = vcvt.s32.f32 %v1324
  %v1357 = vcvt.s32.f32 %v1325
  %v1358 = vcvt.s32.f32 %v1326
  %vm1359 = vcmp.eq.s32.totalorder %v1200, 1
  %vm1360 = vcmp.eq.s32.totalorder %v1202, 1
  %vm1361 = vcmp.eq.s32.totalorder %v1204, 1
  %vm1362 = vcmp.eq.s32.totalorder %v1206, 1
  %vm1363 = vcmp.eq.s32.totalorder %v1208, 1
  %vm1364 = vcmp.eq.s32.totalorder %v1210, 1
  %vm1365 = vcmp.eq.s32.totalorder %v1212, 1
  %vm1366 = vcmp.eq.s32.totalorder %v1214, 1
  %vm1367 = vcmp.eq.s32.totalorder %v1216, 1
  %vm1368 = vcmp.eq.s32.totalorder %v1218, 1
  %vm1369 = vcmp.eq.s32.totalorder %v1220, 1
  %vm1370 = vcmp.eq.s32.totalorder %v1222, 1
  %vm1371 = vcmp.eq.s32.totalorder %v1224, 1
  %vm1372 = vcmp.eq.s32.totalorder %v1226, 1
  %vm1373 = vcmp.eq.s32.totalorder %v1228, 1
  %vm1374 = vcmp.eq.s32.totalorder %v1230, 1
  %vm1375 = vcmp.eq.s32.totalorder %v1232, 1
  %vm1376 = vcmp.eq.s32.totalorder %v1234, 1
  %vm1377 = vcmp.eq.s32.totalorder %v1236, 1
  %vm1378 = vcmp.eq.s32.totalorder %v1238, 1
  %vm1379 = vcmp.eq.s32.totalorder %v1240, 1
  %vm1380 = vcmp.eq.s32.totalorder %v1242, 1
  %vm1381 = vcmp.eq.s32.totalorder %v1244, 1
  %vm1382 = vcmp.eq.s32.totalorder %v1246, 1
  %vm1383 = vcmp.eq.s32.totalorder %v1248, 1
  %vm1384 = vcmp.eq.s32.totalorder %v1250, 1
  %vm1385 = vcmp.eq.s32.totalorder %v1252, 1
  %vm1386 = vcmp.eq.s32.totalorder %v1254, 1
  %vm1387 = vcmp.eq.s32.totalorder %v1256, 1
  %vm1388 = vcmp.eq.s32.totalorder %v1258, 1
  %vm1389 = vcmp.eq.s32.totalorder %v1260, 1
  %vm1390 = vcmp.eq.s32.totalorder %v1262, 1
  %v1391 = vsel %vm1359, 1, 0
  %v1392 = vsel %vm1360, 1, 0
  %v1393 = vsel %vm1361, 1, 0
  %v1394 = vsel %vm1362, 1, 0
  %v1395 = vsel %vm1363, 1, 0
  %v1396 = vsel %vm1364, 1, 0
  %v1397 = vsel %vm1365, 1, 0
  %v1398 = vsel %vm1366, 1, 0
  %v1399 = vsel %vm1367, 1, 0
  %v1400 = vsel %vm1368, 1, 0
  %v1401 = vsel %vm1369, 1, 0
  %v1402 = vsel %vm1370, 1, 0
  %v1403 = vsel %vm1371, 1, 0
  %v1404 = vsel %vm1372, 1, 0
  %v1405 = vsel %vm1373, 1, 0
  %v1406 = vsel %vm1374, 1, 0
  %v1407 = vsel %vm1375, 1, 0
  %v1408 = vsel %vm1376, 1, 0
  %v1409 = vsel %vm1377, 1, 0
  %v1410 = vsel %vm1378, 1, 0
  %v1411 = vsel %vm1379, 1, 0
  %v1412 = vsel %vm1380, 1, 0
  %v1413 = vsel %vm1381, 1, 0
  %v1414 = vsel %vm1382, 1, 0
  %v1415 = vsel %vm1383, 1, 0
  %v1416 = vsel %vm1384, 1, 0
  %v1417 = vsel %vm1385, 1, 0
  %v1418 = vsel %vm1386, 1, 0
  %v1419 = vsel %vm1387, 1, 0
  %v1420 = vsel %vm1388, 1, 0
  %v1421 = vsel %vm1389, 1, 0
  %v1422 = vsel %vm1390, 1, 0
  %v1423 = vcvt.s32.f32 %v1391
  %v1424 = vcvt.s32.f32 %v1392
  %v1425 = vcvt.s32.f32 %v1393
  %v1426 = vcvt.s32.f32 %v1394
  %v1427 = vcvt.s32.f32 %v1395
  %v1428 = vcvt.s32.f32 %v1396
  %v1429 = vcvt.s32.f32 %v1397
  %v1430 = vcvt.s32.f32 %v1398
  %v1431 = vcvt.s32.f32 %v1399
  %v1432 = vcvt.s32.f32 %v1400
  %v1433 = vcvt.s32.f32 %v1401
  %v1434 = vcvt.s32.f32 %v1402
  %v1435 = vcvt.s32.f32 %v1403
  %v1436 = vcvt.s32.f32 %v1404
  %v1437 = vcvt.s32.f32 %v1405
  %v1438 = vcvt.s32.f32 %v1406
  %v1439 = vcvt.s32.f32 %v1407
  %v1440 = vcvt.s32.f32 %v1408
  %v1441 = vcvt.s32.f32 %v1409
  %v1442 = vcvt.s32.f32 %v1410
  %v1443 = vcvt.s32.f32 %v1411
  %v1444 = vcvt.s32.f32 %v1412
  %v1445 = vcvt.s32.f32 %v1413
  %v1446 = vcvt.s32.f32 %v1414
  %v1447 = vcvt.s32.f32 %v1415
  %v1448 = vcvt.s32.f32 %v1416
  %v1449 = vcvt.s32.f32 %v1417
  %v1450 = vcvt.s32.f32 %v1418
  %v1451 = vcvt.s32.f32 %v1419
  %v1452 = vcvt.s32.f32 %v1420
  %v1453 = vcvt.s32.f32 %v1421
  %v1454 = vcvt.s32.f32 %v1422
  %vm1455 = vcmp.eq.s32.totalorder %v1200, 2
  %vm1456 = vcmp.eq.s32.totalorder %v1202, 2
  %vm1457 = vcmp.eq.s32.totalorder %v1204, 2
  %vm1458 = vcmp.eq.s32.totalorder %v1206, 2
  %vm1459 = vcmp.eq.s32.totalorder %v1208, 2
  %vm1460 = vcmp.eq.s32.totalorder %v1210, 2
  %vm1461 = vcmp.eq.s32.totalorder %v1212, 2
  %vm1462 = vcmp.eq.s32.totalorder %v1214, 2
  %vm1463 = vcmp.eq.s32.totalorder %v1216, 2
  %vm1464 = vcmp.eq.s32.totalorder %v1218, 2
  %vm1465 = vcmp.eq.s32.totalorder %v1220, 2
  %vm1466 = vcmp.eq.s32.totalorder %v1222, 2
  %vm1467 = vcmp.eq.s32.totalorder %v1224, 2
  %vm1468 = vcmp.eq.s32.totalorder %v1226, 2
  %vm1469 = vcmp.eq.s32.totalorder %v1228, 2
  %vm1470 = vcmp.eq.s32.totalorder %v1230, 2
  %vm1471 = vcmp.eq.s32.totalorder %v1232, 2
  %vm1472 = vcmp.eq.s32.totalorder %v1234, 2
  %vm1473 = vcmp.eq.s32.totalorder %v1236, 2
  %vm1474 = vcmp.eq.s32.totalorder %v1238, 2
  %vm1475 = vcmp.eq.s32.totalorder %v1240, 2
  %vm1476 = vcmp.eq.s32.totalorder %v1242, 2
  %vm1477 = vcmp.eq.s32.totalorder %v1244, 2
  %vm1478 = vcmp.eq.s32.totalorder %v1246, 2
  %vm1479 = vcmp.eq.s32.totalorder %v1248, 2
  %vm1480 = vcmp.eq.s32.totalorder %v1250, 2
  %vm1481 = vcmp.eq.s32.totalorder %v1252, 2
  %vm1482 = vcmp.eq.s32.totalorder %v1254, 2
  %vm1483 = vcmp.eq.s32.totalorder %v1256, 2
  %vm1484 = vcmp.eq.s32.totalorder %v1258, 2
  %vm1485 = vcmp.eq.s32.totalorder %v1260, 2
  %vm1486 = vcmp.eq.s32.totalorder %v1262, 2
  %v1487 = vsel %vm1455, 1, 0
  %v1488 = vsel %vm1456, 1, 0
  %v1489 = vsel %vm1457, 1, 0
  %v1490 = vsel %vm1458, 1, 0
  %v1491 = vsel %vm1459, 1, 0
  %v1492 = vsel %vm1460, 1, 0
  %v1493 = vsel %vm1461, 1, 0
  %v1494 = vsel %vm1462, 1, 0
  %v1495 = vsel %vm1463, 1, 0
  %v1496 = vsel %vm1464, 1, 0
  %v1497 = vsel %vm1465, 1, 0
  %v1498 = vsel %vm1466, 1, 0
  %v1499 = vsel %vm1467, 1, 0
  %v1500 = vsel %vm1468, 1, 0
  %v1501 = vsel %vm1469, 1, 0
  %v1502 = vsel %vm1470, 1, 0
  %v1503 = vsel %vm1471, 1, 0
  %v1504 = vsel %vm1472, 1, 0
  %v1505 = vsel %vm1473, 1, 0
  %v1506 = vsel %vm1474, 1, 0
  %v1507 = vsel %vm1475, 1, 0
  %v1508 = vsel %vm1476, 1, 0
  %v1509 = vsel %vm1477, 1, 0
  %v1510 = vsel %vm1478, 1, 0
  %v1511 = vsel %vm1479, 1, 0
  %v1512 = vsel %vm1480, 1, 0
  %v1513 = vsel %vm1481, 1, 0
  %v1514 = vsel %vm1482, 1, 0
  %v1515 = vsel %vm1483, 1, 0
  %v1516 = vsel %vm1484, 1, 0
  %v1517 = vsel %vm1485, 1, 0
  %v1518 = vsel %vm1486, 1, 0
  %v1519 = vcvt.s32.f32 %v1487
  %v1520 = vcvt.s32.f32 %v1488
  %v1521 = vcvt.s32.f32 %v1489
  %v1522 = vcvt.s32.f32 %v1490
  %v1523 = vcvt.s32.f32 %v1491
  %v1524 = vcvt.s32.f32 %v1492
  %v1525 = vcvt.s32.f32 %v1493
  %v1526 = vcvt.s32.f32 %v1494
  %v1527 = vcvt.s32.f32 %v1495
  %v1528 = vcvt.s32.f32 %v1496
  %v1529 = vcvt.s32.f32 %v1497
  %v1530 = vcvt.s32.f32 %v1498
  %v1531 = vcvt.s32.f32 %v1499
  %v1532 = vcvt.s32.f32 %v1500
  %v1533 = vcvt.s32.f32 %v1501
  %v1534 = vcvt.s32.f32 %v1502
  %v1535 = vcvt.s32.f32 %v1503
  %v1536 = vcvt.s32.f32 %v1504
  %v1537 = vcvt.s32.f32 %v1505
  %v1538 = vcvt.s32.f32 %v1506
  %v1539 = vcvt.s32.f32 %v1507
  %v1540 = vcvt.s32.f32 %v1508
  %v1541 = vcvt.s32.f32 %v1509
  %v1542 = vcvt.s32.f32 %v1510
  %v1543 = vcvt.s32.f32 %v1511
  %v1544 = vcvt.s32.f32 %v1512
  %v1545 = vcvt.s32.f32 %v1513
  %v1546 = vcvt.s32.f32 %v1514
  %v1547 = vcvt.s32.f32 %v1515
  %v1548 = vcvt.s32.f32 %v1516
  %v1549 = vcvt.s32.f32 %v1517
  %v1550 = vcvt.s32.f32 %v1518
  %vm1551 = vcmp.eq.s32.totalorder %v1200, 3
  %vm1552 = vcmp.eq.s32.totalorder %v1202, 3
  %vm1553 = vcmp.eq.s32.totalorder %v1204, 3
  %vm1554 = vcmp.eq.s32.totalorder %v1206, 3
  %vm1555 = vcmp.eq.s32.totalorder %v1208, 3
  %vm1556 = vcmp.eq.s32.totalorder %v1210, 3
  %vm1557 = vcmp.eq.s32.totalorder %v1212, 3
  %vm1558 = vcmp.eq.s32.totalorder %v1214, 3
  %vm1559 = vcmp.eq.s32.totalorder %v1216, 3
  %vm1560 = vcmp.eq.s32.totalorder %v1218, 3
  %vm1561 = vcmp.eq.s32.totalorder %v1220, 3
  %vm1562 = vcmp.eq.s32.totalorder %v1222, 3
  %vm1563 = vcmp.eq.s32.totalorder %v1224, 3
  %vm1564 = vcmp.eq.s32.totalorder %v1226, 3
  %vm1565 = vcmp.eq.s32.totalorder %v1228, 3
  %vm1566 = vcmp.eq.s32.totalorder %v1230, 3
  %vm1567 = vcmp.eq.s32.totalorder %v1232, 3
  %vm1568 = vcmp.eq.s32.totalorder %v1234, 3
  %vm1569 = vcmp.eq.s32.totalorder %v1236, 3
  %vm1570 = vcmp.eq.s32.totalorder %v1238, 3
  %vm1571 = vcmp.eq.s32.totalorder %v1240, 3
  %vm1572 = vcmp.eq.s32.totalorder %v1242, 3
  %vm1573 = vcmp.eq.s32.totalorder %v1244, 3
  %vm1574 = vcmp.eq.s32.totalorder %v1246, 3
  %vm1575 = vcmp.eq.s32.totalorder %v1248, 3
  %vm1576 = vcmp.eq.s32.totalorder %v1250, 3
  %vm1577 = vcmp.eq.s32.totalorder %v1252, 3
  %vm1578 = vcmp.eq.s32.totalorder %v1254, 3
  %vm1579 = vcmp.eq.s32.totalorder %v1256, 3
  %vm1580 = vcmp.eq.s32.totalorder %v1258, 3
  %vm1581 = vcmp.eq.s32.totalorder %v1260, 3
  %vm1582 = vcmp.eq.s32.totalorder %v1262, 3
  %v1583 = vsel %vm1551, 1, 0
  %v1584 = vsel %vm1552, 1, 0
  %v1585 = vsel %vm1553, 1, 0
  %v1586 = vsel %vm1554, 1, 0
  %v1587 = vsel %vm1555, 1, 0
  %v1588 = vsel %vm1556, 1, 0
  %v1589 = vsel %vm1557, 1, 0
  %v1590 = vsel %vm1558, 1, 0
  %v1591 = vsel %vm1559, 1, 0
  %v1592 = vsel %vm1560, 1, 0
  %v1593 = vsel %vm1561, 1, 0
  %v1594 = vsel %vm1562, 1, 0
  %v1595 = vsel %vm1563, 1, 0
  %v1596 = vsel %vm1564, 1, 0
  %v1597 = vsel %vm1565, 1, 0
  %v1598 = vsel %vm1566, 1, 0
  %v1599 = vsel %vm1567, 1, 0
  %v1600 = vsel %vm1568, 1, 0
  %v1601 = vsel %vm1569, 1, 0
  %v1602 = vsel %vm1570, 1, 0
  %v1603 = vsel %vm1571, 1, 0
  %v1604 = vsel %vm1572, 1, 0
  %v1605 = vsel %vm1573, 1, 0
  %v1606 = vsel %vm1574, 1, 0
  %v1607 = vsel %vm1575, 1, 0
  %v1608 = vsel %vm1576, 1, 0
  %v1609 = vsel %vm1577, 1, 0
  %v1610 = vsel %vm1578, 1, 0
  %v1611 = vsel %vm1579, 1, 0
  %v1612 = vsel %vm1580, 1, 0
  %v1613 = vsel %vm1581, 1, 0
  %v1614 = vsel %vm1582, 1, 0
  %v1615 = vcvt.s32.f32 %v1583
  %v1616 = vcvt.s32.f32 %v1584
  %v1617 = vcvt.s32.f32 %v1585
  %v1618 = vcvt.s32.f32 %v1586
  %v1619 = vcvt.s32.f32 %v1587
  %v1620 = vcvt.s32.f32 %v1588
  %v1621 = vcvt.s32.f32 %v1589
  %v1622 = vcvt.s32.f32 %v1590
  %v1623 = vcvt.s32.f32 %v1591
  %v1624 = vcvt.s32.f32 %v1592
  %v1625 = vcvt.s32.f32 %v1593
  %v1626 = vcvt.s32.f32 %v1594
  %v1627 = vcvt.s32.f32 %v1595
  %v1628 = vcvt.s32.f32 %v1596
  %v1629 = vcvt.s32.f32 %v1597
  %v1630 = vcvt.s32.f32 %v1598
  %v1631 = vcvt.s32.f32 %v1599
  %v1632 = vcvt.s32.f32 %v1600
  %v1633 = vcvt.s32.f32 %v1601
  %v1634 = vcvt.s32.f32 %v1602
  %v1635 = vcvt.s32.f32 %v1603
  %v1636 = vcvt.s32.f32 %v1604
  %v1637 = vcvt.s32.f32 %v1605
  %v1638 = vcvt.s32.f32 %v1606
  %v1639 = vcvt.s32.f32 %v1607
  %v1640 = vcvt.s32.f32 %v1608
  %v1641 = vcvt.s32.f32 %v1609
  %v1642 = vcvt.s32.f32 %v1610
  %v1643 = vcvt.s32.f32 %v1611
  %v1644 = vcvt.s32.f32 %v1612
  %v1645 = vcvt.s32.f32 %v1613
  %v1646 = vcvt.s32.f32 %v1614
  %v1647 = vld [vmem:[%s3] sm:$0xf]
  %v1648 = vld [vmem:[%s3 + $0x10] sm:$0xf]
  %v1649 = vld [vmem:[%s5] sm:$0x1]
  %v1651 = vperm.slane %v1649, 0
  %v1655 = vunpack.c.l.b16 %v1647
  %v1656 = vunpack.c.l.b16 %v1648
  %v1657 = vpack.c.b16 %v1656, %v1655
  %vm1659 = vcmask 130048
  %v1661 = vsel %vm1659, %v538, 0
  %v1664 = vsel %vm1659, %v539, 0
  %v1667 = vsel %vm1659, %v540, 0
  %v1670 = vsel %vm1659, %v541, 0
  %v1673 = vsel %vm1659, %v542, 0
  %v1676 = vsel %vm1659, %v543, 0
  %v1679 = vsel %vm1659, %v544, 0
  %v1682 = vsel %vm1659, %v545, 0
  %v1685 = vsel %vm1659, %v546, 0
  %v1688 = vsel %vm1659, %v547, 0
  %v1691 = vsel %vm1659, %v548, 0
  %v1694 = vsel %vm1659, %v549, 0
  %v1697 = vsel %vm1659, %v550, 0
  %v1700 = vsel %vm1659, %v551, 0
  %v1703 = vsel %vm1659, %v552, 0
  %v1706 = vsel %vm1659, %v553, 0
  %1708 = vmatpush.bf16.msra.mxu0 0
  %1709 = vmatpush.bf16.msra.mxu0 0
  %1710 = vmatpush.bf16.msra.mxu0 0
  %1711 = vmatpush.bf16.msra.mxu0 0
  %1712 = vmatpush.bf16.msra.mxu0 0
  %1713 = vmatpush.bf16.msra.mxu0 0
  %1714 = vmatpush.bf16.msra.mxu0 0
  %1715 = vmatpush.bf16.msra.mxu0 %v1657
  %1716 = vmatmul.bf16.gmra.mxu0 %v1661
  %v1717 = vpop.f32.mrf.mxu0
  %v1718 = vadd.f32 %v1651, %v1717
  %v1719 = vpop.f32.mrf.mxu0
  %v1720 = vadd.f32 %v1651, %v1719
  %1721 = vmatmul.bf16.gmra.mxu0 %v1664
  %v1722 = vpop.f32.mrf.mxu0
  %v1723 = vadd.f32 %v1651, %v1722
  %v1724 = vpop.f32.mrf.mxu0
  %v1725 = vadd.f32 %v1651, %v1724
  %1726 = vmatmul.bf16.gmra.mxu0 %v1667
  %v1727 = vpop.f32.mrf.mxu0
  %v1728 = vadd.f32 %v1651, %v1727
  %v1729 = vpop.f32.mrf.mxu0
  %v1730 = vadd.f32 %v1651, %v1729
  %1731 = vmatmul.bf16.gmra.mxu0 %v1670
  %v1732 = vpop.f32.mrf.mxu0
  %v1733 = vadd.f32 %v1651, %v1732
  %v1734 = vpop.f32.mrf.mxu0
  %v1735 = vadd.f32 %v1651, %v1734
  %1736 = vmatmul.bf16.gmra.mxu0 %v1673
  %v1737 = vpop.f32.mrf.mxu0
  %v1738 = vadd.f32 %v1651, %v1737
  %v1739 = vpop.f32.mrf.mxu0
  %v1740 = vadd.f32 %v1651, %v1739
  %1741 = vmatmul.bf16.gmra.mxu0 %v1676
  %v1742 = vpop.f32.mrf.mxu0
  %v1743 = vadd.f32 %v1651, %v1742
  %v1744 = vpop.f32.mrf.mxu0
  %v1745 = vadd.f32 %v1651, %v1744
  %1746 = vmatmul.bf16.gmra.mxu0 %v1679
  %v1747 = vpop.f32.mrf.mxu0
  %v1748 = vadd.f32 %v1651, %v1747
  %v1749 = vpop.f32.mrf.mxu0
  %v1750 = vadd.f32 %v1651, %v1749
  %1751 = vmatmul.bf16.gmra.mxu0 %v1682
  %v1752 = vpop.f32.mrf.mxu0
  %v1753 = vadd.f32 %v1651, %v1752
  %v1754 = vpop.f32.mrf.mxu0
  %v1755 = vadd.f32 %v1651, %v1754
  %1756 = vmatmul.bf16.gmra.mxu0 %v1685
  %v1757 = vpop.f32.mrf.mxu0
  %v1758 = vadd.f32 %v1651, %v1757
  %v1759 = vpop.f32.mrf.mxu0
  %v1760 = vadd.f32 %v1651, %v1759
  %1761 = vmatmul.bf16.gmra.mxu0 %v1688
  %v1762 = vpop.f32.mrf.mxu0
  %v1763 = vadd.f32 %v1651, %v1762
  %v1764 = vpop.f32.mrf.mxu0
  %v1765 = vadd.f32 %v1651, %v1764
  %1766 = vmatmul.bf16.gmra.mxu0 %v1691
  %v1767 = vpop.f32.mrf.mxu0
  %v1768 = vadd.f32 %v1651, %v1767
  %v1769 = vpop.f32.mrf.mxu0
  %v1770 = vadd.f32 %v1651, %v1769
  %1771 = vmatmul.bf16.gmra.mxu0 %v1694
  %v1772 = vpop.f32.mrf.mxu0
  %v1773 = vadd.f32 %v1651, %v1772
  %v1774 = vpop.f32.mrf.mxu0
  %v1775 = vadd.f32 %v1651, %v1774
  %1776 = vmatmul.bf16.gmra.mxu0 %v1697
  %v1777 = vpop.f32.mrf.mxu0
  %v1778 = vadd.f32 %v1651, %v1777
  %v1779 = vpop.f32.mrf.mxu0
  %v1780 = vadd.f32 %v1651, %v1779
  %1781 = vmatmul.bf16.gmra.mxu0 %v1700
  %v1782 = vpop.f32.mrf.mxu0
  %v1783 = vadd.f32 %v1651, %v1782
  %v1784 = vpop.f32.mrf.mxu0
  %v1785 = vadd.f32 %v1651, %v1784
  %1786 = vmatmul.bf16.gmra.mxu0 %v1703
  %v1787 = vpop.f32.mrf.mxu0
  %v1788 = vadd.f32 %v1651, %v1787
  %v1789 = vpop.f32.mrf.mxu0
  %v1790 = vadd.f32 %v1651, %v1789
  %1791 = vmatmul.bf16.gmra.mxu0 %v1706
  %v1792 = vpop.f32.mrf.mxu0
  %v1793 = vadd.f32 %v1651, %v1792
  %v1794 = vpop.f32.mrf.mxu0
  %v1795 = vadd.f32 %v1651, %v1794
  %1796 = vdwg.mxu0
  %v1797 = vld [vmem:[%s4] ss:$0 sm:$0xff]
  %v1798 = vmul.f32 %v1327, %v1797
  %v1799 = vmul.f32 %v1328, %v1797
  %v1800 = vmul.f32 %v1329, %v1797
  %v1801 = vmul.f32 %v1330, %v1797
  %v1802 = vmul.f32 %v1331, %v1797
  %v1803 = vmul.f32 %v1332, %v1797
  %v1804 = vmul.f32 %v1333, %v1797
  %v1805 = vmul.f32 %v1334, %v1797
  %v1806 = vmul.f32 %v1335, %v1797
  %v1807 = vmul.f32 %v1336, %v1797
  %v1808 = vmul.f32 %v1337, %v1797
  %v1809 = vmul.f32 %v1338, %v1797
  %v1810 = vmul.f32 %v1339, %v1797
  %v1811 = vmul.f32 %v1340, %v1797
  %v1812 = vmul.f32 %v1341, %v1797
  %v1813 = vmul.f32 %v1342, %v1797
  %v1814 = vmul.f32 %v1343, %v1797
  %v1815 = vmul.f32 %v1344, %v1797
  %v1816 = vmul.f32 %v1345, %v1797
  %v1817 = vmul.f32 %v1346, %v1797
  %v1818 = vmul.f32 %v1347, %v1797
  %v1819 = vmul.f32 %v1348, %v1797
  %v1820 = vmul.f32 %v1349, %v1797
  %v1821 = vmul.f32 %v1350, %v1797
  %v1822 = vmul.f32 %v1351, %v1797
  %v1823 = vmul.f32 %v1352, %v1797
  %v1824 = vmul.f32 %v1353, %v1797
  %v1825 = vmul.f32 %v1354, %v1797
  %v1826 = vmul.f32 %v1355, %v1797
  %v1827 = vmul.f32 %v1356, %v1797
  %v1828 = vmul.f32 %v1357, %v1797
  %v1829 = vmul.f32 %v1358, %v1797
  %v1830 = vld [vmem:[%s4 + $0x1] ss:$0 sm:$0xff]
  %v1831 = vmul.f32 %v1423, %v1830
  %v1832 = vmul.f32 %v1424, %v1830
  %v1833 = vmul.f32 %v1425, %v1830
  %v1834 = vmul.f32 %v1426, %v1830
  %v1835 = vmul.f32 %v1427, %v1830
  %v1836 = vmul.f32 %v1428, %v1830
  %v1837 = vmul.f32 %v1429, %v1830
  %v1838 = vmul.f32 %v1430, %v1830
  %v1839 = vmul.f32 %v1431, %v1830
  %v1840 = vmul.f32 %v1432, %v1830
  %v1841 = vmul.f32 %v1433, %v1830
  %v1842 = vmul.f32 %v1434, %v1830
  %v1843 = vmul.f32 %v1435, %v1830
  %v1844 = vmul.f32 %v1436, %v1830
  %v1845 = vmul.f32 %v1437, %v1830
  %v1846 = vmul.f32 %v1438, %v1830
  %v1847 = vmul.f32 %v1439, %v1830
  %v1848 = vmul.f32 %v1440, %v1830
  %v1849 = vmul.f32 %v1441, %v1830
  %v1850 = vmul.f32 %v1442, %v1830
  %v1851 = vmul.f32 %v1443, %v1830
  %v1852 = vmul.f32 %v1444, %v1830
  %v1853 = vmul.f32 %v1445, %v1830
  %v1854 = vmul.f32 %v1446, %v1830
  %v1855 = vmul.f32 %v1447, %v1830
  %v1856 = vmul.f32 %v1448, %v1830
  %v1857 = vmul.f32 %v1449, %v1830
  %v1858 = vmul.f32 %v1450, %v1830
  %v1859 = vmul.f32 %v1451, %v1830
  %v1860 = vmul.f32 %v1452, %v1830
  %v1861 = vmul.f32 %v1453, %v1830
  %v1862 = vmul.f32 %v1454, %v1830
  %v1863 = vadd.f32 %v1798, %v1831
  %v1864 = vadd.f32 %v1799, %v1832
  %v1865 = vadd.f32 %v1800, %v1833
  %v1866 = vadd.f32 %v1801, %v1834
  %v1867 = vadd.f32 %v1802, %v1835
  %v1868 = vadd.f32 %v1803, %v1836
  %v1869 = vadd.f32 %v1804, %v1837
  %v1870 = vadd.f32 %v1805, %v1838
  %v1871 = vadd.f32 %v1806, %v1839
  %v1872 = vadd.f32 %v1807, %v1840
  %v1873 = vadd.f32 %v1808, %v1841
  %v1874 = vadd.f32 %v1809, %v1842
  %v1875 = vadd.f32 %v1810, %v1843
  %v1876 = vadd.f32 %v1811, %v1844
  %v1877 = vadd.f32 %v1812, %v1845
  %v1878 = vadd.f32 %v1813, %v1846
  %v1879 = vadd.f32 %v1814, %v1847
  %v1880 = vadd.f32 %v1815, %v1848
  %v1881 = vadd.f32 %v1816, %v1849
  %v1882 = vadd.f32 %v1817, %v1850
  %v1883 = vadd.f32 %v1818, %v1851
  %v1884 = vadd.f32 %v1819, %v1852
  %v1885 = vadd.f32 %v1820, %v1853
  %v1886 = vadd.f32 %v1821, %v1854
  %v1887 = vadd.f32 %v1822, %v1855
  %v1888 = vadd.f32 %v1823, %v1856
  %v1889 = vadd.f32 %v1824, %v1857
  %v1890 = vadd.f32 %v1825, %v1858
  %v1891 = vadd.f32 %v1826, %v1859
  %v1892 = vadd.f32 %v1827, %v1860
  %v1893 = vadd.f32 %v1828, %v1861
  %v1894 = vadd.f32 %v1829, %v1862
  %v1895 = vld [vmem:[%s4 + $0x2] ss:$0 sm:$0xff]
  %v1896 = vmul.f32 %v1519, %v1895
  %v1897 = vmul.f32 %v1520, %v1895
  %v1898 = vmul.f32 %v1521, %v1895
  %v1899 = vmul.f32 %v1522, %v1895
  %v1900 = vmul.f32 %v1523, %v1895
  %v1901 = vmul.f32 %v1524, %v1895
  %v1902 = vmul.f32 %v1525, %v1895
  %v1903 = vmul.f32 %v1526, %v1895
  %v1904 = vmul.f32 %v1527, %v1895
  %v1905 = vmul.f32 %v1528, %v1895
  %v1906 = vmul.f32 %v1529, %v1895
  %v1907 = vmul.f32 %v1530, %v1895
  %v1908 = vmul.f32 %v1531, %v1895
  %v1909 = vmul.f32 %v1532, %v1895
  %v1910 = vmul.f32 %v1533, %v1895
  %v1911 = vmul.f32 %v1534, %v1895
  %v1912 = vmul.f32 %v1535, %v1895
  %v1913 = vmul.f32 %v1536, %v1895
  %v1914 = vmul.f32 %v1537, %v1895
  %v1915 = vmul.f32 %v1538, %v1895
  %v1916 = vmul.f32 %v1539, %v1895
  %v1917 = vmul.f32 %v1540, %v1895
  %v1918 = vmul.f32 %v1541, %v1895
  %v1919 = vmul.f32 %v1542, %v1895
  %v1920 = vmul.f32 %v1543, %v1895
  %v1921 = vmul.f32 %v1544, %v1895
  %v1922 = vmul.f32 %v1545, %v1895
  %v1923 = vmul.f32 %v1546, %v1895
  %v1924 = vmul.f32 %v1547, %v1895
  %v1925 = vmul.f32 %v1548, %v1895
  %v1926 = vmul.f32 %v1549, %v1895
  %v1927 = vmul.f32 %v1550, %v1895
  %v1928 = vadd.f32 %v1863, %v1896
  %v1929 = vadd.f32 %v1864, %v1897
  %v1930 = vadd.f32 %v1865, %v1898
  %v1931 = vadd.f32 %v1866, %v1899
  %v1932 = vadd.f32 %v1867, %v1900
  %v1933 = vadd.f32 %v1868, %v1901
  %v1934 = vadd.f32 %v1869, %v1902
  %v1935 = vadd.f32 %v1870, %v1903
  %v1936 = vadd.f32 %v1871, %v1904
  %v1937 = vadd.f32 %v1872, %v1905
  %v1938 = vadd.f32 %v1873, %v1906
  %v1939 = vadd.f32 %v1874, %v1907
  %v1940 = vadd.f32 %v1875, %v1908
  %v1941 = vadd.f32 %v1876, %v1909
  %v1942 = vadd.f32 %v1877, %v1910
  %v1943 = vadd.f32 %v1878, %v1911
  %v1944 = vadd.f32 %v1879, %v1912
  %v1945 = vadd.f32 %v1880, %v1913
  %v1946 = vadd.f32 %v1881, %v1914
  %v1947 = vadd.f32 %v1882, %v1915
  %v1948 = vadd.f32 %v1883, %v1916
  %v1949 = vadd.f32 %v1884, %v1917
  %v1950 = vadd.f32 %v1885, %v1918
  %v1951 = vadd.f32 %v1886, %v1919
  %v1952 = vadd.f32 %v1887, %v1920
  %v1953 = vadd.f32 %v1888, %v1921
  %v1954 = vadd.f32 %v1889, %v1922
  %v1955 = vadd.f32 %v1890, %v1923
  %v1956 = vadd.f32 %v1891, %v1924
  %v1957 = vadd.f32 %v1892, %v1925
  %v1958 = vadd.f32 %v1893, %v1926
  %v1959 = vadd.f32 %v1894, %v1927
  %v1960 = vld [vmem:[%s4 + $0x3] ss:$0 sm:$0xff]
  %v1961 = vmul.f32 %v1615, %v1960
  %v1962 = vmul.f32 %v1616, %v1960
  %v1963 = vmul.f32 %v1617, %v1960
  %v1964 = vmul.f32 %v1618, %v1960
  %v1965 = vmul.f32 %v1619, %v1960
  %v1966 = vmul.f32 %v1620, %v1960
  %v1967 = vmul.f32 %v1621, %v1960
  %v1968 = vmul.f32 %v1622, %v1960
  %v1969 = vmul.f32 %v1623, %v1960
  %v1970 = vmul.f32 %v1624, %v1960
  %v1971 = vmul.f32 %v1625, %v1960
  %v1972 = vmul.f32 %v1626, %v1960
  %v1973 = vmul.f32 %v1627, %v1960
  %v1974 = vmul.f32 %v1628, %v1960
  %v1975 = vmul.f32 %v1629, %v1960
  %v1976 = vmul.f32 %v1630, %v1960
  %v1977 = vmul.f32 %v1631, %v1960
  %v1978 = vmul.f32 %v1632, %v1960
  %v1979 = vmul.f32 %v1633, %v1960
  %v1980 = vmul.f32 %v1634, %v1960
  %v1981 = vmul.f32 %v1635, %v1960
  %v1982 = vmul.f32 %v1636, %v1960
  %v1983 = vmul.f32 %v1637, %v1960
  %v1984 = vmul.f32 %v1638, %v1960
  %v1985 = vmul.f32 %v1639, %v1960
  %v1986 = vmul.f32 %v1640, %v1960
  %v1987 = vmul.f32 %v1641, %v1960
  %v1988 = vmul.f32 %v1642, %v1960
  %v1989 = vmul.f32 %v1643, %v1960
  %v1990 = vmul.f32 %v1644, %v1960
  %v1991 = vmul.f32 %v1645, %v1960
  %v1992 = vmul.f32 %v1646, %v1960
  %v1993 = vadd.f32 %v1928, %v1961
  %v1994 = vadd.f32 %v1929, %v1962
  %v1995 = vadd.f32 %v1930, %v1963
  %v1996 = vadd.f32 %v1931, %v1964
  %v1997 = vadd.f32 %v1932, %v1965
  %v1998 = vadd.f32 %v1933, %v1966
  %v1999 = vadd.f32 %v1934, %v1967
  %v2000 = vadd.f32 %v1935, %v1968
  %v2001 = vadd.f32 %v1936, %v1969
  %v2002 = vadd.f32 %v1937, %v1970
  %v2003 = vadd.f32 %v1938, %v1971
  %v2004 = vadd.f32 %v1939, %v1972
  %v2005 = vadd.f32 %v1940, %v1973
  %v2006 = vadd.f32 %v1941, %v1974
  %v2007 = vadd.f32 %v1942, %v1975
  %v2008 = vadd.f32 %v1943, %v1976
  %v2009 = vadd.f32 %v1944, %v1977
  %v2010 = vadd.f32 %v1945, %v1978
  %v2011 = vadd.f32 %v1946, %v1979
  %v2012 = vadd.f32 %v1947, %v1980
  %v2013 = vadd.f32 %v1948, %v1981
  %v2014 = vadd.f32 %v1949, %v1982
  %v2015 = vadd.f32 %v1950, %v1983
  %v2016 = vadd.f32 %v1951, %v1984
  %v2017 = vadd.f32 %v1952, %v1985
  %v2018 = vadd.f32 %v1953, %v1986
  %v2019 = vadd.f32 %v1954, %v1987
  %v2020 = vadd.f32 %v1955, %v1988
  %v2021 = vadd.f32 %v1956, %v1989
  %v2022 = vadd.f32 %v1957, %v1990
  %v2023 = vadd.f32 %v1958, %v1991
  %v2024 = vadd.f32 %v1959, %v1992
  %v2025 = vadd.f32 %v1718, %v1993
  %v2026 = vadd.f32 %v1720, %v1994
  %v2027 = vadd.f32 %v1723, %v1995
  %v2028 = vadd.f32 %v1725, %v1996
  %v2029 = vadd.f32 %v1728, %v1997
  %v2030 = vadd.f32 %v1730, %v1998
  %v2031 = vadd.f32 %v1733, %v1999
  %v2032 = vadd.f32 %v1735, %v2000
  %v2033 = vadd.f32 %v1738, %v2001
  %v2034 = vadd.f32 %v1740, %v2002
  %v2035 = vadd.f32 %v1743, %v2003
  %v2036 = vadd.f32 %v1745, %v2004
  %v2037 = vadd.f32 %v1748, %v2005
  %v2038 = vadd.f32 %v1750, %v2006
  %v2039 = vadd.f32 %v1753, %v2007
  %v2040 = vadd.f32 %v1755, %v2008
  %v2041 = vadd.f32 %v1758, %v2009
  %v2042 = vadd.f32 %v1760, %v2010
  %v2043 = vadd.f32 %v1763, %v2011
  %v2044 = vadd.f32 %v1765, %v2012
  %v2045 = vadd.f32 %v1768, %v2013
  %v2046 = vadd.f32 %v1770, %v2014
  %v2047 = vadd.f32 %v1773, %v2015
  %v2048 = vadd.f32 %v1775, %v2016
  %v2049 = vadd.f32 %v1778, %v2017
  %v2050 = vadd.f32 %v1780, %v2018
  %v2051 = vadd.f32 %v1783, %v2019
  %v2052 = vadd.f32 %v1785, %v2020
  %v2053 = vadd.f32 %v1788, %v2021
  %v2054 = vadd.f32 %v1790, %v2022
  %v2055 = vadd.f32 %v1793, %v2023
  %v2056 = vadd.f32 %v1795, %v2024
  %v2057 = vxor.u32 %v2025, 2147483648
  %v2058 = vxor.u32 %v2026, 2147483648
  %v2059 = vxor.u32 %v2027, 2147483648
  %v2060 = vxor.u32 %v2028, 2147483648
  %v2061 = vxor.u32 %v2029, 2147483648
  %v2062 = vxor.u32 %v2030, 2147483648
  %v2063 = vxor.u32 %v2031, 2147483648
  %v2064 = vxor.u32 %v2032, 2147483648
  %v2065 = vxor.u32 %v2033, 2147483648
  %v2066 = vxor.u32 %v2034, 2147483648
  %v2067 = vxor.u32 %v2035, 2147483648
  %v2068 = vxor.u32 %v2036, 2147483648
  %v2069 = vxor.u32 %v2037, 2147483648
  %v2070 = vxor.u32 %v2038, 2147483648
  %v2071 = vxor.u32 %v2039, 2147483648
  %v2072 = vxor.u32 %v2040, 2147483648
  %v2073 = vxor.u32 %v2041, 2147483648
  %v2074 = vxor.u32 %v2042, 2147483648
  %v2075 = vxor.u32 %v2043, 2147483648
  %v2076 = vxor.u32 %v2044, 2147483648
  %v2077 = vxor.u32 %v2045, 2147483648
  %v2078 = vxor.u32 %v2046, 2147483648
  %v2079 = vxor.u32 %v2047, 2147483648
  %v2080 = vxor.u32 %v2048, 2147483648
  %v2081 = vxor.u32 %v2049, 2147483648
  %v2082 = vxor.u32 %v2050, 2147483648
  %v2083 = vxor.u32 %v2051, 2147483648
  %v2084 = vxor.u32 %v2052, 2147483648
  %v2085 = vxor.u32 %v2053, 2147483648
  %v2086 = vxor.u32 %v2054, 2147483648
  %v2087 = vxor.u32 %v2055, 2147483648
  %v2088 = vxor.u32 %v2056, 2147483648
  %v2089 = vmul.f32 %v2057, 1.442695
  %v2090 = vpow.pop %v2089
  %v2091 = vmul.f32 %v2058, 1.442695
  %v2092 = vpow.pop %v2091
  %v2093 = vmul.f32 %v2059, 1.442695
  %v2094 = vpow.pop %v2093
  %v2095 = vmul.f32 %v2060, 1.442695
  %v2096 = vpow.pop %v2095
  %v2097 = vmul.f32 %v2061, 1.442695
  %v2098 = vpow.pop %v2097
  %v2099 = vmul.f32 %v2062, 1.442695
  %v2100 = vpow.pop %v2099
  %v2101 = vmul.f32 %v2063, 1.442695
  %v2102 = vpow.pop %v2101
  %v2103 = vmul.f32 %v2064, 1.442695
  %v2104 = vpow.pop %v2103
  %v2105 = vmul.f32 %v2065, 1.442695
  %v2106 = vpow.pop %v2105
  %v2107 = vmul.f32 %v2066, 1.442695
  %v2108 = vpow.pop %v2107
  %v2109 = vmul.f32 %v2067, 1.442695
  %v2110 = vpow.pop %v2109
  %v2111 = vmul.f32 %v2068, 1.442695
  %v2112 = vpow.pop %v2111
  %v2113 = vmul.f32 %v2069, 1.442695
  %v2114 = vpow.pop %v2113
  %v2115 = vmul.f32 %v2070, 1.442695
  %v2116 = vpow.pop %v2115
  %v2117 = vmul.f32 %v2071, 1.442695
  %v2118 = vpow.pop %v2117
  %v2119 = vmul.f32 %v2072, 1.442695
  %v2120 = vpow.pop %v2119
  %v2121 = vmul.f32 %v2073, 1.442695
  %v2122 = vpow.pop %v2121
  %v2123 = vmul.f32 %v2074, 1.442695
  %v2124 = vpow.pop %v2123
  %v2125 = vmul.f32 %v2075, 1.442695
  %v2126 = vpow.pop %v2125
  %v2127 = vmul.f32 %v2076, 1.442695
  %v2128 = vpow.pop %v2127
  %v2129 = vmul.f32 %v2077, 1.442695
  %v2130 = vpow.pop %v2129
  %v2131 = vmul.f32 %v2078, 1.442695
  %v2132 = vpow.pop %v2131
  %v2133 = vmul.f32 %v2079, 1.442695
  %v2134 = vpow.pop %v2133
  %v2135 = vmul.f32 %v2080, 1.442695
  %v2136 = vpow.pop %v2135
  %v2137 = vmul.f32 %v2081, 1.442695
  %v2138 = vpow.pop %v2137
  %v2139 = vmul.f32 %v2082, 1.442695
  %v2140 = vpow.pop %v2139
  %v2141 = vmul.f32 %v2083, 1.442695
  %v2142 = vpow.pop %v2141
  %v2143 = vmul.f32 %v2084, 1.442695
  %v2144 = vpow.pop %v2143
  %v2145 = vmul.f32 %v2085, 1.442695
  %v2146 = vpow.pop %v2145
  %v2147 = vmul.f32 %v2086, 1.442695
  %v2148 = vpow.pop %v2147
  %v2149 = vmul.f32 %v2087, 1.442695
  %v2150 = vpow.pop %v2149
  %v2151 = vmul.f32 %v2088, 1.442695
  %v2152 = vpow.pop %v2151
  %v2153 = vadd.f32 %v2090, 1.0
  %v2154 = vadd.f32 %v2092, 1.0
  %v2155 = vadd.f32 %v2094, 1.0
  %v2156 = vadd.f32 %v2096, 1.0
  %v2157 = vadd.f32 %v2098, 1.0
  %v2158 = vadd.f32 %v2100, 1.0
  %v2159 = vadd.f32 %v2102, 1.0
  %v2160 = vadd.f32 %v2104, 1.0
  %v2161 = vadd.f32 %v2106, 1.0
  %v2162 = vadd.f32 %v2108, 1.0
  %v2163 = vadd.f32 %v2110, 1.0
  %v2164 = vadd.f32 %v2112, 1.0
  %v2165 = vadd.f32 %v2114, 1.0
  %v2166 = vadd.f32 %v2116, 1.0
  %v2167 = vadd.f32 %v2118, 1.0
  %v2168 = vadd.f32 %v2120, 1.0
  %v2169 = vadd.f32 %v2122, 1.0
  %v2170 = vadd.f32 %v2124, 1.0
  %v2171 = vadd.f32 %v2126, 1.0
  %v2172 = vadd.f32 %v2128, 1.0
  %v2173 = vadd.f32 %v2130, 1.0
  %v2174 = vadd.f32 %v2132, 1.0
  %v2175 = vadd.f32 %v2134, 1.0
  %v2176 = vadd.f32 %v2136, 1.0
  %v2177 = vadd.f32 %v2138, 1.0
  %v2178 = vadd.f32 %v2140, 1.0
  %v2179 = vadd.f32 %v2142, 1.0
  %v2180 = vadd.f32 %v2144, 1.0
  %v2181 = vadd.f32 %v2146, 1.0
  %v2182 = vadd.f32 %v2148, 1.0
  %v2183 = vadd.f32 %v2150, 1.0
  %v2184 = vadd.f32 %v2152, 1.0
  %v2185 = vrcp.pop %v2153
  %v2186 = vmul.f32 %v2153, %v2185
  %v2187 = vsub.f32 1.0, %v2186
  %v2188 = vmul.f32 %v2185, %v2187
  %v2189 = vadd.f32 %v2185, %v2188
  %vm2190 = vweird.f32 %v2153
  %vm2191 = vweird.f32 %v2185
  %vm2192 = vmor %vm2190, %vm2191
  %v2193 = vsel %vm2192, %v2185, %v2189
  %v2194 = vand.u32 2147483647, %v2153
  %vm2195 = vcmp.eq.f32.partialorder %v2194, 8.507059e+37
  %v2196 = vand.u32 %v2153, 2147483648
  %v2197 = vor.u32 1.1754944e-38, %v2196
  %v2198 = vsel %vm2195, %v2197, %v2193
  %v2199 = vmul.f32 1.0, %v2198
  %v2200 = vrcp.pop %v2154
  %v2201 = vmul.f32 %v2154, %v2200
  %v2202 = vsub.f32 1.0, %v2201
  %v2203 = vmul.f32 %v2200, %v2202
  %v2204 = vadd.f32 %v2200, %v2203
  %vm2205 = vweird.f32 %v2154
  %vm2206 = vweird.f32 %v2200
  %vm2207 = vmor %vm2205, %vm2206
  %v2208 = vsel %vm2207, %v2200, %v2204
  %v2209 = vand.u32 2147483647, %v2154
  %vm2210 = vcmp.eq.f32.partialorder %v2209, 8.507059e+37
  %v2211 = vand.u32 %v2154, 2147483648
  %v2212 = vor.u32 1.1754944e-38, %v2211
  %v2213 = vsel %vm2210, %v2212, %v2208
  %v2214 = vmul.f32 1.0, %v2213
  %v2215 = vrcp.pop %v2155
  %v2216 = vmul.f32 %v2155, %v2215
  %v2217 = vsub.f32 1.0, %v2216
  %v2218 = vmul.f32 %v2215, %v2217
  %v2219 = vadd.f32 %v2215, %v2218
  %vm2220 = vweird.f32 %v2155
  %vm2221 = vweird.f32 %v2215
  %vm2222 = vmor %vm2220, %vm2221
  %v2223 = vsel %vm2222, %v2215, %v2219
  %v2224 = vand.u32 2147483647, %v2155
  %vm2225 = vcmp.eq.f32.partialorder %v2224, 8.507059e+37
  %v2226 = vand.u32 %v2155, 2147483648
  %v2227 = vor.u32 1.1754944e-38, %v2226
  %v2228 = vsel %vm2225, %v2227, %v2223
  %v2229 = vmul.f32 1.0, %v2228
  %v2230 = vrcp.pop %v2156
  %v2231 = vmul.f32 %v2156, %v2230
  %v2232 = vsub.f32 1.0, %v2231
  %v2233 = vmul.f32 %v2230, %v2232
  %v2234 = vadd.f32 %v2230, %v2233
  %vm2235 = vweird.f32 %v2156
  %vm2236 = vweird.f32 %v2230
  %vm2237 = vmor %vm2235, %vm2236
  %v2238 = vsel %vm2237, %v2230, %v2234
  %v2239 = vand.u32 2147483647, %v2156
  %vm2240 = vcmp.eq.f32.partialorder %v2239, 8.507059e+37
  %v2241 = vand.u32 %v2156, 2147483648
  %v2242 = vor.u32 1.1754944e-38, %v2241
  %v2243 = vsel %vm2240, %v2242, %v2238
  %v2244 = vmul.f32 1.0, %v2243
  %v2245 = vrcp.pop %v2157
  %v2246 = vmul.f32 %v2157, %v2245
  %v2247 = vsub.f32 1.0, %v2246
  %v2248 = vmul.f32 %v2245, %v2247
  %v2249 = vadd.f32 %v2245, %v2248
  %vm2250 = vweird.f32 %v2157
  %vm2251 = vweird.f32 %v2245
  %vm2252 = vmor %vm2250, %vm2251
  %v2253 = vsel %vm2252, %v2245, %v2249
  %v2254 = vand.u32 2147483647, %v2157
  %vm2255 = vcmp.eq.f32.partialorder %v2254, 8.507059e+37
  %v2256 = vand.u32 %v2157, 2147483648
  %v2257 = vor.u32 1.1754944e-38, %v2256
  %v2258 = vsel %vm2255, %v2257, %v2253
  %v2259 = vmul.f32 1.0, %v2258
  %v2260 = vrcp.pop %v2158
  %v2261 = vmul.f32 %v2158, %v2260
  %v2262 = vsub.f32 1.0, %v2261
  %v2263 = vmul.f32 %v2260, %v2262
  %v2264 = vadd.f32 %v2260, %v2263
  %vm2265 = vweird.f32 %v2158
  %vm2266 = vweird.f32 %v2260
  %vm2267 = vmor %vm2265, %vm2266
  %v2268 = vsel %vm2267, %v2260, %v2264
  %v2269 = vand.u32 2147483647, %v2158
  %vm2270 = vcmp.eq.f32.partialorder %v2269, 8.507059e+37
  %v2271 = vand.u32 %v2158, 2147483648
  %v2272 = vor.u32 1.1754944e-38, %v2271
  %v2273 = vsel %vm2270, %v2272, %v2268
  %v2274 = vmul.f32 1.0, %v2273
  %v2275 = vrcp.pop %v2159
  %v2276 = vmul.f32 %v2159, %v2275
  %v2277 = vsub.f32 1.0, %v2276
  %v2278 = vmul.f32 %v2275, %v2277
  %v2279 = vadd.f32 %v2275, %v2278
  %vm2280 = vweird.f32 %v2159
  %vm2281 = vweird.f32 %v2275
  %vm2282 = vmor %vm2280, %vm2281
  %v2283 = vsel %vm2282, %v2275, %v2279
  %v2284 = vand.u32 2147483647, %v2159
  %vm2285 = vcmp.eq.f32.partialorder %v2284, 8.507059e+37
  %v2286 = vand.u32 %v2159, 2147483648
  %v2287 = vor.u32 1.1754944e-38, %v2286
  %v2288 = vsel %vm2285, %v2287, %v2283
  %v2289 = vmul.f32 1.0, %v2288
  %v2290 = vrcp.pop %v2160
  %v2291 = vmul.f32 %v2160, %v2290
  %v2292 = vsub.f32 1.0, %v2291
  %v2293 = vmul.f32 %v2290, %v2292
  %v2294 = vadd.f32 %v2290, %v2293
  %vm2295 = vweird.f32 %v2160
  %vm2296 = vweird.f32 %v2290
  %vm2297 = vmor %vm2295, %vm2296
  %v2298 = vsel %vm2297, %v2290, %v2294
  %v2299 = vand.u32 2147483647, %v2160
  %vm2300 = vcmp.eq.f32.partialorder %v2299, 8.507059e+37
  %v2301 = vand.u32 %v2160, 2147483648
  %v2302 = vor.u32 1.1754944e-38, %v2301
  %v2303 = vsel %vm2300, %v2302, %v2298
  %v2304 = vmul.f32 1.0, %v2303
  %v2305 = vrcp.pop %v2161
  %v2306 = vmul.f32 %v2161, %v2305
  %v2307 = vsub.f32 1.0, %v2306
  %v2308 = vmul.f32 %v2305, %v2307
  %v2309 = vadd.f32 %v2305, %v2308
  %vm2310 = vweird.f32 %v2161
  %vm2311 = vweird.f32 %v2305
  %vm2312 = vmor %vm2310, %vm2311
  %v2313 = vsel %vm2312, %v2305, %v2309
  %v2314 = vand.u32 2147483647, %v2161
  %vm2315 = vcmp.eq.f32.partialorder %v2314, 8.507059e+37
  %v2316 = vand.u32 %v2161, 2147483648
  %v2317 = vor.u32 1.1754944e-38, %v2316
  %v2318 = vsel %vm2315, %v2317, %v2313
  %v2319 = vmul.f32 1.0, %v2318
  %v2320 = vrcp.pop %v2162
  %v2321 = vmul.f32 %v2162, %v2320
  %v2322 = vsub.f32 1.0, %v2321
  %v2323 = vmul.f32 %v2320, %v2322
  %v2324 = vadd.f32 %v2320, %v2323
  %vm2325 = vweird.f32 %v2162
  %vm2326 = vweird.f32 %v2320
  %vm2327 = vmor %vm2325, %vm2326
  %v2328 = vsel %vm2327, %v2320, %v2324
  %v2329 = vand.u32 2147483647, %v2162
  %vm2330 = vcmp.eq.f32.partialorder %v2329, 8.507059e+37
  %v2331 = vand.u32 %v2162, 2147483648
  %v2332 = vor.u32 1.1754944e-38, %v2331
  %v2333 = vsel %vm2330, %v2332, %v2328
  %v2334 = vmul.f32 1.0, %v2333
  %v2335 = vrcp.pop %v2163
  %v2336 = vmul.f32 %v2163, %v2335
  %v2337 = vsub.f32 1.0, %v2336
  %v2338 = vmul.f32 %v2335, %v2337
  %v2339 = vadd.f32 %v2335, %v2338
  %vm2340 = vweird.f32 %v2163
  %vm2341 = vweird.f32 %v2335
  %vm2342 = vmor %vm2340, %vm2341
  %v2343 = vsel %vm2342, %v2335, %v2339
  %v2344 = vand.u32 2147483647, %v2163
  %vm2345 = vcmp.eq.f32.partialorder %v2344, 8.507059e+37
  %v2346 = vand.u32 %v2163, 2147483648
  %v2347 = vor.u32 1.1754944e-38, %v2346
  %v2348 = vsel %vm2345, %v2347, %v2343
  %v2349 = vmul.f32 1.0, %v2348
  %v2350 = vrcp.pop %v2164
  %v2351 = vmul.f32 %v2164, %v2350
  %v2352 = vsub.f32 1.0, %v2351
  %v2353 = vmul.f32 %v2350, %v2352
  %v2354 = vadd.f32 %v2350, %v2353
  %vm2355 = vweird.f32 %v2164
  %vm2356 = vweird.f32 %v2350
  %vm2357 = vmor %vm2355, %vm2356
  %v2358 = vsel %vm2357, %v2350, %v2354
  %v2359 = vand.u32 2147483647, %v2164
  %vm2360 = vcmp.eq.f32.partialorder %v2359, 8.507059e+37
  %v2361 = vand.u32 %v2164, 2147483648
  %v2362 = vor.u32 1.1754944e-38, %v2361
  %v2363 = vsel %vm2360, %v2362, %v2358
  %v2364 = vmul.f32 1.0, %v2363
  %v2365 = vrcp.pop %v2165
  %v2366 = vmul.f32 %v2165, %v2365
  %v2367 = vsub.f32 1.0, %v2366
  %v2368 = vmul.f32 %v2365, %v2367
  %v2369 = vadd.f32 %v2365, %v2368
  %vm2370 = vweird.f32 %v2165
  %vm2371 = vweird.f32 %v2365
  %vm2372 = vmor %vm2370, %vm2371
  %v2373 = vsel %vm2372, %v2365, %v2369
  %v2374 = vand.u32 2147483647, %v2165
  %vm2375 = vcmp.eq.f32.partialorder %v2374, 8.507059e+37
  %v2376 = vand.u32 %v2165, 2147483648
  %v2377 = vor.u32 1.1754944e-38, %v2376
  %v2378 = vsel %vm2375, %v2377, %v2373
  %v2379 = vmul.f32 1.0, %v2378
  %v2380 = vrcp.pop %v2166
  %v2381 = vmul.f32 %v2166, %v2380
  %v2382 = vsub.f32 1.0, %v2381
  %v2383 = vmul.f32 %v2380, %v2382
  %v2384 = vadd.f32 %v2380, %v2383
  %vm2385 = vweird.f32 %v2166
  %vm2386 = vweird.f32 %v2380
  %vm2387 = vmor %vm2385, %vm2386
  %v2388 = vsel %vm2387, %v2380, %v2384
  %v2389 = vand.u32 2147483647, %v2166
  %vm2390 = vcmp.eq.f32.partialorder %v2389, 8.507059e+37
  %v2391 = vand.u32 %v2166, 2147483648
  %v2392 = vor.u32 1.1754944e-38, %v2391
  %v2393 = vsel %vm2390, %v2392, %v2388
  %v2394 = vmul.f32 1.0, %v2393
  %v2395 = vrcp.pop %v2167
  %v2396 = vmul.f32 %v2167, %v2395
  %v2397 = vsub.f32 1.0, %v2396
  %v2398 = vmul.f32 %v2395, %v2397
  %v2399 = vadd.f32 %v2395, %v2398
  %vm2400 = vweird.f32 %v2167
  %vm2401 = vweird.f32 %v2395
  %vm2402 = vmor %vm2400, %vm2401
  %v2403 = vsel %vm2402, %v2395, %v2399
  %v2404 = vand.u32 2147483647, %v2167
  %vm2405 = vcmp.eq.f32.partialorder %v2404, 8.507059e+37
  %v2406 = vand.u32 %v2167, 2147483648
  %v2407 = vor.u32 1.1754944e-38, %v2406
  %v2408 = vsel %vm2405, %v2407, %v2403
  %v2409 = vmul.f32 1.0, %v2408
  %v2410 = vrcp.pop %v2168
  %v2411 = vmul.f32 %v2168, %v2410
  %v2412 = vsub.f32 1.0, %v2411
  %v2413 = vmul.f32 %v2410, %v2412
  %v2414 = vadd.f32 %v2410, %v2413
  %vm2415 = vweird.f32 %v2168
  %vm2416 = vweird.f32 %v2410
  %vm2417 = vmor %vm2415, %vm2416
  %v2418 = vsel %vm2417, %v2410, %v2414
  %v2419 = vand.u32 2147483647, %v2168
  %vm2420 = vcmp.eq.f32.partialorder %v2419, 8.507059e+37
  %v2421 = vand.u32 %v2168, 2147483648
  %v2422 = vor.u32 1.1754944e-38, %v2421
  %v2423 = vsel %vm2420, %v2422, %v2418
  %v2424 = vmul.f32 1.0, %v2423
  %v2425 = vrcp.pop %v2169
  %v2426 = vmul.f32 %v2169, %v2425
  %v2427 = vsub.f32 1.0, %v2426
  %v2428 = vmul.f32 %v2425, %v2427
  %v2429 = vadd.f32 %v2425, %v2428
  %vm2430 = vweird.f32 %v2169
  %vm2431 = vweird.f32 %v2425
  %vm2432 = vmor %vm2430, %vm2431
  %v2433 = vsel %vm2432, %v2425, %v2429
  %v2434 = vand.u32 2147483647, %v2169
  %vm2435 = vcmp.eq.f32.partialorder %v2434, 8.507059e+37
  %v2436 = vand.u32 %v2169, 2147483648
  %v2437 = vor.u32 1.1754944e-38, %v2436
  %v2438 = vsel %vm2435, %v2437, %v2433
  %v2439 = vmul.f32 1.0, %v2438
  %v2440 = vrcp.pop %v2170
  %v2441 = vmul.f32 %v2170, %v2440
  %v2442 = vsub.f32 1.0, %v2441
  %v2443 = vmul.f32 %v2440, %v2442
  %v2444 = vadd.f32 %v2440, %v2443
  %vm2445 = vweird.f32 %v2170
  %vm2446 = vweird.f32 %v2440
  %vm2447 = vmor %vm2445, %vm2446
  %v2448 = vsel %vm2447, %v2440, %v2444
  %v2449 = vand.u32 2147483647, %v2170
  %vm2450 = vcmp.eq.f32.partialorder %v2449, 8.507059e+37
  %v2451 = vand.u32 %v2170, 2147483648
  %v2452 = vor.u32 1.1754944e-38, %v2451
  %v2453 = vsel %vm2450, %v2452, %v2448
  %v2454 = vmul.f32 1.0, %v2453
  %v2455 = vrcp.pop %v2171
  %v2456 = vmul.f32 %v2171, %v2455
  %v2457 = vsub.f32 1.0, %v2456
  %v2458 = vmul.f32 %v2455, %v2457
  %v2459 = vadd.f32 %v2455, %v2458
  %vm2460 = vweird.f32 %v2171
  %vm2461 = vweird.f32 %v2455
  %vm2462 = vmor %vm2460, %vm2461
  %v2463 = vsel %vm2462, %v2455, %v2459
  %v2464 = vand.u32 2147483647, %v2171
  %vm2465 = vcmp.eq.f32.partialorder %v2464, 8.507059e+37
  %v2466 = vand.u32 %v2171, 2147483648
  %v2467 = vor.u32 1.1754944e-38, %v2466
  %v2468 = vsel %vm2465, %v2467, %v2463
  %v2469 = vmul.f32 1.0, %v2468
  %v2470 = vrcp.pop %v2172
  %v2471 = vmul.f32 %v2172, %v2470
  %v2472 = vsub.f32 1.0, %v2471
  %v2473 = vmul.f32 %v2470, %v2472
  %v2474 = vadd.f32 %v2470, %v2473
  %vm2475 = vweird.f32 %v2172
  %vm2476 = vweird.f32 %v2470
  %vm2477 = vmor %vm2475, %vm2476
  %v2478 = vsel %vm2477, %v2470, %v2474
  %v2479 = vand.u32 2147483647, %v2172
  %vm2480 = vcmp.eq.f32.partialorder %v2479, 8.507059e+37
  %v2481 = vand.u32 %v2172, 2147483648
  %v2482 = vor.u32 1.1754944e-38, %v2481
  %v2483 = vsel %vm2480, %v2482, %v2478
  %v2484 = vmul.f32 1.0, %v2483
  %v2485 = vrcp.pop %v2173
  %v2486 = vmul.f32 %v2173, %v2485
  %v2487 = vsub.f32 1.0, %v2486
  %v2488 = vmul.f32 %v2485, %v2487
  %v2489 = vadd.f32 %v2485, %v2488
  %vm2490 = vweird.f32 %v2173
  %vm2491 = vweird.f32 %v2485
  %vm2492 = vmor %vm2490, %vm2491
  %v2493 = vsel %vm2492, %v2485, %v2489
  %v2494 = vand.u32 2147483647, %v2173
  %vm2495 = vcmp.eq.f32.partialorder %v2494, 8.507059e+37
  %v2496 = vand.u32 %v2173, 2147483648
  %v2497 = vor.u32 1.1754944e-38, %v2496
  %v2498 = vsel %vm2495, %v2497, %v2493
  %v2499 = vmul.f32 1.0, %v2498
  %v2500 = vrcp.pop %v2174
  %v2501 = vmul.f32 %v2174, %v2500
  %v2502 = vsub.f32 1.0, %v2501
  %v2503 = vmul.f32 %v2500, %v2502
  %v2504 = vadd.f32 %v2500, %v2503
  %vm2505 = vweird.f32 %v2174
  %vm2506 = vweird.f32 %v2500
  %vm2507 = vmor %vm2505, %vm2506
  %v2508 = vsel %vm2507, %v2500, %v2504
  %v2509 = vand.u32 2147483647, %v2174
  %vm2510 = vcmp.eq.f32.partialorder %v2509, 8.507059e+37
  %v2511 = vand.u32 %v2174, 2147483648
  %v2512 = vor.u32 1.1754944e-38, %v2511
  %v2513 = vsel %vm2510, %v2512, %v2508
  %v2514 = vmul.f32 1.0, %v2513
  %v2515 = vrcp.pop %v2175
  %v2516 = vmul.f32 %v2175, %v2515
  %v2517 = vsub.f32 1.0, %v2516
  %v2518 = vmul.f32 %v2515, %v2517
  %v2519 = vadd.f32 %v2515, %v2518
  %vm2520 = vweird.f32 %v2175
  %vm2521 = vweird.f32 %v2515
  %vm2522 = vmor %vm2520, %vm2521
  %v2523 = vsel %vm2522, %v2515, %v2519
  %v2524 = vand.u32 2147483647, %v2175
  %vm2525 = vcmp.eq.f32.partialorder %v2524, 8.507059e+37
  %v2526 = vand.u32 %v2175, 2147483648
  %v2527 = vor.u32 1.1754944e-38, %v2526
  %v2528 = vsel %vm2525, %v2527, %v2523
  %v2529 = vmul.f32 1.0, %v2528
  %v2530 = vrcp.pop %v2176
  %v2531 = vmul.f32 %v2176, %v2530
  %v2532 = vsub.f32 1.0, %v2531
  %v2533 = vmul.f32 %v2530, %v2532
  %v2534 = vadd.f32 %v2530, %v2533
  %vm2535 = vweird.f32 %v2176
  %vm2536 = vweird.f32 %v2530
  %vm2537 = vmor %vm2535, %vm2536
  %v2538 = vsel %vm2537, %v2530, %v2534
  %v2539 = vand.u32 2147483647, %v2176
  %vm2540 = vcmp.eq.f32.partialorder %v2539, 8.507059e+37
  %v2541 = vand.u32 %v2176, 2147483648
  %v2542 = vor.u32 1.1754944e-38, %v2541
  %v2543 = vsel %vm2540, %v2542, %v2538
  %v2544 = vmul.f32 1.0, %v2543
  %v2545 = vrcp.pop %v2177
  %v2546 = vmul.f32 %v2177, %v2545
  %v2547 = vsub.f32 1.0, %v2546
  %v2548 = vmul.f32 %v2545, %v2547
  %v2549 = vadd.f32 %v2545, %v2548
  %vm2550 = vweird.f32 %v2177
  %vm2551 = vweird.f32 %v2545
  %vm2552 = vmor %vm2550, %vm2551
  %v2553 = vsel %vm2552, %v2545, %v2549
  %v2554 = vand.u32 2147483647, %v2177
  %vm2555 = vcmp.eq.f32.partialorder %v2554, 8.507059e+37
  %v2556 = vand.u32 %v2177, 2147483648
  %v2557 = vor.u32 1.1754944e-38, %v2556
  %v2558 = vsel %vm2555, %v2557, %v2553
  %v2559 = vmul.f32 1.0, %v2558
  %v2560 = vrcp.pop %v2178
  %v2561 = vmul.f32 %v2178, %v2560
  %v2562 = vsub.f32 1.0, %v2561
  %v2563 = vmul.f32 %v2560, %v2562
  %v2564 = vadd.f32 %v2560, %v2563
  %vm2565 = vweird.f32 %v2178
  %vm2566 = vweird.f32 %v2560
  %vm2567 = vmor %vm2565, %vm2566
  %v2568 = vsel %vm2567, %v2560, %v2564
  %v2569 = vand.u32 2147483647, %v2178
  %vm2570 = vcmp.eq.f32.partialorder %v2569, 8.507059e+37
  %v2571 = vand.u32 %v2178, 2147483648
  %v2572 = vor.u32 1.1754944e-38, %v2571
  %v2573 = vsel %vm2570, %v2572, %v2568
  %v2574 = vmul.f32 1.0, %v2573
  %v2575 = vrcp.pop %v2179
  %v2576 = vmul.f32 %v2179, %v2575
  %v2577 = vsub.f32 1.0, %v2576
  %v2578 = vmul.f32 %v2575, %v2577
  %v2579 = vadd.f32 %v2575, %v2578
  %vm2580 = vweird.f32 %v2179
  %vm2581 = vweird.f32 %v2575
  %vm2582 = vmor %vm2580, %vm2581
  %v2583 = vsel %vm2582, %v2575, %v2579
  %v2584 = vand.u32 2147483647, %v2179
  %vm2585 = vcmp.eq.f32.partialorder %v2584, 8.507059e+37
  %v2586 = vand.u32 %v2179, 2147483648
  %v2587 = vor.u32 1.1754944e-38, %v2586
  %v2588 = vsel %vm2585, %v2587, %v2583
  %v2589 = vmul.f32 1.0, %v2588
  %v2590 = vrcp.pop %v2180
  %v2591 = vmul.f32 %v2180, %v2590
  %v2592 = vsub.f32 1.0, %v2591
  %v2593 = vmul.f32 %v2590, %v2592
  %v2594 = vadd.f32 %v2590, %v2593
  %vm2595 = vweird.f32 %v2180
  %vm2596 = vweird.f32 %v2590
  %vm2597 = vmor %vm2595, %vm2596
  %v2598 = vsel %vm2597, %v2590, %v2594
  %v2599 = vand.u32 2147483647, %v2180
  %vm2600 = vcmp.eq.f32.partialorder %v2599, 8.507059e+37
  %v2601 = vand.u32 %v2180, 2147483648
  %v2602 = vor.u32 1.1754944e-38, %v2601
  %v2603 = vsel %vm2600, %v2602, %v2598
  %v2604 = vmul.f32 1.0, %v2603
  %v2605 = vrcp.pop %v2181
  %v2606 = vmul.f32 %v2181, %v2605
  %v2607 = vsub.f32 1.0, %v2606
  %v2608 = vmul.f32 %v2605, %v2607
  %v2609 = vadd.f32 %v2605, %v2608
  %vm2610 = vweird.f32 %v2181
  %vm2611 = vweird.f32 %v2605
  %vm2612 = vmor %vm2610, %vm2611
  %v2613 = vsel %vm2612, %v2605, %v2609
  %v2614 = vand.u32 2147483647, %v2181
  %vm2615 = vcmp.eq.f32.partialorder %v2614, 8.507059e+37
  %v2616 = vand.u32 %v2181, 2147483648
  %v2617 = vor.u32 1.1754944e-38, %v2616
  %v2618 = vsel %vm2615, %v2617, %v2613
  %v2619 = vmul.f32 1.0, %v2618
  %v2620 = vrcp.pop %v2182
  %v2621 = vmul.f32 %v2182, %v2620
  %v2622 = vsub.f32 1.0, %v2621
  %v2623 = vmul.f32 %v2620, %v2622
  %v2624 = vadd.f32 %v2620, %v2623
  %vm2625 = vweird.f32 %v2182
  %vm2626 = vweird.f32 %v2620
  %vm2627 = vmor %vm2625, %vm2626
  %v2628 = vsel %vm2627, %v2620, %v2624
  %v2629 = vand.u32 2147483647, %v2182
  %vm2630 = vcmp.eq.f32.partialorder %v2629, 8.507059e+37
  %v2631 = vand.u32 %v2182, 2147483648
  %v2632 = vor.u32 1.1754944e-38, %v2631
  %v2633 = vsel %vm2630, %v2632, %v2628
  %v2634 = vmul.f32 1.0, %v2633
  %v2635 = vrcp.pop %v2183
  %v2636 = vmul.f32 %v2183, %v2635
  %v2637 = vsub.f32 1.0, %v2636
  %v2638 = vmul.f32 %v2635, %v2637
  %v2639 = vadd.f32 %v2635, %v2638
  %vm2640 = vweird.f32 %v2183
  %vm2641 = vweird.f32 %v2635
  %vm2642 = vmor %vm2640, %vm2641
  %v2643 = vsel %vm2642, %v2635, %v2639
  %v2644 = vand.u32 2147483647, %v2183
  %vm2645 = vcmp.eq.f32.partialorder %v2644, 8.507059e+37
  %v2646 = vand.u32 %v2183, 2147483648
  %v2647 = vor.u32 1.1754944e-38, %v2646
  %v2648 = vsel %vm2645, %v2647, %v2643
  %v2649 = vmul.f32 1.0, %v2648
  %v2650 = vrcp.pop %v2184
  %v2651 = vmul.f32 %v2184, %v2650
  %v2652 = vsub.f32 1.0, %v2651
  %v2653 = vmul.f32 %v2650, %v2652
  %v2654 = vadd.f32 %v2650, %v2653
  %vm2655 = vweird.f32 %v2184
  %vm2656 = vweird.f32 %v2650
  %vm2657 = vmor %vm2655, %vm2656
  %v2658 = vsel %vm2657, %v2650, %v2654
  %v2659 = vand.u32 2147483647, %v2184
  %vm2660 = vcmp.eq.f32.partialorder %v2659, 8.507059e+37
  %v2661 = vand.u32 %v2184, 2147483648
  %v2662 = vor.u32 1.1754944e-38, %v2661
  %v2663 = vsel %vm2660, %v2662, %v2658
  %v2664 = vmul.f32 1.0, %v2663
  %v2665 = vld [vmem:[%s3 + $0x8] sm:$0xf]
  %v2666 = vld [vmem:[%s3 + $0x18] sm:$0xf]
  %v2667 = vld [vmem:[%s5 + $0x2] sm:$0x1]
  %v2669 = vperm.slane %v2667, 0
  %v2673 = vunpack.c.l.b16 %v2665
  %v2674 = vunpack.c.l.b16 %v2666
  %v2675 = vpack.c.b16 %v2674, %v2673
  %2677 = vmatpush.bf16.msra.mxu0 0
  %2678 = vmatpush.bf16.msra.mxu0 0
  %2679 = vmatpush.bf16.msra.mxu0 0
  %2680 = vmatpush.bf16.msra.mxu0 0
  %2681 = vmatpush.bf16.msra.mxu0 0
  %2682 = vmatpush.bf16.msra.mxu0 0
  %2683 = vmatpush.bf16.msra.mxu0 0
  %2684 = vmatpush.bf16.msra.mxu0 %v2675
  %2685 = vmatmul.bf16.gmra.mxu0 %v1661
  %v2686 = vpop.f32.mrf.mxu0
  %v2687 = vadd.f32 %v2669, %v2686
  %v2688 = vpop.f32.mrf.mxu0
  %v2689 = vadd.f32 %v2669, %v2688
  %2690 = vmatmul.bf16.gmra.mxu0 %v1664
  %v2691 = vpop.f32.mrf.mxu0
  %v2692 = vadd.f32 %v2669, %v2691
  %v2693 = vpop.f32.mrf.mxu0
  %v2694 = vadd.f32 %v2669, %v2693
  %2695 = vmatmul.bf16.gmra.mxu0 %v1667
  %v2696 = vpop.f32.mrf.mxu0
  %v2697 = vadd.f32 %v2669, %v2696
  %v2698 = vpop.f32.mrf.mxu0
  %v2699 = vadd.f32 %v2669, %v2698
  %2700 = vmatmul.bf16.gmra.mxu0 %v1670
  %v2701 = vpop.f32.mrf.mxu0
  %v2702 = vadd.f32 %v2669, %v2701
  %v2703 = vpop.f32.mrf.mxu0
  %v2704 = vadd.f32 %v2669, %v2703
  %2705 = vmatmul.bf16.gmra.mxu0 %v1673
  %v2706 = vpop.f32.mrf.mxu0
  %v2707 = vadd.f32 %v2669, %v2706
  %v2708 = vpop.f32.mrf.mxu0
  %v2709 = vadd.f32 %v2669, %v2708
  %2710 = vmatmul.bf16.gmra.mxu0 %v1676
  %v2711 = vpop.f32.mrf.mxu0
  %v2712 = vadd.f32 %v2669, %v2711
  %v2713 = vpop.f32.mrf.mxu0
  %v2714 = vadd.f32 %v2669, %v2713
  %2715 = vmatmul.bf16.gmra.mxu0 %v1679
  %v2716 = vpop.f32.mrf.mxu0
  %v2717 = vadd.f32 %v2669, %v2716
  %v2718 = vpop.f32.mrf.mxu0
  %v2719 = vadd.f32 %v2669, %v2718
  %2720 = vmatmul.bf16.gmra.mxu0 %v1682
  %v2721 = vpop.f32.mrf.mxu0
  %v2722 = vadd.f32 %v2669, %v2721
  %v2723 = vpop.f32.mrf.mxu0
  %v2724 = vadd.f32 %v2669, %v2723
  %2725 = vmatmul.bf16.gmra.mxu0 %v1685
  %v2726 = vpop.f32.mrf.mxu0
  %v2727 = vadd.f32 %v2669, %v2726
  %v2728 = vpop.f32.mrf.mxu0
  %v2729 = vadd.f32 %v2669, %v2728
  %2730 = vmatmul.bf16.gmra.mxu0 %v1688
  %v2731 = vpop.f32.mrf.mxu0
  %v2732 = vadd.f32 %v2669, %v2731
  %v2733 = vpop.f32.mrf.mxu0
  %v2734 = vadd.f32 %v2669, %v2733
  %2735 = vmatmul.bf16.gmra.mxu0 %v1691
  %v2736 = vpop.f32.mrf.mxu0
  %v2737 = vadd.f32 %v2669, %v2736
  %v2738 = vpop.f32.mrf.mxu0
  %v2739 = vadd.f32 %v2669, %v2738
  %2740 = vmatmul.bf16.gmra.mxu0 %v1694
  %v2741 = vpop.f32.mrf.mxu0
  %v2742 = vadd.f32 %v2669, %v2741
  %v2743 = vpop.f32.mrf.mxu0
  %v2744 = vadd.f32 %v2669, %v2743
  %2745 = vmatmul.bf16.gmra.mxu0 %v1697
  %v2746 = vpop.f32.mrf.mxu0
  %v2747 = vadd.f32 %v2669, %v2746
  %v2748 = vpop.f32.mrf.mxu0
  %v2749 = vadd.f32 %v2669, %v2748
  %2750 = vmatmul.bf16.gmra.mxu0 %v1700
  %v2751 = vpop.f32.mrf.mxu0
  %v2752 = vadd.f32 %v2669, %v2751
  %v2753 = vpop.f32.mrf.mxu0
  %v2754 = vadd.f32 %v2669, %v2753
  %2755 = vmatmul.bf16.gmra.mxu0 %v1703
  %v2756 = vpop.f32.mrf.mxu0
  %v2757 = vadd.f32 %v2669, %v2756
  %v2758 = vpop.f32.mrf.mxu0
  %v2759 = vadd.f32 %v2669, %v2758
  %2760 = vmatmul.bf16.gmra.mxu0 %v1706
  %v2761 = vpop.f32.mrf.mxu0
  %v2762 = vadd.f32 %v2669, %v2761
  %v2763 = vpop.f32.mrf.mxu0
  %v2764 = vadd.f32 %v2669, %v2763
  %2765 = vdwg.mxu0
  %v2766 = vld [vmem:[%s4 + $0x10] ss:$0 sm:$0xff]
  %v2767 = vmul.f32 %v1327, %v2766
  %v2768 = vmul.f32 %v1328, %v2766
  %v2769 = vmul.f32 %v1329, %v2766
  %v2770 = vmul.f32 %v1330, %v2766
  %v2771 = vmul.f32 %v1331, %v2766
  %v2772 = vmul.f32 %v1332, %v2766
  %v2773 = vmul.f32 %v1333, %v2766
  %v2774 = vmul.f32 %v1334, %v2766
  %v2775 = vmul.f32 %v1335, %v2766
  %v2776 = vmul.f32 %v1336, %v2766
  %v2777 = vmul.f32 %v1337, %v2766
  %v2778 = vmul.f32 %v1338, %v2766
  %v2779 = vmul.f32 %v1339, %v2766
  %v2780 = vmul.f32 %v1340, %v2766
  %v2781 = vmul.f32 %v1341, %v2766
  %v2782 = vmul.f32 %v1342, %v2766
  %v2783 = vmul.f32 %v1343, %v2766
  %v2784 = vmul.f32 %v1344, %v2766
  %v2785 = vmul.f32 %v1345, %v2766
  %v2786 = vmul.f32 %v1346, %v2766
  %v2787 = vmul.f32 %v1347, %v2766
  %v2788 = vmul.f32 %v1348, %v2766
  %v2789 = vmul.f32 %v1349, %v2766
  %v2790 = vmul.f32 %v1350, %v2766
  %v2791 = vmul.f32 %v1351, %v2766
  %v2792 = vmul.f32 %v1352, %v2766
  %v2793 = vmul.f32 %v1353, %v2766
  %v2794 = vmul.f32 %v1354, %v2766
  %v2795 = vmul.f32 %v1355, %v2766
  %v2796 = vmul.f32 %v1356, %v2766
  %v2797 = vmul.f32 %v1357, %v2766
  %v2798 = vmul.f32 %v1358, %v2766
  %v2799 = vld [vmem:[%s4 + $0x11] ss:$0 sm:$0xff]
  %v2800 = vmul.f32 %v1423, %v2799
  %v2801 = vmul.f32 %v1424, %v2799
  %v2802 = vmul.f32 %v1425, %v2799
  %v2803 = vmul.f32 %v1426, %v2799
  %v2804 = vmul.f32 %v1427, %v2799
  %v2805 = vmul.f32 %v1428, %v2799
  %v2806 = vmul.f32 %v1429, %v2799
  %v2807 = vmul.f32 %v1430, %v2799
  %v2808 = vmul.f32 %v1431, %v2799
  %v2809 = vmul.f32 %v1432, %v2799
  %v2810 = vmul.f32 %v1433, %v2799
  %v2811 = vmul.f32 %v1434, %v2799
  %v2812 = vmul.f32 %v1435, %v2799
  %v2813 = vmul.f32 %v1436, %v2799
  %v2814 = vmul.f32 %v1437, %v2799
  %v2815 = vmul.f32 %v1438, %v2799
  %v2816 = vmul.f32 %v1439, %v2799
  %v2817 = vmul.f32 %v1440, %v2799
  %v2818 = vmul.f32 %v1441, %v2799
  %v2819 = vmul.f32 %v1442, %v2799
  %v2820 = vmul.f32 %v1443, %v2799
  %v2821 = vmul.f32 %v1444, %v2799
  %v2822 = vmul.f32 %v1445, %v2799
  %v2823 = vmul.f32 %v1446, %v2799
  %v2824 = vmul.f32 %v1447, %v2799
  %v2825 = vmul.f32 %v1448, %v2799
  %v2826 = vmul.f32 %v1449, %v2799
  %v2827 = vmul.f32 %v1450, %v2799
  %v2828 = vmul.f32 %v1451, %v2799
  %v2829 = vmul.f32 %v1452, %v2799
  %v2830 = vmul.f32 %v1453, %v2799
  %v2831 = vmul.f32 %v1454, %v2799
  %v2832 = vadd.f32 %v2767, %v2800
  %v2833 = vadd.f32 %v2768, %v2801
  %v2834 = vadd.f32 %v2769, %v2802
  %v2835 = vadd.f32 %v2770, %v2803
  %v2836 = vadd.f32 %v2771, %v2804
  %v2837 = vadd.f32 %v2772, %v2805
  %v2838 = vadd.f32 %v2773, %v2806
  %v2839 = vadd.f32 %v2774, %v2807
  %v2840 = vadd.f32 %v2775, %v2808
  %v2841 = vadd.f32 %v2776, %v2809
  %v2842 = vadd.f32 %v2777, %v2810
  %v2843 = vadd.f32 %v2778, %v2811
  %v2844 = vadd.f32 %v2779, %v2812
  %v2845 = vadd.f32 %v2780, %v2813
  %v2846 = vadd.f32 %v2781, %v2814
  %v2847 = vadd.f32 %v2782, %v2815
  %v2848 = vadd.f32 %v2783, %v2816
  %v2849 = vadd.f32 %v2784, %v2817
  %v2850 = vadd.f32 %v2785, %v2818
  %v2851 = vadd.f32 %v2786, %v2819
  %v2852 = vadd.f32 %v2787, %v2820
  %v2853 = vadd.f32 %v2788, %v2821
  %v2854 = vadd.f32 %v2789, %v2822
  %v2855 = vadd.f32 %v2790, %v2823
  %v2856 = vadd.f32 %v2791, %v2824
  %v2857 = vadd.f32 %v2792, %v2825
  %v2858 = vadd.f32 %v2793, %v2826
  %v2859 = vadd.f32 %v2794, %v2827
  %v2860 = vadd.f32 %v2795, %v2828
  %v2861 = vadd.f32 %v2796, %v2829
  %v2862 = vadd.f32 %v2797, %v2830
  %v2863 = vadd.f32 %v2798, %v2831
  %v2864 = vld [vmem:[%s4 + $0x12] ss:$0 sm:$0xff]
  %v2865 = vmul.f32 %v1519, %v2864
  %v2866 = vmul.f32 %v1520, %v2864
  %v2867 = vmul.f32 %v1521, %v2864
  %v2868 = vmul.f32 %v1522, %v2864
  %v2869 = vmul.f32 %v1523, %v2864
  %v2870 = vmul.f32 %v1524, %v2864
  %v2871 = vmul.f32 %v1525, %v2864
  %v2872 = vmul.f32 %v1526, %v2864
  %v2873 = vmul.f32 %v1527, %v2864
  %v2874 = vmul.f32 %v1528, %v2864
  %v2875 = vmul.f32 %v1529, %v2864
  %v2876 = vmul.f32 %v1530, %v2864
  %v2877 = vmul.f32 %v1531, %v2864
  %v2878 = vmul.f32 %v1532, %v2864
  %v2879 = vmul.f32 %v1533, %v2864
  %v2880 = vmul.f32 %v1534, %v2864
  %v2881 = vmul.f32 %v1535, %v2864
  %v2882 = vmul.f32 %v1536, %v2864
  %v2883 = vmul.f32 %v1537, %v2864
  %v2884 = vmul.f32 %v1538, %v2864
  %v2885 = vmul.f32 %v1539, %v2864
  %v2886 = vmul.f32 %v1540, %v2864
  %v2887 = vmul.f32 %v1541, %v2864
  %v2888 = vmul.f32 %v1542, %v2864
  %v2889 = vmul.f32 %v1543, %v2864
  %v2890 = vmul.f32 %v1544, %v2864
  %v2891 = vmul.f32 %v1545, %v2864
  %v2892 = vmul.f32 %v1546, %v2864
  %v2893 = vmul.f32 %v1547, %v2864
  %v2894 = vmul.f32 %v1548, %v2864
  %v2895 = vmul.f32 %v1549, %v2864
  %v2896 = vmul.f32 %v1550, %v2864
  %v2897 = vadd.f32 %v2832, %v2865
  %v2898 = vadd.f32 %v2833, %v2866
  %v2899 = vadd.f32 %v2834, %v2867
  %v2900 = vadd.f32 %v2835, %v2868
  %v2901 = vadd.f32 %v2836, %v2869
  %v2902 = vadd.f32 %v2837, %v2870
  %v2903 = vadd.f32 %v2838, %v2871
  %v2904 = vadd.f32 %v2839, %v2872
  %v2905 = vadd.f32 %v2840, %v2873
  %v2906 = vadd.f32 %v2841, %v2874
  %v2907 = vadd.f32 %v2842, %v2875
  %v2908 = vadd.f32 %v2843, %v2876
  %v2909 = vadd.f32 %v2844, %v2877
  %v2910 = vadd.f32 %v2845, %v2878
  %v2911 = vadd.f32 %v2846, %v2879
  %v2912 = vadd.f32 %v2847, %v2880
  %v2913 = vadd.f32 %v2848, %v2881
  %v2914 = vadd.f32 %v2849, %v2882
  %v2915 = vadd.f32 %v2850, %v2883
  %v2916 = vadd.f32 %v2851, %v2884
  %v2917 = vadd.f32 %v2852, %v2885
  %v2918 = vadd.f32 %v2853, %v2886
  %v2919 = vadd.f32 %v2854, %v2887
  %v2920 = vadd.f32 %v2855, %v2888
  %v2921 = vadd.f32 %v2856, %v2889
  %v2922 = vadd.f32 %v2857, %v2890
  %v2923 = vadd.f32 %v2858, %v2891
  %v2924 = vadd.f32 %v2859, %v2892
  %v2925 = vadd.f32 %v2860, %v2893
  %v2926 = vadd.f32 %v2861, %v2894
  %v2927 = vadd.f32 %v2862, %v2895
  %v2928 = vadd.f32 %v2863, %v2896
  %v2929 = vld [vmem:[%s4 + $0x13] ss:$0 sm:$0xff]
  %v2930 = vmul.f32 %v1615, %v2929
  %v2931 = vmul.f32 %v1616, %v2929
  %v2932 = vmul.f32 %v1617, %v2929
  %v2933 = vmul.f32 %v1618, %v2929
  %v2934 = vmul.f32 %v1619, %v2929
  %v2935 = vmul.f32 %v1620, %v2929
  %v2936 = vmul.f32 %v1621, %v2929
  %v2937 = vmul.f32 %v1622, %v2929
  %v2938 = vmul.f32 %v1623, %v2929
  %v2939 = vmul.f32 %v1624, %v2929
  %v2940 = vmul.f32 %v1625, %v2929
  %v2941 = vmul.f32 %v1626, %v2929
  %v2942 = vmul.f32 %v1627, %v2929
  %v2943 = vmul.f32 %v1628, %v2929
  %v2944 = vmul.f32 %v1629, %v2929
  %v2945 = vmul.f32 %v1630, %v2929
  %v2946 = vmul.f32 %v1631, %v2929
  %v2947 = vmul.f32 %v1632, %v2929
  %v2948 = vmul.f32 %v1633, %v2929
  %v2949 = vmul.f32 %v1634, %v2929
  %v2950 = vmul.f32 %v1635, %v2929
  %v2951 = vmul.f32 %v1636, %v2929
  %v2952 = vmul.f32 %v1637, %v2929
  %v2953 = vmul.f32 %v1638, %v2929
  %v2954 = vmul.f32 %v1639, %v2929
  %v2955 = vmul.f32 %v1640, %v2929
  %v2956 = vmul.f32 %v1641, %v2929
  %v2957 = vmul.f32 %v1642, %v2929
  %v2958 = vmul.f32 %v1643, %v2929
  %v2959 = vmul.f32 %v1644, %v2929
  %v2960 = vmul.f32 %v1645, %v2929
  %v2961 = vmul.f32 %v1646, %v2929
  %v2962 = vadd.f32 %v2897, %v2930
  %v2963 = vadd.f32 %v2898, %v2931
  %v2964 = vadd.f32 %v2899, %v2932
  %v2965 = vadd.f32 %v2900, %v2933
  %v2966 = vadd.f32 %v2901, %v2934
  %v2967 = vadd.f32 %v2902, %v2935
  %v2968 = vadd.f32 %v2903, %v2936
  %v2969 = vadd.f32 %v2904, %v2937
  %v2970 = vadd.f32 %v2905, %v2938
  %v2971 = vadd.f32 %v2906, %v2939
  %v2972 = vadd.f32 %v2907, %v2940
  %v2973 = vadd.f32 %v2908, %v2941
  %v2974 = vadd.f32 %v2909, %v2942
  %v2975 = vadd.f32 %v2910, %v2943
  %v2976 = vadd.f32 %v2911, %v2944
  %v2977 = vadd.f32 %v2912, %v2945
  %v2978 = vadd.f32 %v2913, %v2946
  %v2979 = vadd.f32 %v2914, %v2947
  %v2980 = vadd.f32 %v2915, %v2948
  %v2981 = vadd.f32 %v2916, %v2949
  %v2982 = vadd.f32 %v2917, %v2950
  %v2983 = vadd.f32 %v2918, %v2951
  %v2984 = vadd.f32 %v2919, %v2952
  %v2985 = vadd.f32 %v2920, %v2953
  %v2986 = vadd.f32 %v2921, %v2954
  %v2987 = vadd.f32 %v2922, %v2955
  %v2988 = vadd.f32 %v2923, %v2956
  %v2989 = vadd.f32 %v2924, %v2957
  %v2990 = vadd.f32 %v2925, %v2958
  %v2991 = vadd.f32 %v2926, %v2959
  %v2992 = vadd.f32 %v2927, %v2960
  %v2993 = vadd.f32 %v2928, %v2961
  %v2994 = vadd.f32 %v2687, %v2962
  %v2995 = vadd.f32 %v2689, %v2963
  %v2996 = vadd.f32 %v2692, %v2964
  %v2997 = vadd.f32 %v2694, %v2965
  %v2998 = vadd.f32 %v2697, %v2966
  %v2999 = vadd.f32 %v2699, %v2967
  %v3000 = vadd.f32 %v2702, %v2968
  %v3001 = vadd.f32 %v2704, %v2969
  %v3002 = vadd.f32 %v2707, %v2970
  %v3003 = vadd.f32 %v2709, %v2971
  %v3004 = vadd.f32 %v2712, %v2972
  %v3005 = vadd.f32 %v2714, %v2973
  %v3006 = vadd.f32 %v2717, %v2974
  %v3007 = vadd.f32 %v2719, %v2975
  %v3008 = vadd.f32 %v2722, %v2976
  %v3009 = vadd.f32 %v2724, %v2977
  %v3010 = vadd.f32 %v2727, %v2978
  %v3011 = vadd.f32 %v2729, %v2979
  %v3012 = vadd.f32 %v2732, %v2980
  %v3013 = vadd.f32 %v2734, %v2981
  %v3014 = vadd.f32 %v2737, %v2982
  %v3015 = vadd.f32 %v2739, %v2983
  %v3016 = vadd.f32 %v2742, %v2984
  %v3017 = vadd.f32 %v2744, %v2985
  %v3018 = vadd.f32 %v2747, %v2986
  %v3019 = vadd.f32 %v2749, %v2987
  %v3020 = vadd.f32 %v2752, %v2988
  %v3021 = vadd.f32 %v2754, %v2989
  %v3022 = vadd.f32 %v2757, %v2990
  %v3023 = vadd.f32 %v2759, %v2991
  %v3024 = vadd.f32 %v2762, %v2992
  %v3025 = vadd.f32 %v2764, %v2993
  %v3026 = vtanh.pop %v2994
  %v3027 = vtanh.pop %v2995
  %v3028 = vtanh.pop %v2996
  %v3029 = vtanh.pop %v2997
  %v3030 = vtanh.pop %v2998
  %v3031 = vtanh.pop %v2999
  %v3032 = vtanh.pop %v3000
  %v3033 = vtanh.pop %v3001
  %v3034 = vtanh.pop %v3002
  %v3035 = vtanh.pop %v3003
  %v3036 = vtanh.pop %v3004
  %v3037 = vtanh.pop %v3005
  %v3038 = vtanh.pop %v3006
  %v3039 = vtanh.pop %v3007
  %v3040 = vtanh.pop %v3008
  %v3041 = vtanh.pop %v3009
  %v3042 = vtanh.pop %v3010
  %v3043 = vtanh.pop %v3011
  %v3044 = vtanh.pop %v3012
  %v3045 = vtanh.pop %v3013
  %v3046 = vtanh.pop %v3014
  %v3047 = vtanh.pop %v3015
  %v3048 = vtanh.pop %v3016
  %v3049 = vtanh.pop %v3017
  %v3050 = vtanh.pop %v3018
  %v3051 = vtanh.pop %v3019
  %v3052 = vtanh.pop %v3020
  %v3053 = vtanh.pop %v3021
  %v3054 = vtanh.pop %v3022
  %v3055 = vtanh.pop %v3023
  %v3056 = vtanh.pop %v3024
  %v3057 = vtanh.pop %v3025
  %v3058 = vld [vmem:[%s3 + $0xc] sm:$0xf]
  %v3059 = vld [vmem:[%s3 + $0x1c] sm:$0xf]
  %v3060 = vld [vmem:[%s5 + $0x3] sm:$0x1]
  %v3062 = vperm.slane %v3060, 0
  %v3066 = vunpack.c.l.b16 %v3058
  %v3067 = vunpack.c.l.b16 %v3059
  %v3068 = vpack.c.b16 %v3067, %v3066
  %3070 = vmatpush.bf16.msra.mxu0 0
  %3071 = vmatpush.bf16.msra.mxu0 0
  %3072 = vmatpush.bf16.msra.mxu0 0
  %3073 = vmatpush.bf16.msra.mxu0 0
  %3074 = vmatpush.bf16.msra.mxu0 0
  %3075 = vmatpush.bf16.msra.mxu0 0
  %3076 = vmatpush.bf16.msra.mxu0 0
  %3077 = vmatpush.bf16.msra.mxu0 %v3068
  %3078 = vmatmul.bf16.gmra.mxu0 %v1661
  %v3079 = vpop.f32.mrf.mxu0
  %v3080 = vadd.f32 %v3062, %v3079
  %v3081 = vpop.f32.mrf.mxu0
  %v3082 = vadd.f32 %v3062, %v3081
  %3083 = vmatmul.bf16.gmra.mxu0 %v1664
  %v3084 = vpop.f32.mrf.mxu0
  %v3085 = vadd.f32 %v3062, %v3084
  %v3086 = vpop.f32.mrf.mxu0
  %v3087 = vadd.f32 %v3062, %v3086
  %3088 = vmatmul.bf16.gmra.mxu0 %v1667
  %v3089 = vpop.f32.mrf.mxu0
  %v3090 = vadd.f32 %v3062, %v3089
  %v3091 = vpop.f32.mrf.mxu0
  %v3092 = vadd.f32 %v3062, %v3091
  %3093 = vmatmul.bf16.gmra.mxu0 %v1670
  %v3094 = vpop.f32.mrf.mxu0
  %v3095 = vadd.f32 %v3062, %v3094
  %v3096 = vpop.f32.mrf.mxu0
  %v3097 = vadd.f32 %v3062, %v3096
  %3098 = vmatmul.bf16.gmra.mxu0 %v1673
  %v3099 = vpop.f32.mrf.mxu0
  %v3100 = vadd.f32 %v3062, %v3099
  %v3101 = vpop.f32.mrf.mxu0
  %v3102 = vadd.f32 %v3062, %v3101
  %3103 = vmatmul.bf16.gmra.mxu0 %v1676
  %v3104 = vpop.f32.mrf.mxu0
  %v3105 = vadd.f32 %v3062, %v3104
  %v3106 = vpop.f32.mrf.mxu0
  %v3107 = vadd.f32 %v3062, %v3106
  %3108 = vmatmul.bf16.gmra.mxu0 %v1679
  %v3109 = vpop.f32.mrf.mxu0
  %v3110 = vadd.f32 %v3062, %v3109
  %v3111 = vpop.f32.mrf.mxu0
  %v3112 = vadd.f32 %v3062, %v3111
  %3113 = vmatmul.bf16.gmra.mxu0 %v1682
  %v3114 = vpop.f32.mrf.mxu0
  %v3115 = vadd.f32 %v3062, %v3114
  %v3116 = vpop.f32.mrf.mxu0
  %v3117 = vadd.f32 %v3062, %v3116
  %3118 = vmatmul.bf16.gmra.mxu0 %v1685
  %v3119 = vpop.f32.mrf.mxu0
  %v3120 = vadd.f32 %v3062, %v3119
  %v3121 = vpop.f32.mrf.mxu0
  %v3122 = vadd.f32 %v3062, %v3121
  %3123 = vmatmul.bf16.gmra.mxu0 %v1688
  %v3124 = vpop.f32.mrf.mxu0
  %v3125 = vadd.f32 %v3062, %v3124
  %v3126 = vpop.f32.mrf.mxu0
  %v3127 = vadd.f32 %v3062, %v3126
  %3128 = vmatmul.bf16.gmra.mxu0 %v1691
  %v3129 = vpop.f32.mrf.mxu0
  %v3130 = vadd.f32 %v3062, %v3129
  %v3131 = vpop.f32.mrf.mxu0
  %v3132 = vadd.f32 %v3062, %v3131
  %3133 = vmatmul.bf16.gmra.mxu0 %v1694
  %v3134 = vpop.f32.mrf.mxu0
  %v3135 = vadd.f32 %v3062, %v3134
  %v3136 = vpop.f32.mrf.mxu0
  %v3137 = vadd.f32 %v3062, %v3136
  %3138 = vmatmul.bf16.gmra.mxu0 %v1697
  %v3139 = vpop.f32.mrf.mxu0
  %v3140 = vadd.f32 %v3062, %v3139
  %v3141 = vpop.f32.mrf.mxu0
  %v3142 = vadd.f32 %v3062, %v3141
  %3143 = vmatmul.bf16.gmra.mxu0 %v1700
  %v3144 = vpop.f32.mrf.mxu0
  %v3145 = vadd.f32 %v3062, %v3144
  %v3146 = vpop.f32.mrf.mxu0
  %v3147 = vadd.f32 %v3062, %v3146
  %3148 = vmatmul.bf16.gmra.mxu0 %v1703
  %v3149 = vpop.f32.mrf.mxu0
  %v3150 = vadd.f32 %v3062, %v3149
  %v3151 = vpop.f32.mrf.mxu0
  %v3152 = vadd.f32 %v3062, %v3151
  %3153 = vmatmul.bf16.gmra.mxu0 %v1706
  %v3154 = vpop.f32.mrf.mxu0
  %v3155 = vadd.f32 %v3062, %v3154
  %v3156 = vpop.f32.mrf.mxu0
  %v3157 = vadd.f32 %v3062, %v3156
  %3158 = vdwg.mxu0
  %v3159 = vld [vmem:[%s4 + $0x18] ss:$0 sm:$0xff]
  %v3160 = vmul.f32 %v1327, %v3159
  %v3161 = vmul.f32 %v1328, %v3159
  %v3162 = vmul.f32 %v1329, %v3159
  %v3163 = vmul.f32 %v1330, %v3159
  %v3164 = vmul.f32 %v1331, %v3159
  %v3165 = vmul.f32 %v1332, %v3159
  %v3166 = vmul.f32 %v1333, %v3159
  %v3167 = vmul.f32 %v1334, %v3159
  %v3168 = vmul.f32 %v1335, %v3159
  %v3169 = vmul.f32 %v1336, %v3159
  %v3170 = vmul.f32 %v1337, %v3159
  %v3171 = vmul.f32 %v1338, %v3159
  %v3172 = vmul.f32 %v1339, %v3159
  %v3173 = vmul.f32 %v1340, %v3159
  %v3174 = vmul.f32 %v1341, %v3159
  %v3175 = vmul.f32 %v1342, %v3159
  %v3176 = vmul.f32 %v1343, %v3159
  %v3177 = vmul.f32 %v1344, %v3159
  %v3178 = vmul.f32 %v1345, %v3159
  %v3179 = vmul.f32 %v1346, %v3159
  %v3180 = vmul.f32 %v1347, %v3159
  %v3181 = vmul.f32 %v1348, %v3159
  %v3182 = vmul.f32 %v1349, %v3159
  %v3183 = vmul.f32 %v1350, %v3159
  %v3184 = vmul.f32 %v1351, %v3159
  %v3185 = vmul.f32 %v1352, %v3159
  %v3186 = vmul.f32 %v1353, %v3159
  %v3187 = vmul.f32 %v1354, %v3159
  %v3188 = vmul.f32 %v1355, %v3159
  %v3189 = vmul.f32 %v1356, %v3159
  %v3190 = vmul.f32 %v1357, %v3159
  %v3191 = vmul.f32 %v1358, %v3159
  %v3192 = vld [vmem:[%s4 + $0x19] ss:$0 sm:$0xff]
  %v3193 = vmul.f32 %v1423, %v3192
  %v3194 = vmul.f32 %v1424, %v3192
  %v3195 = vmul.f32 %v1425, %v3192
  %v3196 = vmul.f32 %v1426, %v3192
  %v3197 = vmul.f32 %v1427, %v3192
  %v3198 = vmul.f32 %v1428, %v3192
  %v3199 = vmul.f32 %v1429, %v3192
  %v3200 = vmul.f32 %v1430, %v3192
  %v3201 = vmul.f32 %v1431, %v3192
  %v3202 = vmul.f32 %v1432, %v3192
  %v3203 = vmul.f32 %v1433, %v3192
  %v3204 = vmul.f32 %v1434, %v3192
  %v3205 = vmul.f32 %v1435, %v3192
  %v3206 = vmul.f32 %v1436, %v3192
  %v3207 = vmul.f32 %v1437, %v3192
  %v3208 = vmul.f32 %v1438, %v3192
  %v3209 = vmul.f32 %v1439, %v3192
  %v3210 = vmul.f32 %v1440, %v3192
  %v3211 = vmul.f32 %v1441, %v3192
  %v3212 = vmul.f32 %v1442, %v3192
  %v3213 = vmul.f32 %v1443, %v3192
  %v3214 = vmul.f32 %v1444, %v3192
  %v3215 = vmul.f32 %v1445, %v3192
  %v3216 = vmul.f32 %v1446, %v3192
  %v3217 = vmul.f32 %v1447, %v3192
  %v3218 = vmul.f32 %v1448, %v3192
  %v3219 = vmul.f32 %v1449, %v3192
  %v3220 = vmul.f32 %v1450, %v3192
  %v3221 = vmul.f32 %v1451, %v3192
  %v3222 = vmul.f32 %v1452, %v3192
  %v3223 = vmul.f32 %v1453, %v3192
  %v3224 = vmul.f32 %v1454, %v3192
  %v3225 = vadd.f32 %v3160, %v3193
  %v3226 = vadd.f32 %v3161, %v3194
  %v3227 = vadd.f32 %v3162, %v3195
  %v3228 = vadd.f32 %v3163, %v3196
  %v3229 = vadd.f32 %v3164, %v3197
  %v3230 = vadd.f32 %v3165, %v3198
  %v3231 = vadd.f32 %v3166, %v3199
  %v3232 = vadd.f32 %v3167, %v3200
  %v3233 = vadd.f32 %v3168, %v3201
  %v3234 = vadd.f32 %v3169, %v3202
  %v3235 = vadd.f32 %v3170, %v3203
  %v3236 = vadd.f32 %v3171, %v3204
  %v3237 = vadd.f32 %v3172, %v3205
  %v3238 = vadd.f32 %v3173, %v3206
  %v3239 = vadd.f32 %v3174, %v3207
  %v3240 = vadd.f32 %v3175, %v3208
  %v3241 = vadd.f32 %v3176, %v3209
  %v3242 = vadd.f32 %v3177, %v3210
  %v3243 = vadd.f32 %v3178, %v3211
  %v3244 = vadd.f32 %v3179, %v3212
  %v3245 = vadd.f32 %v3180, %v3213
  %v3246 = vadd.f32 %v3181, %v3214
  %v3247 = vadd.f32 %v3182, %v3215
  %v3248 = vadd.f32 %v3183, %v3216
  %v3249 = vadd.f32 %v3184, %v3217
  %v3250 = vadd.f32 %v3185, %v3218
  %v3251 = vadd.f32 %v3186, %v3219
  %v3252 = vadd.f32 %v3187, %v3220
  %v3253 = vadd.f32 %v3188, %v3221
  %v3254 = vadd.f32 %v3189, %v3222
  %v3255 = vadd.f32 %v3190, %v3223
  %v3256 = vadd.f32 %v3191, %v3224
  %v3257 = vld [vmem:[%s4 + $0x1a] ss:$0 sm:$0xff]
  %v3258 = vmul.f32 %v1519, %v3257
  %v3259 = vmul.f32 %v1520, %v3257
  %v3260 = vmul.f32 %v1521, %v3257
  %v3261 = vmul.f32 %v1522, %v3257
  %v3262 = vmul.f32 %v1523, %v3257
  %v3263 = vmul.f32 %v1524, %v3257
  %v3264 = vmul.f32 %v1525, %v3257
  %v3265 = vmul.f32 %v1526, %v3257
  %v3266 = vmul.f32 %v1527, %v3257
  %v3267 = vmul.f32 %v1528, %v3257
  %v3268 = vmul.f32 %v1529, %v3257
  %v3269 = vmul.f32 %v1530, %v3257
  %v3270 = vmul.f32 %v1531, %v3257
  %v3271 = vmul.f32 %v1532, %v3257
  %v3272 = vmul.f32 %v1533, %v3257
  %v3273 = vmul.f32 %v1534, %v3257
  %v3274 = vmul.f32 %v1535, %v3257
  %v3275 = vmul.f32 %v1536, %v3257
  %v3276 = vmul.f32 %v1537, %v3257
  %v3277 = vmul.f32 %v1538, %v3257
  %v3278 = vmul.f32 %v1539, %v3257
  %v3279 = vmul.f32 %v1540, %v3257
  %v3280 = vmul.f32 %v1541, %v3257
  %v3281 = vmul.f32 %v1542, %v3257
  %v3282 = vmul.f32 %v1543, %v3257
  %v3283 = vmul.f32 %v1544, %v3257
  %v3284 = vmul.f32 %v1545, %v3257
  %v3285 = vmul.f32 %v1546, %v3257
  %v3286 = vmul.f32 %v1547, %v3257
  %v3287 = vmul.f32 %v1548, %v3257
  %v3288 = vmul.f32 %v1549, %v3257
  %v3289 = vmul.f32 %v1550, %v3257
  %v3290 = vadd.f32 %v3225, %v3258
  %v3291 = vadd.f32 %v3226, %v3259
  %v3292 = vadd.f32 %v3227, %v3260
  %v3293 = vadd.f32 %v3228, %v3261
  %v3294 = vadd.f32 %v3229, %v3262
  %v3295 = vadd.f32 %v3230, %v3263
  %v3296 = vadd.f32 %v3231, %v3264
  %v3297 = vadd.f32 %v3232, %v3265
  %v3298 = vadd.f32 %v3233, %v3266
  %v3299 = vadd.f32 %v3234, %v3267
  %v3300 = vadd.f32 %v3235, %v3268
  %v3301 = vadd.f32 %v3236, %v3269
  %v3302 = vadd.f32 %v3237, %v3270
  %v3303 = vadd.f32 %v3238, %v3271
  %v3304 = vadd.f32 %v3239, %v3272
  %v3305 = vadd.f32 %v3240, %v3273
  %v3306 = vadd.f32 %v3241, %v3274
  %v3307 = vadd.f32 %v3242, %v3275
  %v3308 = vadd.f32 %v3243, %v3276
  %v3309 = vadd.f32 %v3244, %v3277
  %v3310 = vadd.f32 %v3245, %v3278
  %v3311 = vadd.f32 %v3246, %v3279
  %v3312 = vadd.f32 %v3247, %v3280
  %v3313 = vadd.f32 %v3248, %v3281
  %v3314 = vadd.f32 %v3249, %v3282
  %v3315 = vadd.f32 %v3250, %v3283
  %v3316 = vadd.f32 %v3251, %v3284
  %v3317 = vadd.f32 %v3252, %v3285
  %v3318 = vadd.f32 %v3253, %v3286
  %v3319 = vadd.f32 %v3254, %v3287
  %v3320 = vadd.f32 %v3255, %v3288
  %v3321 = vadd.f32 %v3256, %v3289
  %v3322 = vld [vmem:[%s4 + $0x1b] ss:$0 sm:$0xff]
  %v3323 = vmul.f32 %v1615, %v3322
  %v3324 = vmul.f32 %v1616, %v3322
  %v3325 = vmul.f32 %v1617, %v3322
  %v3326 = vmul.f32 %v1618, %v3322
  %v3327 = vmul.f32 %v1619, %v3322
  %v3328 = vmul.f32 %v1620, %v3322
  %v3329 = vmul.f32 %v1621, %v3322
  %v3330 = vmul.f32 %v1622, %v3322
  %v3331 = vmul.f32 %v1623, %v3322
  %v3332 = vmul.f32 %v1624, %v3322
  %v3333 = vmul.f32 %v1625, %v3322
  %v3334 = vmul.f32 %v1626, %v3322
  %v3335 = vmul.f32 %v1627, %v3322
  %v3336 = vmul.f32 %v1628, %v3322
  %v3337 = vmul.f32 %v1629, %v3322
  %v3338 = vmul.f32 %v1630, %v3322
  %v3339 = vmul.f32 %v1631, %v3322
  %v3340 = vmul.f32 %v1632, %v3322
  %v3341 = vmul.f32 %v1633, %v3322
  %v3342 = vmul.f32 %v1634, %v3322
  %v3343 = vmul.f32 %v1635, %v3322
  %v3344 = vmul.f32 %v1636, %v3322
  %v3345 = vmul.f32 %v1637, %v3322
  %v3346 = vmul.f32 %v1638, %v3322
  %v3347 = vmul.f32 %v1639, %v3322
  %v3348 = vmul.f32 %v1640, %v3322
  %v3349 = vmul.f32 %v1641, %v3322
  %v3350 = vmul.f32 %v1642, %v3322
  %v3351 = vmul.f32 %v1643, %v3322
  %v3352 = vmul.f32 %v1644, %v3322
  %v3353 = vmul.f32 %v1645, %v3322
  %v3354 = vmul.f32 %v1646, %v3322
  %v3355 = vadd.f32 %v3290, %v3323
  %v3356 = vadd.f32 %v3291, %v3324
  %v3357 = vadd.f32 %v3292, %v3325
  %v3358 = vadd.f32 %v3293, %v3326
  %v3359 = vadd.f32 %v3294, %v3327
  %v3360 = vadd.f32 %v3295, %v3328
  %v3361 = vadd.f32 %v3296, %v3329
  %v3362 = vadd.f32 %v3297, %v3330
  %v3363 = vadd.f32 %v3298, %v3331
  %v3364 = vadd.f32 %v3299, %v3332
  %v3365 = vadd.f32 %v3300, %v3333
  %v3366 = vadd.f32 %v3301, %v3334
  %v3367 = vadd.f32 %v3302, %v3335
  %v3368 = vadd.f32 %v3303, %v3336
  %v3369 = vadd.f32 %v3304, %v3337
  %v3370 = vadd.f32 %v3305, %v3338
  %v3371 = vadd.f32 %v3306, %v3339
  %v3372 = vadd.f32 %v3307, %v3340
  %v3373 = vadd.f32 %v3308, %v3341
  %v3374 = vadd.f32 %v3309, %v3342
  %v3375 = vadd.f32 %v3310, %v3343
  %v3376 = vadd.f32 %v3311, %v3344
  %v3377 = vadd.f32 %v3312, %v3345
  %v3378 = vadd.f32 %v3313, %v3346
  %v3379 = vadd.f32 %v3314, %v3347
  %v3380 = vadd.f32 %v3315, %v3348
  %v3381 = vadd.f32 %v3316, %v3349
  %v3382 = vadd.f32 %v3317, %v3350
  %v3383 = vadd.f32 %v3318, %v3351
  %v3384 = vadd.f32 %v3319, %v3352
  %v3385 = vadd.f32 %v3320, %v3353
  %v3386 = vadd.f32 %v3321, %v3354
  %v3387 = vadd.f32 %v3080, %v3355
  %v3388 = vadd.f32 %v3082, %v3356
  %v3389 = vadd.f32 %v3085, %v3357
  %v3390 = vadd.f32 %v3087, %v3358
  %v3391 = vadd.f32 %v3090, %v3359
  %v3392 = vadd.f32 %v3092, %v3360
  %v3393 = vadd.f32 %v3095, %v3361
  %v3394 = vadd.f32 %v3097, %v3362
  %v3395 = vadd.f32 %v3100, %v3363
  %v3396 = vadd.f32 %v3102, %v3364
  %v3397 = vadd.f32 %v3105, %v3365
  %v3398 = vadd.f32 %v3107, %v3366
  %v3399 = vadd.f32 %v3110, %v3367
  %v3400 = vadd.f32 %v3112, %v3368
  %v3401 = vadd.f32 %v3115, %v3369
  %v3402 = vadd.f32 %v3117, %v3370
  %v3403 = vadd.f32 %v3120, %v3371
  %v3404 = vadd.f32 %v3122, %v3372
  %v3405 = vadd.f32 %v3125, %v3373
  %v3406 = vadd.f32 %v3127, %v3374
  %v3407 = vadd.f32 %v3130, %v3375
  %v3408 = vadd.f32 %v3132, %v3376
  %v3409 = vadd.f32 %v3135, %v3377
  %v3410 = vadd.f32 %v3137, %v3378
  %v3411 = vadd.f32 %v3140, %v3379
  %v3412 = vadd.f32 %v3142, %v3380
  %v3413 = vadd.f32 %v3145, %v3381
  %v3414 = vadd.f32 %v3147, %v3382
  %v3415 = vadd.f32 %v3150, %v3383
  %v3416 = vadd.f32 %v3152, %v3384
  %v3417 = vadd.f32 %v3155, %v3385
  %v3418 = vadd.f32 %v3157, %v3386
  %v3419 = vxor.u32 %v3387, 2147483648
  %v3420 = vxor.u32 %v3388, 2147483648
  %v3421 = vxor.u32 %v3389, 2147483648
  %v3422 = vxor.u32 %v3390, 2147483648
  %v3423 = vxor.u32 %v3391, 2147483648
  %v3424 = vxor.u32 %v3392, 2147483648
  %v3425 = vxor.u32 %v3393, 2147483648
  %v3426 = vxor.u32 %v3394, 2147483648
  %v3427 = vxor.u32 %v3395, 2147483648
  %v3428 = vxor.u32 %v3396, 2147483648
  %v3429 = vxor.u32 %v3397, 2147483648
  %v3430 = vxor.u32 %v3398, 2147483648
  %v3431 = vxor.u32 %v3399, 2147483648
  %v3432 = vxor.u32 %v3400, 2147483648
  %v3433 = vxor.u32 %v3401, 2147483648
  %v3434 = vxor.u32 %v3402, 2147483648
  %v3435 = vxor.u32 %v3403, 2147483648
  %v3436 = vxor.u32 %v3404, 2147483648
  %v3437 = vxor.u32 %v3405, 2147483648
  %v3438 = vxor.u32 %v3406, 2147483648
  %v3439 = vxor.u32 %v3407, 2147483648
  %v3440 = vxor.u32 %v3408, 2147483648
  %v3441 = vxor.u32 %v3409, 2147483648
  %v3442 = vxor.u32 %v3410, 2147483648
  %v3443 = vxor.u32 %v3411, 2147483648
  %v3444 = vxor.u32 %v3412, 2147483648
  %v3445 = vxor.u32 %v3413, 2147483648
  %v3446 = vxor.u32 %v3414, 2147483648
  %v3447 = vxor.u32 %v3415, 2147483648
  %v3448 = vxor.u32 %v3416, 2147483648
  %v3449 = vxor.u32 %v3417, 2147483648
  %v3450 = vxor.u32 %v3418, 2147483648
  %v3451 = vmul.f32 %v3419, 1.442695
  %v3452 = vpow.pop %v3451
  %v3453 = vmul.f32 %v3420, 1.442695
  %v3454 = vpow.pop %v3453
  %v3455 = vmul.f32 %v3421, 1.442695
  %v3456 = vpow.pop %v3455
  %v3457 = vmul.f32 %v3422, 1.442695
  %v3458 = vpow.pop %v3457
  %v3459 = vmul.f32 %v3423, 1.442695
  %v3460 = vpow.pop %v3459
  %v3461 = vmul.f32 %v3424, 1.442695
  %v3462 = vpow.pop %v3461
  %v3463 = vmul.f32 %v3425, 1.442695
  %v3464 = vpow.pop %v3463
  %v3465 = vmul.f32 %v3426, 1.442695
  %v3466 = vpow.pop %v3465
  %v3467 = vmul.f32 %v3427, 1.442695
  %v3468 = vpow.pop %v3467
  %v3469 = vmul.f32 %v3428, 1.442695
  %v3470 = vpow.pop %v3469
  %v3471 = vmul.f32 %v3429, 1.442695
  %v3472 = vpow.pop %v3471
  %v3473 = vmul.f32 %v3430, 1.442695
  %v3474 = vpow.pop %v3473
  %v3475 = vmul.f32 %v3431, 1.442695
  %v3476 = vpow.pop %v3475
  %v3477 = vmul.f32 %v3432, 1.442695
  %v3478 = vpow.pop %v3477
  %v3479 = vmul.f32 %v3433, 1.442695
  %v3480 = vpow.pop %v3479
  %v3481 = vmul.f32 %v3434, 1.442695
  %v3482 = vpow.pop %v3481
  %v3483 = vmul.f32 %v3435, 1.442695
  %v3484 = vpow.pop %v3483
  %v3485 = vmul.f32 %v3436, 1.442695
  %v3486 = vpow.pop %v3485
  %v3487 = vmul.f32 %v3437, 1.442695
  %v3488 = vpow.pop %v3487
  %v3489 = vmul.f32 %v3438, 1.442695
  %v3490 = vpow.pop %v3489
  %v3491 = vmul.f32 %v3439, 1.442695
  %v3492 = vpow.pop %v3491
  %v3493 = vmul.f32 %v3440, 1.442695
  %v3494 = vpow.pop %v3493
  %v3495 = vmul.f32 %v3441, 1.442695
  %v3496 = vpow.pop %v3495
  %v3497 = vmul.f32 %v3442, 1.442695
  %v3498 = vpow.pop %v3497
  %v3499 = vmul.f32 %v3443, 1.442695
  %v3500 = vpow.pop %v3499
  %v3501 = vmul.f32 %v3444, 1.442695
  %v3502 = vpow.pop %v3501
  %v3503 = vmul.f32 %v3445, 1.442695
  %v3504 = vpow.pop %v3503
  %v3505 = vmul.f32 %v3446, 1.442695
  %v3506 = vpow.pop %v3505
  %v3507 = vmul.f32 %v3447, 1.442695
  %v3508 = vpow.pop %v3507
  %v3509 = vmul.f32 %v3448, 1.442695
  %v3510 = vpow.pop %v3509
  %v3511 = vmul.f32 %v3449, 1.442695
  %v3512 = vpow.pop %v3511
  %v3513 = vmul.f32 %v3450, 1.442695
  %v3514 = vpow.pop %v3513
  %v3515 = vadd.f32 %v3452, 1.0
  %v3516 = vadd.f32 %v3454, 1.0
  %v3517 = vadd.f32 %v3456, 1.0
  %v3518 = vadd.f32 %v3458, 1.0
  %v3519 = vadd.f32 %v3460, 1.0
  %v3520 = vadd.f32 %v3462, 1.0
  %v3521 = vadd.f32 %v3464, 1.0
  %v3522 = vadd.f32 %v3466, 1.0
  %v3523 = vadd.f32 %v3468, 1.0
  %v3524 = vadd.f32 %v3470, 1.0
  %v3525 = vadd.f32 %v3472, 1.0
  %v3526 = vadd.f32 %v3474, 1.0
  %v3527 = vadd.f32 %v3476, 1.0
  %v3528 = vadd.f32 %v3478, 1.0
  %v3529 = vadd.f32 %v3480, 1.0
  %v3530 = vadd.f32 %v3482, 1.0
  %v3531 = vadd.f32 %v3484, 1.0
  %v3532 = vadd.f32 %v3486, 1.0
  %v3533 = vadd.f32 %v3488, 1.0
  %v3534 = vadd.f32 %v3490, 1.0
  %v3535 = vadd.f32 %v3492, 1.0
  %v3536 = vadd.f32 %v3494, 1.0
  %v3537 = vadd.f32 %v3496, 1.0
  %v3538 = vadd.f32 %v3498, 1.0
  %v3539 = vadd.f32 %v3500, 1.0
  %v3540 = vadd.f32 %v3502, 1.0
  %v3541 = vadd.f32 %v3504, 1.0
  %v3542 = vadd.f32 %v3506, 1.0
  %v3543 = vadd.f32 %v3508, 1.0
  %v3544 = vadd.f32 %v3510, 1.0
  %v3545 = vadd.f32 %v3512, 1.0
  %v3546 = vadd.f32 %v3514, 1.0
  %v3547 = vrcp.pop %v3515
  %v3548 = vmul.f32 %v3515, %v3547
  %v3549 = vsub.f32 1.0, %v3548
  %v3550 = vmul.f32 %v3547, %v3549
  %v3551 = vadd.f32 %v3547, %v3550
  %vm3552 = vweird.f32 %v3515
  %vm3553 = vweird.f32 %v3547
  %vm3554 = vmor %vm3552, %vm3553
  %v3555 = vsel %vm3554, %v3547, %v3551
  %v3556 = vand.u32 2147483647, %v3515
  %vm3557 = vcmp.eq.f32.partialorder %v3556, 8.507059e+37
  %v3558 = vand.u32 %v3515, 2147483648
  %v3559 = vor.u32 1.1754944e-38, %v3558
  %v3560 = vsel %vm3557, %v3559, %v3555
  %v3561 = vmul.f32 1.0, %v3560
  %v3562 = vrcp.pop %v3516
  %v3563 = vmul.f32 %v3516, %v3562
  %v3564 = vsub.f32 1.0, %v3563
  %v3565 = vmul.f32 %v3562, %v3564
  %v3566 = vadd.f32 %v3562, %v3565
  %vm3567 = vweird.f32 %v3516
  %vm3568 = vweird.f32 %v3562
  %vm3569 = vmor %vm3567, %vm3568
  %v3570 = vsel %vm3569, %v3562, %v3566
  %v3571 = vand.u32 2147483647, %v3516
  %vm3572 = vcmp.eq.f32.partialorder %v3571, 8.507059e+37
  %v3573 = vand.u32 %v3516, 2147483648
  %v3574 = vor.u32 1.1754944e-38, %v3573
  %v3575 = vsel %vm3572, %v3574, %v3570
  %v3576 = vmul.f32 1.0, %v3575
  %v3577 = vrcp.pop %v3517
  %v3578 = vmul.f32 %v3517, %v3577
  %v3579 = vsub.f32 1.0, %v3578
  %v3580 = vmul.f32 %v3577, %v3579
  %v3581 = vadd.f32 %v3577, %v3580
  %vm3582 = vweird.f32 %v3517
  %vm3583 = vweird.f32 %v3577
  %vm3584 = vmor %vm3582, %vm3583
  %v3585 = vsel %vm3584, %v3577, %v3581
  %v3586 = vand.u32 2147483647, %v3517
  %vm3587 = vcmp.eq.f32.partialorder %v3586, 8.507059e+37
  %v3588 = vand.u32 %v3517, 2147483648
  %v3589 = vor.u32 1.1754944e-38, %v3588
  %v3590 = vsel %vm3587, %v3589, %v3585
  %v3591 = vmul.f32 1.0, %v3590
  %v3592 = vrcp.pop %v3518
  %v3593 = vmul.f32 %v3518, %v3592
  %v3594 = vsub.f32 1.0, %v3593
  %v3595 = vmul.f32 %v3592, %v3594
  %v3596 = vadd.f32 %v3592, %v3595
  %vm3597 = vweird.f32 %v3518
  %vm3598 = vweird.f32 %v3592
  %vm3599 = vmor %vm3597, %vm3598
  %v3600 = vsel %vm3599, %v3592, %v3596
  %v3601 = vand.u32 2147483647, %v3518
  %vm3602 = vcmp.eq.f32.partialorder %v3601, 8.507059e+37
  %v3603 = vand.u32 %v3518, 2147483648
  %v3604 = vor.u32 1.1754944e-38, %v3603
  %v3605 = vsel %vm3602, %v3604, %v3600
  %v3606 = vmul.f32 1.0, %v3605
  %v3607 = vrcp.pop %v3519
  %v3608 = vmul.f32 %v3519, %v3607
  %v3609 = vsub.f32 1.0, %v3608
  %v3610 = vmul.f32 %v3607, %v3609
  %v3611 = vadd.f32 %v3607, %v3610
  %vm3612 = vweird.f32 %v3519
  %vm3613 = vweird.f32 %v3607
  %vm3614 = vmor %vm3612, %vm3613
  %v3615 = vsel %vm3614, %v3607, %v3611
  %v3616 = vand.u32 2147483647, %v3519
  %vm3617 = vcmp.eq.f32.partialorder %v3616, 8.507059e+37
  %v3618 = vand.u32 %v3519, 2147483648
  %v3619 = vor.u32 1.1754944e-38, %v3618
  %v3620 = vsel %vm3617, %v3619, %v3615
  %v3621 = vmul.f32 1.0, %v3620
  %v3622 = vrcp.pop %v3520
  %v3623 = vmul.f32 %v3520, %v3622
  %v3624 = vsub.f32 1.0, %v3623
  %v3625 = vmul.f32 %v3622, %v3624
  %v3626 = vadd.f32 %v3622, %v3625
  %vm3627 = vweird.f32 %v3520
  %vm3628 = vweird.f32 %v3622
  %vm3629 = vmor %vm3627, %vm3628
  %v3630 = vsel %vm3629, %v3622, %v3626
  %v3631 = vand.u32 2147483647, %v3520
  %vm3632 = vcmp.eq.f32.partialorder %v3631, 8.507059e+37
  %v3633 = vand.u32 %v3520, 2147483648
  %v3634 = vor.u32 1.1754944e-38, %v3633
  %v3635 = vsel %vm3632, %v3634, %v3630
  %v3636 = vmul.f32 1.0, %v3635
  %v3637 = vrcp.pop %v3521
  %v3638 = vmul.f32 %v3521, %v3637
  %v3639 = vsub.f32 1.0, %v3638
  %v3640 = vmul.f32 %v3637, %v3639
  %v3641 = vadd.f32 %v3637, %v3640
  %vm3642 = vweird.f32 %v3521
  %vm3643 = vweird.f32 %v3637
  %vm3644 = vmor %vm3642, %vm3643
  %v3645 = vsel %vm3644, %v3637, %v3641
  %v3646 = vand.u32 2147483647, %v3521
  %vm3647 = vcmp.eq.f32.partialorder %v3646, 8.507059e+37
  %v3648 = vand.u32 %v3521, 2147483648
  %v3649 = vor.u32 1.1754944e-38, %v3648
  %v3650 = vsel %vm3647, %v3649, %v3645
  %v3651 = vmul.f32 1.0, %v3650
  %v3652 = vrcp.pop %v3522
  %v3653 = vmul.f32 %v3522, %v3652
  %v3654 = vsub.f32 1.0, %v3653
  %v3655 = vmul.f32 %v3652, %v3654
  %v3656 = vadd.f32 %v3652, %v3655
  %vm3657 = vweird.f32 %v3522
  %vm3658 = vweird.f32 %v3652
  %vm3659 = vmor %vm3657, %vm3658
  %v3660 = vsel %vm3659, %v3652, %v3656
  %v3661 = vand.u32 2147483647, %v3522
  %vm3662 = vcmp.eq.f32.partialorder %v3661, 8.507059e+37
  %v3663 = vand.u32 %v3522, 2147483648
  %v3664 = vor.u32 1.1754944e-38, %v3663
  %v3665 = vsel %vm3662, %v3664, %v3660
  %v3666 = vmul.f32 1.0, %v3665
  %v3667 = vrcp.pop %v3523
  %v3668 = vmul.f32 %v3523, %v3667
  %v3669 = vsub.f32 1.0, %v3668
  %v3670 = vmul.f32 %v3667, %v3669
  %v3671 = vadd.f32 %v3667, %v3670
  %vm3672 = vweird.f32 %v3523
  %vm3673 = vweird.f32 %v3667
  %vm3674 = vmor %vm3672, %vm3673
  %v3675 = vsel %vm3674, %v3667, %v3671
  %v3676 = vand.u32 2147483647, %v3523
  %vm3677 = vcmp.eq.f32.partialorder %v3676, 8.507059e+37
  %v3678 = vand.u32 %v3523, 2147483648
  %v3679 = vor.u32 1.1754944e-38, %v3678
  %v3680 = vsel %vm3677, %v3679, %v3675
  %v3681 = vmul.f32 1.0, %v3680
  %v3682 = vrcp.pop %v3524
  %v3683 = vmul.f32 %v3524, %v3682
  %v3684 = vsub.f32 1.0, %v3683
  %v3685 = vmul.f32 %v3682, %v3684
  %v3686 = vadd.f32 %v3682, %v3685
  %vm3687 = vweird.f32 %v3524
  %vm3688 = vweird.f32 %v3682
  %vm3689 = vmor %vm3687, %vm3688
  %v3690 = vsel %vm3689, %v3682, %v3686
  %v3691 = vand.u32 2147483647, %v3524
  %vm3692 = vcmp.eq.f32.partialorder %v3691, 8.507059e+37
  %v3693 = vand.u32 %v3524, 2147483648
  %v3694 = vor.u32 1.1754944e-38, %v3693
  %v3695 = vsel %vm3692, %v3694, %v3690
  %v3696 = vmul.f32 1.0, %v3695
  %v3697 = vrcp.pop %v3525
  %v3698 = vmul.f32 %v3525, %v3697
  %v3699 = vsub.f32 1.0, %v3698
  %v3700 = vmul.f32 %v3697, %v3699
  %v3701 = vadd.f32 %v3697, %v3700
  %vm3702 = vweird.f32 %v3525
  %vm3703 = vweird.f32 %v3697
  %vm3704 = vmor %vm3702, %vm3703
  %v3705 = vsel %vm3704, %v3697, %v3701
  %v3706 = vand.u32 2147483647, %v3525
  %vm3707 = vcmp.eq.f32.partialorder %v3706, 8.507059e+37
  %v3708 = vand.u32 %v3525, 2147483648
  %v3709 = vor.u32 1.1754944e-38, %v3708
  %v3710 = vsel %vm3707, %v3709, %v3705
  %v3711 = vmul.f32 1.0, %v3710
  %v3712 = vrcp.pop %v3526
  %v3713 = vmul.f32 %v3526, %v3712
  %v3714 = vsub.f32 1.0, %v3713
  %v3715 = vmul.f32 %v3712, %v3714
  %v3716 = vadd.f32 %v3712, %v3715
  %vm3717 = vweird.f32 %v3526
  %vm3718 = vweird.f32 %v3712
  %vm3719 = vmor %vm3717, %vm3718
  %v3720 = vsel %vm3719, %v3712, %v3716
  %v3721 = vand.u32 2147483647, %v3526
  %vm3722 = vcmp.eq.f32.partialorder %v3721, 8.507059e+37
  %v3723 = vand.u32 %v3526, 2147483648
  %v3724 = vor.u32 1.1754944e-38, %v3723
  %v3725 = vsel %vm3722, %v3724, %v3720
  %v3726 = vmul.f32 1.0, %v3725
  %v3727 = vrcp.pop %v3527
  %v3728 = vmul.f32 %v3527, %v3727
  %v3729 = vsub.f32 1.0, %v3728
  %v3730 = vmul.f32 %v3727, %v3729
  %v3731 = vadd.f32 %v3727, %v3730
  %vm3732 = vweird.f32 %v3527
  %vm3733 = vweird.f32 %v3727
  %vm3734 = vmor %vm3732, %vm3733
  %v3735 = vsel %vm3734, %v3727, %v3731
  %v3736 = vand.u32 2147483647, %v3527
  %vm3737 = vcmp.eq.f32.partialorder %v3736, 8.507059e+37
  %v3738 = vand.u32 %v3527, 2147483648
  %v3739 = vor.u32 1.1754944e-38, %v3738
  %v3740 = vsel %vm3737, %v3739, %v3735
  %v3741 = vmul.f32 1.0, %v3740
  %v3742 = vrcp.pop %v3528
  %v3743 = vmul.f32 %v3528, %v3742
  %v3744 = vsub.f32 1.0, %v3743
  %v3745 = vmul.f32 %v3742, %v3744
  %v3746 = vadd.f32 %v3742, %v3745
  %vm3747 = vweird.f32 %v3528
  %vm3748 = vweird.f32 %v3742
  %vm3749 = vmor %vm3747, %vm3748
  %v3750 = vsel %vm3749, %v3742, %v3746
  %v3751 = vand.u32 2147483647, %v3528
  %vm3752 = vcmp.eq.f32.partialorder %v3751, 8.507059e+37
  %v3753 = vand.u32 %v3528, 2147483648
  %v3754 = vor.u32 1.1754944e-38, %v3753
  %v3755 = vsel %vm3752, %v3754, %v3750
  %v3756 = vmul.f32 1.0, %v3755
  %v3757 = vrcp.pop %v3529
  %v3758 = vmul.f32 %v3529, %v3757
  %v3759 = vsub.f32 1.0, %v3758
  %v3760 = vmul.f32 %v3757, %v3759
  %v3761 = vadd.f32 %v3757, %v3760
  %vm3762 = vweird.f32 %v3529
  %vm3763 = vweird.f32 %v3757
  %vm3764 = vmor %vm3762, %vm3763
  %v3765 = vsel %vm3764, %v3757, %v3761
  %v3766 = vand.u32 2147483647, %v3529
  %vm3767 = vcmp.eq.f32.partialorder %v3766, 8.507059e+37
  %v3768 = vand.u32 %v3529, 2147483648
  %v3769 = vor.u32 1.1754944e-38, %v3768
  %v3770 = vsel %vm3767, %v3769, %v3765
  %v3771 = vmul.f32 1.0, %v3770
  %v3772 = vrcp.pop %v3530
  %v3773 = vmul.f32 %v3530, %v3772
  %v3774 = vsub.f32 1.0, %v3773
  %v3775 = vmul.f32 %v3772, %v3774
  %v3776 = vadd.f32 %v3772, %v3775
  %vm3777 = vweird.f32 %v3530
  %vm3778 = vweird.f32 %v3772
  %vm3779 = vmor %vm3777, %vm3778
  %v3780 = vsel %vm3779, %v3772, %v3776
  %v3781 = vand.u32 2147483647, %v3530
  %vm3782 = vcmp.eq.f32.partialorder %v3781, 8.507059e+37
  %v3783 = vand.u32 %v3530, 2147483648
  %v3784 = vor.u32 1.1754944e-38, %v3783
  %v3785 = vsel %vm3782, %v3784, %v3780
  %v3786 = vmul.f32 1.0, %v3785
  %v3787 = vrcp.pop %v3531
  %v3788 = vmul.f32 %v3531, %v3787
  %v3789 = vsub.f32 1.0, %v3788
  %v3790 = vmul.f32 %v3787, %v3789
  %v3791 = vadd.f32 %v3787, %v3790
  %vm3792 = vweird.f32 %v3531
  %vm3793 = vweird.f32 %v3787
  %vm3794 = vmor %vm3792, %vm3793
  %v3795 = vsel %vm3794, %v3787, %v3791
  %v3796 = vand.u32 2147483647, %v3531
  %vm3797 = vcmp.eq.f32.partialorder %v3796, 8.507059e+37
  %v3798 = vand.u32 %v3531, 2147483648
  %v3799 = vor.u32 1.1754944e-38, %v3798
  %v3800 = vsel %vm3797, %v3799, %v3795
  %v3801 = vmul.f32 1.0, %v3800
  %v3802 = vrcp.pop %v3532
  %v3803 = vmul.f32 %v3532, %v3802
  %v3804 = vsub.f32 1.0, %v3803
  %v3805 = vmul.f32 %v3802, %v3804
  %v3806 = vadd.f32 %v3802, %v3805
  %vm3807 = vweird.f32 %v3532
  %vm3808 = vweird.f32 %v3802
  %vm3809 = vmor %vm3807, %vm3808
  %v3810 = vsel %vm3809, %v3802, %v3806
  %v3811 = vand.u32 2147483647, %v3532
  %vm3812 = vcmp.eq.f32.partialorder %v3811, 8.507059e+37
  %v3813 = vand.u32 %v3532, 2147483648
  %v3814 = vor.u32 1.1754944e-38, %v3813
  %v3815 = vsel %vm3812, %v3814, %v3810
  %v3816 = vmul.f32 1.0, %v3815
  %v3817 = vrcp.pop %v3533
  %v3818 = vmul.f32 %v3533, %v3817
  %v3819 = vsub.f32 1.0, %v3818
  %v3820 = vmul.f32 %v3817, %v3819
  %v3821 = vadd.f32 %v3817, %v3820
  %vm3822 = vweird.f32 %v3533
  %vm3823 = vweird.f32 %v3817
  %vm3824 = vmor %vm3822, %vm3823
  %v3825 = vsel %vm3824, %v3817, %v3821
  %v3826 = vand.u32 2147483647, %v3533
  %vm3827 = vcmp.eq.f32.partialorder %v3826, 8.507059e+37
  %v3828 = vand.u32 %v3533, 2147483648
  %v3829 = vor.u32 1.1754944e-38, %v3828
  %v3830 = vsel %vm3827, %v3829, %v3825
  %v3831 = vmul.f32 1.0, %v3830
  %v3832 = vrcp.pop %v3534
  %v3833 = vmul.f32 %v3534, %v3832
  %v3834 = vsub.f32 1.0, %v3833
  %v3835 = vmul.f32 %v3832, %v3834
  %v3836 = vadd.f32 %v3832, %v3835
  %vm3837 = vweird.f32 %v3534
  %vm3838 = vweird.f32 %v3832
  %vm3839 = vmor %vm3837, %vm3838
  %v3840 = vsel %vm3839, %v3832, %v3836
  %v3841 = vand.u32 2147483647, %v3534
  %vm3842 = vcmp.eq.f32.partialorder %v3841, 8.507059e+37
  %v3843 = vand.u32 %v3534, 2147483648
  %v3844 = vor.u32 1.1754944e-38, %v3843
  %v3845 = vsel %vm3842, %v3844, %v3840
  %v3846 = vmul.f32 1.0, %v3845
  %v3847 = vrcp.pop %v3535
  %v3848 = vmul.f32 %v3535, %v3847
  %v3849 = vsub.f32 1.0, %v3848
  %v3850 = vmul.f32 %v3847, %v3849
  %v3851 = vadd.f32 %v3847, %v3850
  %vm3852 = vweird.f32 %v3535
  %vm3853 = vweird.f32 %v3847
  %vm3854 = vmor %vm3852, %vm3853
  %v3855 = vsel %vm3854, %v3847, %v3851
  %v3856 = vand.u32 2147483647, %v3535
  %vm3857 = vcmp.eq.f32.partialorder %v3856, 8.507059e+37
  %v3858 = vand.u32 %v3535, 2147483648
  %v3859 = vor.u32 1.1754944e-38, %v3858
  %v3860 = vsel %vm3857, %v3859, %v3855
  %v3861 = vmul.f32 1.0, %v3860
  %v3862 = vrcp.pop %v3536
  %v3863 = vmul.f32 %v3536, %v3862
  %v3864 = vsub.f32 1.0, %v3863
  %v3865 = vmul.f32 %v3862, %v3864
  %v3866 = vadd.f32 %v3862, %v3865
  %vm3867 = vweird.f32 %v3536
  %vm3868 = vweird.f32 %v3862
  %vm3869 = vmor %vm3867, %vm3868
  %v3870 = vsel %vm3869, %v3862, %v3866
  %v3871 = vand.u32 2147483647, %v3536
  %vm3872 = vcmp.eq.f32.partialorder %v3871, 8.507059e+37
  %v3873 = vand.u32 %v3536, 2147483648
  %v3874 = vor.u32 1.1754944e-38, %v3873
  %v3875 = vsel %vm3872, %v3874, %v3870
  %v3876 = vmul.f32 1.0, %v3875
  %v3877 = vrcp.pop %v3537
  %v3878 = vmul.f32 %v3537, %v3877
  %v3879 = vsub.f32 1.0, %v3878
  %v3880 = vmul.f32 %v3877, %v3879
  %v3881 = vadd.f32 %v3877, %v3880
  %vm3882 = vweird.f32 %v3537
  %vm3883 = vweird.f32 %v3877
  %vm3884 = vmor %vm3882, %vm3883
  %v3885 = vsel %vm3884, %v3877, %v3881
  %v3886 = vand.u32 2147483647, %v3537
  %vm3887 = vcmp.eq.f32.partialorder %v3886, 8.507059e+37
  %v3888 = vand.u32 %v3537, 2147483648
  %v3889 = vor.u32 1.1754944e-38, %v3888
  %v3890 = vsel %vm3887, %v3889, %v3885
  %v3891 = vmul.f32 1.0, %v3890
  %v3892 = vrcp.pop %v3538
  %v3893 = vmul.f32 %v3538, %v3892
  %v3894 = vsub.f32 1.0, %v3893
  %v3895 = vmul.f32 %v3892, %v3894
  %v3896 = vadd.f32 %v3892, %v3895
  %vm3897 = vweird.f32 %v3538
  %vm3898 = vweird.f32 %v3892
  %vm3899 = vmor %vm3897, %vm3898
  %v3900 = vsel %vm3899, %v3892, %v3896
  %v3901 = vand.u32 2147483647, %v3538
  %vm3902 = vcmp.eq.f32.partialorder %v3901, 8.507059e+37
  %v3903 = vand.u32 %v3538, 2147483648
  %v3904 = vor.u32 1.1754944e-38, %v3903
  %v3905 = vsel %vm3902, %v3904, %v3900
  %v3906 = vmul.f32 1.0, %v3905
  %v3907 = vrcp.pop %v3539
  %v3908 = vmul.f32 %v3539, %v3907
  %v3909 = vsub.f32 1.0, %v3908
  %v3910 = vmul.f32 %v3907, %v3909
  %v3911 = vadd.f32 %v3907, %v3910
  %vm3912 = vweird.f32 %v3539
  %vm3913 = vweird.f32 %v3907
  %vm3914 = vmor %vm3912, %vm3913
  %v3915 = vsel %vm3914, %v3907, %v3911
  %v3916 = vand.u32 2147483647, %v3539
  %vm3917 = vcmp.eq.f32.partialorder %v3916, 8.507059e+37
  %v3918 = vand.u32 %v3539, 2147483648
  %v3919 = vor.u32 1.1754944e-38, %v3918
  %v3920 = vsel %vm3917, %v3919, %v3915
  %v3921 = vmul.f32 1.0, %v3920
  %v3922 = vrcp.pop %v3540
  %v3923 = vmul.f32 %v3540, %v3922
  %v3924 = vsub.f32 1.0, %v3923
  %v3925 = vmul.f32 %v3922, %v3924
  %v3926 = vadd.f32 %v3922, %v3925
  %vm3927 = vweird.f32 %v3540
  %vm3928 = vweird.f32 %v3922
  %vm3929 = vmor %vm3927, %vm3928
  %v3930 = vsel %vm3929, %v3922, %v3926
  %v3931 = vand.u32 2147483647, %v3540
  %vm3932 = vcmp.eq.f32.partialorder %v3931, 8.507059e+37
  %v3933 = vand.u32 %v3540, 2147483648
  %v3934 = vor.u32 1.1754944e-38, %v3933
  %v3935 = vsel %vm3932, %v3934, %v3930
  %v3936 = vmul.f32 1.0, %v3935
  %v3937 = vrcp.pop %v3541
  %v3938 = vmul.f32 %v3541, %v3937
  %v3939 = vsub.f32 1.0, %v3938
  %v3940 = vmul.f32 %v3937, %v3939
  %v3941 = vadd.f32 %v3937, %v3940
  %vm3942 = vweird.f32 %v3541
  %vm3943 = vweird.f32 %v3937
  %vm3944 = vmor %vm3942, %vm3943
  %v3945 = vsel %vm3944, %v3937, %v3941
  %v3946 = vand.u32 2147483647, %v3541
  %vm3947 = vcmp.eq.f32.partialorder %v3946, 8.507059e+37
  %v3948 = vand.u32 %v3541, 2147483648
  %v3949 = vor.u32 1.1754944e-38, %v3948
  %v3950 = vsel %vm3947, %v3949, %v3945
  %v3951 = vmul.f32 1.0, %v3950
  %v3952 = vrcp.pop %v3542
  %v3953 = vmul.f32 %v3542, %v3952
  %v3954 = vsub.f32 1.0, %v3953
  %v3955 = vmul.f32 %v3952, %v3954
  %v3956 = vadd.f32 %v3952, %v3955
  %vm3957 = vweird.f32 %v3542
  %vm3958 = vweird.f32 %v3952
  %vm3959 = vmor %vm3957, %vm3958
  %v3960 = vsel %vm3959, %v3952, %v3956
  %v3961 = vand.u32 2147483647, %v3542
  %vm3962 = vcmp.eq.f32.partialorder %v3961, 8.507059e+37
  %v3963 = vand.u32 %v3542, 2147483648
  %v3964 = vor.u32 1.1754944e-38, %v3963
  %v3965 = vsel %vm3962, %v3964, %v3960
  %v3966 = vmul.f32 1.0, %v3965
  %v3967 = vrcp.pop %v3543
  %v3968 = vmul.f32 %v3543, %v3967
  %v3969 = vsub.f32 1.0, %v3968
  %v3970 = vmul.f32 %v3967, %v3969
  %v3971 = vadd.f32 %v3967, %v3970
  %vm3972 = vweird.f32 %v3543
  %vm3973 = vweird.f32 %v3967
  %vm3974 = vmor %vm3972, %vm3973
  %v3975 = vsel %vm3974, %v3967, %v3971
  %v3976 = vand.u32 2147483647, %v3543
  %vm3977 = vcmp.eq.f32.partialorder %v3976, 8.507059e+37
  %v3978 = vand.u32 %v3543, 2147483648
  %v3979 = vor.u32 1.1754944e-38, %v3978
  %v3980 = vsel %vm3977, %v3979, %v3975
  %v3981 = vmul.f32 1.0, %v3980
  %v3982 = vrcp.pop %v3544
  %v3983 = vmul.f32 %v3544, %v3982
  %v3984 = vsub.f32 1.0, %v3983
  %v3985 = vmul.f32 %v3982, %v3984
  %v3986 = vadd.f32 %v3982, %v3985
  %vm3987 = vweird.f32 %v3544
  %vm3988 = vweird.f32 %v3982
  %vm3989 = vmor %vm3987, %vm3988
  %v3990 = vsel %vm3989, %v3982, %v3986
  %v3991 = vand.u32 2147483647, %v3544
  %vm3992 = vcmp.eq.f32.partialorder %v3991, 8.507059e+37
  %v3993 = vand.u32 %v3544, 2147483648
  %v3994 = vor.u32 1.1754944e-38, %v3993
  %v3995 = vsel %vm3992, %v3994, %v3990
  %v3996 = vmul.f32 1.0, %v3995
  %v3997 = vrcp.pop %v3545
  %v3998 = vmul.f32 %v3545, %v3997
  %v3999 = vsub.f32 1.0, %v3998
  %v4000 = vmul.f32 %v3997, %v3999
  %v4001 = vadd.f32 %v3997, %v4000
  %vm4002 = vweird.f32 %v3545
  %vm4003 = vweird.f32 %v3997
  %vm4004 = vmor %vm4002, %vm4003
  %v4005 = vsel %vm4004, %v3997, %v4001
  %v4006 = vand.u32 2147483647, %v3545
  %vm4007 = vcmp.eq.f32.partialorder %v4006, 8.507059e+37
  %v4008 = vand.u32 %v3545, 2147483648
  %v4009 = vor.u32 1.1754944e-38, %v4008
  %v4010 = vsel %vm4007, %v4009, %v4005
  %v4011 = vmul.f32 1.0, %v4010
  %v4012 = vrcp.pop %v3546
  %v4013 = vmul.f32 %v3546, %v4012
  %v4014 = vsub.f32 1.0, %v4013
  %v4015 = vmul.f32 %v4012, %v4014
  %v4016 = vadd.f32 %v4012, %v4015
  %vm4017 = vweird.f32 %v3546
  %vm4018 = vweird.f32 %v4012
  %vm4019 = vmor %vm4017, %vm4018
  %v4020 = vsel %vm4019, %v4012, %v4016
  %v4021 = vand.u32 2147483647, %v3546
  %vm4022 = vcmp.eq.f32.partialorder %v4021, 8.507059e+37
  %v4023 = vand.u32 %v3546, 2147483648
  %v4024 = vor.u32 1.1754944e-38, %v4023
  %v4025 = vsel %vm4022, %v4024, %v4020
  %v4026 = vmul.f32 1.0, %v4025
  %v4027 = vmul.f32 %v2199, %v3026
  %v4028 = vmul.f32 %v2214, %v3027
  %v4029 = vmul.f32 %v2229, %v3028
  %v4030 = vmul.f32 %v2244, %v3029
  %v4031 = vmul.f32 %v2259, %v3030
  %v4032 = vmul.f32 %v2274, %v3031
  %v4033 = vmul.f32 %v2289, %v3032
  %v4034 = vmul.f32 %v2304, %v3033
  %v4035 = vmul.f32 %v2319, %v3034
  %v4036 = vmul.f32 %v2334, %v3035
  %v4037 = vmul.f32 %v2349, %v3036
  %v4038 = vmul.f32 %v2364, %v3037
  %v4039 = vmul.f32 %v2379, %v3038
  %v4040 = vmul.f32 %v2394, %v3039
  %v4041 = vmul.f32 %v2409, %v3040
  %v4042 = vmul.f32 %v2424, %v3041
  %v4043 = vmul.f32 %v2439, %v3042
  %v4044 = vmul.f32 %v2454, %v3043
  %v4045 = vmul.f32 %v2469, %v3044
  %v4046 = vmul.f32 %v2484, %v3045
  %v4047 = vmul.f32 %v2499, %v3046
  %v4048 = vmul.f32 %v2514, %v3047
  %v4049 = vmul.f32 %v2529, %v3048
  %v4050 = vmul.f32 %v2544, %v3049
  %v4051 = vmul.f32 %v2559, %v3050
  %v4052 = vmul.f32 %v2574, %v3051
  %v4053 = vmul.f32 %v2589, %v3052
  %v4054 = vmul.f32 %v2604, %v3053
  %v4055 = vmul.f32 %v2619, %v3054
  %v4056 = vmul.f32 %v2634, %v3055
  %v4057 = vmul.f32 %v2649, %v3056
  %v4058 = vmul.f32 %v2664, %v3057
  %v4059 = vtanh.pop %v4027
  %v4060 = vtanh.pop %v4028
  %v4061 = vtanh.pop %v4029
  %v4062 = vtanh.pop %v4030
  %v4063 = vtanh.pop %v4031
  %v4064 = vtanh.pop %v4032
  %v4065 = vtanh.pop %v4033
  %v4066 = vtanh.pop %v4034
  %v4067 = vtanh.pop %v4035
  %v4068 = vtanh.pop %v4036
  %v4069 = vtanh.pop %v4037
  %v4070 = vtanh.pop %v4038
  %v4071 = vtanh.pop %v4039
  %v4072 = vtanh.pop %v4040
  %v4073 = vtanh.pop %v4041
  %v4074 = vtanh.pop %v4042
  %v4075 = vtanh.pop %v4043
  %v4076 = vtanh.pop %v4044
  %v4077 = vtanh.pop %v4045
  %v4078 = vtanh.pop %v4046
  %v4079 = vtanh.pop %v4047
  %v4080 = vtanh.pop %v4048
  %v4081 = vtanh.pop %v4049
  %v4082 = vtanh.pop %v4050
  %v4083 = vtanh.pop %v4051
  %v4084 = vtanh.pop %v4052
  %v4085 = vtanh.pop %v4053
  %v4086 = vtanh.pop %v4054
  %v4087 = vtanh.pop %v4055
  %v4088 = vtanh.pop %v4056
  %v4089 = vtanh.pop %v4057
  %v4090 = vtanh.pop %v4058
  %v4091 = vmul.f32 %v3561, %v4059
  %v4092 = vmul.f32 %v3576, %v4060
  %v4093 = vmul.f32 %v3591, %v4061
  %v4094 = vmul.f32 %v3606, %v4062
  %v4095 = vmul.f32 %v3621, %v4063
  %v4096 = vmul.f32 %v3636, %v4064
  %v4097 = vmul.f32 %v3651, %v4065
  %v4098 = vmul.f32 %v3666, %v4066
  %v4099 = vmul.f32 %v3681, %v4067
  %v4100 = vmul.f32 %v3696, %v4068
  %v4101 = vmul.f32 %v3711, %v4069
  %v4102 = vmul.f32 %v3726, %v4070
  %v4103 = vmul.f32 %v3741, %v4071
  %v4104 = vmul.f32 %v3756, %v4072
  %v4105 = vmul.f32 %v3771, %v4073
  %v4106 = vmul.f32 %v3786, %v4074
  %v4107 = vmul.f32 %v3801, %v4075
  %v4108 = vmul.f32 %v3816, %v4076
  %v4109 = vmul.f32 %v3831, %v4077
  %v4110 = vmul.f32 %v3846, %v4078
  %v4111 = vmul.f32 %v3861, %v4079
  %v4112 = vmul.f32 %v3876, %v4080
  %v4113 = vmul.f32 %v3891, %v4081
  %v4114 = vmul.f32 %v3906, %v4082
  %v4115 = vmul.f32 %v3921, %v4083
  %v4116 = vmul.f32 %v3936, %v4084
  %v4117 = vmul.f32 %v3951, %v4085
  %v4118 = vmul.f32 %v3966, %v4086
  %v4119 = vmul.f32 %v3981, %v4087
  %v4120 = vmul.f32 %v3996, %v4088
  %v4121 = vmul.f32 %v4011, %v4089
  %v4122 = vmul.f32 %v4026, %v4090
  %v4123 = vpack.c.bf16 %v4092, %v4091
  %v4124 = vpack.c.bf16 %v4094, %v4093
  %v4125 = vpack.c.bf16 %v4096, %v4095
  %v4126 = vpack.c.bf16 %v4098, %v4097
  %v4127 = vpack.c.bf16 %v4100, %v4099
  %v4128 = vpack.c.bf16 %v4102, %v4101
  %v4129 = vpack.c.bf16 %v4104, %v4103
  %v4130 = vpack.c.bf16 %v4106, %v4105
  %v4131 = vpack.c.bf16 %v4108, %v4107
  %v4132 = vpack.c.bf16 %v4110, %v4109
  %v4133 = vpack.c.bf16 %v4112, %v4111
  %v4134 = vpack.c.bf16 %v4114, %v4113
  %v4135 = vpack.c.bf16 %v4116, %v4115
  %v4136 = vpack.c.bf16 %v4118, %v4117
  %v4137 = vpack.c.bf16 %v4120, %v4119
  %v4138 = vpack.c.bf16 %v4122, %v4121
  %v4139 = vld [vmem:[%s6] sm:$0xf]
  %v4140 = vld [vmem:[%s6 + $0x4] sm:$0xf]
  %v4141 = vld [vmem:[%s6 + $0x8] sm:$0xf]
  %v4142 = vld [vmem:[%s6 + $0xc] sm:$0xf]
  %v4143 = vld [vmem:[%s6 + $0x10] sm:$0xf]
  %v4144 = vld [vmem:[%s6 + $0x14] sm:$0xf]
  %v4145 = vld [vmem:[%s6 + $0x18] sm:$0xf]
  %v4146 = vld [vmem:[%s6 + $0x1c] sm:$0xf]
  %v4147 = vld [vmem:[%s6 + $0x20] sm:$0xf]
  %v4148 = vld [vmem:[%s6 + $0x24] sm:$0xf]
  %v4149 = vld [vmem:[%s6 + $0x28] sm:$0xf]
  %v4150 = vld [vmem:[%s6 + $0x2c] sm:$0xf]
  %v4151 = vld [vmem:[%s6 + $0x30] sm:$0xf]
  %v4152 = vld [vmem:[%s6 + $0x34] sm:$0xf]
  %v4153 = vld [vmem:[%s6 + $0x38] sm:$0xf]
  %v4154 = vld [vmem:[%s6 + $0x3c] sm:$0xf]
  %v4155 = vld [vmem:[%s7] sm:$0x1]
  %v4157 = vperm.slane %v4155, 0
  %v4175 = vunpack.c.l.b16 %v4139
  %v4176 = vunpack.c.l.b16 %v4140
  %v4177 = vunpack.c.l.b16 %v4141
  %v4178 = vunpack.c.l.b16 %v4142
  %v4179 = vunpack.c.l.b16 %v4143
  %v4180 = vunpack.c.l.b16 %v4144
  %v4181 = vunpack.c.l.b16 %v4145
  %v4182 = vunpack.c.l.b16 %v4146
  %v4183 = vunpack.c.l.b16 %v4147
  %v4184 = vunpack.c.l.b16 %v4148
  %v4185 = vunpack.c.l.b16 %v4149
  %v4186 = vunpack.c.l.b16 %v4150
  %v4187 = vunpack.c.l.b16 %v4151
  %v4188 = vunpack.c.l.b16 %v4152
  %v4189 = vunpack.c.l.b16 %v4153
  %v4190 = vunpack.c.l.b16 %v4154
  %v4191 = vpack.c.b16 %v4176, %v4175
  %v4192 = vpack.c.b16 %v4178, %v4177
  %v4193 = vpack.c.b16 %v4180, %v4179
  %v4194 = vpack.c.b16 %v4182, %v4181
  %v4195 = vpack.c.b16 %v4184, %v4183
  %v4196 = vpack.c.b16 %v4186, %v4185
  %v4197 = vpack.c.b16 %v4188, %v4187
  %v4198 = vpack.c.b16 %v4190, %v4189
  %4207 = vmatpush.bf16.msra.mxu0 %v4198
  %4208 = vmatpush.bf16.msra.mxu0 %v4197
  %4209 = vmatpush.bf16.msra.mxu0 %v4196
  %4210 = vmatpush.bf16.msra.mxu0 %v4195
  %4211 = vmatpush.bf16.msra.mxu0 %v4194
  %4212 = vmatpush.bf16.msra.mxu0 %v4193
  %4213 = vmatpush.bf16.msra.mxu0 %v4192
  %4214 = vmatpush.bf16.msra.mxu0 %v4191
  %4215 = vmatmul.bf16.gmra.mxu0 %v4123
  %v4216 = vpop.f32.mrf.mxu0
  %v4217 = vadd.f32 %v4157, %v4216
  %v4218 = vpop.f32.mrf.mxu0
  %v4219 = vadd.f32 %v4157, %v4218
  %4220 = vmatmul.bf16.gmra.mxu0 %v4124
  %v4221 = vpop.f32.mrf.mxu0
  %v4222 = vadd.f32 %v4157, %v4221
  %v4223 = vpop.f32.mrf.mxu0
  %v4224 = vadd.f32 %v4157, %v4223
  %4225 = vmatmul.bf16.gmra.mxu0 %v4125
  %v4226 = vpop.f32.mrf.mxu0
  %v4227 = vadd.f32 %v4157, %v4226
  %v4228 = vpop.f32.mrf.mxu0
  %v4229 = vadd.f32 %v4157, %v4228
  %4230 = vmatmul.bf16.gmra.mxu0 %v4126
  %v4231 = vpop.f32.mrf.mxu0
  %v4232 = vadd.f32 %v4157, %v4231
  %v4233 = vpop.f32.mrf.mxu0
  %v4234 = vadd.f32 %v4157, %v4233
  %4235 = vmatmul.bf16.gmra.mxu0 %v4127
  %v4236 = vpop.f32.mrf.mxu0
  %v4237 = vadd.f32 %v4157, %v4236
  %v4238 = vpop.f32.mrf.mxu0
  %v4239 = vadd.f32 %v4157, %v4238
  %4240 = vmatmul.bf16.gmra.mxu0 %v4128
  %v4241 = vpop.f32.mrf.mxu0
  %v4242 = vadd.f32 %v4157, %v4241
  %v4243 = vpop.f32.mrf.mxu0
  %v4244 = vadd.f32 %v4157, %v4243
  %4245 = vmatmul.bf16.gmra.mxu0 %v4129
  %v4246 = vpop.f32.mrf.mxu0
  %v4247 = vadd.f32 %v4157, %v4246
  %v4248 = vpop.f32.mrf.mxu0
  %v4249 = vadd.f32 %v4157, %v4248
  %4250 = vmatmul.bf16.gmra.mxu0 %v4130
  %v4251 = vpop.f32.mrf.mxu0
  %v4252 = vadd.f32 %v4157, %v4251
  %v4253 = vpop.f32.mrf.mxu0
  %v4254 = vadd.f32 %v4157, %v4253
  %4255 = vmatmul.bf16.gmra.mxu0 %v4131
  %v4256 = vpop.f32.mrf.mxu0
  %v4257 = vadd.f32 %v4157, %v4256
  %v4258 = vpop.f32.mrf.mxu0
  %v4259 = vadd.f32 %v4157, %v4258
  %4260 = vmatmul.bf16.gmra.mxu0 %v4132
  %v4261 = vpop.f32.mrf.mxu0
  %v4262 = vadd.f32 %v4157, %v4261
  %v4263 = vpop.f32.mrf.mxu0
  %v4264 = vadd.f32 %v4157, %v4263
  %4265 = vmatmul.bf16.gmra.mxu0 %v4133
  %v4266 = vpop.f32.mrf.mxu0
  %v4267 = vadd.f32 %v4157, %v4266
  %v4268 = vpop.f32.mrf.mxu0
  %v4269 = vadd.f32 %v4157, %v4268
  %4270 = vmatmul.bf16.gmra.mxu0 %v4134
  %v4271 = vpop.f32.mrf.mxu0
  %v4272 = vadd.f32 %v4157, %v4271
  %v4273 = vpop.f32.mrf.mxu0
  %v4274 = vadd.f32 %v4157, %v4273
  %4275 = vmatmul.bf16.gmra.mxu0 %v4135
  %v4276 = vpop.f32.mrf.mxu0
  %v4277 = vadd.f32 %v4157, %v4276
  %v4278 = vpop.f32.mrf.mxu0
  %v4279 = vadd.f32 %v4157, %v4278
  %4280 = vmatmul.bf16.gmra.mxu0 %v4136
  %v4281 = vpop.f32.mrf.mxu0
  %v4282 = vadd.f32 %v4157, %v4281
  %v4283 = vpop.f32.mrf.mxu0
  %v4284 = vadd.f32 %v4157, %v4283
  %4285 = vmatmul.bf16.gmra.mxu0 %v4137
  %v4286 = vpop.f32.mrf.mxu0
  %v4287 = vadd.f32 %v4157, %v4286
  %v4288 = vpop.f32.mrf.mxu0
  %v4289 = vadd.f32 %v4157, %v4288
  %4290 = vmatmul.bf16.gmra.mxu0 %v4138
  %v4291 = vpop.f32.mrf.mxu0
  %v4292 = vadd.f32 %v4157, %v4291
  %v4293 = vpop.f32.mrf.mxu0
  %v4294 = vadd.f32 %v4157, %v4293
  %4295 = vdwg.mxu0
  %v4296 = vsel %vm782, %v4217, -inf
  %4297 = vmax.xlane.f32.xlu0 %v4296
  %v4298 = vpop.xlane.xlu0 %4297
  %v4299 = vsel %vm782, %v4219, -inf
  %4300 = vmax.xlane.f32.xlu0 %v4299
  %v4301 = vpop.xlane.xlu0 %4300
  %v4302 = vsel %vm782, %v4222, -inf
  %4303 = vmax.xlane.f32.xlu0 %v4302
  %v4304 = vpop.xlane.xlu0 %4303
  %v4305 = vsel %vm782, %v4224, -inf
  %4306 = vmax.xlane.f32.xlu0 %v4305
  %v4307 = vpop.xlane.xlu0 %4306
  %v4308 = vsel %vm782, %v4227, -inf
  %4309 = vmax.xlane.f32.xlu0 %v4308
  %v4310 = vpop.xlane.xlu0 %4309
  %v4311 = vsel %vm782, %v4229, -inf
  %4312 = vmax.xlane.f32.xlu0 %v4311
  %v4313 = vpop.xlane.xlu0 %4312
  %v4314 = vsel %vm782, %v4232, -inf
  %4315 = vmax.xlane.f32.xlu0 %v4314
  %v4316 = vpop.xlane.xlu0 %4315
  %v4317 = vsel %vm782, %v4234, -inf
  %4318 = vmax.xlane.f32.xlu0 %v4317
  %v4319 = vpop.xlane.xlu0 %4318
  %v4320 = vsel %vm782, %v4237, -inf
  %4321 = vmax.xlane.f32.xlu0 %v4320
  %v4322 = vpop.xlane.xlu0 %4321
  %v4323 = vsel %vm782, %v4239, -inf
  %4324 = vmax.xlane.f32.xlu0 %v4323
  %v4325 = vpop.xlane.xlu0 %4324
  %v4326 = vsel %vm782, %v4242, -inf
  %4327 = vmax.xlane.f32.xlu0 %v4326
  %v4328 = vpop.xlane.xlu0 %4327
  %v4329 = vsel %vm782, %v4244, -inf
  %4330 = vmax.xlane.f32.xlu0 %v4329
  %v4331 = vpop.xlane.xlu0 %4330
  %v4332 = vsel %vm782, %v4247, -inf
  %4333 = vmax.xlane.f32.xlu0 %v4332
  %v4334 = vpop.xlane.xlu0 %4333
  %v4335 = vsel %vm782, %v4249, -inf
  %4336 = vmax.xlane.f32.xlu0 %v4335
  %v4337 = vpop.xlane.xlu0 %4336
  %v4338 = vsel %vm782, %v4252, -inf
  %4339 = vmax.xlane.f32.xlu0 %v4338
  %v4340 = vpop.xlane.xlu0 %4339
  %v4341 = vsel %vm782, %v4254, -inf
  %4342 = vmax.xlane.f32.xlu0 %v4341
  %v4343 = vpop.xlane.xlu0 %4342
  %v4344 = vsel %vm782, %v4257, -inf
  %4345 = vmax.xlane.f32.xlu0 %v4344
  %v4346 = vpop.xlane.xlu0 %4345
  %v4347 = vsel %vm782, %v4259, -inf
  %4348 = vmax.xlane.f32.xlu0 %v4347
  %v4349 = vpop.xlane.xlu0 %4348
  %v4350 = vsel %vm782, %v4262, -inf
  %4351 = vmax.xlane.f32.xlu0 %v4350
  %v4352 = vpop.xlane.xlu0 %4351
  %v4353 = vsel %vm782, %v4264, -inf
  %4354 = vmax.xlane.f32.xlu0 %v4353
  %v4355 = vpop.xlane.xlu0 %4354
  %v4356 = vsel %vm782, %v4267, -inf
  %4357 = vmax.xlane.f32.xlu0 %v4356
  %v4358 = vpop.xlane.xlu0 %4357
  %v4359 = vsel %vm782, %v4269, -inf
  %4360 = vmax.xlane.f32.xlu0 %v4359
  %v4361 = vpop.xlane.xlu0 %4360
  %v4362 = vsel %vm782, %v4272, -inf
  %4363 = vmax.xlane.f32.xlu0 %v4362
  %v4364 = vpop.xlane.xlu0 %4363
  %v4365 = vsel %vm782, %v4274, -inf
  %4366 = vmax.xlane.f32.xlu0 %v4365
  %v4367 = vpop.xlane.xlu0 %4366
  %v4368 = vsel %vm782, %v4277, -inf
  %4369 = vmax.xlane.f32.xlu0 %v4368
  %v4370 = vpop.xlane.xlu0 %4369
  %v4371 = vsel %vm782, %v4279, -inf
  %4372 = vmax.xlane.f32.xlu0 %v4371
  %v4373 = vpop.xlane.xlu0 %4372
  %v4374 = vsel %vm782, %v4282, -inf
  %4375 = vmax.xlane.f32.xlu0 %v4374
  %v4376 = vpop.xlane.xlu0 %4375
  %v4377 = vsel %vm782, %v4284, -inf
  %4378 = vmax.xlane.f32.xlu0 %v4377
  %v4379 = vpop.xlane.xlu0 %4378
  %v4380 = vsel %vm782, %v4287, -inf
  %4381 = vmax.xlane.f32.xlu0 %v4380
  %v4382 = vpop.xlane.xlu0 %4381
  %v4383 = vsel %vm782, %v4289, -inf
  %4384 = vmax.xlane.f32.xlu0 %v4383
  %v4385 = vpop.xlane.xlu0 %4384
  %v4386 = vsel %vm782, %v4292, -inf
  %4387 = vmax.xlane.f32.xlu0 %v4386
  %v4388 = vpop.xlane.xlu0 %4387
  %v4389 = vsel %vm782, %v4294, -inf
  %4390 = vmax.xlane.f32.xlu0 %v4389
  %v4391 = vpop.xlane.xlu0 %4390
  %v4392 = vsub.f32 %v4217, %v4298
  %v4393 = vsub.f32 %v4219, %v4301
  %v4394 = vsub.f32 %v4222, %v4304
  %v4395 = vsub.f32 %v4224, %v4307
  %v4396 = vsub.f32 %v4227, %v4310
  %v4397 = vsub.f32 %v4229, %v4313
  %v4398 = vsub.f32 %v4232, %v4316
  %v4399 = vsub.f32 %v4234, %v4319
  %v4400 = vsub.f32 %v4237, %v4322
  %v4401 = vsub.f32 %v4239, %v4325
  %v4402 = vsub.f32 %v4242, %v4328
  %v4403 = vsub.f32 %v4244, %v4331
  %v4404 = vsub.f32 %v4247, %v4334
  %v4405 = vsub.f32 %v4249, %v4337
  %v4406 = vsub.f32 %v4252, %v4340
  %v4407 = vsub.f32 %v4254, %v4343
  %v4408 = vsub.f32 %v4257, %v4346
  %v4409 = vsub.f32 %v4259, %v4349
  %v4410 = vsub.f32 %v4262, %v4352
  %v4411 = vsub.f32 %v4264, %v4355
  %v4412 = vsub.f32 %v4267, %v4358
  %v4413 = vsub.f32 %v4269, %v4361
  %v4414 = vsub.f32 %v4272, %v4364
  %v4415 = vsub.f32 %v4274, %v4367
  %v4416 = vsub.f32 %v4277, %v4370
  %v4417 = vsub.f32 %v4279, %v4373
  %v4418 = vsub.f32 %v4282, %v4376
  %v4419 = vsub.f32 %v4284, %v4379
  %v4420 = vsub.f32 %v4287, %v4382
  %v4421 = vsub.f32 %v4289, %v4385
  %v4422 = vsub.f32 %v4292, %v4388
  %v4423 = vsub.f32 %v4294, %v4391
  %v4424 = vmul.f32 %v4392, 1.442695
  %v4425 = vpow.pop %v4424
  %v4426 = vmul.f32 %v4393, 1.442695
  %v4427 = vpow.pop %v4426
  %v4428 = vmul.f32 %v4394, 1.442695
  %v4429 = vpow.pop %v4428
  %v4430 = vmul.f32 %v4395, 1.442695
  %v4431 = vpow.pop %v4430
  %v4432 = vmul.f32 %v4396, 1.442695
  %v4433 = vpow.pop %v4432
  %v4434 = vmul.f32 %v4397, 1.442695
  %v4435 = vpow.pop %v4434
  %v4436 = vmul.f32 %v4398, 1.442695
  %v4437 = vpow.pop %v4436
  %v4438 = vmul.f32 %v4399, 1.442695
  %v4439 = vpow.pop %v4438
  %v4440 = vmul.f32 %v4400, 1.442695
  %v4441 = vpow.pop %v4440
  %v4442 = vmul.f32 %v4401, 1.442695
  %v4443 = vpow.pop %v4442
  %v4444 = vmul.f32 %v4402, 1.442695
  %v4445 = vpow.pop %v4444
  %v4446 = vmul.f32 %v4403, 1.442695
  %v4447 = vpow.pop %v4446
  %v4448 = vmul.f32 %v4404, 1.442695
  %v4449 = vpow.pop %v4448
  %v4450 = vmul.f32 %v4405, 1.442695
  %v4451 = vpow.pop %v4450
  %v4452 = vmul.f32 %v4406, 1.442695
  %v4453 = vpow.pop %v4452
  %v4454 = vmul.f32 %v4407, 1.442695
  %v4455 = vpow.pop %v4454
  %v4456 = vmul.f32 %v4408, 1.442695
  %v4457 = vpow.pop %v4456
  %v4458 = vmul.f32 %v4409, 1.442695
  %v4459 = vpow.pop %v4458
  %v4460 = vmul.f32 %v4410, 1.442695
  %v4461 = vpow.pop %v4460
  %v4462 = vmul.f32 %v4411, 1.442695
  %v4463 = vpow.pop %v4462
  %v4464 = vmul.f32 %v4412, 1.442695
  %v4465 = vpow.pop %v4464
  %v4466 = vmul.f32 %v4413, 1.442695
  %v4467 = vpow.pop %v4466
  %v4468 = vmul.f32 %v4414, 1.442695
  %v4469 = vpow.pop %v4468
  %v4470 = vmul.f32 %v4415, 1.442695
  %v4471 = vpow.pop %v4470
  %v4472 = vmul.f32 %v4416, 1.442695
  %v4473 = vpow.pop %v4472
  %v4474 = vmul.f32 %v4417, 1.442695
  %v4475 = vpow.pop %v4474
  %v4476 = vmul.f32 %v4418, 1.442695
  %v4477 = vpow.pop %v4476
  %v4478 = vmul.f32 %v4419, 1.442695
  %v4479 = vpow.pop %v4478
  %v4480 = vmul.f32 %v4420, 1.442695
  %v4481 = vpow.pop %v4480
  %v4482 = vmul.f32 %v4421, 1.442695
  %v4483 = vpow.pop %v4482
  %v4484 = vmul.f32 %v4422, 1.442695
  %v4485 = vpow.pop %v4484
  %v4486 = vmul.f32 %v4423, 1.442695
  %v4487 = vpow.pop %v4486
  %v4488 = vsel %vm782, %v4425, 0.0
  %4489 = vadd.xlane.f32.xlu0 %v4488
  %v4490 = vpop.xlane.xlu0 %4489
  %v4491 = vsel %vm782, %v4427, 0.0
  %4492 = vadd.xlane.f32.xlu0 %v4491
  %v4493 = vpop.xlane.xlu0 %4492
  %v4494 = vsel %vm782, %v4429, 0.0
  %4495 = vadd.xlane.f32.xlu0 %v4494
  %v4496 = vpop.xlane.xlu0 %4495
  %v4497 = vsel %vm782, %v4431, 0.0
  %4498 = vadd.xlane.f32.xlu0 %v4497
  %v4499 = vpop.xlane.xlu0 %4498
  %v4500 = vsel %vm782, %v4433, 0.0
  %4501 = vadd.xlane.f32.xlu0 %v4500
  %v4502 = vpop.xlane.xlu0 %4501
  %v4503 = vsel %vm782, %v4435, 0.0
  %4504 = vadd.xlane.f32.xlu0 %v4503
  %v4505 = vpop.xlane.xlu0 %4504
  %v4506 = vsel %vm782, %v4437, 0.0
  %4507 = vadd.xlane.f32.xlu0 %v4506
  %v4508 = vpop.xlane.xlu0 %4507
  %v4509 = vsel %vm782, %v4439, 0.0
  %4510 = vadd.xlane.f32.xlu0 %v4509
  %v4511 = vpop.xlane.xlu0 %4510
  %v4512 = vsel %vm782, %v4441, 0.0
  %4513 = vadd.xlane.f32.xlu0 %v4512
  %v4514 = vpop.xlane.xlu0 %4513
  %v4515 = vsel %vm782, %v4443, 0.0
  %4516 = vadd.xlane.f32.xlu0 %v4515
  %v4517 = vpop.xlane.xlu0 %4516
  %v4518 = vsel %vm782, %v4445, 0.0
  %4519 = vadd.xlane.f32.xlu0 %v4518
  %v4520 = vpop.xlane.xlu0 %4519
  %v4521 = vsel %vm782, %v4447, 0.0
  %4522 = vadd.xlane.f32.xlu0 %v4521
  %v4523 = vpop.xlane.xlu0 %4522
  %v4524 = vsel %vm782, %v4449, 0.0
  %4525 = vadd.xlane.f32.xlu0 %v4524
  %v4526 = vpop.xlane.xlu0 %4525
  %v4527 = vsel %vm782, %v4451, 0.0
  %4528 = vadd.xlane.f32.xlu0 %v4527
  %v4529 = vpop.xlane.xlu0 %4528
  %v4530 = vsel %vm782, %v4453, 0.0
  %4531 = vadd.xlane.f32.xlu0 %v4530
  %v4532 = vpop.xlane.xlu0 %4531
  %v4533 = vsel %vm782, %v4455, 0.0
  %4534 = vadd.xlane.f32.xlu0 %v4533
  %v4535 = vpop.xlane.xlu0 %4534
  %v4536 = vsel %vm782, %v4457, 0.0
  %4537 = vadd.xlane.f32.xlu0 %v4536
  %v4538 = vpop.xlane.xlu0 %4537
  %v4539 = vsel %vm782, %v4459, 0.0
  %4540 = vadd.xlane.f32.xlu0 %v4539
  %v4541 = vpop.xlane.xlu0 %4540
  %v4542 = vsel %vm782, %v4461, 0.0
  %4543 = vadd.xlane.f32.xlu0 %v4542
  %v4544 = vpop.xlane.xlu0 %4543
  %v4545 = vsel %vm782, %v4463, 0.0
  %4546 = vadd.xlane.f32.xlu0 %v4545
  %v4547 = vpop.xlane.xlu0 %4546
  %v4548 = vsel %vm782, %v4465, 0.0
  %4549 = vadd.xlane.f32.xlu0 %v4548
  %v4550 = vpop.xlane.xlu0 %4549
  %v4551 = vsel %vm782, %v4467, 0.0
  %4552 = vadd.xlane.f32.xlu0 %v4551
  %v4553 = vpop.xlane.xlu0 %4552
  %v4554 = vsel %vm782, %v4469, 0.0
  %4555 = vadd.xlane.f32.xlu0 %v4554
  %v4556 = vpop.xlane.xlu0 %4555
  %v4557 = vsel %vm782, %v4471, 0.0
  %4558 = vadd.xlane.f32.xlu0 %v4557
  %v4559 = vpop.xlane.xlu0 %4558
  %v4560 = vsel %vm782, %v4473, 0.0
  %4561 = vadd.xlane.f32.xlu0 %v4560
  %v4562 = vpop.xlane.xlu0 %4561
  %v4563 = vsel %vm782, %v4475, 0.0
  %4564 = vadd.xlane.f32.xlu0 %v4563
  %v4565 = vpop.xlane.xlu0 %4564
  %v4566 = vsel %vm782, %v4477, 0.0
  %4567 = vadd.xlane.f32.xlu0 %v4566
  %v4568 = vpop.xlane.xlu0 %4567
  %v4569 = vsel %vm782, %v4479, 0.0
  %4570 = vadd.xlane.f32.xlu0 %v4569
  %v4571 = vpop.xlane.xlu0 %4570
  %v4572 = vsel %vm782, %v4481, 0.0
  %4573 = vadd.xlane.f32.xlu0 %v4572
  %v4574 = vpop.xlane.xlu0 %4573
  %v4575 = vsel %vm782, %v4483, 0.0
  %4576 = vadd.xlane.f32.xlu0 %v4575
  %v4577 = vpop.xlane.xlu0 %4576
  %v4578 = vsel %vm782, %v4485, 0.0
  %4579 = vadd.xlane.f32.xlu0 %v4578
  %v4580 = vpop.xlane.xlu0 %4579
  %v4581 = vsel %vm782, %v4487, 0.0
  %4582 = vadd.xlane.f32.xlu0 %v4581
  %v4583 = vpop.xlane.xlu0 %4582
  %v4585 = vsel %vm782, %v4425, 0
  %v4588 = vsel %vm782, %v4427, 0
  %v4591 = vsel %vm782, %v4429, 0
  %v4594 = vsel %vm782, %v4431, 0
  %v4597 = vsel %vm782, %v4433, 0
  %v4600 = vsel %vm782, %v4435, 0
  %v4603 = vsel %vm782, %v4437, 0
  %v4606 = vsel %vm782, %v4439, 0
  %v4609 = vsel %vm782, %v4441, 0
  %v4612 = vsel %vm782, %v4443, 0
  %v4615 = vsel %vm782, %v4445, 0
  %v4618 = vsel %vm782, %v4447, 0
  %v4621 = vsel %vm782, %v4449, 0
  %v4624 = vsel %vm782, %v4451, 0
  %v4627 = vsel %vm782, %v4453, 0
  %v4630 = vsel %vm782, %v4455, 0
  %v4633 = vsel %vm782, %v4457, 0
  %v4636 = vsel %vm782, %v4459, 0
  %v4639 = vsel %vm782, %v4461, 0
  %v4642 = vsel %vm782, %v4463, 0
  %v4645 = vsel %vm782, %v4465, 0
  %v4648 = vsel %vm782, %v4467, 0
  %v4651 = vsel %vm782, %v4469, 0
  %v4654 = vsel %vm782, %v4471, 0
  %v4657 = vsel %vm782, %v4473, 0
  %v4660 = vsel %vm782, %v4475, 0
  %v4663 = vsel %vm782, %v4477, 0
  %v4666 = vsel %vm782, %v4479, 0
  %v4669 = vsel %vm782, %v4481, 0
  %v4672 = vsel %vm782, %v4483, 0
  %v4675 = vsel %vm782, %v4485, 0
  %v4678 = vsel %vm782, %v4487, 0
  %vm4680 = vcmask 1043456
  %v4682 = vsel %vm4680, %v53, 0
  %4684 = vmatpush.msra.mxu0 0.0
  %4685 = vmatpush.msra.mxu0 0.0
  %4686 = vmatpush.msra.mxu0 0.0
  %4687 = vmatpush.msra.mxu0 0.0
  %4688 = vmatpush.msra.mxu0 0.0
  %4689 = vmatpush.msra.mxu0 0.0
  %4690 = vmatpush.msra.mxu0 0.0
  %4691 = vmatpush.msra.mxu0 0.0
  %4692 = vmatpush.msra.mxu0 0.0
  %4693 = vmatpush.msra.mxu0 0.0
  %4694 = vmatpush.msra.mxu0 0.0
  %4695 = vmatpush.msra.mxu0 0.0
  %4696 = vmatpush.msra.mxu0 0.0
  %4697 = vmatpush.msra.mxu0 0.0
  %4698 = vmatpush.msra.mxu0 0.0
  %4699 = vmatpush.msra.mxu0 %v4682
  %4700 = vmatmul.f32.gmra.mxu0 %v4585
  %v4701 = vpop.f32.mrf.mxu0
  %v4702 = vadd.f32 0.0, %v4701
  %4703 = vmatmul.f32.gmra.mxu0 %v4588
  %v4704 = vpop.f32.mrf.mxu0
  %v4705 = vadd.f32 0.0, %v4704
  %4706 = vmatmul.f32.gmra.mxu0 %v4591
  %v4707 = vpop.f32.mrf.mxu0
  %v4708 = vadd.f32 0.0, %v4707
  %4709 = vmatmul.f32.gmra.mxu0 %v4594
  %v4710 = vpop.f32.mrf.mxu0
  %v4711 = vadd.f32 0.0, %v4710
  %4712 = vmatmul.f32.gmra.mxu0 %v4597
  %v4713 = vpop.f32.mrf.mxu0
  %v4714 = vadd.f32 0.0, %v4713
  %4715 = vmatmul.f32.gmra.mxu0 %v4600
  %v4716 = vpop.f32.mrf.mxu0
  %v4717 = vadd.f32 0.0, %v4716
  %4718 = vmatmul.f32.gmra.mxu0 %v4603
  %v4719 = vpop.f32.mrf.mxu0
  %v4720 = vadd.f32 0.0, %v4719
  %4721 = vmatmul.f32.gmra.mxu0 %v4606
  %v4722 = vpop.f32.mrf.mxu0
  %v4723 = vadd.f32 0.0, %v4722
  %4724 = vmatmul.f32.gmra.mxu0 %v4609
  %v4725 = vpop.f32.mrf.mxu0
  %v4726 = vadd.f32 0.0, %v4725
  %4727 = vmatmul.f32.gmra.mxu0 %v4612
  %v4728 = vpop.f32.mrf.mxu0
  %v4729 = vadd.f32 0.0, %v4728
  %4730 = vmatmul.f32.gmra.mxu0 %v4615
  %v4731 = vpop.f32.mrf.mxu0
  %v4732 = vadd.f32 0.0, %v4731
  %4733 = vmatmul.f32.gmra.mxu0 %v4618
  %v4734 = vpop.f32.mrf.mxu0
  %v4735 = vadd.f32 0.0, %v4734
  %4736 = vmatmul.f32.gmra.mxu0 %v4621
  %v4737 = vpop.f32.mrf.mxu0
  %v4738 = vadd.f32 0.0, %v4737
  %4739 = vmatmul.f32.gmra.mxu0 %v4624
  %v4740 = vpop.f32.mrf.mxu0
  %v4741 = vadd.f32 0.0, %v4740
  %4742 = vmatmul.f32.gmra.mxu0 %v4627
  %v4743 = vpop.f32.mrf.mxu0
  %v4744 = vadd.f32 0.0, %v4743
  %4745 = vmatmul.f32.gmra.mxu0 %v4630
  %v4746 = vpop.f32.mrf.mxu0
  %v4747 = vadd.f32 0.0, %v4746
  %4748 = vmatmul.f32.gmra.mxu0 %v4633
  %v4749 = vpop.f32.mrf.mxu0
  %v4750 = vadd.f32 0.0, %v4749
  %4751 = vmatmul.f32.gmra.mxu0 %v4636
  %v4752 = vpop.f32.mrf.mxu0
  %v4753 = vadd.f32 0.0, %v4752
  %4754 = vmatmul.f32.gmra.mxu0 %v4639
  %v4755 = vpop.f32.mrf.mxu0
  %v4756 = vadd.f32 0.0, %v4755
  %4757 = vmatmul.f32.gmra.mxu0 %v4642
  %v4758 = vpop.f32.mrf.mxu0
  %v4759 = vadd.f32 0.0, %v4758
  %4760 = vmatmul.f32.gmra.mxu0 %v4645
  %v4761 = vpop.f32.mrf.mxu0
  %v4762 = vadd.f32 0.0, %v4761
  %4763 = vmatmul.f32.gmra.mxu0 %v4648
  %v4764 = vpop.f32.mrf.mxu0
  %v4765 = vadd.f32 0.0, %v4764
  %4766 = vmatmul.f32.gmra.mxu0 %v4651
  %v4767 = vpop.f32.mrf.mxu0
  %v4768 = vadd.f32 0.0, %v4767
  %4769 = vmatmul.f32.gmra.mxu0 %v4654
  %v4770 = vpop.f32.mrf.mxu0
  %v4771 = vadd.f32 0.0, %v4770
  %4772 = vmatmul.f32.gmra.mxu0 %v4657
  %v4773 = vpop.f32.mrf.mxu0
  %v4774 = vadd.f32 0.0, %v4773
  %4775 = vmatmul.f32.gmra.mxu0 %v4660
  %v4776 = vpop.f32.mrf.mxu0
  %v4777 = vadd.f32 0.0, %v4776
  %4778 = vmatmul.f32.gmra.mxu0 %v4663
  %v4779 = vpop.f32.mrf.mxu0
  %v4780 = vadd.f32 0.0, %v4779
  %4781 = vmatmul.f32.gmra.mxu0 %v4666
  %v4782 = vpop.f32.mrf.mxu0
  %v4783 = vadd.f32 0.0, %v4782
  %4784 = vmatmul.f32.gmra.mxu0 %v4669
  %v4785 = vpop.f32.mrf.mxu0
  %v4786 = vadd.f32 0.0, %v4785
  %4787 = vmatmul.f32.gmra.mxu0 %v4672
  %v4788 = vpop.f32.mrf.mxu0
  %v4789 = vadd.f32 0.0, %v4788
  %4790 = vmatmul.f32.gmra.mxu0 %v4675
  %v4791 = vpop.f32.mrf.mxu0
  %v4792 = vadd.f32 0.0, %v4791
  %4793 = vmatmul.f32.gmra.mxu0 %v4678
  %v4794 = vpop.f32.mrf.mxu0
  %v4795 = vadd.f32 0.0, %v4794
  %4796 = vdwg.mxu0
  %v4797 = vmul.f32 %v90, %v4490
  %v4798 = vmul.f32 %v91, %v4493
  %v4799 = vmul.f32 %v92, %v4496
  %v4800 = vmul.f32 %v93, %v4499
  %v4801 = vmul.f32 %v94, %v4502
  %v4802 = vmul.f32 %v95, %v4505
  %v4803 = vmul.f32 %v96, %v4508
  %v4804 = vmul.f32 %v97, %v4511
  %v4805 = vmul.f32 %v98, %v4514
  %v4806 = vmul.f32 %v99, %v4517
  %v4807 = vmul.f32 %v100, %v4520
  %v4808 = vmul.f32 %v101, %v4523
  %v4809 = vmul.f32 %v102, %v4526
  %v4810 = vmul.f32 %v103, %v4529
  %v4811 = vmul.f32 %v104, %v4532
  %v4812 = vmul.f32 %v105, %v4535
  %v4813 = vmul.f32 %v106, %v4538
  %v4814 = vmul.f32 %v107, %v4541
  %v4815 = vmul.f32 %v108, %v4544
  %v4816 = vmul.f32 %v109, %v4547
  %v4817 = vmul.f32 %v110, %v4550
  %v4818 = vmul.f32 %v111, %v4553
  %v4819 = vmul.f32 %v112, %v4556
  %v4820 = vmul.f32 %v113, %v4559
  %v4821 = vmul.f32 %v114, %v4562
  %v4822 = vmul.f32 %v115, %v4565
  %v4823 = vmul.f32 %v116, %v4568
  %v4824 = vmul.f32 %v117, %v4571
  %v4825 = vmul.f32 %v118, %v4574
  %v4826 = vmul.f32 %v119, %v4577
  %v4827 = vmul.f32 %v120, %v4580
  %v4828 = vmul.f32 %v121, %v4583
  %4830 = vset.pattern.permute.xlu0 1
  %4831 = vperm.xlu0 %4830, %v4797
  %v4832 = vpop.permute.xlu0 %4831
  %4835 = vset.pattern.permute.xlu0 1
  %4836 = vperm.xlu0 %4835, %v4798
  %v4837 = vpop.permute.xlu0 %4836
  %4840 = vset.pattern.permute.xlu0 1
  %4841 = vperm.xlu0 %4840, %v4799
  %v4842 = vpop.permute.xlu0 %4841
  %4845 = vset.pattern.permute.xlu0 1
  %4846 = vperm.xlu0 %4845, %v4800
  %v4847 = vpop.permute.xlu0 %4846
  %4850 = vset.pattern.permute.xlu0 1
  %4851 = vperm.xlu0 %4850, %v4801
  %v4852 = vpop.permute.xlu0 %4851
  %4855 = vset.pattern.permute.xlu0 1
  %4856 = vperm.xlu0 %4855, %v4802
  %v4857 = vpop.permute.xlu0 %4856
  %4860 = vset.pattern.permute.xlu0 1
  %4861 = vperm.xlu0 %4860, %v4803
  %v4862 = vpop.permute.xlu0 %4861
  %4865 = vset.pattern.permute.xlu0 1
  %4866 = vperm.xlu0 %4865, %v4804
  %v4867 = vpop.permute.xlu0 %4866
  %4870 = vset.pattern.permute.xlu0 1
  %4871 = vperm.xlu0 %4870, %v4805
  %v4872 = vpop.permute.xlu0 %4871
  %4875 = vset.pattern.permute.xlu0 1
  %4876 = vperm.xlu0 %4875, %v4806
  %v4877 = vpop.permute.xlu0 %4876
  %4880 = vset.pattern.permute.xlu0 1
  %4881 = vperm.xlu0 %4880, %v4807
  %v4882 = vpop.permute.xlu0 %4881
  %4885 = vset.pattern.permute.xlu0 1
  %4886 = vperm.xlu0 %4885, %v4808
  %v4887 = vpop.permute.xlu0 %4886
  %4890 = vset.pattern.permute.xlu0 1
  %4891 = vperm.xlu0 %4890, %v4809
  %v4892 = vpop.permute.xlu0 %4891
  %4895 = vset.pattern.permute.xlu0 1
  %4896 = vperm.xlu0 %4895, %v4810
  %v4897 = vpop.permute.xlu0 %4896
  %4900 = vset.pattern.permute.xlu0 1
  %4901 = vperm.xlu0 %4900, %v4811
  %v4902 = vpop.permute.xlu0 %4901
  %4905 = vset.pattern.permute.xlu0 1
  %4906 = vperm.xlu0 %4905, %v4812
  %v4907 = vpop.permute.xlu0 %4906
  %4910 = vset.pattern.permute.xlu0 1
  %4911 = vperm.xlu0 %4910, %v4813
  %v4912 = vpop.permute.xlu0 %4911
  %4915 = vset.pattern.permute.xlu0 1
  %4916 = vperm.xlu0 %4915, %v4814
  %v4917 = vpop.permute.xlu0 %4916
  %4920 = vset.pattern.permute.xlu0 1
  %4921 = vperm.xlu0 %4920, %v4815
  %v4922 = vpop.permute.xlu0 %4921
  %4925 = vset.pattern.permute.xlu0 1
  %4926 = vperm.xlu0 %4925, %v4816
  %v4927 = vpop.permute.xlu0 %4926
  %4930 = vset.pattern.permute.xlu0 1
  %4931 = vperm.xlu0 %4930, %v4817
  %v4932 = vpop.permute.xlu0 %4931
  %4935 = vset.pattern.permute.xlu0 1
  %4936 = vperm.xlu0 %4935, %v4818
  %v4937 = vpop.permute.xlu0 %4936
  %4940 = vset.pattern.permute.xlu0 1
  %4941 = vperm.xlu0 %4940, %v4819
  %v4942 = vpop.permute.xlu0 %4941
  %4945 = vset.pattern.permute.xlu0 1
  %4946 = vperm.xlu0 %4945, %v4820
  %v4947 = vpop.permute.xlu0 %4946
  %4950 = vset.pattern.permute.xlu0 1
  %4951 = vperm.xlu0 %4950, %v4821
  %v4952 = vpop.permute.xlu0 %4951
  %4955 = vset.pattern.permute.xlu0 1
  %4956 = vperm.xlu0 %4955, %v4822
  %v4957 = vpop.permute.xlu0 %4956
  %4960 = vset.pattern.permute.xlu0 1
  %4961 = vperm.xlu0 %4960, %v4823
  %v4962 = vpop.permute.xlu0 %4961
  %4965 = vset.pattern.permute.xlu0 1
  %4966 = vperm.xlu0 %4965, %v4824
  %v4967 = vpop.permute.xlu0 %4966
  %4970 = vset.pattern.permute.xlu0 1
  %4971 = vperm.xlu0 %4970, %v4825
  %v4972 = vpop.permute.xlu0 %4971
  %4975 = vset.pattern.permute.xlu0 1
  %4976 = vperm.xlu0 %4975, %v4826
  %v4977 = vpop.permute.xlu0 %4976
  %4980 = vset.pattern.permute.xlu0 1
  %4981 = vperm.xlu0 %4980, %v4827
  %v4982 = vpop.permute.xlu0 %4981
  %4985 = vset.pattern.permute.xlu0 1
  %4986 = vperm.xlu0 %4985, %v4828
  %v4987 = vpop.permute.xlu0 %4986
  %vm4989 = vcmp.ge.f32.partialorder %v4832, %v4702
  %vm4990 = vcmp.ge.f32.partialorder %v4837, %v4705
  %vm4991 = vcmp.ge.f32.partialorder %v4842, %v4708
  %vm4992 = vcmp.ge.f32.partialorder %v4847, %v4711
  %vm4993 = vcmp.ge.f32.partialorder %v4852, %v4714
  %vm4994 = vcmp.ge.f32.partialorder %v4857, %v4717
  %vm4995 = vcmp.ge.f32.partialorder %v4862, %v4720
  %vm4996 = vcmp.ge.f32.partialorder %v4867, %v4723
  %vm4997 = vcmp.ge.f32.partialorder %v4872, %v4726
  %vm4998 = vcmp.ge.f32.partialorder %v4877, %v4729
  %vm4999 = vcmp.ge.f32.partialorder %v4882, %v4732
  %vm5000 = vcmp.ge.f32.partialorder %v4887, %v4735
  %vm5001 = vcmp.ge.f32.partialorder %v4892, %v4738
  %vm5002 = vcmp.ge.f32.partialorder %v4897, %v4741
  %vm5003 = vcmp.ge.f32.partialorder %v4902, %v4744
  %vm5004 = vcmp.ge.f32.partialorder %v4907, %v4747
  %vm5005 = vcmp.ge.f32.partialorder %v4912, %v4750
  %vm5006 = vcmp.ge.f32.partialorder %v4917, %v4753
  %vm5007 = vcmp.ge.f32.partialorder %v4922, %v4756
  %vm5008 = vcmp.ge.f32.partialorder %v4927, %v4759
  %vm5009 = vcmp.ge.f32.partialorder %v4932, %v4762
  %vm5010 = vcmp.ge.f32.partialorder %v4937, %v4765
  %vm5011 = vcmp.ge.f32.partialorder %v4942, %v4768
  %vm5012 = vcmp.ge.f32.partialorder %v4947, %v4771
  %vm5013 = vcmp.ge.f32.partialorder %v4952, %v4774
  %vm5014 = vcmp.ge.f32.partialorder %v4957, %v4777
  %vm5015 = vcmp.ge.f32.partialorder %v4962, %v4780
  %vm5016 = vcmp.ge.f32.partialorder %v4967, %v4783
  %vm5017 = vcmp.ge.f32.partialorder %v4972, %v4786
  %vm5018 = vcmp.ge.f32.partialorder %v4977, %v4789
  %vm5019 = vcmp.ge.f32.partialorder %v4982, %v4792
  %vm5020 = vcmp.ge.f32.partialorder %v4987, %v4795
  %v5021 = vsel %vm4989, 1, 0
  %v5022 = vsel %vm4990, 1, 0
  %v5023 = vsel %vm4991, 1, 0
  %v5024 = vsel %vm4992, 1, 0
  %v5025 = vsel %vm4993, 1, 0
  %v5026 = vsel %vm4994, 1, 0
  %v5027 = vsel %vm4995, 1, 0
  %v5028 = vsel %vm4996, 1, 0
  %v5029 = vsel %vm4997, 1, 0
  %v5030 = vsel %vm4998, 1, 0
  %v5031 = vsel %vm4999, 1, 0
  %v5032 = vsel %vm5000, 1, 0
  %v5033 = vsel %vm5001, 1, 0
  %v5034 = vsel %vm5002, 1, 0
  %v5035 = vsel %vm5003, 1, 0
  %v5036 = vsel %vm5004, 1, 0
  %v5037 = vsel %vm5005, 1, 0
  %v5038 = vsel %vm5006, 1, 0
  %v5039 = vsel %vm5007, 1, 0
  %v5040 = vsel %vm5008, 1, 0
  %v5041 = vsel %vm5009, 1, 0
  %v5042 = vsel %vm5010, 1, 0
  %v5043 = vsel %vm5011, 1, 0
  %v5044 = vsel %vm5012, 1, 0
  %v5045 = vsel %vm5013, 1, 0
  %v5046 = vsel %vm5014, 1, 0
  %v5047 = vsel %vm5015, 1, 0
  %v5048 = vsel %vm5016, 1, 0
  %v5049 = vsel %vm5017, 1, 0
  %v5050 = vsel %vm5018, 1, 0
  %v5051 = vsel %vm5019, 1, 0
  %v5052 = vsel %vm5020, 1, 0
  %v5053 = vsel %vm782, %v5021, 0
  %v5054 = vand.u32 %v5053, 65535
  %v5055 = vshrl.u32 %v5053, 16
  %v5056 = vcvt.s32.f32 %v5054
  %v5057 = vcvt.s32.f32 %v5055
  %5058 = vadd.xlane.f32.xlu0 %v5056
  %v5059 = vpop.xlane.xlu0 %5058
  %5060 = vadd.xlane.f32.xlu0 %v5057
  %v5061 = vpop.xlane.xlu0 %5060
  %v5062 = vcvt.f32.s32 %v5059
  %v5063 = vcvt.f32.s32 %v5061
  %v5064 = vshll.u32 %v5063, 16
  %v5065 = vadd.s32 %v5064, %v5062
  %v5066 = vsel %vm782, %v5022, 0
  %v5067 = vand.u32 %v5066, 65535
  %v5068 = vshrl.u32 %v5066, 16
  %v5069 = vcvt.s32.f32 %v5067
  %v5070 = vcvt.s32.f32 %v5068
  %5071 = vadd.xlane.f32.xlu0 %v5069
  %v5072 = vpop.xlane.xlu0 %5071
  %5073 = vadd.xlane.f32.xlu0 %v5070
  %v5074 = vpop.xlane.xlu0 %5073
  %v5075 = vcvt.f32.s32 %v5072
  %v5076 = vcvt.f32.s32 %v5074
  %v5077 = vshll.u32 %v5076, 16
  %v5078 = vadd.s32 %v5077, %v5075
  %v5079 = vsel %vm782, %v5023, 0
  %v5080 = vand.u32 %v5079, 65535
  %v5081 = vshrl.u32 %v5079, 16
  %v5082 = vcvt.s32.f32 %v5080
  %v5083 = vcvt.s32.f32 %v5081
  %5084 = vadd.xlane.f32.xlu0 %v5082
  %v5085 = vpop.xlane.xlu0 %5084
  %5086 = vadd.xlane.f32.xlu0 %v5083
  %v5087 = vpop.xlane.xlu0 %5086
  %v5088 = vcvt.f32.s32 %v5085
  %v5089 = vcvt.f32.s32 %v5087
  %v5090 = vshll.u32 %v5089, 16
  %v5091 = vadd.s32 %v5090, %v5088
  %v5092 = vsel %vm782, %v5024, 0
  %v5093 = vand.u32 %v5092, 65535
  %v5094 = vshrl.u32 %v5092, 16
  %v5095 = vcvt.s32.f32 %v5093
  %v5096 = vcvt.s32.f32 %v5094
  %5097 = vadd.xlane.f32.xlu0 %v5095
  %v5098 = vpop.xlane.xlu0 %5097
  %5099 = vadd.xlane.f32.xlu0 %v5096
  %v5100 = vpop.xlane.xlu0 %5099
  %v5101 = vcvt.f32.s32 %v5098
  %v5102 = vcvt.f32.s32 %v5100
  %v5103 = vshll.u32 %v5102, 16
  %v5104 = vadd.s32 %v5103, %v5101
  %v5105 = vsel %vm782, %v5025, 0
  %v5106 = vand.u32 %v5105, 65535
  %v5107 = vshrl.u32 %v5105, 16
  %v5108 = vcvt.s32.f32 %v5106
  %v5109 = vcvt.s32.f32 %v5107
  %5110 = vadd.xlane.f32.xlu0 %v5108
  %v5111 = vpop.xlane.xlu0 %5110
  %5112 = vadd.xlane.f32.xlu0 %v5109
  %v5113 = vpop.xlane.xlu0 %5112
  %v5114 = vcvt.f32.s32 %v5111
  %v5115 = vcvt.f32.s32 %v5113
  %v5116 = vshll.u32 %v5115, 16
  %v5117 = vadd.s32 %v5116, %v5114
  %v5118 = vsel %vm782, %v5026, 0
  %v5119 = vand.u32 %v5118, 65535
  %v5120 = vshrl.u32 %v5118, 16
  %v5121 = vcvt.s32.f32 %v5119
  %v5122 = vcvt.s32.f32 %v5120
  %5123 = vadd.xlane.f32.xlu0 %v5121
  %v5124 = vpop.xlane.xlu0 %5123
  %5125 = vadd.xlane.f32.xlu0 %v5122
  %v5126 = vpop.xlane.xlu0 %5125
  %v5127 = vcvt.f32.s32 %v5124
  %v5128 = vcvt.f32.s32 %v5126
  %v5129 = vshll.u32 %v5128, 16
  %v5130 = vadd.s32 %v5129, %v5127
  %v5131 = vsel %vm782, %v5027, 0
  %v5132 = vand.u32 %v5131, 65535
  %v5133 = vshrl.u32 %v5131, 16
  %v5134 = vcvt.s32.f32 %v5132
  %v5135 = vcvt.s32.f32 %v5133
  %5136 = vadd.xlane.f32.xlu0 %v5134
  %v5137 = vpop.xlane.xlu0 %5136
  %5138 = vadd.xlane.f32.xlu0 %v5135
  %v5139 = vpop.xlane.xlu0 %5138
  %v5140 = vcvt.f32.s32 %v5137
  %v5141 = vcvt.f32.s32 %v5139
  %v5142 = vshll.u32 %v5141, 16
  %v5143 = vadd.s32 %v5142, %v5140
  %v5144 = vsel %vm782, %v5028, 0
  %v5145 = vand.u32 %v5144, 65535
  %v5146 = vshrl.u32 %v5144, 16
  %v5147 = vcvt.s32.f32 %v5145
  %v5148 = vcvt.s32.f32 %v5146
  %5149 = vadd.xlane.f32.xlu0 %v5147
  %v5150 = vpop.xlane.xlu0 %5149
  %5151 = vadd.xlane.f32.xlu0 %v5148
  %v5152 = vpop.xlane.xlu0 %5151
  %v5153 = vcvt.f32.s32 %v5150
  %v5154 = vcvt.f32.s32 %v5152
  %v5155 = vshll.u32 %v5154, 16
  %v5156 = vadd.s32 %v5155, %v5153
  %v5157 = vsel %vm782, %v5029, 0
  %v5158 = vand.u32 %v5157, 65535
  %v5159 = vshrl.u32 %v5157, 16
  %v5160 = vcvt.s32.f32 %v5158
  %v5161 = vcvt.s32.f32 %v5159
  %5162 = vadd.xlane.f32.xlu0 %v5160
  %v5163 = vpop.xlane.xlu0 %5162
  %5164 = vadd.xlane.f32.xlu0 %v5161
  %v5165 = vpop.xlane.xlu0 %5164
  %v5166 = vcvt.f32.s32 %v5163
  %v5167 = vcvt.f32.s32 %v5165
  %v5168 = vshll.u32 %v5167, 16
  %v5169 = vadd.s32 %v5168, %v5166
  %v5170 = vsel %vm782, %v5030, 0
  %v5171 = vand.u32 %v5170, 65535
  %v5172 = vshrl.u32 %v5170, 16
  %v5173 = vcvt.s32.f32 %v5171
  %v5174 = vcvt.s32.f32 %v5172
  %5175 = vadd.xlane.f32.xlu0 %v5173
  %v5176 = vpop.xlane.xlu0 %5175
  %5177 = vadd.xlane.f32.xlu0 %v5174
  %v5178 = vpop.xlane.xlu0 %5177
  %v5179 = vcvt.f32.s32 %v5176
  %v5180 = vcvt.f32.s32 %v5178
  %v5181 = vshll.u32 %v5180, 16
  %v5182 = vadd.s32 %v5181, %v5179
  %v5183 = vsel %vm782, %v5031, 0
  %v5184 = vand.u32 %v5183, 65535
  %v5185 = vshrl.u32 %v5183, 16
  %v5186 = vcvt.s32.f32 %v5184
  %v5187 = vcvt.s32.f32 %v5185
  %5188 = vadd.xlane.f32.xlu0 %v5186
  %v5189 = vpop.xlane.xlu0 %5188
  %5190 = vadd.xlane.f32.xlu0 %v5187
  %v5191 = vpop.xlane.xlu0 %5190
  %v5192 = vcvt.f32.s32 %v5189
  %v5193 = vcvt.f32.s32 %v5191
  %v5194 = vshll.u32 %v5193, 16
  %v5195 = vadd.s32 %v5194, %v5192
  %v5196 = vsel %vm782, %v5032, 0
  %v5197 = vand.u32 %v5196, 65535
  %v5198 = vshrl.u32 %v5196, 16
  %v5199 = vcvt.s32.f32 %v5197
  %v5200 = vcvt.s32.f32 %v5198
  %5201 = vadd.xlane.f32.xlu0 %v5199
  %v5202 = vpop.xlane.xlu0 %5201
  %5203 = vadd.xlane.f32.xlu0 %v5200
  %v5204 = vpop.xlane.xlu0 %5203
  %v5205 = vcvt.f32.s32 %v5202
  %v5206 = vcvt.f32.s32 %v5204
  %v5207 = vshll.u32 %v5206, 16
  %v5208 = vadd.s32 %v5207, %v5205
  %v5209 = vsel %vm782, %v5033, 0
  %v5210 = vand.u32 %v5209, 65535
  %v5211 = vshrl.u32 %v5209, 16
  %v5212 = vcvt.s32.f32 %v5210
  %v5213 = vcvt.s32.f32 %v5211
  %5214 = vadd.xlane.f32.xlu0 %v5212
  %v5215 = vpop.xlane.xlu0 %5214
  %5216 = vadd.xlane.f32.xlu0 %v5213
  %v5217 = vpop.xlane.xlu0 %5216
  %v5218 = vcvt.f32.s32 %v5215
  %v5219 = vcvt.f32.s32 %v5217
  %v5220 = vshll.u32 %v5219, 16
  %v5221 = vadd.s32 %v5220, %v5218
  %v5222 = vsel %vm782, %v5034, 0
  %v5223 = vand.u32 %v5222, 65535
  %v5224 = vshrl.u32 %v5222, 16
  %v5225 = vcvt.s32.f32 %v5223
  %v5226 = vcvt.s32.f32 %v5224
  %5227 = vadd.xlane.f32.xlu0 %v5225
  %v5228 = vpop.xlane.xlu0 %5227
  %5229 = vadd.xlane.f32.xlu0 %v5226
  %v5230 = vpop.xlane.xlu0 %5229
  %v5231 = vcvt.f32.s32 %v5228
  %v5232 = vcvt.f32.s32 %v5230
  %v5233 = vshll.u32 %v5232, 16
  %v5234 = vadd.s32 %v5233, %v5231
  %v5235 = vsel %vm782, %v5035, 0
  %v5236 = vand.u32 %v5235, 65535
  %v5237 = vshrl.u32 %v5235, 16
  %v5238 = vcvt.s32.f32 %v5236
  %v5239 = vcvt.s32.f32 %v5237
  %5240 = vadd.xlane.f32.xlu0 %v5238
  %v5241 = vpop.xlane.xlu0 %5240
  %5242 = vadd.xlane.f32.xlu0 %v5239
  %v5243 = vpop.xlane.xlu0 %5242
  %v5244 = vcvt.f32.s32 %v5241
  %v5245 = vcvt.f32.s32 %v5243
  %v5246 = vshll.u32 %v5245, 16
  %v5247 = vadd.s32 %v5246, %v5244
  %v5248 = vsel %vm782, %v5036, 0
  %v5249 = vand.u32 %v5248, 65535
  %v5250 = vshrl.u32 %v5248, 16
  %v5251 = vcvt.s32.f32 %v5249
  %v5252 = vcvt.s32.f32 %v5250
  %5253 = vadd.xlane.f32.xlu0 %v5251
  %v5254 = vpop.xlane.xlu0 %5253
  %5255 = vadd.xlane.f32.xlu0 %v5252
  %v5256 = vpop.xlane.xlu0 %5255
  %v5257 = vcvt.f32.s32 %v5254
  %v5258 = vcvt.f32.s32 %v5256
  %v5259 = vshll.u32 %v5258, 16
  %v5260 = vadd.s32 %v5259, %v5257
  %v5261 = vsel %vm782, %v5037, 0
  %v5262 = vand.u32 %v5261, 65535
  %v5263 = vshrl.u32 %v5261, 16
  %v5264 = vcvt.s32.f32 %v5262
  %v5265 = vcvt.s32.f32 %v5263
  %5266 = vadd.xlane.f32.xlu0 %v5264
  %v5267 = vpop.xlane.xlu0 %5266
  %5268 = vadd.xlane.f32.xlu0 %v5265
  %v5269 = vpop.xlane.xlu0 %5268
  %v5270 = vcvt.f32.s32 %v5267
  %v5271 = vcvt.f32.s32 %v5269
  %v5272 = vshll.u32 %v5271, 16
  %v5273 = vadd.s32 %v5272, %v5270
  %v5274 = vsel %vm782, %v5038, 0
  %v5275 = vand.u32 %v5274, 65535
  %v5276 = vshrl.u32 %v5274, 16
  %v5277 = vcvt.s32.f32 %v5275
  %v5278 = vcvt.s32.f32 %v5276
  %5279 = vadd.xlane.f32.xlu0 %v5277
  %v5280 = vpop.xlane.xlu0 %5279
  %5281 = vadd.xlane.f32.xlu0 %v5278
  %v5282 = vpop.xlane.xlu0 %5281
  %v5283 = vcvt.f32.s32 %v5280
  %v5284 = vcvt.f32.s32 %v5282
  %v5285 = vshll.u32 %v5284, 16
  %v5286 = vadd.s32 %v5285, %v5283
  %v5287 = vsel %vm782, %v5039, 0
  %v5288 = vand.u32 %v5287, 65535
  %v5289 = vshrl.u32 %v5287, 16
  %v5290 = vcvt.s32.f32 %v5288
  %v5291 = vcvt.s32.f32 %v5289
  %5292 = vadd.xlane.f32.xlu0 %v5290
  %v5293 = vpop.xlane.xlu0 %5292
  %5294 = vadd.xlane.f32.xlu0 %v5291
  %v5295 = vpop.xlane.xlu0 %5294
  %v5296 = vcvt.f32.s32 %v5293
  %v5297 = vcvt.f32.s32 %v5295
  %v5298 = vshll.u32 %v5297, 16
  %v5299 = vadd.s32 %v5298, %v5296
  %v5300 = vsel %vm782, %v5040, 0
  %v5301 = vand.u32 %v5300, 65535
  %v5302 = vshrl.u32 %v5300, 16
  %v5303 = vcvt.s32.f32 %v5301
  %v5304 = vcvt.s32.f32 %v5302
  %5305 = vadd.xlane.f32.xlu0 %v5303
  %v5306 = vpop.xlane.xlu0 %5305
  %5307 = vadd.xlane.f32.xlu0 %v5304
  %v5308 = vpop.xlane.xlu0 %5307
  %v5309 = vcvt.f32.s32 %v5306
  %v5310 = vcvt.f32.s32 %v5308
  %v5311 = vshll.u32 %v5310, 16
  %v5312 = vadd.s32 %v5311, %v5309
  %v5313 = vsel %vm782, %v5041, 0
  %v5314 = vand.u32 %v5313, 65535
  %v5315 = vshrl.u32 %v5313, 16
  %v5316 = vcvt.s32.f32 %v5314
  %v5317 = vcvt.s32.f32 %v5315
  %5318 = vadd.xlane.f32.xlu0 %v5316
  %v5319 = vpop.xlane.xlu0 %5318
  %5320 = vadd.xlane.f32.xlu0 %v5317
  %v5321 = vpop.xlane.xlu0 %5320
  %v5322 = vcvt.f32.s32 %v5319
  %v5323 = vcvt.f32.s32 %v5321
  %v5324 = vshll.u32 %v5323, 16
  %v5325 = vadd.s32 %v5324, %v5322
  %v5326 = vsel %vm782, %v5042, 0
  %v5327 = vand.u32 %v5326, 65535
  %v5328 = vshrl.u32 %v5326, 16
  %v5329 = vcvt.s32.f32 %v5327
  %v5330 = vcvt.s32.f32 %v5328
  %5331 = vadd.xlane.f32.xlu0 %v5329
  %v5332 = vpop.xlane.xlu0 %5331
  %5333 = vadd.xlane.f32.xlu0 %v5330
  %v5334 = vpop.xlane.xlu0 %5333
  %v5335 = vcvt.f32.s32 %v5332
  %v5336 = vcvt.f32.s32 %v5334
  %v5337 = vshll.u32 %v5336, 16
  %v5338 = vadd.s32 %v5337, %v5335
  %v5339 = vsel %vm782, %v5043, 0
  %v5340 = vand.u32 %v5339, 65535
  %v5341 = vshrl.u32 %v5339, 16
  %v5342 = vcvt.s32.f32 %v5340
  %v5343 = vcvt.s32.f32 %v5341
  %5344 = vadd.xlane.f32.xlu0 %v5342
  %v5345 = vpop.xlane.xlu0 %5344
  %5346 = vadd.xlane.f32.xlu0 %v5343
  %v5347 = vpop.xlane.xlu0 %5346
  %v5348 = vcvt.f32.s32 %v5345
  %v5349 = vcvt.f32.s32 %v5347
  %v5350 = vshll.u32 %v5349, 16
  %v5351 = vadd.s32 %v5350, %v5348
  %v5352 = vsel %vm782, %v5044, 0
  %v5353 = vand.u32 %v5352, 65535
  %v5354 = vshrl.u32 %v5352, 16
  %v5355 = vcvt.s32.f32 %v5353
  %v5356 = vcvt.s32.f32 %v5354
  %5357 = vadd.xlane.f32.xlu0 %v5355
  %v5358 = vpop.xlane.xlu0 %5357
  %5359 = vadd.xlane.f32.xlu0 %v5356
  %v5360 = vpop.xlane.xlu0 %5359
  %v5361 = vcvt.f32.s32 %v5358
  %v5362 = vcvt.f32.s32 %v5360
  %v5363 = vshll.u32 %v5362, 16
  %v5364 = vadd.s32 %v5363, %v5361
  %v5365 = vsel %vm782, %v5045, 0
  %v5366 = vand.u32 %v5365, 65535
  %v5367 = vshrl.u32 %v5365, 16
  %v5368 = vcvt.s32.f32 %v5366
  %v5369 = vcvt.s32.f32 %v5367
  %5370 = vadd.xlane.f32.xlu0 %v5368
  %v5371 = vpop.xlane.xlu0 %5370
  %5372 = vadd.xlane.f32.xlu0 %v5369
  %v5373 = vpop.xlane.xlu0 %5372
  %v5374 = vcvt.f32.s32 %v5371
  %v5375 = vcvt.f32.s32 %v5373
  %v5376 = vshll.u32 %v5375, 16
  %v5377 = vadd.s32 %v5376, %v5374
  %v5378 = vsel %vm782, %v5046, 0
  %v5379 = vand.u32 %v5378, 65535
  %v5380 = vshrl.u32 %v5378, 16
  %v5381 = vcvt.s32.f32 %v5379
  %v5382 = vcvt.s32.f32 %v5380
  %5383 = vadd.xlane.f32.xlu0 %v5381
  %v5384 = vpop.xlane.xlu0 %5383
  %5385 = vadd.xlane.f32.xlu0 %v5382
  %v5386 = vpop.xlane.xlu0 %5385
  %v5387 = vcvt.f32.s32 %v5384
  %v5388 = vcvt.f32.s32 %v5386
  %v5389 = vshll.u32 %v5388, 16
  %v5390 = vadd.s32 %v5389, %v5387
  %v5391 = vsel %vm782, %v5047, 0
  %v5392 = vand.u32 %v5391, 65535
  %v5393 = vshrl.u32 %v5391, 16
  %v5394 = vcvt.s32.f32 %v5392
  %v5395 = vcvt.s32.f32 %v5393
  %5396 = vadd.xlane.f32.xlu0 %v5394
  %v5397 = vpop.xlane.xlu0 %5396
  %5398 = vadd.xlane.f32.xlu0 %v5395
  %v5399 = vpop.xlane.xlu0 %5398
  %v5400 = vcvt.f32.s32 %v5397
  %v5401 = vcvt.f32.s32 %v5399
  %v5402 = vshll.u32 %v5401, 16
  %v5403 = vadd.s32 %v5402, %v5400
  %v5404 = vsel %vm782, %v5048, 0
  %v5405 = vand.u32 %v5404, 65535
  %v5406 = vshrl.u32 %v5404, 16
  %v5407 = vcvt.s32.f32 %v5405
  %v5408 = vcvt.s32.f32 %v5406
  %5409 = vadd.xlane.f32.xlu0 %v5407
  %v5410 = vpop.xlane.xlu0 %5409
  %5411 = vadd.xlane.f32.xlu0 %v5408
  %v5412 = vpop.xlane.xlu0 %5411
  %v5413 = vcvt.f32.s32 %v5410
  %v5414 = vcvt.f32.s32 %v5412
  %v5415 = vshll.u32 %v5414, 16
  %v5416 = vadd.s32 %v5415, %v5413
  %v5417 = vsel %vm782, %v5049, 0
  %v5418 = vand.u32 %v5417, 65535
  %v5419 = vshrl.u32 %v5417, 16
  %v5420 = vcvt.s32.f32 %v5418
  %v5421 = vcvt.s32.f32 %v5419
  %5422 = vadd.xlane.f32.xlu0 %v5420
  %v5423 = vpop.xlane.xlu0 %5422
  %5424 = vadd.xlane.f32.xlu0 %v5421
  %v5425 = vpop.xlane.xlu0 %5424
  %v5426 = vcvt.f32.s32 %v5423
  %v5427 = vcvt.f32.s32 %v5425
  %v5428 = vshll.u32 %v5427, 16
  %v5429 = vadd.s32 %v5428, %v5426
  %v5430 = vsel %vm782, %v5050, 0
  %v5431 = vand.u32 %v5430, 65535
  %v5432 = vshrl.u32 %v5430, 16
  %v5433 = vcvt.s32.f32 %v5431
  %v5434 = vcvt.s32.f32 %v5432
  %5435 = vadd.xlane.f32.xlu0 %v5433
  %v5436 = vpop.xlane.xlu0 %5435
  %5437 = vadd.xlane.f32.xlu0 %v5434
  %v5438 = vpop.xlane.xlu0 %5437
  %v5439 = vcvt.f32.s32 %v5436
  %v5440 = vcvt.f32.s32 %v5438
  %v5441 = vshll.u32 %v5440, 16
  %v5442 = vadd.s32 %v5441, %v5439
  %v5443 = vsel %vm782, %v5051, 0
  %v5444 = vand.u32 %v5443, 65535
  %v5445 = vshrl.u32 %v5443, 16
  %v5446 = vcvt.s32.f32 %v5444
  %v5447 = vcvt.s32.f32 %v5445
  %5448 = vadd.xlane.f32.xlu0 %v5446
  %v5449 = vpop.xlane.xlu0 %5448
  %5450 = vadd.xlane.f32.xlu0 %v5447
  %v5451 = vpop.xlane.xlu0 %5450
  %v5452 = vcvt.f32.s32 %v5449
  %v5453 = vcvt.f32.s32 %v5451
  %v5454 = vshll.u32 %v5453, 16
  %v5455 = vadd.s32 %v5454, %v5452
  %v5456 = vsel %vm782, %v5052, 0
  %v5457 = vand.u32 %v5456, 65535
  %v5458 = vshrl.u32 %v5456, 16
  %v5459 = vcvt.s32.f32 %v5457
  %v5460 = vcvt.s32.f32 %v5458
  %5461 = vadd.xlane.f32.xlu0 %v5459
  %v5462 = vpop.xlane.xlu0 %5461
  %5463 = vadd.xlane.f32.xlu0 %v5460
  %v5464 = vpop.xlane.xlu0 %5463
  %v5465 = vcvt.f32.s32 %v5462
  %v5466 = vcvt.f32.s32 %v5464
  %v5467 = vshll.u32 %v5466, 16
  %v5468 = vadd.s32 %v5467, %v5465
  %vm5469 = vcmp.lt.s32.totalorder %v5065, 3
  %v5470 = vsel %vm5469, %v5065, 3
  %vm5471 = vcmp.lt.s32.totalorder %v5078, 3
  %v5472 = vsel %vm5471, %v5078, 3
  %vm5473 = vcmp.lt.s32.totalorder %v5091, 3
  %v5474 = vsel %vm5473, %v5091, 3
  %vm5475 = vcmp.lt.s32.totalorder %v5104, 3
  %v5476 = vsel %vm5475, %v5104, 3
  %vm5477 = vcmp.lt.s32.totalorder %v5117, 3
  %v5478 = vsel %vm5477, %v5117, 3
  %vm5479 = vcmp.lt.s32.totalorder %v5130, 3
  %v5480 = vsel %vm5479, %v5130, 3
  %vm5481 = vcmp.lt.s32.totalorder %v5143, 3
  %v5482 = vsel %vm5481, %v5143, 3
  %vm5483 = vcmp.lt.s32.totalorder %v5156, 3
  %v5484 = vsel %vm5483, %v5156, 3
  %vm5485 = vcmp.lt.s32.totalorder %v5169, 3
  %v5486 = vsel %vm5485, %v5169, 3
  %vm5487 = vcmp.lt.s32.totalorder %v5182, 3
  %v5488 = vsel %vm5487, %v5182, 3
  %vm5489 = vcmp.lt.s32.totalorder %v5195, 3
  %v5490 = vsel %vm5489, %v5195, 3
  %vm5491 = vcmp.lt.s32.totalorder %v5208, 3
  %v5492 = vsel %vm5491, %v5208, 3
  %vm5493 = vcmp.lt.s32.totalorder %v5221, 3
  %v5494 = vsel %vm5493, %v5221, 3
  %vm5495 = vcmp.lt.s32.totalorder %v5234, 3
  %v5496 = vsel %vm5495, %v5234, 3
  %vm5497 = vcmp.lt.s32.totalorder %v5247, 3
  %v5498 = vsel %vm5497, %v5247, 3
  %vm5499 = vcmp.lt.s32.totalorder %v5260, 3
  %v5500 = vsel %vm5499, %v5260, 3
  %vm5501 = vcmp.lt.s32.totalorder %v5273, 3
  %v5502 = vsel %vm5501, %v5273, 3
  %vm5503 = vcmp.lt.s32.totalorder %v5286, 3
  %v5504 = vsel %vm5503, %v5286, 3
  %vm5505 = vcmp.lt.s32.totalorder %v5299, 3
  %v5506 = vsel %vm5505, %v5299, 3
  %vm5507 = vcmp.lt.s32.totalorder %v5312, 3
  %v5508 = vsel %vm5507, %v5312, 3
  %vm5509 = vcmp.lt.s32.totalorder %v5325, 3
  %v5510 = vsel %vm5509, %v5325, 3
  %vm5511 = vcmp.lt.s32.totalorder %v5338, 3
  %v5512 = vsel %vm5511, %v5338, 3
  %vm5513 = vcmp.lt.s32.totalorder %v5351, 3
  %v5514 = vsel %vm5513, %v5351, 3
  %vm5515 = vcmp.lt.s32.totalorder %v5364, 3
  %v5516 = vsel %vm5515, %v5364, 3
  %vm5517 = vcmp.lt.s32.totalorder %v5377, 3
  %v5518 = vsel %vm5517, %v5377, 3
  %vm5519 = vcmp.lt.s32.totalorder %v5390, 3
  %v5520 = vsel %vm5519, %v5390, 3
  %vm5521 = vcmp.lt.s32.totalorder %v5403, 3
  %v5522 = vsel %vm5521, %v5403, 3
  %vm5523 = vcmp.lt.s32.totalorder %v5416, 3
  %v5524 = vsel %vm5523, %v5416, 3
  %vm5525 = vcmp.lt.s32.totalorder %v5429, 3
  %v5526 = vsel %vm5525, %v5429, 3
  %vm5527 = vcmp.lt.s32.totalorder %v5442, 3
  %v5528 = vsel %vm5527, %v5442, 3
  %vm5529 = vcmp.lt.s32.totalorder %v5455, 3
  %v5530 = vsel %vm5529, %v5455, 3
  %vm5531 = vcmp.lt.s32.totalorder %v5468, 3
  %v5532 = vsel %vm5531, %v5468, 3
  %vm5533 = vcmp.eq.s32.totalorder %v1200, %v50
  %vm5534 = vcmp.eq.s32.totalorder %v1202, %v50
  %vm5535 = vcmp.eq.s32.totalorder %v1204, %v50
  %vm5536 = vcmp.eq.s32.totalorder %v1206, %v50
  %vm5537 = vcmp.eq.s32.totalorder %v1208, %v50
  %vm5538 = vcmp.eq.s32.totalorder %v1210, %v50
  %vm5539 = vcmp.eq.s32.totalorder %v1212, %v50
  %vm5540 = vcmp.eq.s32.totalorder %v1214, %v50
  %vm5541 = vcmp.eq.s32.totalorder %v1216, %v50
  %vm5542 = vcmp.eq.s32.totalorder %v1218, %v50
  %vm5543 = vcmp.eq.s32.totalorder %v1220, %v50
  %vm5544 = vcmp.eq.s32.totalorder %v1222, %v50
  %vm5545 = vcmp.eq.s32.totalorder %v1224, %v50
  %vm5546 = vcmp.eq.s32.totalorder %v1226, %v50
  %vm5547 = vcmp.eq.s32.totalorder %v1228, %v50
  %vm5548 = vcmp.eq.s32.totalorder %v1230, %v50
  %vm5549 = vcmp.eq.s32.totalorder %v1232, %v50
  %vm5550 = vcmp.eq.s32.totalorder %v1234, %v50
  %vm5551 = vcmp.eq.s32.totalorder %v1236, %v50
  %vm5552 = vcmp.eq.s32.totalorder %v1238, %v50
  %vm5553 = vcmp.eq.s32.totalorder %v1240, %v50
  %vm5554 = vcmp.eq.s32.totalorder %v1242, %v50
  %vm5555 = vcmp.eq.s32.totalorder %v1244, %v50
  %vm5556 = vcmp.eq.s32.totalorder %v1246, %v50
  %vm5557 = vcmp.eq.s32.totalorder %v1248, %v50
  %vm5558 = vcmp.eq.s32.totalorder %v1250, %v50
  %vm5559 = vcmp.eq.s32.totalorder %v1252, %v50
  %vm5560 = vcmp.eq.s32.totalorder %v1254, %v50
  %vm5561 = vcmp.eq.s32.totalorder %v1256, %v50
  %vm5562 = vcmp.eq.s32.totalorder %v1258, %v50
  %vm5563 = vcmp.eq.s32.totalorder %v1260, %v50
  %vm5564 = vcmp.eq.s32.totalorder %v1262, %v50
  %v5565 = vsel %vm5533, 1, 0
  %v5566 = vsel %vm5534, 1, 0
  %v5567 = vsel %vm5535, 1, 0
  %v5568 = vsel %vm5536, 1, 0
  %v5569 = vsel %vm5537, 1, 0
  %v5570 = vsel %vm5538, 1, 0
  %v5571 = vsel %vm5539, 1, 0
  %v5572 = vsel %vm5540, 1, 0
  %v5573 = vsel %vm5541, 1, 0
  %v5574 = vsel %vm5542, 1, 0
  %v5575 = vsel %vm5543, 1, 0
  %v5576 = vsel %vm5544, 1, 0
  %v5577 = vsel %vm5545, 1, 0
  %v5578 = vsel %vm5546, 1, 0
  %v5579 = vsel %vm5547, 1, 0
  %v5580 = vsel %vm5548, 1, 0
  %v5581 = vsel %vm5549, 1, 0
  %v5582 = vsel %vm5550, 1, 0
  %v5583 = vsel %vm5551, 1, 0
  %v5584 = vsel %vm5552, 1, 0
  %v5585 = vsel %vm5553, 1, 0
  %v5586 = vsel %vm5554, 1, 0
  %v5587 = vsel %vm5555, 1, 0
  %v5588 = vsel %vm5556, 1, 0
  %v5589 = vsel %vm5557, 1, 0
  %v5590 = vsel %vm5558, 1, 0
  %v5591 = vsel %vm5559, 1, 0
  %v5592 = vsel %vm5560, 1, 0
  %v5593 = vsel %vm5561, 1, 0
  %v5594 = vsel %vm5562, 1, 0
  %v5595 = vsel %vm5563, 1, 0
  %v5596 = vsel %vm5564, 1, 0
  %v5597 = vcvt.s32.f32 %v5565
  %v5598 = vcvt.s32.f32 %v5566
  %v5599 = vcvt.s32.f32 %v5567
  %v5600 = vcvt.s32.f32 %v5568
  %v5601 = vcvt.s32.f32 %v5569
  %v5602 = vcvt.s32.f32 %v5570
  %v5603 = vcvt.s32.f32 %v5571
  %v5604 = vcvt.s32.f32 %v5572
  %v5605 = vcvt.s32.f32 %v5573
  %v5606 = vcvt.s32.f32 %v5574
  %v5607 = vcvt.s32.f32 %v5575
  %v5608 = vcvt.s32.f32 %v5576
  %v5609 = vcvt.s32.f32 %v5577
  %v5610 = vcvt.s32.f32 %v5578
  %v5611 = vcvt.s32.f32 %v5579
  %v5612 = vcvt.s32.f32 %v5580
  %v5613 = vcvt.s32.f32 %v5581
  %v5614 = vcvt.s32.f32 %v5582
  %v5615 = vcvt.s32.f32 %v5583
  %v5616 = vcvt.s32.f32 %v5584
  %v5617 = vcvt.s32.f32 %v5585
  %v5618 = vcvt.s32.f32 %v5586
  %v5619 = vcvt.s32.f32 %v5587
  %v5620 = vcvt.s32.f32 %v5588
  %v5621 = vcvt.s32.f32 %v5589
  %v5622 = vcvt.s32.f32 %v5590
  %v5623 = vcvt.s32.f32 %v5591
  %v5624 = vcvt.s32.f32 %v5592
  %v5625 = vcvt.s32.f32 %v5593
  %v5626 = vcvt.s32.f32 %v5594
  %v5627 = vcvt.s32.f32 %v5595
  %v5628 = vcvt.s32.f32 %v5596
  %v5629 = vadd.s32 %v5470, 4
  %v5630 = vadd.s32 %v5472, 4
  %v5631 = vadd.s32 %v5474, 4
  %v5632 = vadd.s32 %v5476, 4
  %v5633 = vadd.s32 %v5478, 4
  %v5634 = vadd.s32 %v5480, 4
  %v5635 = vadd.s32 %v5482, 4
  %v5636 = vadd.s32 %v5484, 4
  %v5637 = vadd.s32 %v5486, 4
  %v5638 = vadd.s32 %v5488, 4
  %v5639 = vadd.s32 %v5490, 4
  %v5640 = vadd.s32 %v5492, 4
  %v5641 = vadd.s32 %v5494, 4
  %v5642 = vadd.s32 %v5496, 4
  %v5643 = vadd.s32 %v5498, 4
  %v5644 = vadd.s32 %v5500, 4
  %v5645 = vadd.s32 %v5502, 4
  %v5646 = vadd.s32 %v5504, 4
  %v5647 = vadd.s32 %v5506, 4
  %v5648 = vadd.s32 %v5508, 4
  %v5649 = vadd.s32 %v5510, 4
  %v5650 = vadd.s32 %v5512, 4
  %v5651 = vadd.s32 %v5514, 4
  %v5652 = vadd.s32 %v5516, 4
  %v5653 = vadd.s32 %v5518, 4
  %v5654 = vadd.s32 %v5520, 4
  %v5655 = vadd.s32 %v5522, 4
  %v5656 = vadd.s32 %v5524, 4
  %v5657 = vadd.s32 %v5526, 4
  %v5658 = vadd.s32 %v5528, 4
  %v5659 = vadd.s32 %v5530, 4
  %v5660 = vadd.s32 %v5532, 4
  %vm5661 = vcmp.eq.s32.totalorder %v5629, %v50
  %vm5662 = vcmp.eq.s32.totalorder %v5630, %v50
  %vm5663 = vcmp.eq.s32.totalorder %v5631, %v50
  %vm5664 = vcmp.eq.s32.totalorder %v5632, %v50
  %vm5665 = vcmp.eq.s32.totalorder %v5633, %v50
  %vm5666 = vcmp.eq.s32.totalorder %v5634, %v50
  %vm5667 = vcmp.eq.s32.totalorder %v5635, %v50
  %vm5668 = vcmp.eq.s32.totalorder %v5636, %v50
  %vm5669 = vcmp.eq.s32.totalorder %v5637, %v50
  %vm5670 = vcmp.eq.s32.totalorder %v5638, %v50
  %vm5671 = vcmp.eq.s32.totalorder %v5639, %v50
  %vm5672 = vcmp.eq.s32.totalorder %v5640, %v50
  %vm5673 = vcmp.eq.s32.totalorder %v5641, %v50
  %vm5674 = vcmp.eq.s32.totalorder %v5642, %v50
  %vm5675 = vcmp.eq.s32.totalorder %v5643, %v50
  %vm5676 = vcmp.eq.s32.totalorder %v5644, %v50
  %vm5677 = vcmp.eq.s32.totalorder %v5645, %v50
  %vm5678 = vcmp.eq.s32.totalorder %v5646, %v50
  %vm5679 = vcmp.eq.s32.totalorder %v5647, %v50
  %vm5680 = vcmp.eq.s32.totalorder %v5648, %v50
  %vm5681 = vcmp.eq.s32.totalorder %v5649, %v50
  %vm5682 = vcmp.eq.s32.totalorder %v5650, %v50
  %vm5683 = vcmp.eq.s32.totalorder %v5651, %v50
  %vm5684 = vcmp.eq.s32.totalorder %v5652, %v50
  %vm5685 = vcmp.eq.s32.totalorder %v5653, %v50
  %vm5686 = vcmp.eq.s32.totalorder %v5654, %v50
  %vm5687 = vcmp.eq.s32.totalorder %v5655, %v50
  %vm5688 = vcmp.eq.s32.totalorder %v5656, %v50
  %vm5689 = vcmp.eq.s32.totalorder %v5657, %v50
  %vm5690 = vcmp.eq.s32.totalorder %v5658, %v50
  %vm5691 = vcmp.eq.s32.totalorder %v5659, %v50
  %vm5692 = vcmp.eq.s32.totalorder %v5660, %v50
  %v5693 = vsel %vm5661, 1, 0
  %v5694 = vsel %vm5662, 1, 0
  %v5695 = vsel %vm5663, 1, 0
  %v5696 = vsel %vm5664, 1, 0
  %v5697 = vsel %vm5665, 1, 0
  %v5698 = vsel %vm5666, 1, 0
  %v5699 = vsel %vm5667, 1, 0
  %v5700 = vsel %vm5668, 1, 0
  %v5701 = vsel %vm5669, 1, 0
  %v5702 = vsel %vm5670, 1, 0
  %v5703 = vsel %vm5671, 1, 0
  %v5704 = vsel %vm5672, 1, 0
  %v5705 = vsel %vm5673, 1, 0
  %v5706 = vsel %vm5674, 1, 0
  %v5707 = vsel %vm5675, 1, 0
  %v5708 = vsel %vm5676, 1, 0
  %v5709 = vsel %vm5677, 1, 0
  %v5710 = vsel %vm5678, 1, 0
  %v5711 = vsel %vm5679, 1, 0
  %v5712 = vsel %vm5680, 1, 0
  %v5713 = vsel %vm5681, 1, 0
  %v5714 = vsel %vm5682, 1, 0
  %v5715 = vsel %vm5683, 1, 0
  %v5716 = vsel %vm5684, 1, 0
  %v5717 = vsel %vm5685, 1, 0
  %v5718 = vsel %vm5686, 1, 0
  %v5719 = vsel %vm5687, 1, 0
  %v5720 = vsel %vm5688, 1, 0
  %v5721 = vsel %vm5689, 1, 0
  %v5722 = vsel %vm5690, 1, 0
  %v5723 = vsel %vm5691, 1, 0
  %v5724 = vsel %vm5692, 1, 0
  %v5725 = vcvt.s32.f32 %v5693
  %v5726 = vcvt.s32.f32 %v5694
  %v5727 = vcvt.s32.f32 %v5695
  %v5728 = vcvt.s32.f32 %v5696
  %v5729 = vcvt.s32.f32 %v5697
  %v5730 = vcvt.s32.f32 %v5698
  %v5731 = vcvt.s32.f32 %v5699
  %v5732 = vcvt.s32.f32 %v5700
  %v5733 = vcvt.s32.f32 %v5701
  %v5734 = vcvt.s32.f32 %v5702
  %v5735 = vcvt.s32.f32 %v5703
  %v5736 = vcvt.s32.f32 %v5704
  %v5737 = vcvt.s32.f32 %v5705
  %v5738 = vcvt.s32.f32 %v5706
  %v5739 = vcvt.s32.f32 %v5707
  %v5740 = vcvt.s32.f32 %v5708
  %v5741 = vcvt.s32.f32 %v5709
  %v5742 = vcvt.s32.f32 %v5710
  %v5743 = vcvt.s32.f32 %v5711
  %v5744 = vcvt.s32.f32 %v5712
  %v5745 = vcvt.s32.f32 %v5713
  %v5746 = vcvt.s32.f32 %v5714
  %v5747 = vcvt.s32.f32 %v5715
  %v5748 = vcvt.s32.f32 %v5716
  %v5749 = vcvt.s32.f32 %v5717
  %v5750 = vcvt.s32.f32 %v5718
  %v5751 = vcvt.s32.f32 %v5719
  %v5752 = vcvt.s32.f32 %v5720
  %v5753 = vcvt.s32.f32 %v5721
  %v5754 = vcvt.s32.f32 %v5722
  %v5755 = vcvt.s32.f32 %v5723
  %v5756 = vcvt.s32.f32 %v5724
  %v5757 = vadd.f32 %v5597, %v5725
  %v5758 = vadd.f32 %v5598, %v5726
  %v5759 = vadd.f32 %v5599, %v5727
  %v5760 = vadd.f32 %v5600, %v5728
  %v5761 = vadd.f32 %v5601, %v5729
  %v5762 = vadd.f32 %v5602, %v5730
  %v5763 = vadd.f32 %v5603, %v5731
  %v5764 = vadd.f32 %v5604, %v5732
  %v5765 = vadd.f32 %v5605, %v5733
  %v5766 = vadd.f32 %v5606, %v5734
  %v5767 = vadd.f32 %v5607, %v5735
  %v5768 = vadd.f32 %v5608, %v5736
  %v5769 = vadd.f32 %v5609, %v5737
  %v5770 = vadd.f32 %v5610, %v5738
  %v5771 = vadd.f32 %v5611, %v5739
  %v5772 = vadd.f32 %v5612, %v5740
  %v5773 = vadd.f32 %v5613, %v5741
  %v5774 = vadd.f32 %v5614, %v5742
  %v5775 = vadd.f32 %v5615, %v5743
  %v5776 = vadd.f32 %v5616, %v5744
  %v5777 = vadd.f32 %v5617, %v5745
  %v5778 = vadd.f32 %v5618, %v5746
  %v5779 = vadd.f32 %v5619, %v5747
  %v5780 = vadd.f32 %v5620, %v5748
  %v5781 = vadd.f32 %v5621, %v5749
  %v5782 = vadd.f32 %v5622, %v5750
  %v5783 = vadd.f32 %v5623, %v5751
  %v5784 = vadd.f32 %v5624, %v5752
  %v5785 = vadd.f32 %v5625, %v5753
  %v5786 = vadd.f32 %v5626, %v5754
  %v5787 = vadd.f32 %v5627, %v5755
  %v5788 = vadd.f32 %v5628, %v5756
  %v5789 = vpack.c.bf16 %v5758, %v5757
  %v5790 = vpack.c.bf16 %v5760, %v5759
  %v5791 = vpack.c.bf16 %v5762, %v5761
  %v5792 = vpack.c.bf16 %v5764, %v5763
  %v5793 = vpack.c.bf16 %v5766, %v5765
  %v5794 = vpack.c.bf16 %v5768, %v5767
  %v5795 = vpack.c.bf16 %v5770, %v5769
  %v5796 = vpack.c.bf16 %v5772, %v5771
  %v5797 = vpack.c.bf16 %v5774, %v5773
  %v5798 = vpack.c.bf16 %v5776, %v5775
  %v5799 = vpack.c.bf16 %v5778, %v5777
  %v5800 = vpack.c.bf16 %v5780, %v5779
  %v5801 = vpack.c.bf16 %v5782, %v5781
  %v5802 = vpack.c.bf16 %v5784, %v5783
  %v5803 = vpack.c.bf16 %v5786, %v5785
  %v5804 = vpack.c.bf16 %v5788, %v5787
  %v5805 = vld [vmem:[%s9] sm:$0xf]
  %v5806 = vld [vmem:[%s9 + $0x10] sm:$0xf]
  %v5807 = vld [vmem:[%s10] sm:$0x1]
  %v5809 = vperm.slane %v5807, 0
  %v5813 = vunpack.c.l.b16 %v5805
  %v5814 = vunpack.c.l.b16 %v5806
  %v5815 = vpack.c.b16 %v5814, %v5813
  %v5818 = vsel %vm1659, %v5789, 0
  %v5821 = vsel %vm1659, %v5790, 0
  %v5824 = vsel %vm1659, %v5791, 0
  %v5827 = vsel %vm1659, %v5792, 0
  %v5830 = vsel %vm1659, %v5793, 0
  %v5833 = vsel %vm1659, %v5794, 0
  %v5836 = vsel %vm1659, %v5795, 0
  %v5839 = vsel %vm1659, %v5796, 0
  %v5842 = vsel %vm1659, %v5797, 0
  %v5845 = vsel %vm1659, %v5798, 0
  %v5848 = vsel %vm1659, %v5799, 0
  %v5851 = vsel %vm1659, %v5800, 0
  %v5854 = vsel %vm1659, %v5801, 0
  %v5857 = vsel %vm1659, %v5802, 0
  %v5860 = vsel %vm1659, %v5803, 0
  %v5863 = vsel %vm1659, %v5804, 0
  %5865 = vmatpush.bf16.msra.mxu0 0
  %5866 = vmatpush.bf16.msra.mxu0 0
  %5867 = vmatpush.bf16.msra.mxu0 0
  %5868 = vmatpush.bf16.msra.mxu0 0
  %5869 = vmatpush.bf16.msra.mxu0 0
  %5870 = vmatpush.bf16.msra.mxu0 0
  %5871 = vmatpush.bf16.msra.mxu0 0
  %5872 = vmatpush.bf16.msra.mxu0 %v5815
  %5873 = vmatmul.bf16.gmra.mxu0 %v5818
  %v5874 = vpop.f32.mrf.mxu0
  %v5875 = vadd.f32 %v5809, %v5874
  %v5876 = vpop.f32.mrf.mxu0
  %v5877 = vadd.f32 %v5809, %v5876
  %5878 = vmatmul.bf16.gmra.mxu0 %v5821
  %v5879 = vpop.f32.mrf.mxu0
  %v5880 = vadd.f32 %v5809, %v5879
  %v5881 = vpop.f32.mrf.mxu0
  %v5882 = vadd.f32 %v5809, %v5881
  %5883 = vmatmul.bf16.gmra.mxu0 %v5824
  %v5884 = vpop.f32.mrf.mxu0
  %v5885 = vadd.f32 %v5809, %v5884
  %v5886 = vpop.f32.mrf.mxu0
  %v5887 = vadd.f32 %v5809, %v5886
  %5888 = vmatmul.bf16.gmra.mxu0 %v5827
  %v5889 = vpop.f32.mrf.mxu0
  %v5890 = vadd.f32 %v5809, %v5889
  %v5891 = vpop.f32.mrf.mxu0
  %v5892 = vadd.f32 %v5809, %v5891
  %5893 = vmatmul.bf16.gmra.mxu0 %v5830
  %v5894 = vpop.f32.mrf.mxu0
  %v5895 = vadd.f32 %v5809, %v5894
  %v5896 = vpop.f32.mrf.mxu0
  %v5897 = vadd.f32 %v5809, %v5896
  %5898 = vmatmul.bf16.gmra.mxu0 %v5833
  %v5899 = vpop.f32.mrf.mxu0
  %v5900 = vadd.f32 %v5809, %v5899
  %v5901 = vpop.f32.mrf.mxu0
  %v5902 = vadd.f32 %v5809, %v5901
  %5903 = vmatmul.bf16.gmra.mxu0 %v5836
  %v5904 = vpop.f32.mrf.mxu0
  %v5905 = vadd.f32 %v5809, %v5904
  %v5906 = vpop.f32.mrf.mxu0
  %v5907 = vadd.f32 %v5809, %v5906
  %5908 = vmatmul.bf16.gmra.mxu0 %v5839
  %v5909 = vpop.f32.mrf.mxu0
  %v5910 = vadd.f32 %v5809, %v5909
  %v5911 = vpop.f32.mrf.mxu0
  %v5912 = vadd.f32 %v5809, %v5911
  %5913 = vmatmul.bf16.gmra.mxu0 %v5842
  %v5914 = vpop.f32.mrf.mxu0
  %v5915 = vadd.f32 %v5809, %v5914
  %v5916 = vpop.f32.mrf.mxu0
  %v5917 = vadd.f32 %v5809, %v5916
  %5918 = vmatmul.bf16.gmra.mxu0 %v5845
  %v5919 = vpop.f32.mrf.mxu0
  %v5920 = vadd.f32 %v5809, %v5919
  %v5921 = vpop.f32.mrf.mxu0
  %v5922 = vadd.f32 %v5809, %v5921
  %5923 = vmatmul.bf16.gmra.mxu0 %v5848
  %v5924 = vpop.f32.mrf.mxu0
  %v5925 = vadd.f32 %v5809, %v5924
  %v5926 = vpop.f32.mrf.mxu0
  %v5927 = vadd.f32 %v5809, %v5926
  %5928 = vmatmul.bf16.gmra.mxu0 %v5851
  %v5929 = vpop.f32.mrf.mxu0
  %v5930 = vadd.f32 %v5809, %v5929
  %v5931 = vpop.f32.mrf.mxu0
  %v5932 = vadd.f32 %v5809, %v5931
  %5933 = vmatmul.bf16.gmra.mxu0 %v5854
  %v5934 = vpop.f32.mrf.mxu0
  %v5935 = vadd.f32 %v5809, %v5934
  %v5936 = vpop.f32.mrf.mxu0
  %v5937 = vadd.f32 %v5809, %v5936
  %5938 = vmatmul.bf16.gmra.mxu0 %v5857
  %v5939 = vpop.f32.mrf.mxu0
  %v5940 = vadd.f32 %v5809, %v5939
  %v5941 = vpop.f32.mrf.mxu0
  %v5942 = vadd.f32 %v5809, %v5941
  %5943 = vmatmul.bf16.gmra.mxu0 %v5860
  %v5944 = vpop.f32.mrf.mxu0
  %v5945 = vadd.f32 %v5809, %v5944
  %v5946 = vpop.f32.mrf.mxu0
  %v5947 = vadd.f32 %v5809, %v5946
  %5948 = vmatmul.bf16.gmra.mxu0 %v5863
  %v5949 = vpop.f32.mrf.mxu0
  %v5950 = vadd.f32 %v5809, %v5949
  %v5951 = vpop.f32.mrf.mxu0
  %v5952 = vadd.f32 %v5809, %v5951
  %5953 = vdwg.mxu0
  %v5954 = vxor.u32 %v5875, 2147483648
  %v5955 = vxor.u32 %v5877, 2147483648
  %v5956 = vxor.u32 %v5880, 2147483648
  %v5957 = vxor.u32 %v5882, 2147483648
  %v5958 = vxor.u32 %v5885, 2147483648
  %v5959 = vxor.u32 %v5887, 2147483648
  %v5960 = vxor.u32 %v5890, 2147483648
  %v5961 = vxor.u32 %v5892, 2147483648
  %v5962 = vxor.u32 %v5895, 2147483648
  %v5963 = vxor.u32 %v5897, 2147483648
  %v5964 = vxor.u32 %v5900, 2147483648
  %v5965 = vxor.u32 %v5902, 2147483648
  %v5966 = vxor.u32 %v5905, 2147483648
  %v5967 = vxor.u32 %v5907, 2147483648
  %v5968 = vxor.u32 %v5910, 2147483648
  %v5969 = vxor.u32 %v5912, 2147483648
  %v5970 = vxor.u32 %v5915, 2147483648
  %v5971 = vxor.u32 %v5917, 2147483648
  %v5972 = vxor.u32 %v5920, 2147483648
  %v5973 = vxor.u32 %v5922, 2147483648
  %v5974 = vxor.u32 %v5925, 2147483648
  %v5975 = vxor.u32 %v5927, 2147483648
  %v5976 = vxor.u32 %v5930, 2147483648
  %v5977 = vxor.u32 %v5932, 2147483648
  %v5978 = vxor.u32 %v5935, 2147483648
  %v5979 = vxor.u32 %v5937, 2147483648
  %v5980 = vxor.u32 %v5940, 2147483648
  %v5981 = vxor.u32 %v5942, 2147483648
  %v5982 = vxor.u32 %v5945, 2147483648
  %v5983 = vxor.u32 %v5947, 2147483648
  %v5984 = vxor.u32 %v5950, 2147483648
  %v5985 = vxor.u32 %v5952, 2147483648
  %v5986 = vmul.f32 %v5954, 1.442695
  %v5987 = vpow.pop %v5986
  %v5988 = vmul.f32 %v5955, 1.442695
  %v5989 = vpow.pop %v5988
  %v5990 = vmul.f32 %v5956, 1.442695
  %v5991 = vpow.pop %v5990
  %v5992 = vmul.f32 %v5957, 1.442695
  %v5993 = vpow.pop %v5992
  %v5994 = vmul.f32 %v5958, 1.442695
  %v5995 = vpow.pop %v5994
  %v5996 = vmul.f32 %v5959, 1.442695
  %v5997 = vpow.pop %v5996
  %v5998 = vmul.f32 %v5960, 1.442695
  %v5999 = vpow.pop %v5998
  %v6000 = vmul.f32 %v5961, 1.442695
  %v6001 = vpow.pop %v6000
  %v6002 = vmul.f32 %v5962, 1.442695
  %v6003 = vpow.pop %v6002
  %v6004 = vmul.f32 %v5963, 1.442695
  %v6005 = vpow.pop %v6004
  %v6006 = vmul.f32 %v5964, 1.442695
  %v6007 = vpow.pop %v6006
  %v6008 = vmul.f32 %v5965, 1.442695
  %v6009 = vpow.pop %v6008
  %v6010 = vmul.f32 %v5966, 1.442695
  %v6011 = vpow.pop %v6010
  %v6012 = vmul.f32 %v5967, 1.442695
  %v6013 = vpow.pop %v6012
  %v6014 = vmul.f32 %v5968, 1.442695
  %v6015 = vpow.pop %v6014
  %v6016 = vmul.f32 %v5969, 1.442695
  %v6017 = vpow.pop %v6016
  %v6018 = vmul.f32 %v5970, 1.442695
  %v6019 = vpow.pop %v6018
  %v6020 = vmul.f32 %v5971, 1.442695
  %v6021 = vpow.pop %v6020
  %v6022 = vmul.f32 %v5972, 1.442695
  %v6023 = vpow.pop %v6022
  %v6024 = vmul.f32 %v5973, 1.442695
  %v6025 = vpow.pop %v6024
  %v6026 = vmul.f32 %v5974, 1.442695
  %v6027 = vpow.pop %v6026
  %v6028 = vmul.f32 %v5975, 1.442695
  %v6029 = vpow.pop %v6028
  %v6030 = vmul.f32 %v5976, 1.442695
  %v6031 = vpow.pop %v6030
  %v6032 = vmul.f32 %v5977, 1.442695
  %v6033 = vpow.pop %v6032
  %v6034 = vmul.f32 %v5978, 1.442695
  %v6035 = vpow.pop %v6034
  %v6036 = vmul.f32 %v5979, 1.442695
  %v6037 = vpow.pop %v6036
  %v6038 = vmul.f32 %v5980, 1.442695
  %v6039 = vpow.pop %v6038
  %v6040 = vmul.f32 %v5981, 1.442695
  %v6041 = vpow.pop %v6040
  %v6042 = vmul.f32 %v5982, 1.442695
  %v6043 = vpow.pop %v6042
  %v6044 = vmul.f32 %v5983, 1.442695
  %v6045 = vpow.pop %v6044
  %v6046 = vmul.f32 %v5984, 1.442695
  %v6047 = vpow.pop %v6046
  %v6048 = vmul.f32 %v5985, 1.442695
  %v6049 = vpow.pop %v6048
  %v6050 = vadd.f32 %v5987, 1.0
  %v6051 = vadd.f32 %v5989, 1.0
  %v6052 = vadd.f32 %v5991, 1.0
  %v6053 = vadd.f32 %v5993, 1.0
  %v6054 = vadd.f32 %v5995, 1.0
  %v6055 = vadd.f32 %v5997, 1.0
  %v6056 = vadd.f32 %v5999, 1.0
  %v6057 = vadd.f32 %v6001, 1.0
  %v6058 = vadd.f32 %v6003, 1.0
  %v6059 = vadd.f32 %v6005, 1.0
  %v6060 = vadd.f32 %v6007, 1.0
  %v6061 = vadd.f32 %v6009, 1.0
  %v6062 = vadd.f32 %v6011, 1.0
  %v6063 = vadd.f32 %v6013, 1.0
  %v6064 = vadd.f32 %v6015, 1.0
  %v6065 = vadd.f32 %v6017, 1.0
  %v6066 = vadd.f32 %v6019, 1.0
  %v6067 = vadd.f32 %v6021, 1.0
  %v6068 = vadd.f32 %v6023, 1.0
  %v6069 = vadd.f32 %v6025, 1.0
  %v6070 = vadd.f32 %v6027, 1.0
  %v6071 = vadd.f32 %v6029, 1.0
  %v6072 = vadd.f32 %v6031, 1.0
  %v6073 = vadd.f32 %v6033, 1.0
  %v6074 = vadd.f32 %v6035, 1.0
  %v6075 = vadd.f32 %v6037, 1.0
  %v6076 = vadd.f32 %v6039, 1.0
  %v6077 = vadd.f32 %v6041, 1.0
  %v6078 = vadd.f32 %v6043, 1.0
  %v6079 = vadd.f32 %v6045, 1.0
  %v6080 = vadd.f32 %v6047, 1.0
  %v6081 = vadd.f32 %v6049, 1.0
  %v6082 = vrcp.pop %v6050
  %v6083 = vmul.f32 %v6050, %v6082
  %v6084 = vsub.f32 1.0, %v6083
  %v6085 = vmul.f32 %v6082, %v6084
  %v6086 = vadd.f32 %v6082, %v6085
  %vm6087 = vweird.f32 %v6050
  %vm6088 = vweird.f32 %v6082
  %vm6089 = vmor %vm6087, %vm6088
  %v6090 = vsel %vm6089, %v6082, %v6086
  %v6091 = vand.u32 2147483647, %v6050
  %vm6092 = vcmp.eq.f32.partialorder %v6091, 8.507059e+37
  %v6093 = vand.u32 %v6050, 2147483648
  %v6094 = vor.u32 1.1754944e-38, %v6093
  %v6095 = vsel %vm6092, %v6094, %v6090
  %v6096 = vmul.f32 1.0, %v6095
  %v6097 = vrcp.pop %v6051
  %v6098 = vmul.f32 %v6051, %v6097
  %v6099 = vsub.f32 1.0, %v6098
  %v6100 = vmul.f32 %v6097, %v6099
  %v6101 = vadd.f32 %v6097, %v6100
  %vm6102 = vweird.f32 %v6051
  %vm6103 = vweird.f32 %v6097
  %vm6104 = vmor %vm6102, %vm6103
  %v6105 = vsel %vm6104, %v6097, %v6101
  %v6106 = vand.u32 2147483647, %v6051
  %vm6107 = vcmp.eq.f32.partialorder %v6106, 8.507059e+37
  %v6108 = vand.u32 %v6051, 2147483648
  %v6109 = vor.u32 1.1754944e-38, %v6108
  %v6110 = vsel %vm6107, %v6109, %v6105
  %v6111 = vmul.f32 1.0, %v6110
  %v6112 = vrcp.pop %v6052
  %v6113 = vmul.f32 %v6052, %v6112
  %v6114 = vsub.f32 1.0, %v6113
  %v6115 = vmul.f32 %v6112, %v6114
  %v6116 = vadd.f32 %v6112, %v6115
  %vm6117 = vweird.f32 %v6052
  %vm6118 = vweird.f32 %v6112
  %vm6119 = vmor %vm6117, %vm6118
  %v6120 = vsel %vm6119, %v6112, %v6116
  %v6121 = vand.u32 2147483647, %v6052
  %vm6122 = vcmp.eq.f32.partialorder %v6121, 8.507059e+37
  %v6123 = vand.u32 %v6052, 2147483648
  %v6124 = vor.u32 1.1754944e-38, %v6123
  %v6125 = vsel %vm6122, %v6124, %v6120
  %v6126 = vmul.f32 1.0, %v6125
  %v6127 = vrcp.pop %v6053
  %v6128 = vmul.f32 %v6053, %v6127
  %v6129 = vsub.f32 1.0, %v6128
  %v6130 = vmul.f32 %v6127, %v6129
  %v6131 = vadd.f32 %v6127, %v6130
  %vm6132 = vweird.f32 %v6053
  %vm6133 = vweird.f32 %v6127
  %vm6134 = vmor %vm6132, %vm6133
  %v6135 = vsel %vm6134, %v6127, %v6131
  %v6136 = vand.u32 2147483647, %v6053
  %vm6137 = vcmp.eq.f32.partialorder %v6136, 8.507059e+37
  %v6138 = vand.u32 %v6053, 2147483648
  %v6139 = vor.u32 1.1754944e-38, %v6138
  %v6140 = vsel %vm6137, %v6139, %v6135
  %v6141 = vmul.f32 1.0, %v6140
  %v6142 = vrcp.pop %v6054
  %v6143 = vmul.f32 %v6054, %v6142
  %v6144 = vsub.f32 1.0, %v6143
  %v6145 = vmul.f32 %v6142, %v6144
  %v6146 = vadd.f32 %v6142, %v6145
  %vm6147 = vweird.f32 %v6054
  %vm6148 = vweird.f32 %v6142
  %vm6149 = vmor %vm6147, %vm6148
  %v6150 = vsel %vm6149, %v6142, %v6146
  %v6151 = vand.u32 2147483647, %v6054
  %vm6152 = vcmp.eq.f32.partialorder %v6151, 8.507059e+37
  %v6153 = vand.u32 %v6054, 2147483648
  %v6154 = vor.u32 1.1754944e-38, %v6153
  %v6155 = vsel %vm6152, %v6154, %v6150
  %v6156 = vmul.f32 1.0, %v6155
  %v6157 = vrcp.pop %v6055
  %v6158 = vmul.f32 %v6055, %v6157
  %v6159 = vsub.f32 1.0, %v6158
  %v6160 = vmul.f32 %v6157, %v6159
  %v6161 = vadd.f32 %v6157, %v6160
  %vm6162 = vweird.f32 %v6055
  %vm6163 = vweird.f32 %v6157
  %vm6164 = vmor %vm6162, %vm6163
  %v6165 = vsel %vm6164, %v6157, %v6161
  %v6166 = vand.u32 2147483647, %v6055
  %vm6167 = vcmp.eq.f32.partialorder %v6166, 8.507059e+37
  %v6168 = vand.u32 %v6055, 2147483648
  %v6169 = vor.u32 1.1754944e-38, %v6168
  %v6170 = vsel %vm6167, %v6169, %v6165
  %v6171 = vmul.f32 1.0, %v6170
  %v6172 = vrcp.pop %v6056
  %v6173 = vmul.f32 %v6056, %v6172
  %v6174 = vsub.f32 1.0, %v6173
  %v6175 = vmul.f32 %v6172, %v6174
  %v6176 = vadd.f32 %v6172, %v6175
  %vm6177 = vweird.f32 %v6056
  %vm6178 = vweird.f32 %v6172
  %vm6179 = vmor %vm6177, %vm6178
  %v6180 = vsel %vm6179, %v6172, %v6176
  %v6181 = vand.u32 2147483647, %v6056
  %vm6182 = vcmp.eq.f32.partialorder %v6181, 8.507059e+37
  %v6183 = vand.u32 %v6056, 2147483648
  %v6184 = vor.u32 1.1754944e-38, %v6183
  %v6185 = vsel %vm6182, %v6184, %v6180
  %v6186 = vmul.f32 1.0, %v6185
  %v6187 = vrcp.pop %v6057
  %v6188 = vmul.f32 %v6057, %v6187
  %v6189 = vsub.f32 1.0, %v6188
  %v6190 = vmul.f32 %v6187, %v6189
  %v6191 = vadd.f32 %v6187, %v6190
  %vm6192 = vweird.f32 %v6057
  %vm6193 = vweird.f32 %v6187
  %vm6194 = vmor %vm6192, %vm6193
  %v6195 = vsel %vm6194, %v6187, %v6191
  %v6196 = vand.u32 2147483647, %v6057
  %vm6197 = vcmp.eq.f32.partialorder %v6196, 8.507059e+37
  %v6198 = vand.u32 %v6057, 2147483648
  %v6199 = vor.u32 1.1754944e-38, %v6198
  %v6200 = vsel %vm6197, %v6199, %v6195
  %v6201 = vmul.f32 1.0, %v6200
  %v6202 = vrcp.pop %v6058
  %v6203 = vmul.f32 %v6058, %v6202
  %v6204 = vsub.f32 1.0, %v6203
  %v6205 = vmul.f32 %v6202, %v6204
  %v6206 = vadd.f32 %v6202, %v6205
  %vm6207 = vweird.f32 %v6058
  %vm6208 = vweird.f32 %v6202
  %vm6209 = vmor %vm6207, %vm6208
  %v6210 = vsel %vm6209, %v6202, %v6206
  %v6211 = vand.u32 2147483647, %v6058
  %vm6212 = vcmp.eq.f32.partialorder %v6211, 8.507059e+37
  %v6213 = vand.u32 %v6058, 2147483648
  %v6214 = vor.u32 1.1754944e-38, %v6213
  %v6215 = vsel %vm6212, %v6214, %v6210
  %v6216 = vmul.f32 1.0, %v6215
  %v6217 = vrcp.pop %v6059
  %v6218 = vmul.f32 %v6059, %v6217
  %v6219 = vsub.f32 1.0, %v6218
  %v6220 = vmul.f32 %v6217, %v6219
  %v6221 = vadd.f32 %v6217, %v6220
  %vm6222 = vweird.f32 %v6059
  %vm6223 = vweird.f32 %v6217
  %vm6224 = vmor %vm6222, %vm6223
  %v6225 = vsel %vm6224, %v6217, %v6221
  %v6226 = vand.u32 2147483647, %v6059
  %vm6227 = vcmp.eq.f32.partialorder %v6226, 8.507059e+37
  %v6228 = vand.u32 %v6059, 2147483648
  %v6229 = vor.u32 1.1754944e-38, %v6228
  %v6230 = vsel %vm6227, %v6229, %v6225
  %v6231 = vmul.f32 1.0, %v6230
  %v6232 = vrcp.pop %v6060
  %v6233 = vmul.f32 %v6060, %v6232
  %v6234 = vsub.f32 1.0, %v6233
  %v6235 = vmul.f32 %v6232, %v6234
  %v6236 = vadd.f32 %v6232, %v6235
  %vm6237 = vweird.f32 %v6060
  %vm6238 = vweird.f32 %v6232
  %vm6239 = vmor %vm6237, %vm6238
  %v6240 = vsel %vm6239, %v6232, %v6236
  %v6241 = vand.u32 2147483647, %v6060
  %vm6242 = vcmp.eq.f32.partialorder %v6241, 8.507059e+37
  %v6243 = vand.u32 %v6060, 2147483648
  %v6244 = vor.u32 1.1754944e-38, %v6243
  %v6245 = vsel %vm6242, %v6244, %v6240
  %v6246 = vmul.f32 1.0, %v6245
  %v6247 = vrcp.pop %v6061
  %v6248 = vmul.f32 %v6061, %v6247
  %v6249 = vsub.f32 1.0, %v6248
  %v6250 = vmul.f32 %v6247, %v6249
  %v6251 = vadd.f32 %v6247, %v6250
  %vm6252 = vweird.f32 %v6061
  %vm6253 = vweird.f32 %v6247
  %vm6254 = vmor %vm6252, %vm6253
  %v6255 = vsel %vm6254, %v6247, %v6251
  %v6256 = vand.u32 2147483647, %v6061
  %vm6257 = vcmp.eq.f32.partialorder %v6256, 8.507059e+37
  %v6258 = vand.u32 %v6061, 2147483648
  %v6259 = vor.u32 1.1754944e-38, %v6258
  %v6260 = vsel %vm6257, %v6259, %v6255
  %v6261 = vmul.f32 1.0, %v6260
  %v6262 = vrcp.pop %v6062
  %v6263 = vmul.f32 %v6062, %v6262
  %v6264 = vsub.f32 1.0, %v6263
  %v6265 = vmul.f32 %v6262, %v6264
  %v6266 = vadd.f32 %v6262, %v6265
  %vm6267 = vweird.f32 %v6062
  %vm6268 = vweird.f32 %v6262
  %vm6269 = vmor %vm6267, %vm6268
  %v6270 = vsel %vm6269, %v6262, %v6266
  %v6271 = vand.u32 2147483647, %v6062
  %vm6272 = vcmp.eq.f32.partialorder %v6271, 8.507059e+37
  %v6273 = vand.u32 %v6062, 2147483648
  %v6274 = vor.u32 1.1754944e-38, %v6273
  %v6275 = vsel %vm6272, %v6274, %v6270
  %v6276 = vmul.f32 1.0, %v6275
  %v6277 = vrcp.pop %v6063
  %v6278 = vmul.f32 %v6063, %v6277
  %v6279 = vsub.f32 1.0, %v6278
  %v6280 = vmul.f32 %v6277, %v6279
  %v6281 = vadd.f32 %v6277, %v6280
  %vm6282 = vweird.f32 %v6063
  %vm6283 = vweird.f32 %v6277
  %vm6284 = vmor %vm6282, %vm6283
  %v6285 = vsel %vm6284, %v6277, %v6281
  %v6286 = vand.u32 2147483647, %v6063
  %vm6287 = vcmp.eq.f32.partialorder %v6286, 8.507059e+37
  %v6288 = vand.u32 %v6063, 2147483648
  %v6289 = vor.u32 1.1754944e-38, %v6288
  %v6290 = vsel %vm6287, %v6289, %v6285
  %v6291 = vmul.f32 1.0, %v6290
  %v6292 = vrcp.pop %v6064
  %v6293 = vmul.f32 %v6064, %v6292
  %v6294 = vsub.f32 1.0, %v6293
  %v6295 = vmul.f32 %v6292, %v6294
  %v6296 = vadd.f32 %v6292, %v6295
  %vm6297 = vweird.f32 %v6064
  %vm6298 = vweird.f32 %v6292
  %vm6299 = vmor %vm6297, %vm6298
  %v6300 = vsel %vm6299, %v6292, %v6296
  %v6301 = vand.u32 2147483647, %v6064
  %vm6302 = vcmp.eq.f32.partialorder %v6301, 8.507059e+37
  %v6303 = vand.u32 %v6064, 2147483648
  %v6304 = vor.u32 1.1754944e-38, %v6303
  %v6305 = vsel %vm6302, %v6304, %v6300
  %v6306 = vmul.f32 1.0, %v6305
  %v6307 = vrcp.pop %v6065
  %v6308 = vmul.f32 %v6065, %v6307
  %v6309 = vsub.f32 1.0, %v6308
  %v6310 = vmul.f32 %v6307, %v6309
  %v6311 = vadd.f32 %v6307, %v6310
  %vm6312 = vweird.f32 %v6065
  %vm6313 = vweird.f32 %v6307
  %vm6314 = vmor %vm6312, %vm6313
  %v6315 = vsel %vm6314, %v6307, %v6311
  %v6316 = vand.u32 2147483647, %v6065
  %vm6317 = vcmp.eq.f32.partialorder %v6316, 8.507059e+37
  %v6318 = vand.u32 %v6065, 2147483648
  %v6319 = vor.u32 1.1754944e-38, %v6318
  %v6320 = vsel %vm6317, %v6319, %v6315
  %v6321 = vmul.f32 1.0, %v6320
  %v6322 = vrcp.pop %v6066
  %v6323 = vmul.f32 %v6066, %v6322
  %v6324 = vsub.f32 1.0, %v6323
  %v6325 = vmul.f32 %v6322, %v6324
  %v6326 = vadd.f32 %v6322, %v6325
  %vm6327 = vweird.f32 %v6066
  %vm6328 = vweird.f32 %v6322
  %vm6329 = vmor %vm6327, %vm6328
  %v6330 = vsel %vm6329, %v6322, %v6326
  %v6331 = vand.u32 2147483647, %v6066
  %vm6332 = vcmp.eq.f32.partialorder %v6331, 8.507059e+37
  %v6333 = vand.u32 %v6066, 2147483648
  %v6334 = vor.u32 1.1754944e-38, %v6333
  %v6335 = vsel %vm6332, %v6334, %v6330
  %v6336 = vmul.f32 1.0, %v6335
  %v6337 = vrcp.pop %v6067
  %v6338 = vmul.f32 %v6067, %v6337
  %v6339 = vsub.f32 1.0, %v6338
  %v6340 = vmul.f32 %v6337, %v6339
  %v6341 = vadd.f32 %v6337, %v6340
  %vm6342 = vweird.f32 %v6067
  %vm6343 = vweird.f32 %v6337
  %vm6344 = vmor %vm6342, %vm6343
  %v6345 = vsel %vm6344, %v6337, %v6341
  %v6346 = vand.u32 2147483647, %v6067
  %vm6347 = vcmp.eq.f32.partialorder %v6346, 8.507059e+37
  %v6348 = vand.u32 %v6067, 2147483648
  %v6349 = vor.u32 1.1754944e-38, %v6348
  %v6350 = vsel %vm6347, %v6349, %v6345
  %v6351 = vmul.f32 1.0, %v6350
  %v6352 = vrcp.pop %v6068
  %v6353 = vmul.f32 %v6068, %v6352
  %v6354 = vsub.f32 1.0, %v6353
  %v6355 = vmul.f32 %v6352, %v6354
  %v6356 = vadd.f32 %v6352, %v6355
  %vm6357 = vweird.f32 %v6068
  %vm6358 = vweird.f32 %v6352
  %vm6359 = vmor %vm6357, %vm6358
  %v6360 = vsel %vm6359, %v6352, %v6356
  %v6361 = vand.u32 2147483647, %v6068
  %vm6362 = vcmp.eq.f32.partialorder %v6361, 8.507059e+37
  %v6363 = vand.u32 %v6068, 2147483648
  %v6364 = vor.u32 1.1754944e-38, %v6363
  %v6365 = vsel %vm6362, %v6364, %v6360
  %v6366 = vmul.f32 1.0, %v6365
  %v6367 = vrcp.pop %v6069
  %v6368 = vmul.f32 %v6069, %v6367
  %v6369 = vsub.f32 1.0, %v6368
  %v6370 = vmul.f32 %v6367, %v6369
  %v6371 = vadd.f32 %v6367, %v6370
  %vm6372 = vweird.f32 %v6069
  %vm6373 = vweird.f32 %v6367
  %vm6374 = vmor %vm6372, %vm6373
  %v6375 = vsel %vm6374, %v6367, %v6371
  %v6376 = vand.u32 2147483647, %v6069
  %vm6377 = vcmp.eq.f32.partialorder %v6376, 8.507059e+37
  %v6378 = vand.u32 %v6069, 2147483648
  %v6379 = vor.u32 1.1754944e-38, %v6378
  %v6380 = vsel %vm6377, %v6379, %v6375
  %v6381 = vmul.f32 1.0, %v6380
  %v6382 = vrcp.pop %v6070
  %v6383 = vmul.f32 %v6070, %v6382
  %v6384 = vsub.f32 1.0, %v6383
  %v6385 = vmul.f32 %v6382, %v6384
  %v6386 = vadd.f32 %v6382, %v6385
  %vm6387 = vweird.f32 %v6070
  %vm6388 = vweird.f32 %v6382
  %vm6389 = vmor %vm6387, %vm6388
  %v6390 = vsel %vm6389, %v6382, %v6386
  %v6391 = vand.u32 2147483647, %v6070
  %vm6392 = vcmp.eq.f32.partialorder %v6391, 8.507059e+37
  %v6393 = vand.u32 %v6070, 2147483648
  %v6394 = vor.u32 1.1754944e-38, %v6393
  %v6395 = vsel %vm6392, %v6394, %v6390
  %v6396 = vmul.f32 1.0, %v6395
  %v6397 = vrcp.pop %v6071
  %v6398 = vmul.f32 %v6071, %v6397
  %v6399 = vsub.f32 1.0, %v6398
  %v6400 = vmul.f32 %v6397, %v6399
  %v6401 = vadd.f32 %v6397, %v6400
  %vm6402 = vweird.f32 %v6071
  %vm6403 = vweird.f32 %v6397
  %vm6404 = vmor %vm6402, %vm6403
  %v6405 = vsel %vm6404, %v6397, %v6401
  %v6406 = vand.u32 2147483647, %v6071
  %vm6407 = vcmp.eq.f32.partialorder %v6406, 8.507059e+37
  %v6408 = vand.u32 %v6071, 2147483648
  %v6409 = vor.u32 1.1754944e-38, %v6408
  %v6410 = vsel %vm6407, %v6409, %v6405
  %v6411 = vmul.f32 1.0, %v6410
  %v6412 = vrcp.pop %v6072
  %v6413 = vmul.f32 %v6072, %v6412
  %v6414 = vsub.f32 1.0, %v6413
  %v6415 = vmul.f32 %v6412, %v6414
  %v6416 = vadd.f32 %v6412, %v6415
  %vm6417 = vweird.f32 %v6072
  %vm6418 = vweird.f32 %v6412
  %vm6419 = vmor %vm6417, %vm6418
  %v6420 = vsel %vm6419, %v6412, %v6416
  %v6421 = vand.u32 2147483647, %v6072
  %vm6422 = vcmp.eq.f32.partialorder %v6421, 8.507059e+37
  %v6423 = vand.u32 %v6072, 2147483648
  %v6424 = vor.u32 1.1754944e-38, %v6423
  %v6425 = vsel %vm6422, %v6424, %v6420
  %v6426 = vmul.f32 1.0, %v6425
  %v6427 = vrcp.pop %v6073
  %v6428 = vmul.f32 %v6073, %v6427
  %v6429 = vsub.f32 1.0, %v6428
  %v6430 = vmul.f32 %v6427, %v6429
  %v6431 = vadd.f32 %v6427, %v6430
  %vm6432 = vweird.f32 %v6073
  %vm6433 = vweird.f32 %v6427
  %vm6434 = vmor %vm6432, %vm6433
  %v6435 = vsel %vm6434, %v6427, %v6431
  %v6436 = vand.u32 2147483647, %v6073
  %vm6437 = vcmp.eq.f32.partialorder %v6436, 8.507059e+37
  %v6438 = vand.u32 %v6073, 2147483648
  %v6439 = vor.u32 1.1754944e-38, %v6438
  %v6440 = vsel %vm6437, %v6439, %v6435
  %v6441 = vmul.f32 1.0, %v6440
  %v6442 = vrcp.pop %v6074
  %v6443 = vmul.f32 %v6074, %v6442
  %v6444 = vsub.f32 1.0, %v6443
  %v6445 = vmul.f32 %v6442, %v6444
  %v6446 = vadd.f32 %v6442, %v6445
  %vm6447 = vweird.f32 %v6074
  %vm6448 = vweird.f32 %v6442
  %vm6449 = vmor %vm6447, %vm6448
  %v6450 = vsel %vm6449, %v6442, %v6446
  %v6451 = vand.u32 2147483647, %v6074
  %vm6452 = vcmp.eq.f32.partialorder %v6451, 8.507059e+37
  %v6453 = vand.u32 %v6074, 2147483648
  %v6454 = vor.u32 1.1754944e-38, %v6453
  %v6455 = vsel %vm6452, %v6454, %v6450
  %v6456 = vmul.f32 1.0, %v6455
  %v6457 = vrcp.pop %v6075
  %v6458 = vmul.f32 %v6075, %v6457
  %v6459 = vsub.f32 1.0, %v6458
  %v6460 = vmul.f32 %v6457, %v6459
  %v6461 = vadd.f32 %v6457, %v6460
  %vm6462 = vweird.f32 %v6075
  %vm6463 = vweird.f32 %v6457
  %vm6464 = vmor %vm6462, %vm6463
  %v6465 = vsel %vm6464, %v6457, %v6461
  %v6466 = vand.u32 2147483647, %v6075
  %vm6467 = vcmp.eq.f32.partialorder %v6466, 8.507059e+37
  %v6468 = vand.u32 %v6075, 2147483648
  %v6469 = vor.u32 1.1754944e-38, %v6468
  %v6470 = vsel %vm6467, %v6469, %v6465
  %v6471 = vmul.f32 1.0, %v6470
  %v6472 = vrcp.pop %v6076
  %v6473 = vmul.f32 %v6076, %v6472
  %v6474 = vsub.f32 1.0, %v6473
  %v6475 = vmul.f32 %v6472, %v6474
  %v6476 = vadd.f32 %v6472, %v6475
  %vm6477 = vweird.f32 %v6076
  %vm6478 = vweird.f32 %v6472
  %vm6479 = vmor %vm6477, %vm6478
  %v6480 = vsel %vm6479, %v6472, %v6476
  %v6481 = vand.u32 2147483647, %v6076
  %vm6482 = vcmp.eq.f32.partialorder %v6481, 8.507059e+37
  %v6483 = vand.u32 %v6076, 2147483648
  %v6484 = vor.u32 1.1754944e-38, %v6483
  %v6485 = vsel %vm6482, %v6484, %v6480
  %v6486 = vmul.f32 1.0, %v6485
  %v6487 = vrcp.pop %v6077
  %v6488 = vmul.f32 %v6077, %v6487
  %v6489 = vsub.f32 1.0, %v6488
  %v6490 = vmul.f32 %v6487, %v6489
  %v6491 = vadd.f32 %v6487, %v6490
  %vm6492 = vweird.f32 %v6077
  %vm6493 = vweird.f32 %v6487
  %vm6494 = vmor %vm6492, %vm6493
  %v6495 = vsel %vm6494, %v6487, %v6491
  %v6496 = vand.u32 2147483647, %v6077
  %vm6497 = vcmp.eq.f32.partialorder %v6496, 8.507059e+37
  %v6498 = vand.u32 %v6077, 2147483648
  %v6499 = vor.u32 1.1754944e-38, %v6498
  %v6500 = vsel %vm6497, %v6499, %v6495
  %v6501 = vmul.f32 1.0, %v6500
  %v6502 = vrcp.pop %v6078
  %v6503 = vmul.f32 %v6078, %v6502
  %v6504 = vsub.f32 1.0, %v6503
  %v6505 = vmul.f32 %v6502, %v6504
  %v6506 = vadd.f32 %v6502, %v6505
  %vm6507 = vweird.f32 %v6078
  %vm6508 = vweird.f32 %v6502
  %vm6509 = vmor %vm6507, %vm6508
  %v6510 = vsel %vm6509, %v6502, %v6506
  %v6511 = vand.u32 2147483647, %v6078
  %vm6512 = vcmp.eq.f32.partialorder %v6511, 8.507059e+37
  %v6513 = vand.u32 %v6078, 2147483648
  %v6514 = vor.u32 1.1754944e-38, %v6513
  %v6515 = vsel %vm6512, %v6514, %v6510
  %v6516 = vmul.f32 1.0, %v6515
  %v6517 = vrcp.pop %v6079
  %v6518 = vmul.f32 %v6079, %v6517
  %v6519 = vsub.f32 1.0, %v6518
  %v6520 = vmul.f32 %v6517, %v6519
  %v6521 = vadd.f32 %v6517, %v6520
  %vm6522 = vweird.f32 %v6079
  %vm6523 = vweird.f32 %v6517
  %vm6524 = vmor %vm6522, %vm6523
  %v6525 = vsel %vm6524, %v6517, %v6521
  %v6526 = vand.u32 2147483647, %v6079
  %vm6527 = vcmp.eq.f32.partialorder %v6526, 8.507059e+37
  %v6528 = vand.u32 %v6079, 2147483648
  %v6529 = vor.u32 1.1754944e-38, %v6528
  %v6530 = vsel %vm6527, %v6529, %v6525
  %v6531 = vmul.f32 1.0, %v6530
  %v6532 = vrcp.pop %v6080
  %v6533 = vmul.f32 %v6080, %v6532
  %v6534 = vsub.f32 1.0, %v6533
  %v6535 = vmul.f32 %v6532, %v6534
  %v6536 = vadd.f32 %v6532, %v6535
  %vm6537 = vweird.f32 %v6080
  %vm6538 = vweird.f32 %v6532
  %vm6539 = vmor %vm6537, %vm6538
  %v6540 = vsel %vm6539, %v6532, %v6536
  %v6541 = vand.u32 2147483647, %v6080
  %vm6542 = vcmp.eq.f32.partialorder %v6541, 8.507059e+37
  %v6543 = vand.u32 %v6080, 2147483648
  %v6544 = vor.u32 1.1754944e-38, %v6543
  %v6545 = vsel %vm6542, %v6544, %v6540
  %v6546 = vmul.f32 1.0, %v6545
  %v6547 = vrcp.pop %v6081
  %v6548 = vmul.f32 %v6081, %v6547
  %v6549 = vsub.f32 1.0, %v6548
  %v6550 = vmul.f32 %v6547, %v6549
  %v6551 = vadd.f32 %v6547, %v6550
  %vm6552 = vweird.f32 %v6081
  %vm6553 = vweird.f32 %v6547
  %vm6554 = vmor %vm6552, %vm6553
  %v6555 = vsel %vm6554, %v6547, %v6551
  %v6556 = vand.u32 2147483647, %v6081
  %vm6557 = vcmp.eq.f32.partialorder %v6556, 8.507059e+37
  %v6558 = vand.u32 %v6081, 2147483648
  %v6559 = vor.u32 1.1754944e-38, %v6558
  %v6560 = vsel %vm6557, %v6559, %v6555
  %v6561 = vmul.f32 1.0, %v6560
  %v6562 = vld [vmem:[%s9 + $0x8] sm:$0xf]
  %v6563 = vld [vmem:[%s9 + $0x18] sm:$0xf]
  %v6564 = vld [vmem:[%s10 + $0x2] sm:$0x1]
  %v6566 = vperm.slane %v6564, 0
  %v6570 = vunpack.c.l.b16 %v6562
  %v6571 = vunpack.c.l.b16 %v6563
  %v6572 = vpack.c.b16 %v6571, %v6570
  %6574 = vmatpush.bf16.msra.mxu0 0
  %6575 = vmatpush.bf16.msra.mxu0 0
  %6576 = vmatpush.bf16.msra.mxu0 0
  %6577 = vmatpush.bf16.msra.mxu0 0
  %6578 = vmatpush.bf16.msra.mxu0 0
  %6579 = vmatpush.bf16.msra.mxu0 0
  %6580 = vmatpush.bf16.msra.mxu0 0
  %6581 = vmatpush.bf16.msra.mxu0 %v6572
  %6582 = vmatmul.bf16.gmra.mxu0 %v5818
  %v6583 = vpop.f32.mrf.mxu0
  %v6584 = vadd.f32 %v6566, %v6583
  %v6585 = vpop.f32.mrf.mxu0
  %v6586 = vadd.f32 %v6566, %v6585
  %6587 = vmatmul.bf16.gmra.mxu0 %v5821
  %v6588 = vpop.f32.mrf.mxu0
  %v6589 = vadd.f32 %v6566, %v6588
  %v6590 = vpop.f32.mrf.mxu0
  %v6591 = vadd.f32 %v6566, %v6590
  %6592 = vmatmul.bf16.gmra.mxu0 %v5824
  %v6593 = vpop.f32.mrf.mxu0
  %v6594 = vadd.f32 %v6566, %v6593
  %v6595 = vpop.f32.mrf.mxu0
  %v6596 = vadd.f32 %v6566, %v6595
  %6597 = vmatmul.bf16.gmra.mxu0 %v5827
  %v6598 = vpop.f32.mrf.mxu0
  %v6599 = vadd.f32 %v6566, %v6598
  %v6600 = vpop.f32.mrf.mxu0
  %v6601 = vadd.f32 %v6566, %v6600
  %6602 = vmatmul.bf16.gmra.mxu0 %v5830
  %v6603 = vpop.f32.mrf.mxu0
  %v6604 = vadd.f32 %v6566, %v6603
  %v6605 = vpop.f32.mrf.mxu0
  %v6606 = vadd.f32 %v6566, %v6605
  %6607 = vmatmul.bf16.gmra.mxu0 %v5833
  %v6608 = vpop.f32.mrf.mxu0
  %v6609 = vadd.f32 %v6566, %v6608
  %v6610 = vpop.f32.mrf.mxu0
  %v6611 = vadd.f32 %v6566, %v6610
  %6612 = vmatmul.bf16.gmra.mxu0 %v5836
  %v6613 = vpop.f32.mrf.mxu0
  %v6614 = vadd.f32 %v6566, %v6613
  %v6615 = vpop.f32.mrf.mxu0
  %v6616 = vadd.f32 %v6566, %v6615
  %6617 = vmatmul.bf16.gmra.mxu0 %v5839
  %v6618 = vpop.f32.mrf.mxu0
  %v6619 = vadd.f32 %v6566, %v6618
  %v6620 = vpop.f32.mrf.mxu0
  %v6621 = vadd.f32 %v6566, %v6620
  %6622 = vmatmul.bf16.gmra.mxu0 %v5842
  %v6623 = vpop.f32.mrf.mxu0
  %v6624 = vadd.f32 %v6566, %v6623
  %v6625 = vpop.f32.mrf.mxu0
  %v6626 = vadd.f32 %v6566, %v6625
  %6627 = vmatmul.bf16.gmra.mxu0 %v5845
  %v6628 = vpop.f32.mrf.mxu0
  %v6629 = vadd.f32 %v6566, %v6628
  %v6630 = vpop.f32.mrf.mxu0
  %v6631 = vadd.f32 %v6566, %v6630
  %6632 = vmatmul.bf16.gmra.mxu0 %v5848
  %v6633 = vpop.f32.mrf.mxu0
  %v6634 = vadd.f32 %v6566, %v6633
  %v6635 = vpop.f32.mrf.mxu0
  %v6636 = vadd.f32 %v6566, %v6635
  %6637 = vmatmul.bf16.gmra.mxu0 %v5851
  %v6638 = vpop.f32.mrf.mxu0
  %v6639 = vadd.f32 %v6566, %v6638
  %v6640 = vpop.f32.mrf.mxu0
  %v6641 = vadd.f32 %v6566, %v6640
  %6642 = vmatmul.bf16.gmra.mxu0 %v5854
  %v6643 = vpop.f32.mrf.mxu0
  %v6644 = vadd.f32 %v6566, %v6643
  %v6645 = vpop.f32.mrf.mxu0
  %v6646 = vadd.f32 %v6566, %v6645
  %6647 = vmatmul.bf16.gmra.mxu0 %v5857
  %v6648 = vpop.f32.mrf.mxu0
  %v6649 = vadd.f32 %v6566, %v6648
  %v6650 = vpop.f32.mrf.mxu0
  %v6651 = vadd.f32 %v6566, %v6650
  %6652 = vmatmul.bf16.gmra.mxu0 %v5860
  %v6653 = vpop.f32.mrf.mxu0
  %v6654 = vadd.f32 %v6566, %v6653
  %v6655 = vpop.f32.mrf.mxu0
  %v6656 = vadd.f32 %v6566, %v6655
  %6657 = vmatmul.bf16.gmra.mxu0 %v5863
  %v6658 = vpop.f32.mrf.mxu0
  %v6659 = vadd.f32 %v6566, %v6658
  %v6660 = vpop.f32.mrf.mxu0
  %v6661 = vadd.f32 %v6566, %v6660
  %6662 = vdwg.mxu0
  %v6663 = vtanh.pop %v6584
  %v6664 = vtanh.pop %v6586
  %v6665 = vtanh.pop %v6589
  %v6666 = vtanh.pop %v6591
  %v6667 = vtanh.pop %v6594
  %v6668 = vtanh.pop %v6596
  %v6669 = vtanh.pop %v6599
  %v6670 = vtanh.pop %v6601
  %v6671 = vtanh.pop %v6604
  %v6672 = vtanh.pop %v6606
  %v6673 = vtanh.pop %v6609
  %v6674 = vtanh.pop %v6611
  %v6675 = vtanh.pop %v6614
  %v6676 = vtanh.pop %v6616
  %v6677 = vtanh.pop %v6619
  %v6678 = vtanh.pop %v6621
  %v6679 = vtanh.pop %v6624
  %v6680 = vtanh.pop %v6626
  %v6681 = vtanh.pop %v6629
  %v6682 = vtanh.pop %v6631
  %v6683 = vtanh.pop %v6634
  %v6684 = vtanh.pop %v6636
  %v6685 = vtanh.pop %v6639
  %v6686 = vtanh.pop %v6641
  %v6687 = vtanh.pop %v6644
  %v6688 = vtanh.pop %v6646
  %v6689 = vtanh.pop %v6649
  %v6690 = vtanh.pop %v6651
  %v6691 = vtanh.pop %v6654
  %v6692 = vtanh.pop %v6656
  %v6693 = vtanh.pop %v6659
  %v6694 = vtanh.pop %v6661
  %v6695 = vld [vmem:[%s9 + $0xc] sm:$0xf]
  %v6696 = vld [vmem:[%s9 + $0x1c] sm:$0xf]
  %v6697 = vld [vmem:[%s10 + $0x3] sm:$0x1]
  %v6699 = vperm.slane %v6697, 0
  %v6703 = vunpack.c.l.b16 %v6695
  %v6704 = vunpack.c.l.b16 %v6696
  %v6705 = vpack.c.b16 %v6704, %v6703
  %6707 = vmatpush.bf16.msra.mxu0 0
  %6708 = vmatpush.bf16.msra.mxu0 0
  %6709 = vmatpush.bf16.msra.mxu0 0
  %6710 = vmatpush.bf16.msra.mxu0 0
  %6711 = vmatpush.bf16.msra.mxu0 0
  %6712 = vmatpush.bf16.msra.mxu0 0
  %6713 = vmatpush.bf16.msra.mxu0 0
  %6714 = vmatpush.bf16.msra.mxu0 %v6705
  %6715 = vmatmul.bf16.gmra.mxu0 %v5818
  %v6716 = vpop.f32.mrf.mxu0
  %v6717 = vadd.f32 %v6699, %v6716
  %v6718 = vpop.f32.mrf.mxu0
  %v6719 = vadd.f32 %v6699, %v6718
  %6720 = vmatmul.bf16.gmra.mxu0 %v5821
  %v6721 = vpop.f32.mrf.mxu0
  %v6722 = vadd.f32 %v6699, %v6721
  %v6723 = vpop.f32.mrf.mxu0
  %v6724 = vadd.f32 %v6699, %v6723
  %6725 = vmatmul.bf16.gmra.mxu0 %v5824
  %v6726 = vpop.f32.mrf.mxu0
  %v6727 = vadd.f32 %v6699, %v6726
  %v6728 = vpop.f32.mrf.mxu0
  %v6729 = vadd.f32 %v6699, %v6728
  %6730 = vmatmul.bf16.gmra.mxu0 %v5827
  %v6731 = vpop.f32.mrf.mxu0
  %v6732 = vadd.f32 %v6699, %v6731
  %v6733 = vpop.f32.mrf.mxu0
  %v6734 = vadd.f32 %v6699, %v6733
  %6735 = vmatmul.bf16.gmra.mxu0 %v5830
  %v6736 = vpop.f32.mrf.mxu0
  %v6737 = vadd.f32 %v6699, %v6736
  %v6738 = vpop.f32.mrf.mxu0
  %v6739 = vadd.f32 %v6699, %v6738
  %6740 = vmatmul.bf16.gmra.mxu0 %v5833
  %v6741 = vpop.f32.mrf.mxu0
  %v6742 = vadd.f32 %v6699, %v6741
  %v6743 = vpop.f32.mrf.mxu0
  %v6744 = vadd.f32 %v6699, %v6743
  %6745 = vmatmul.bf16.gmra.mxu0 %v5836
  %v6746 = vpop.f32.mrf.mxu0
  %v6747 = vadd.f32 %v6699, %v6746
  %v6748 = vpop.f32.mrf.mxu0
  %v6749 = vadd.f32 %v6699, %v6748
  %6750 = vmatmul.bf16.gmra.mxu0 %v5839
  %v6751 = vpop.f32.mrf.mxu0
  %v6752 = vadd.f32 %v6699, %v6751
  %v6753 = vpop.f32.mrf.mxu0
  %v6754 = vadd.f32 %v6699, %v6753
  %6755 = vmatmul.bf16.gmra.mxu0 %v5842
  %v6756 = vpop.f32.mrf.mxu0
  %v6757 = vadd.f32 %v6699, %v6756
  %v6758 = vpop.f32.mrf.mxu0
  %v6759 = vadd.f32 %v6699, %v6758
  %6760 = vmatmul.bf16.gmra.mxu0 %v5845
  %v6761 = vpop.f32.mrf.mxu0
  %v6762 = vadd.f32 %v6699, %v6761
  %v6763 = vpop.f32.mrf.mxu0
  %v6764 = vadd.f32 %v6699, %v6763
  %6765 = vmatmul.bf16.gmra.mxu0 %v5848
  %v6766 = vpop.f32.mrf.mxu0
  %v6767 = vadd.f32 %v6699, %v6766
  %v6768 = vpop.f32.mrf.mxu0
  %v6769 = vadd.f32 %v6699, %v6768
  %6770 = vmatmul.bf16.gmra.mxu0 %v5851
  %v6771 = vpop.f32.mrf.mxu0
  %v6772 = vadd.f32 %v6699, %v6771
  %v6773 = vpop.f32.mrf.mxu0
  %v6774 = vadd.f32 %v6699, %v6773
  %6775 = vmatmul.bf16.gmra.mxu0 %v5854
  %v6776 = vpop.f32.mrf.mxu0
  %v6777 = vadd.f32 %v6699, %v6776
  %v6778 = vpop.f32.mrf.mxu0
  %v6779 = vadd.f32 %v6699, %v6778
  %6780 = vmatmul.bf16.gmra.mxu0 %v5857
  %v6781 = vpop.f32.mrf.mxu0
  %v6782 = vadd.f32 %v6699, %v6781
  %v6783 = vpop.f32.mrf.mxu0
  %v6784 = vadd.f32 %v6699, %v6783
  %6785 = vmatmul.bf16.gmra.mxu0 %v5860
  %v6786 = vpop.f32.mrf.mxu0
  %v6787 = vadd.f32 %v6699, %v6786
  %v6788 = vpop.f32.mrf.mxu0
  %v6789 = vadd.f32 %v6699, %v6788
  %6790 = vmatmul.bf16.gmra.mxu0 %v5863
  %v6791 = vpop.f32.mrf.mxu0
  %v6792 = vadd.f32 %v6699, %v6791
  %v6793 = vpop.f32.mrf.mxu0
  %v6794 = vadd.f32 %v6699, %v6793
  %6795 = vdwg.mxu0
  %v6796 = vxor.u32 %v6717, 2147483648
  %v6797 = vxor.u32 %v6719, 2147483648
  %v6798 = vxor.u32 %v6722, 2147483648
  %v6799 = vxor.u32 %v6724, 2147483648
  %v6800 = vxor.u32 %v6727, 2147483648
  %v6801 = vxor.u32 %v6729, 2147483648
  %v6802 = vxor.u32 %v6732, 2147483648
  %v6803 = vxor.u32 %v6734, 2147483648
  %v6804 = vxor.u32 %v6737, 2147483648
  %v6805 = vxor.u32 %v6739, 2147483648
  %v6806 = vxor.u32 %v6742, 2147483648
  %v6807 = vxor.u32 %v6744, 2147483648
  %v6808 = vxor.u32 %v6747, 2147483648
  %v6809 = vxor.u32 %v6749, 2147483648
  %v6810 = vxor.u32 %v6752, 2147483648
  %v6811 = vxor.u32 %v6754, 2147483648
  %v6812 = vxor.u32 %v6757, 2147483648
  %v6813 = vxor.u32 %v6759, 2147483648
  %v6814 = vxor.u32 %v6762, 2147483648
  %v6815 = vxor.u32 %v6764, 2147483648
  %v6816 = vxor.u32 %v6767, 2147483648
  %v6817 = vxor.u32 %v6769, 2147483648
  %v6818 = vxor.u32 %v6772, 2147483648
  %v6819 = vxor.u32 %v6774, 2147483648
  %v6820 = vxor.u32 %v6777, 2147483648
  %v6821 = vxor.u32 %v6779, 2147483648
  %v6822 = vxor.u32 %v6782, 2147483648
  %v6823 = vxor.u32 %v6784, 2147483648
  %v6824 = vxor.u32 %v6787, 2147483648
  %v6825 = vxor.u32 %v6789, 2147483648
  %v6826 = vxor.u32 %v6792, 2147483648
  %v6827 = vxor.u32 %v6794, 2147483648
  %v6828 = vmul.f32 %v6796, 1.442695
  %v6829 = vpow.pop %v6828
  %v6830 = vmul.f32 %v6797, 1.442695
  %v6831 = vpow.pop %v6830
  %v6832 = vmul.f32 %v6798, 1.442695
  %v6833 = vpow.pop %v6832
  %v6834 = vmul.f32 %v6799, 1.442695
  %v6835 = vpow.pop %v6834
  %v6836 = vmul.f32 %v6800, 1.442695
  %v6837 = vpow.pop %v6836
  %v6838 = vmul.f32 %v6801, 1.442695
  %v6839 = vpow.pop %v6838
  %v6840 = vmul.f32 %v6802, 1.442695
  %v6841 = vpow.pop %v6840
  %v6842 = vmul.f32 %v6803, 1.442695
  %v6843 = vpow.pop %v6842
  %v6844 = vmul.f32 %v6804, 1.442695
  %v6845 = vpow.pop %v6844
  %v6846 = vmul.f32 %v6805, 1.442695
  %v6847 = vpow.pop %v6846
  %v6848 = vmul.f32 %v6806, 1.442695
  %v6849 = vpow.pop %v6848
  %v6850 = vmul.f32 %v6807, 1.442695
  %v6851 = vpow.pop %v6850
  %v6852 = vmul.f32 %v6808, 1.442695
  %v6853 = vpow.pop %v6852
  %v6854 = vmul.f32 %v6809, 1.442695
  %v6855 = vpow.pop %v6854
  %v6856 = vmul.f32 %v6810, 1.442695
  %v6857 = vpow.pop %v6856
  %v6858 = vmul.f32 %v6811, 1.442695
  %v6859 = vpow.pop %v6858
  %v6860 = vmul.f32 %v6812, 1.442695
  %v6861 = vpow.pop %v6860
  %v6862 = vmul.f32 %v6813, 1.442695
  %v6863 = vpow.pop %v6862
  %v6864 = vmul.f32 %v6814, 1.442695
  %v6865 = vpow.pop %v6864
  %v6866 = vmul.f32 %v6815, 1.442695
  %v6867 = vpow.pop %v6866
  %v6868 = vmul.f32 %v6816, 1.442695
  %v6869 = vpow.pop %v6868
  %v6870 = vmul.f32 %v6817, 1.442695
  %v6871 = vpow.pop %v6870
  %v6872 = vmul.f32 %v6818, 1.442695
  %v6873 = vpow.pop %v6872
  %v6874 = vmul.f32 %v6819, 1.442695
  %v6875 = vpow.pop %v6874
  %v6876 = vmul.f32 %v6820, 1.442695
  %v6877 = vpow.pop %v6876
  %v6878 = vmul.f32 %v6821, 1.442695
  %v6879 = vpow.pop %v6878
  %v6880 = vmul.f32 %v6822, 1.442695
  %v6881 = vpow.pop %v6880
  %v6882 = vmul.f32 %v6823, 1.442695
  %v6883 = vpow.pop %v6882
  %v6884 = vmul.f32 %v6824, 1.442695
  %v6885 = vpow.pop %v6884
  %v6886 = vmul.f32 %v6825, 1.442695
  %v6887 = vpow.pop %v6886
  %v6888 = vmul.f32 %v6826, 1.442695
  %v6889 = vpow.pop %v6888
  %v6890 = vmul.f32 %v6827, 1.442695
  %v6891 = vpow.pop %v6890
  %v6892 = vadd.f32 %v6829, 1.0
  %v6893 = vadd.f32 %v6831, 1.0
  %v6894 = vadd.f32 %v6833, 1.0
  %v6895 = vadd.f32 %v6835, 1.0
  %v6896 = vadd.f32 %v6837, 1.0
  %v6897 = vadd.f32 %v6839, 1.0
  %v6898 = vadd.f32 %v6841, 1.0
  %v6899 = vadd.f32 %v6843, 1.0
  %v6900 = vadd.f32 %v6845, 1.0
  %v6901 = vadd.f32 %v6847, 1.0
  %v6902 = vadd.f32 %v6849, 1.0
  %v6903 = vadd.f32 %v6851, 1.0
  %v6904 = vadd.f32 %v6853, 1.0
  %v6905 = vadd.f32 %v6855, 1.0
  %v6906 = vadd.f32 %v6857, 1.0
  %v6907 = vadd.f32 %v6859, 1.0
  %v6908 = vadd.f32 %v6861, 1.0
  %v6909 = vadd.f32 %v6863, 1.0
  %v6910 = vadd.f32 %v6865, 1.0
  %v6911 = vadd.f32 %v6867, 1.0
  %v6912 = vadd.f32 %v6869, 1.0
  %v6913 = vadd.f32 %v6871, 1.0
  %v6914 = vadd.f32 %v6873, 1.0
  %v6915 = vadd.f32 %v6875, 1.0
  %v6916 = vadd.f32 %v6877, 1.0
  %v6917 = vadd.f32 %v6879, 1.0
  %v6918 = vadd.f32 %v6881, 1.0
  %v6919 = vadd.f32 %v6883, 1.0
  %v6920 = vadd.f32 %v6885, 1.0
  %v6921 = vadd.f32 %v6887, 1.0
  %v6922 = vadd.f32 %v6889, 1.0
  %v6923 = vadd.f32 %v6891, 1.0
  %v6924 = vrcp.pop %v6892
  %v6925 = vmul.f32 %v6892, %v6924
  %v6926 = vsub.f32 1.0, %v6925
  %v6927 = vmul.f32 %v6924, %v6926
  %v6928 = vadd.f32 %v6924, %v6927
  %vm6929 = vweird.f32 %v6892
  %vm6930 = vweird.f32 %v6924
  %vm6931 = vmor %vm6929, %vm6930
  %v6932 = vsel %vm6931, %v6924, %v6928
  %v6933 = vand.u32 2147483647, %v6892
  %vm6934 = vcmp.eq.f32.partialorder %v6933, 8.507059e+37
  %v6935 = vand.u32 %v6892, 2147483648
  %v6936 = vor.u32 1.1754944e-38, %v6935
  %v6937 = vsel %vm6934, %v6936, %v6932
  %v6938 = vmul.f32 1.0, %v6937
  %v6939 = vrcp.pop %v6893
  %v6940 = vmul.f32 %v6893, %v6939
  %v6941 = vsub.f32 1.0, %v6940
  %v6942 = vmul.f32 %v6939, %v6941
  %v6943 = vadd.f32 %v6939, %v6942
  %vm6944 = vweird.f32 %v6893
  %vm6945 = vweird.f32 %v6939
  %vm6946 = vmor %vm6944, %vm6945
  %v6947 = vsel %vm6946, %v6939, %v6943
  %v6948 = vand.u32 2147483647, %v6893
  %vm6949 = vcmp.eq.f32.partialorder %v6948, 8.507059e+37
  %v6950 = vand.u32 %v6893, 2147483648
  %v6951 = vor.u32 1.1754944e-38, %v6950
  %v6952 = vsel %vm6949, %v6951, %v6947
  %v6953 = vmul.f32 1.0, %v6952
  %v6954 = vrcp.pop %v6894
  %v6955 = vmul.f32 %v6894, %v6954
  %v6956 = vsub.f32 1.0, %v6955
  %v6957 = vmul.f32 %v6954, %v6956
  %v6958 = vadd.f32 %v6954, %v6957
  %vm6959 = vweird.f32 %v6894
  %vm6960 = vweird.f32 %v6954
  %vm6961 = vmor %vm6959, %vm6960
  %v6962 = vsel %vm6961, %v6954, %v6958
  %v6963 = vand.u32 2147483647, %v6894
  %vm6964 = vcmp.eq.f32.partialorder %v6963, 8.507059e+37
  %v6965 = vand.u32 %v6894, 2147483648
  %v6966 = vor.u32 1.1754944e-38, %v6965
  %v6967 = vsel %vm6964, %v6966, %v6962
  %v6968 = vmul.f32 1.0, %v6967
  %v6969 = vrcp.pop %v6895
  %v6970 = vmul.f32 %v6895, %v6969
  %v6971 = vsub.f32 1.0, %v6970
  %v6972 = vmul.f32 %v6969, %v6971
  %v6973 = vadd.f32 %v6969, %v6972
  %vm6974 = vweird.f32 %v6895
  %vm6975 = vweird.f32 %v6969
  %vm6976 = vmor %vm6974, %vm6975
  %v6977 = vsel %vm6976, %v6969, %v6973
  %v6978 = vand.u32 2147483647, %v6895
  %vm6979 = vcmp.eq.f32.partialorder %v6978, 8.507059e+37
  %v6980 = vand.u32 %v6895, 2147483648
  %v6981 = vor.u32 1.1754944e-38, %v6980
  %v6982 = vsel %vm6979, %v6981, %v6977
  %v6983 = vmul.f32 1.0, %v6982
  %v6984 = vrcp.pop %v6896
  %v6985 = vmul.f32 %v6896, %v6984
  %v6986 = vsub.f32 1.0, %v6985
  %v6987 = vmul.f32 %v6984, %v6986
  %v6988 = vadd.f32 %v6984, %v6987
  %vm6989 = vweird.f32 %v6896
  %vm6990 = vweird.f32 %v6984
  %vm6991 = vmor %vm6989, %vm6990
  %v6992 = vsel %vm6991, %v6984, %v6988
  %v6993 = vand.u32 2147483647, %v6896
  %vm6994 = vcmp.eq.f32.partialorder %v6993, 8.507059e+37
  %v6995 = vand.u32 %v6896, 2147483648
  %v6996 = vor.u32 1.1754944e-38, %v6995
  %v6997 = vsel %vm6994, %v6996, %v6992
  %v6998 = vmul.f32 1.0, %v6997
  %v6999 = vrcp.pop %v6897
  %v7000 = vmul.f32 %v6897, %v6999
  %v7001 = vsub.f32 1.0, %v7000
  %v7002 = vmul.f32 %v6999, %v7001
  %v7003 = vadd.f32 %v6999, %v7002
  %vm7004 = vweird.f32 %v6897
  %vm7005 = vweird.f32 %v6999
  %vm7006 = vmor %vm7004, %vm7005
  %v7007 = vsel %vm7006, %v6999, %v7003
  %v7008 = vand.u32 2147483647, %v6897
  %vm7009 = vcmp.eq.f32.partialorder %v7008, 8.507059e+37
  %v7010 = vand.u32 %v6897, 2147483648
  %v7011 = vor.u32 1.1754944e-38, %v7010
  %v7012 = vsel %vm7009, %v7011, %v7007
  %v7013 = vmul.f32 1.0, %v7012
  %v7014 = vrcp.pop %v6898
  %v7015 = vmul.f32 %v6898, %v7014
  %v7016 = vsub.f32 1.0, %v7015
  %v7017 = vmul.f32 %v7014, %v7016
  %v7018 = vadd.f32 %v7014, %v7017
  %vm7019 = vweird.f32 %v6898
  %vm7020 = vweird.f32 %v7014
  %vm7021 = vmor %vm7019, %vm7020
  %v7022 = vsel %vm7021, %v7014, %v7018
  %v7023 = vand.u32 2147483647, %v6898
  %vm7024 = vcmp.eq.f32.partialorder %v7023, 8.507059e+37
  %v7025 = vand.u32 %v6898, 2147483648
  %v7026 = vor.u32 1.1754944e-38, %v7025
  %v7027 = vsel %vm7024, %v7026, %v7022
  %v7028 = vmul.f32 1.0, %v7027
  %v7029 = vrcp.pop %v6899
  %v7030 = vmul.f32 %v6899, %v7029
  %v7031 = vsub.f32 1.0, %v7030
  %v7032 = vmul.f32 %v7029, %v7031
  %v7033 = vadd.f32 %v7029, %v7032
  %vm7034 = vweird.f32 %v6899
  %vm7035 = vweird.f32 %v7029
  %vm7036 = vmor %vm7034, %vm7035
  %v7037 = vsel %vm7036, %v7029, %v7033
  %v7038 = vand.u32 2147483647, %v6899
  %vm7039 = vcmp.eq.f32.partialorder %v7038, 8.507059e+37
  %v7040 = vand.u32 %v6899, 2147483648
  %v7041 = vor.u32 1.1754944e-38, %v7040
  %v7042 = vsel %vm7039, %v7041, %v7037
  %v7043 = vmul.f32 1.0, %v7042
  %v7044 = vrcp.pop %v6900
  %v7045 = vmul.f32 %v6900, %v7044
  %v7046 = vsub.f32 1.0, %v7045
  %v7047 = vmul.f32 %v7044, %v7046
  %v7048 = vadd.f32 %v7044, %v7047
  %vm7049 = vweird.f32 %v6900
  %vm7050 = vweird.f32 %v7044
  %vm7051 = vmor %vm7049, %vm7050
  %v7052 = vsel %vm7051, %v7044, %v7048
  %v7053 = vand.u32 2147483647, %v6900
  %vm7054 = vcmp.eq.f32.partialorder %v7053, 8.507059e+37
  %v7055 = vand.u32 %v6900, 2147483648
  %v7056 = vor.u32 1.1754944e-38, %v7055
  %v7057 = vsel %vm7054, %v7056, %v7052
  %v7058 = vmul.f32 1.0, %v7057
  %v7059 = vrcp.pop %v6901
  %v7060 = vmul.f32 %v6901, %v7059
  %v7061 = vsub.f32 1.0, %v7060
  %v7062 = vmul.f32 %v7059, %v7061
  %v7063 = vadd.f32 %v7059, %v7062
  %vm7064 = vweird.f32 %v6901
  %vm7065 = vweird.f32 %v7059
  %vm7066 = vmor %vm7064, %vm7065
  %v7067 = vsel %vm7066, %v7059, %v7063
  %v7068 = vand.u32 2147483647, %v6901
  %vm7069 = vcmp.eq.f32.partialorder %v7068, 8.507059e+37
  %v7070 = vand.u32 %v6901, 2147483648
  %v7071 = vor.u32 1.1754944e-38, %v7070
  %v7072 = vsel %vm7069, %v7071, %v7067
  %v7073 = vmul.f32 1.0, %v7072
  %v7074 = vrcp.pop %v6902
  %v7075 = vmul.f32 %v6902, %v7074
  %v7076 = vsub.f32 1.0, %v7075
  %v7077 = vmul.f32 %v7074, %v7076
  %v7078 = vadd.f32 %v7074, %v7077
  %vm7079 = vweird.f32 %v6902
  %vm7080 = vweird.f32 %v7074
  %vm7081 = vmor %vm7079, %vm7080
  %v7082 = vsel %vm7081, %v7074, %v7078
  %v7083 = vand.u32 2147483647, %v6902
  %vm7084 = vcmp.eq.f32.partialorder %v7083, 8.507059e+37
  %v7085 = vand.u32 %v6902, 2147483648
  %v7086 = vor.u32 1.1754944e-38, %v7085
  %v7087 = vsel %vm7084, %v7086, %v7082
  %v7088 = vmul.f32 1.0, %v7087
  %v7089 = vrcp.pop %v6903
  %v7090 = vmul.f32 %v6903, %v7089
  %v7091 = vsub.f32 1.0, %v7090
  %v7092 = vmul.f32 %v7089, %v7091
  %v7093 = vadd.f32 %v7089, %v7092
  %vm7094 = vweird.f32 %v6903
  %vm7095 = vweird.f32 %v7089
  %vm7096 = vmor %vm7094, %vm7095
  %v7097 = vsel %vm7096, %v7089, %v7093
  %v7098 = vand.u32 2147483647, %v6903
  %vm7099 = vcmp.eq.f32.partialorder %v7098, 8.507059e+37
  %v7100 = vand.u32 %v6903, 2147483648
  %v7101 = vor.u32 1.1754944e-38, %v7100
  %v7102 = vsel %vm7099, %v7101, %v7097
  %v7103 = vmul.f32 1.0, %v7102
  %v7104 = vrcp.pop %v6904
  %v7105 = vmul.f32 %v6904, %v7104
  %v7106 = vsub.f32 1.0, %v7105
  %v7107 = vmul.f32 %v7104, %v7106
  %v7108 = vadd.f32 %v7104, %v7107
  %vm7109 = vweird.f32 %v6904
  %vm7110 = vweird.f32 %v7104
  %vm7111 = vmor %vm7109, %vm7110
  %v7112 = vsel %vm7111, %v7104, %v7108
  %v7113 = vand.u32 2147483647, %v6904
  %vm7114 = vcmp.eq.f32.partialorder %v7113, 8.507059e+37
  %v7115 = vand.u32 %v6904, 2147483648
  %v7116 = vor.u32 1.1754944e-38, %v7115
  %v7117 = vsel %vm7114, %v7116, %v7112
  %v7118 = vmul.f32 1.0, %v7117
  %v7119 = vrcp.pop %v6905
  %v7120 = vmul.f32 %v6905, %v7119
  %v7121 = vsub.f32 1.0, %v7120
  %v7122 = vmul.f32 %v7119, %v7121
  %v7123 = vadd.f32 %v7119, %v7122
  %vm7124 = vweird.f32 %v6905
  %vm7125 = vweird.f32 %v7119
  %vm7126 = vmor %vm7124, %vm7125
  %v7127 = vsel %vm7126, %v7119, %v7123
  %v7128 = vand.u32 2147483647, %v6905
  %vm7129 = vcmp.eq.f32.partialorder %v7128, 8.507059e+37
  %v7130 = vand.u32 %v6905, 2147483648
  %v7131 = vor.u32 1.1754944e-38, %v7130
  %v7132 = vsel %vm7129, %v7131, %v7127
  %v7133 = vmul.f32 1.0, %v7132
  %v7134 = vrcp.pop %v6906
  %v7135 = vmul.f32 %v6906, %v7134
  %v7136 = vsub.f32 1.0, %v7135
  %v7137 = vmul.f32 %v7134, %v7136
  %v7138 = vadd.f32 %v7134, %v7137
  %vm7139 = vweird.f32 %v6906
  %vm7140 = vweird.f32 %v7134
  %vm7141 = vmor %vm7139, %vm7140
  %v7142 = vsel %vm7141, %v7134, %v7138
  %v7143 = vand.u32 2147483647, %v6906
  %vm7144 = vcmp.eq.f32.partialorder %v7143, 8.507059e+37
  %v7145 = vand.u32 %v6906, 2147483648
  %v7146 = vor.u32 1.1754944e-38, %v7145
  %v7147 = vsel %vm7144, %v7146, %v7142
  %v7148 = vmul.f32 1.0, %v7147
  %v7149 = vrcp.pop %v6907
  %v7150 = vmul.f32 %v6907, %v7149
  %v7151 = vsub.f32 1.0, %v7150
  %v7152 = vmul.f32 %v7149, %v7151
  %v7153 = vadd.f32 %v7149, %v7152
  %vm7154 = vweird.f32 %v6907
  %vm7155 = vweird.f32 %v7149
  %vm7156 = vmor %vm7154, %vm7155
  %v7157 = vsel %vm7156, %v7149, %v7153
  %v7158 = vand.u32 2147483647, %v6907
  %vm7159 = vcmp.eq.f32.partialorder %v7158, 8.507059e+37
  %v7160 = vand.u32 %v6907, 2147483648
  %v7161 = vor.u32 1.1754944e-38, %v7160
  %v7162 = vsel %vm7159, %v7161, %v7157
  %v7163 = vmul.f32 1.0, %v7162
  %v7164 = vrcp.pop %v6908
  %v7165 = vmul.f32 %v6908, %v7164
  %v7166 = vsub.f32 1.0, %v7165
  %v7167 = vmul.f32 %v7164, %v7166
  %v7168 = vadd.f32 %v7164, %v7167
  %vm7169 = vweird.f32 %v6908
  %vm7170 = vweird.f32 %v7164
  %vm7171 = vmor %vm7169, %vm7170
  %v7172 = vsel %vm7171, %v7164, %v7168
  %v7173 = vand.u32 2147483647, %v6908
  %vm7174 = vcmp.eq.f32.partialorder %v7173, 8.507059e+37
  %v7175 = vand.u32 %v6908, 2147483648
  %v7176 = vor.u32 1.1754944e-38, %v7175
  %v7177 = vsel %vm7174, %v7176, %v7172
  %v7178 = vmul.f32 1.0, %v7177
  %v7179 = vrcp.pop %v6909
  %v7180 = vmul.f32 %v6909, %v7179
  %v7181 = vsub.f32 1.0, %v7180
  %v7182 = vmul.f32 %v7179, %v7181
  %v7183 = vadd.f32 %v7179, %v7182
  %vm7184 = vweird.f32 %v6909
  %vm7185 = vweird.f32 %v7179
  %vm7186 = vmor %vm7184, %vm7185
  %v7187 = vsel %vm7186, %v7179, %v7183
  %v7188 = vand.u32 2147483647, %v6909
  %vm7189 = vcmp.eq.f32.partialorder %v7188, 8.507059e+37
  %v7190 = vand.u32 %v6909, 2147483648
  %v7191 = vor.u32 1.1754944e-38, %v7190
  %v7192 = vsel %vm7189, %v7191, %v7187
  %v7193 = vmul.f32 1.0, %v7192
  %v7194 = vrcp.pop %v6910
  %v7195 = vmul.f32 %v6910, %v7194
  %v7196 = vsub.f32 1.0, %v7195
  %v7197 = vmul.f32 %v7194, %v7196
  %v7198 = vadd.f32 %v7194, %v7197
  %vm7199 = vweird.f32 %v6910
  %vm7200 = vweird.f32 %v7194
  %vm7201 = vmor %vm7199, %vm7200
  %v7202 = vsel %vm7201, %v7194, %v7198
  %v7203 = vand.u32 2147483647, %v6910
  %vm7204 = vcmp.eq.f32.partialorder %v7203, 8.507059e+37
  %v7205 = vand.u32 %v6910, 2147483648
  %v7206 = vor.u32 1.1754944e-38, %v7205
  %v7207 = vsel %vm7204, %v7206, %v7202
  %v7208 = vmul.f32 1.0, %v7207
  %v7209 = vrcp.pop %v6911
  %v7210 = vmul.f32 %v6911, %v7209
  %v7211 = vsub.f32 1.0, %v7210
  %v7212 = vmul.f32 %v7209, %v7211
  %v7213 = vadd.f32 %v7209, %v7212
  %vm7214 = vweird.f32 %v6911
  %vm7215 = vweird.f32 %v7209
  %vm7216 = vmor %vm7214, %vm7215
  %v7217 = vsel %vm7216, %v7209, %v7213
  %v7218 = vand.u32 2147483647, %v6911
  %vm7219 = vcmp.eq.f32.partialorder %v7218, 8.507059e+37
  %v7220 = vand.u32 %v6911, 2147483648
  %v7221 = vor.u32 1.1754944e-38, %v7220
  %v7222 = vsel %vm7219, %v7221, %v7217
  %v7223 = vmul.f32 1.0, %v7222
  %v7224 = vrcp.pop %v6912
  %v7225 = vmul.f32 %v6912, %v7224
  %v7226 = vsub.f32 1.0, %v7225
  %v7227 = vmul.f32 %v7224, %v7226
  %v7228 = vadd.f32 %v7224, %v7227
  %vm7229 = vweird.f32 %v6912
  %vm7230 = vweird.f32 %v7224
  %vm7231 = vmor %vm7229, %vm7230
  %v7232 = vsel %vm7231, %v7224, %v7228
  %v7233 = vand.u32 2147483647, %v6912
  %vm7234 = vcmp.eq.f32.partialorder %v7233, 8.507059e+37
  %v7235 = vand.u32 %v6912, 2147483648
  %v7236 = vor.u32 1.1754944e-38, %v7235
  %v7237 = vsel %vm7234, %v7236, %v7232
  %v7238 = vmul.f32 1.0, %v7237
  %v7239 = vrcp.pop %v6913
  %v7240 = vmul.f32 %v6913, %v7239
  %v7241 = vsub.f32 1.0, %v7240
  %v7242 = vmul.f32 %v7239, %v7241
  %v7243 = vadd.f32 %v7239, %v7242
  %vm7244 = vweird.f32 %v6913
  %vm7245 = vweird.f32 %v7239
  %vm7246 = vmor %vm7244, %vm7245
  %v7247 = vsel %vm7246, %v7239, %v7243
  %v7248 = vand.u32 2147483647, %v6913
  %vm7249 = vcmp.eq.f32.partialorder %v7248, 8.507059e+37
  %v7250 = vand.u32 %v6913, 2147483648
  %v7251 = vor.u32 1.1754944e-38, %v7250
  %v7252 = vsel %vm7249, %v7251, %v7247
  %v7253 = vmul.f32 1.0, %v7252
  %v7254 = vrcp.pop %v6914
  %v7255 = vmul.f32 %v6914, %v7254
  %v7256 = vsub.f32 1.0, %v7255
  %v7257 = vmul.f32 %v7254, %v7256
  %v7258 = vadd.f32 %v7254, %v7257
  %vm7259 = vweird.f32 %v6914
  %vm7260 = vweird.f32 %v7254
  %vm7261 = vmor %vm7259, %vm7260
  %v7262 = vsel %vm7261, %v7254, %v7258
  %v7263 = vand.u32 2147483647, %v6914
  %vm7264 = vcmp.eq.f32.partialorder %v7263, 8.507059e+37
  %v7265 = vand.u32 %v6914, 2147483648
  %v7266 = vor.u32 1.1754944e-38, %v7265
  %v7267 = vsel %vm7264, %v7266, %v7262
  %v7268 = vmul.f32 1.0, %v7267
  %v7269 = vrcp.pop %v6915
  %v7270 = vmul.f32 %v6915, %v7269
  %v7271 = vsub.f32 1.0, %v7270
  %v7272 = vmul.f32 %v7269, %v7271
  %v7273 = vadd.f32 %v7269, %v7272
  %vm7274 = vweird.f32 %v6915
  %vm7275 = vweird.f32 %v7269
  %vm7276 = vmor %vm7274, %vm7275
  %v7277 = vsel %vm7276, %v7269, %v7273
  %v7278 = vand.u32 2147483647, %v6915
  %vm7279 = vcmp.eq.f32.partialorder %v7278, 8.507059e+37
  %v7280 = vand.u32 %v6915, 2147483648
  %v7281 = vor.u32 1.1754944e-38, %v7280
  %v7282 = vsel %vm7279, %v7281, %v7277
  %v7283 = vmul.f32 1.0, %v7282
  %v7284 = vrcp.pop %v6916
  %v7285 = vmul.f32 %v6916, %v7284
  %v7286 = vsub.f32 1.0, %v7285
  %v7287 = vmul.f32 %v7284, %v7286
  %v7288 = vadd.f32 %v7284, %v7287
  %vm7289 = vweird.f32 %v6916
  %vm7290 = vweird.f32 %v7284
  %vm7291 = vmor %vm7289, %vm7290
  %v7292 = vsel %vm7291, %v7284, %v7288
  %v7293 = vand.u32 2147483647, %v6916
  %vm7294 = vcmp.eq.f32.partialorder %v7293, 8.507059e+37
  %v7295 = vand.u32 %v6916, 2147483648
  %v7296 = vor.u32 1.1754944e-38, %v7295
  %v7297 = vsel %vm7294, %v7296, %v7292
  %v7298 = vmul.f32 1.0, %v7297
  %v7299 = vrcp.pop %v6917
  %v7300 = vmul.f32 %v6917, %v7299
  %v7301 = vsub.f32 1.0, %v7300
  %v7302 = vmul.f32 %v7299, %v7301
  %v7303 = vadd.f32 %v7299, %v7302
  %vm7304 = vweird.f32 %v6917
  %vm7305 = vweird.f32 %v7299
  %vm7306 = vmor %vm7304, %vm7305
  %v7307 = vsel %vm7306, %v7299, %v7303
  %v7308 = vand.u32 2147483647, %v6917
  %vm7309 = vcmp.eq.f32.partialorder %v7308, 8.507059e+37
  %v7310 = vand.u32 %v6917, 2147483648
  %v7311 = vor.u32 1.1754944e-38, %v7310
  %v7312 = vsel %vm7309, %v7311, %v7307
  %v7313 = vmul.f32 1.0, %v7312
  %v7314 = vrcp.pop %v6918
  %v7315 = vmul.f32 %v6918, %v7314
  %v7316 = vsub.f32 1.0, %v7315
  %v7317 = vmul.f32 %v7314, %v7316
  %v7318 = vadd.f32 %v7314, %v7317
  %vm7319 = vweird.f32 %v6918
  %vm7320 = vweird.f32 %v7314
  %vm7321 = vmor %vm7319, %vm7320
  %v7322 = vsel %vm7321, %v7314, %v7318
  %v7323 = vand.u32 2147483647, %v6918
  %vm7324 = vcmp.eq.f32.partialorder %v7323, 8.507059e+37
  %v7325 = vand.u32 %v6918, 2147483648
  %v7326 = vor.u32 1.1754944e-38, %v7325
  %v7327 = vsel %vm7324, %v7326, %v7322
  %v7328 = vmul.f32 1.0, %v7327
  %v7329 = vrcp.pop %v6919
  %v7330 = vmul.f32 %v6919, %v7329
  %v7331 = vsub.f32 1.0, %v7330
  %v7332 = vmul.f32 %v7329, %v7331
  %v7333 = vadd.f32 %v7329, %v7332
  %vm7334 = vweird.f32 %v6919
  %vm7335 = vweird.f32 %v7329
  %vm7336 = vmor %vm7334, %vm7335
  %v7337 = vsel %vm7336, %v7329, %v7333
  %v7338 = vand.u32 2147483647, %v6919
  %vm7339 = vcmp.eq.f32.partialorder %v7338, 8.507059e+37
  %v7340 = vand.u32 %v6919, 2147483648
  %v7341 = vor.u32 1.1754944e-38, %v7340
  %v7342 = vsel %vm7339, %v7341, %v7337
  %v7343 = vmul.f32 1.0, %v7342
  %v7344 = vrcp.pop %v6920
  %v7345 = vmul.f32 %v6920, %v7344
  %v7346 = vsub.f32 1.0, %v7345
  %v7347 = vmul.f32 %v7344, %v7346
  %v7348 = vadd.f32 %v7344, %v7347
  %vm7349 = vweird.f32 %v6920
  %vm7350 = vweird.f32 %v7344
  %vm7351 = vmor %vm7349, %vm7350
  %v7352 = vsel %vm7351, %v7344, %v7348
  %v7353 = vand.u32 2147483647, %v6920
  %vm7354 = vcmp.eq.f32.partialorder %v7353, 8.507059e+37
  %v7355 = vand.u32 %v6920, 2147483648
  %v7356 = vor.u32 1.1754944e-38, %v7355
  %v7357 = vsel %vm7354, %v7356, %v7352
  %v7358 = vmul.f32 1.0, %v7357
  %v7359 = vrcp.pop %v6921
  %v7360 = vmul.f32 %v6921, %v7359
  %v7361 = vsub.f32 1.0, %v7360
  %v7362 = vmul.f32 %v7359, %v7361
  %v7363 = vadd.f32 %v7359, %v7362
  %vm7364 = vweird.f32 %v6921
  %vm7365 = vweird.f32 %v7359
  %vm7366 = vmor %vm7364, %vm7365
  %v7367 = vsel %vm7366, %v7359, %v7363
  %v7368 = vand.u32 2147483647, %v6921
  %vm7369 = vcmp.eq.f32.partialorder %v7368, 8.507059e+37
  %v7370 = vand.u32 %v6921, 2147483648
  %v7371 = vor.u32 1.1754944e-38, %v7370
  %v7372 = vsel %vm7369, %v7371, %v7367
  %v7373 = vmul.f32 1.0, %v7372
  %v7374 = vrcp.pop %v6922
  %v7375 = vmul.f32 %v6922, %v7374
  %v7376 = vsub.f32 1.0, %v7375
  %v7377 = vmul.f32 %v7374, %v7376
  %v7378 = vadd.f32 %v7374, %v7377
  %vm7379 = vweird.f32 %v6922
  %vm7380 = vweird.f32 %v7374
  %vm7381 = vmor %vm7379, %vm7380
  %v7382 = vsel %vm7381, %v7374, %v7378
  %v7383 = vand.u32 2147483647, %v6922
  %vm7384 = vcmp.eq.f32.partialorder %v7383, 8.507059e+37
  %v7385 = vand.u32 %v6922, 2147483648
  %v7386 = vor.u32 1.1754944e-38, %v7385
  %v7387 = vsel %vm7384, %v7386, %v7382
  %v7388 = vmul.f32 1.0, %v7387
  %v7389 = vrcp.pop %v6923
  %v7390 = vmul.f32 %v6923, %v7389
  %v7391 = vsub.f32 1.0, %v7390
  %v7392 = vmul.f32 %v7389, %v7391
  %v7393 = vadd.f32 %v7389, %v7392
  %vm7394 = vweird.f32 %v6923
  %vm7395 = vweird.f32 %v7389
  %vm7396 = vmor %vm7394, %vm7395
  %v7397 = vsel %vm7396, %v7389, %v7393
  %v7398 = vand.u32 2147483647, %v6923
  %vm7399 = vcmp.eq.f32.partialorder %v7398, 8.507059e+37
  %v7400 = vand.u32 %v6923, 2147483648
  %v7401 = vor.u32 1.1754944e-38, %v7400
  %v7402 = vsel %vm7399, %v7401, %v7397
  %v7403 = vmul.f32 1.0, %v7402
  %v7404 = vmul.f32 %v6096, %v6663
  %v7405 = vmul.f32 %v6111, %v6664
  %v7406 = vmul.f32 %v6126, %v6665
  %v7407 = vmul.f32 %v6141, %v6666
  %v7408 = vmul.f32 %v6156, %v6667
  %v7409 = vmul.f32 %v6171, %v6668
  %v7410 = vmul.f32 %v6186, %v6669
  %v7411 = vmul.f32 %v6201, %v6670
  %v7412 = vmul.f32 %v6216, %v6671
  %v7413 = vmul.f32 %v6231, %v6672
  %v7414 = vmul.f32 %v6246, %v6673
  %v7415 = vmul.f32 %v6261, %v6674
  %v7416 = vmul.f32 %v6276, %v6675
  %v7417 = vmul.f32 %v6291, %v6676
  %v7418 = vmul.f32 %v6306, %v6677
  %v7419 = vmul.f32 %v6321, %v6678
  %v7420 = vmul.f32 %v6336, %v6679
  %v7421 = vmul.f32 %v6351, %v6680
  %v7422 = vmul.f32 %v6366, %v6681
  %v7423 = vmul.f32 %v6381, %v6682
  %v7424 = vmul.f32 %v6396, %v6683
  %v7425 = vmul.f32 %v6411, %v6684
  %v7426 = vmul.f32 %v6426, %v6685
  %v7427 = vmul.f32 %v6441, %v6686
  %v7428 = vmul.f32 %v6456, %v6687
  %v7429 = vmul.f32 %v6471, %v6688
  %v7430 = vmul.f32 %v6486, %v6689
  %v7431 = vmul.f32 %v6501, %v6690
  %v7432 = vmul.f32 %v6516, %v6691
  %v7433 = vmul.f32 %v6531, %v6692
  %v7434 = vmul.f32 %v6546, %v6693
  %v7435 = vmul.f32 %v6561, %v6694
  %v7436 = vtanh.pop %v7404
  %v7437 = vtanh.pop %v7405
  %v7438 = vtanh.pop %v7406
  %v7439 = vtanh.pop %v7407
  %v7440 = vtanh.pop %v7408
  %v7441 = vtanh.pop %v7409
  %v7442 = vtanh.pop %v7410
  %v7443 = vtanh.pop %v7411
  %v7444 = vtanh.pop %v7412
  %v7445 = vtanh.pop %v7413
  %v7446 = vtanh.pop %v7414
  %v7447 = vtanh.pop %v7415
  %v7448 = vtanh.pop %v7416
  %v7449 = vtanh.pop %v7417
  %v7450 = vtanh.pop %v7418
  %v7451 = vtanh.pop %v7419
  %v7452 = vtanh.pop %v7420
  %v7453 = vtanh.pop %v7421
  %v7454 = vtanh.pop %v7422
  %v7455 = vtanh.pop %v7423
  %v7456 = vtanh.pop %v7424
  %v7457 = vtanh.pop %v7425
  %v7458 = vtanh.pop %v7426
  %v7459 = vtanh.pop %v7427
  %v7460 = vtanh.pop %v7428
  %v7461 = vtanh.pop %v7429
  %v7462 = vtanh.pop %v7430
  %v7463 = vtanh.pop %v7431
  %v7464 = vtanh.pop %v7432
  %v7465 = vtanh.pop %v7433
  %v7466 = vtanh.pop %v7434
  %v7467 = vtanh.pop %v7435
  %v7468 = vmul.f32 %v6938, %v7436
  %v7469 = vmul.f32 %v6953, %v7437
  %v7470 = vmul.f32 %v6968, %v7438
  %v7471 = vmul.f32 %v6983, %v7439
  %v7472 = vmul.f32 %v6998, %v7440
  %v7473 = vmul.f32 %v7013, %v7441
  %v7474 = vmul.f32 %v7028, %v7442
  %v7475 = vmul.f32 %v7043, %v7443
  %v7476 = vmul.f32 %v7058, %v7444
  %v7477 = vmul.f32 %v7073, %v7445
  %v7478 = vmul.f32 %v7088, %v7446
  %v7479 = vmul.f32 %v7103, %v7447
  %v7480 = vmul.f32 %v7118, %v7448
  %v7481 = vmul.f32 %v7133, %v7449
  %v7482 = vmul.f32 %v7148, %v7450
  %v7483 = vmul.f32 %v7163, %v7451
  %v7484 = vmul.f32 %v7178, %v7452
  %v7485 = vmul.f32 %v7193, %v7453
  %v7486 = vmul.f32 %v7208, %v7454
  %v7487 = vmul.f32 %v7223, %v7455
  %v7488 = vmul.f32 %v7238, %v7456
  %v7489 = vmul.f32 %v7253, %v7457
  %v7490 = vmul.f32 %v7268, %v7458
  %v7491 = vmul.f32 %v7283, %v7459
  %v7492 = vmul.f32 %v7298, %v7460
  %v7493 = vmul.f32 %v7313, %v7461
  %v7494 = vmul.f32 %v7328, %v7462
  %v7495 = vmul.f32 %v7343, %v7463
  %v7496 = vmul.f32 %v7358, %v7464
  %v7497 = vmul.f32 %v7373, %v7465
  %v7498 = vmul.f32 %v7388, %v7466
  %v7499 = vmul.f32 %v7403, %v7467
  %v7500 = vpack.c.bf16 %v7469, %v7468
  %v7501 = vpack.c.bf16 %v7471, %v7470
  %v7502 = vpack.c.bf16 %v7473, %v7472
  %v7503 = vpack.c.bf16 %v7475, %v7474
  %v7504 = vpack.c.bf16 %v7477, %v7476
  %v7505 = vpack.c.bf16 %v7479, %v7478
  %v7506 = vpack.c.bf16 %v7481, %v7480
  %v7507 = vpack.c.bf16 %v7483, %v7482
  %v7508 = vpack.c.bf16 %v7485, %v7484
  %v7509 = vpack.c.bf16 %v7487, %v7486
  %v7510 = vpack.c.bf16 %v7489, %v7488
  %v7511 = vpack.c.bf16 %v7491, %v7490
  %v7512 = vpack.c.bf16 %v7493, %v7492
  %v7513 = vpack.c.bf16 %v7495, %v7494
  %v7514 = vpack.c.bf16 %v7497, %v7496
  %v7515 = vpack.c.bf16 %v7499, %v7498
  %v7516 = vld [vmem:[%s11] sm:$0xf]
  %v7517 = vld [vmem:[%s11 + $0x4] sm:$0xf]
  %v7518 = vld [vmem:[%s11 + $0x8] sm:$0xf]
  %v7519 = vld [vmem:[%s11 + $0xc] sm:$0xf]
  %v7520 = vld [vmem:[%s11 + $0x10] sm:$0xf]
  %v7521 = vld [vmem:[%s11 + $0x14] sm:$0xf]
  %v7522 = vld [vmem:[%s11 + $0x18] sm:$0xf]
  %v7523 = vld [vmem:[%s11 + $0x1c] sm:$0xf]
  %v7524 = vld [vmem:[%s11 + $0x20] sm:$0xf]
  %v7525 = vld [vmem:[%s11 + $0x24] sm:$0xf]
  %v7526 = vld [vmem:[%s11 + $0x28] sm:$0xf]
  %v7527 = vld [vmem:[%s11 + $0x2c] sm:$0xf]
  %v7528 = vld [vmem:[%s11 + $0x30] sm:$0xf]
  %v7529 = vld [vmem:[%s11 + $0x34] sm:$0xf]
  %v7530 = vld [vmem:[%s11 + $0x38] sm:$0xf]
  %v7531 = vld [vmem:[%s11 + $0x3c] sm:$0xf]
  %v7532 = vld [vmem:[%s12] sm:$0x1]
  %v7534 = vperm.slane %v7532, 0
  %v7552 = vunpack.c.l.b16 %v7516
  %v7553 = vunpack.c.l.b16 %v7517
  %v7554 = vunpack.c.l.b16 %v7518
  %v7555 = vunpack.c.l.b16 %v7519
  %v7556 = vunpack.c.l.b16 %v7520
  %v7557 = vunpack.c.l.b16 %v7521
  %v7558 = vunpack.c.l.b16 %v7522
  %v7559 = vunpack.c.l.b16 %v7523
  %v7560 = vunpack.c.l.b16 %v7524
  %v7561 = vunpack.c.l.b16 %v7525
  %v7562 = vunpack.c.l.b16 %v7526
  %v7563 = vunpack.c.l.b16 %v7527
  %v7564 = vunpack.c.l.b16 %v7528
  %v7565 = vunpack.c.l.b16 %v7529
  %v7566 = vunpack.c.l.b16 %v7530
  %v7567 = vunpack.c.l.b16 %v7531
  %v7568 = vpack.c.b16 %v7553, %v7552
  %v7569 = vpack.c.b16 %v7555, %v7554
  %v7570 = vpack.c.b16 %v7557, %v7556
  %v7571 = vpack.c.b16 %v7559, %v7558
  %v7572 = vpack.c.b16 %v7561, %v7560
  %v7573 = vpack.c.b16 %v7563, %v7562
  %v7574 = vpack.c.b16 %v7565, %v7564
  %v7575 = vpack.c.b16 %v7567, %v7566
  %7584 = vmatpush.bf16.msra.mxu0 %v7575
  %7585 = vmatpush.bf16.msra.mxu0 %v7574
  %7586 = vmatpush.bf16.msra.mxu0 %v7573
  %7587 = vmatpush.bf16.msra.mxu0 %v7572
  %7588 = vmatpush.bf16.msra.mxu0 %v7571
  %7589 = vmatpush.bf16.msra.mxu0 %v7570
  %7590 = vmatpush.bf16.msra.mxu0 %v7569
  %7591 = vmatpush.bf16.msra.mxu0 %v7568
  %7592 = vmatmul.bf16.gmra.mxu0 %v7500
  %v7593 = vpop.f32.mrf.mxu0
  %v7594 = vadd.f32 %v7534, %v7593
  %v7595 = vpop.f32.mrf.mxu0
  %v7596 = vadd.f32 %v7534, %v7595
  %7597 = vmatmul.bf16.gmra.mxu0 %v7501
  %v7598 = vpop.f32.mrf.mxu0
  %v7599 = vadd.f32 %v7534, %v7598
  %v7600 = vpop.f32.mrf.mxu0
  %v7601 = vadd.f32 %v7534, %v7600
  %7602 = vmatmul.bf16.gmra.mxu0 %v7502
  %v7603 = vpop.f32.mrf.mxu0
  %v7604 = vadd.f32 %v7534, %v7603
  %v7605 = vpop.f32.mrf.mxu0
  %v7606 = vadd.f32 %v7534, %v7605
  %7607 = vmatmul.bf16.gmra.mxu0 %v7503
  %v7608 = vpop.f32.mrf.mxu0
  %v7609 = vadd.f32 %v7534, %v7608
  %v7610 = vpop.f32.mrf.mxu0
  %v7611 = vadd.f32 %v7534, %v7610
  %7612 = vmatmul.bf16.gmra.mxu0 %v7504
  %v7613 = vpop.f32.mrf.mxu0
  %v7614 = vadd.f32 %v7534, %v7613
  %v7615 = vpop.f32.mrf.mxu0
  %v7616 = vadd.f32 %v7534, %v7615
  %7617 = vmatmul.bf16.gmra.mxu0 %v7505
  %v7618 = vpop.f32.mrf.mxu0
  %v7619 = vadd.f32 %v7534, %v7618
  %v7620 = vpop.f32.mrf.mxu0
  %v7621 = vadd.f32 %v7534, %v7620
  %7622 = vmatmul.bf16.gmra.mxu0 %v7506
  %v7623 = vpop.f32.mrf.mxu0
  %v7624 = vadd.f32 %v7534, %v7623
  %v7625 = vpop.f32.mrf.mxu0
  %v7626 = vadd.f32 %v7534, %v7625
  %7627 = vmatmul.bf16.gmra.mxu0 %v7507
  %v7628 = vpop.f32.mrf.mxu0
  %v7629 = vadd.f32 %v7534, %v7628
  %v7630 = vpop.f32.mrf.mxu0
  %v7631 = vadd.f32 %v7534, %v7630
  %7632 = vmatmul.bf16.gmra.mxu0 %v7508
  %v7633 = vpop.f32.mrf.mxu0
  %v7634 = vadd.f32 %v7534, %v7633
  %v7635 = vpop.f32.mrf.mxu0
  %v7636 = vadd.f32 %v7534, %v7635
  %7637 = vmatmul.bf16.gmra.mxu0 %v7509
  %v7638 = vpop.f32.mrf.mxu0
  %v7639 = vadd.f32 %v7534, %v7638
  %v7640 = vpop.f32.mrf.mxu0
  %v7641 = vadd.f32 %v7534, %v7640
  %7642 = vmatmul.bf16.gmra.mxu0 %v7510
  %v7643 = vpop.f32.mrf.mxu0
  %v7644 = vadd.f32 %v7534, %v7643
  %v7645 = vpop.f32.mrf.mxu0
  %v7646 = vadd.f32 %v7534, %v7645
  %7647 = vmatmul.bf16.gmra.mxu0 %v7511
  %v7648 = vpop.f32.mrf.mxu0
  %v7649 = vadd.f32 %v7534, %v7648
  %v7650 = vpop.f32.mrf.mxu0
  %v7651 = vadd.f32 %v7534, %v7650
  %7652 = vmatmul.bf16.gmra.mxu0 %v7512
  %v7653 = vpop.f32.mrf.mxu0
  %v7654 = vadd.f32 %v7534, %v7653
  %v7655 = vpop.f32.mrf.mxu0
  %v7656 = vadd.f32 %v7534, %v7655
  %7657 = vmatmul.bf16.gmra.mxu0 %v7513
  %v7658 = vpop.f32.mrf.mxu0
  %v7659 = vadd.f32 %v7534, %v7658
  %v7660 = vpop.f32.mrf.mxu0
  %v7661 = vadd.f32 %v7534, %v7660
  %7662 = vmatmul.bf16.gmra.mxu0 %v7514
  %v7663 = vpop.f32.mrf.mxu0
  %v7664 = vadd.f32 %v7534, %v7663
  %v7665 = vpop.f32.mrf.mxu0
  %v7666 = vadd.f32 %v7534, %v7665
  %7667 = vmatmul.bf16.gmra.mxu0 %v7515
  %v7668 = vpop.f32.mrf.mxu0
  %v7669 = vadd.f32 %v7534, %v7668
  %v7670 = vpop.f32.mrf.mxu0
  %v7671 = vadd.f32 %v7534, %v7670
  %7672 = vdwg.mxu0
  %v7673 = vsel %vm1659, %v7594, -inf
  %7674 = vmax.xlane.f32.xlu0 %v7673
  %v7675 = vpop.xlane.xlu0 %7674
  %v7676 = vsel %vm1659, %v7596, -inf
  %7677 = vmax.xlane.f32.xlu0 %v7676
  %v7678 = vpop.xlane.xlu0 %7677
  %v7679 = vsel %vm1659, %v7599, -inf
  %7680 = vmax.xlane.f32.xlu0 %v7679
  %v7681 = vpop.xlane.xlu0 %7680
  %v7682 = vsel %vm1659, %v7601, -inf
  %7683 = vmax.xlane.f32.xlu0 %v7682
  %v7684 = vpop.xlane.xlu0 %7683
  %v7685 = vsel %vm1659, %v7604, -inf
  %7686 = vmax.xlane.f32.xlu0 %v7685
  %v7687 = vpop.xlane.xlu0 %7686
  %v7688 = vsel %vm1659, %v7606, -inf
  %7689 = vmax.xlane.f32.xlu0 %v7688
  %v7690 = vpop.xlane.xlu0 %7689
  %v7691 = vsel %vm1659, %v7609, -inf
  %7692 = vmax.xlane.f32.xlu0 %v7691
  %v7693 = vpop.xlane.xlu0 %7692
  %v7694 = vsel %vm1659, %v7611, -inf
  %7695 = vmax.xlane.f32.xlu0 %v7694
  %v7696 = vpop.xlane.xlu0 %7695
  %v7697 = vsel %vm1659, %v7614, -inf
  %7698 = vmax.xlane.f32.xlu0 %v7697
  %v7699 = vpop.xlane.xlu0 %7698
  %v7700 = vsel %vm1659, %v7616, -inf
  %7701 = vmax.xlane.f32.xlu0 %v7700
  %v7702 = vpop.xlane.xlu0 %7701
  %v7703 = vsel %vm1659, %v7619, -inf
  %7704 = vmax.xlane.f32.xlu0 %v7703
  %v7705 = vpop.xlane.xlu0 %7704
  %v7706 = vsel %vm1659, %v7621, -inf
  %7707 = vmax.xlane.f32.xlu0 %v7706
  %v7708 = vpop.xlane.xlu0 %7707
  %v7709 = vsel %vm1659, %v7624, -inf
  %7710 = vmax.xlane.f32.xlu0 %v7709
  %v7711 = vpop.xlane.xlu0 %7710
  %v7712 = vsel %vm1659, %v7626, -inf
  %7713 = vmax.xlane.f32.xlu0 %v7712
  %v7714 = vpop.xlane.xlu0 %7713
  %v7715 = vsel %vm1659, %v7629, -inf
  %7716 = vmax.xlane.f32.xlu0 %v7715
  %v7717 = vpop.xlane.xlu0 %7716
  %v7718 = vsel %vm1659, %v7631, -inf
  %7719 = vmax.xlane.f32.xlu0 %v7718
  %v7720 = vpop.xlane.xlu0 %7719
  %v7721 = vsel %vm1659, %v7634, -inf
  %7722 = vmax.xlane.f32.xlu0 %v7721
  %v7723 = vpop.xlane.xlu0 %7722
  %v7724 = vsel %vm1659, %v7636, -inf
  %7725 = vmax.xlane.f32.xlu0 %v7724
  %v7726 = vpop.xlane.xlu0 %7725
  %v7727 = vsel %vm1659, %v7639, -inf
  %7728 = vmax.xlane.f32.xlu0 %v7727
  %v7729 = vpop.xlane.xlu0 %7728
  %v7730 = vsel %vm1659, %v7641, -inf
  %7731 = vmax.xlane.f32.xlu0 %v7730
  %v7732 = vpop.xlane.xlu0 %7731
  %v7733 = vsel %vm1659, %v7644, -inf
  %7734 = vmax.xlane.f32.xlu0 %v7733
  %v7735 = vpop.xlane.xlu0 %7734
  %v7736 = vsel %vm1659, %v7646, -inf
  %7737 = vmax.xlane.f32.xlu0 %v7736
  %v7738 = vpop.xlane.xlu0 %7737
  %v7739 = vsel %vm1659, %v7649, -inf
  %7740 = vmax.xlane.f32.xlu0 %v7739
  %v7741 = vpop.xlane.xlu0 %7740
  %v7742 = vsel %vm1659, %v7651, -inf
  %7743 = vmax.xlane.f32.xlu0 %v7742
  %v7744 = vpop.xlane.xlu0 %7743
  %v7745 = vsel %vm1659, %v7654, -inf
  %7746 = vmax.xlane.f32.xlu0 %v7745
  %v7747 = vpop.xlane.xlu0 %7746
  %v7748 = vsel %vm1659, %v7656, -inf
  %7749 = vmax.xlane.f32.xlu0 %v7748
  %v7750 = vpop.xlane.xlu0 %7749
  %v7751 = vsel %vm1659, %v7659, -inf
  %7752 = vmax.xlane.f32.xlu0 %v7751
  %v7753 = vpop.xlane.xlu0 %7752
  %v7754 = vsel %vm1659, %v7661, -inf
  %7755 = vmax.xlane.f32.xlu0 %v7754
  %v7756 = vpop.xlane.xlu0 %7755
  %v7757 = vsel %vm1659, %v7664, -inf
  %7758 = vmax.xlane.f32.xlu0 %v7757
  %v7759 = vpop.xlane.xlu0 %7758
  %v7760 = vsel %vm1659, %v7666, -inf
  %7761 = vmax.xlane.f32.xlu0 %v7760
  %v7762 = vpop.xlane.xlu0 %7761
  %v7763 = vsel %vm1659, %v7669, -inf
  %7764 = vmax.xlane.f32.xlu0 %v7763
  %v7765 = vpop.xlane.xlu0 %7764
  %v7766 = vsel %vm1659, %v7671, -inf
  %7767 = vmax.xlane.f32.xlu0 %v7766
  %v7768 = vpop.xlane.xlu0 %7767
  %v7769 = vsub.f32 %v7594, %v7675
  %v7770 = vsub.f32 %v7596, %v7678
  %v7771 = vsub.f32 %v7599, %v7681
  %v7772 = vsub.f32 %v7601, %v7684
  %v7773 = vsub.f32 %v7604, %v7687
  %v7774 = vsub.f32 %v7606, %v7690
  %v7775 = vsub.f32 %v7609, %v7693
  %v7776 = vsub.f32 %v7611, %v7696
  %v7777 = vsub.f32 %v7614, %v7699
  %v7778 = vsub.f32 %v7616, %v7702
  %v7779 = vsub.f32 %v7619, %v7705
  %v7780 = vsub.f32 %v7621, %v7708
  %v7781 = vsub.f32 %v7624, %v7711
  %v7782 = vsub.f32 %v7626, %v7714
  %v7783 = vsub.f32 %v7629, %v7717
  %v7784 = vsub.f32 %v7631, %v7720
  %v7785 = vsub.f32 %v7634, %v7723
  %v7786 = vsub.f32 %v7636, %v7726
  %v7787 = vsub.f32 %v7639, %v7729
  %v7788 = vsub.f32 %v7641, %v7732
  %v7789 = vsub.f32 %v7644, %v7735
  %v7790 = vsub.f32 %v7646, %v7738
  %v7791 = vsub.f32 %v7649, %v7741
  %v7792 = vsub.f32 %v7651, %v7744
  %v7793 = vsub.f32 %v7654, %v7747
  %v7794 = vsub.f32 %v7656, %v7750
  %v7795 = vsub.f32 %v7659, %v7753
  %v7796 = vsub.f32 %v7661, %v7756
  %v7797 = vsub.f32 %v7664, %v7759
  %v7798 = vsub.f32 %v7666, %v7762
  %v7799 = vsub.f32 %v7669, %v7765
  %v7800 = vsub.f32 %v7671, %v7768
  %v7801 = vmul.f32 %v7769, 1.442695
  %v7802 = vpow.pop %v7801
  %v7803 = vmul.f32 %v7770, 1.442695
  %v7804 = vpow.pop %v7803
  %v7805 = vmul.f32 %v7771, 1.442695
  %v7806 = vpow.pop %v7805
  %v7807 = vmul.f32 %v7772, 1.442695
  %v7808 = vpow.pop %v7807
  %v7809 = vmul.f32 %v7773, 1.442695
  %v7810 = vpow.pop %v7809
  %v7811 = vmul.f32 %v7774, 1.442695
  %v7812 = vpow.pop %v7811
  %v7813 = vmul.f32 %v7775, 1.442695
  %v7814 = vpow.pop %v7813
  %v7815 = vmul.f32 %v7776, 1.442695
  %v7816 = vpow.pop %v7815
  %v7817 = vmul.f32 %v7777, 1.442695
  %v7818 = vpow.pop %v7817
  %v7819 = vmul.f32 %v7778, 1.442695
  %v7820 = vpow.pop %v7819
  %v7821 = vmul.f32 %v7779, 1.442695
  %v7822 = vpow.pop %v7821
  %v7823 = vmul.f32 %v7780, 1.442695
  %v7824 = vpow.pop %v7823
  %v7825 = vmul.f32 %v7781, 1.442695
  %v7826 = vpow.pop %v7825
  %v7827 = vmul.f32 %v7782, 1.442695
  %v7828 = vpow.pop %v7827
  %v7829 = vmul.f32 %v7783, 1.442695
  %v7830 = vpow.pop %v7829
  %v7831 = vmul.f32 %v7784, 1.442695
  %v7832 = vpow.pop %v7831
  %v7833 = vmul.f32 %v7785, 1.442695
  %v7834 = vpow.pop %v7833
  %v7835 = vmul.f32 %v7786, 1.442695
  %v7836 = vpow.pop %v7835
  %v7837 = vmul.f32 %v7787, 1.442695
  %v7838 = vpow.pop %v7837
  %v7839 = vmul.f32 %v7788, 1.442695
  %v7840 = vpow.pop %v7839
  %v7841 = vmul.f32 %v7789, 1.442695
  %v7842 = vpow.pop %v7841
  %v7843 = vmul.f32 %v7790, 1.442695
  %v7844 = vpow.pop %v7843
  %v7845 = vmul.f32 %v7791, 1.442695
  %v7846 = vpow.pop %v7845
  %v7847 = vmul.f32 %v7792, 1.442695
  %v7848 = vpow.pop %v7847
  %v7849 = vmul.f32 %v7793, 1.442695
  %v7850 = vpow.pop %v7849
  %v7851 = vmul.f32 %v7794, 1.442695
  %v7852 = vpow.pop %v7851
  %v7853 = vmul.f32 %v7795, 1.442695
  %v7854 = vpow.pop %v7853
  %v7855 = vmul.f32 %v7796, 1.442695
  %v7856 = vpow.pop %v7855
  %v7857 = vmul.f32 %v7797, 1.442695
  %v7858 = vpow.pop %v7857
  %v7859 = vmul.f32 %v7798, 1.442695
  %v7860 = vpow.pop %v7859
  %v7861 = vmul.f32 %v7799, 1.442695
  %v7862 = vpow.pop %v7861
  %v7863 = vmul.f32 %v7800, 1.442695
  %v7864 = vpow.pop %v7863
  %v7865 = vsel %vm1659, %v7802, 0.0
  %7866 = vadd.xlane.f32.xlu0 %v7865
  %v7867 = vpop.xlane.xlu0 %7866
  %v7868 = vsel %vm1659, %v7804, 0.0
  %7869 = vadd.xlane.f32.xlu0 %v7868
  %v7870 = vpop.xlane.xlu0 %7869
  %v7871 = vsel %vm1659, %v7806, 0.0
  %7872 = vadd.xlane.f32.xlu0 %v7871
  %v7873 = vpop.xlane.xlu0 %7872
  %v7874 = vsel %vm1659, %v7808, 0.0
  %7875 = vadd.xlane.f32.xlu0 %v7874
  %v7876 = vpop.xlane.xlu0 %7875
  %v7877 = vsel %vm1659, %v7810, 0.0
  %7878 = vadd.xlane.f32.xlu0 %v7877
  %v7879 = vpop.xlane.xlu0 %7878
  %v7880 = vsel %vm1659, %v7812, 0.0
  %7881 = vadd.xlane.f32.xlu0 %v7880
  %v7882 = vpop.xlane.xlu0 %7881
  %v7883 = vsel %vm1659, %v7814, 0.0
  %7884 = vadd.xlane.f32.xlu0 %v7883
  %v7885 = vpop.xlane.xlu0 %7884
  %v7886 = vsel %vm1659, %v7816, 0.0
  %7887 = vadd.xlane.f32.xlu0 %v7886
  %v7888 = vpop.xlane.xlu0 %7887
  %v7889 = vsel %vm1659, %v7818, 0.0
  %7890 = vadd.xlane.f32.xlu0 %v7889
  %v7891 = vpop.xlane.xlu0 %7890
  %v7892 = vsel %vm1659, %v7820, 0.0
  %7893 = vadd.xlane.f32.xlu0 %v7892
  %v7894 = vpop.xlane.xlu0 %7893
  %v7895 = vsel %vm1659, %v7822, 0.0
  %7896 = vadd.xlane.f32.xlu0 %v7895
  %v7897 = vpop.xlane.xlu0 %7896
  %v7898 = vsel %vm1659, %v7824, 0.0
  %7899 = vadd.xlane.f32.xlu0 %v7898
  %v7900 = vpop.xlane.xlu0 %7899
  %v7901 = vsel %vm1659, %v7826, 0.0
  %7902 = vadd.xlane.f32.xlu0 %v7901
  %v7903 = vpop.xlane.xlu0 %7902
  %v7904 = vsel %vm1659, %v7828, 0.0
  %7905 = vadd.xlane.f32.xlu0 %v7904
  %v7906 = vpop.xlane.xlu0 %7905
  %v7907 = vsel %vm1659, %v7830, 0.0
  %7908 = vadd.xlane.f32.xlu0 %v7907
  %v7909 = vpop.xlane.xlu0 %7908
  %v7910 = vsel %vm1659, %v7832, 0.0
  %7911 = vadd.xlane.f32.xlu0 %v7910
  %v7912 = vpop.xlane.xlu0 %7911
  %v7913 = vsel %vm1659, %v7834, 0.0
  %7914 = vadd.xlane.f32.xlu0 %v7913
  %v7915 = vpop.xlane.xlu0 %7914
  %v7916 = vsel %vm1659, %v7836, 0.0
  %7917 = vadd.xlane.f32.xlu0 %v7916
  %v7918 = vpop.xlane.xlu0 %7917
  %v7919 = vsel %vm1659, %v7838, 0.0
  %7920 = vadd.xlane.f32.xlu0 %v7919
  %v7921 = vpop.xlane.xlu0 %7920
  %v7922 = vsel %vm1659, %v7840, 0.0
  %7923 = vadd.xlane.f32.xlu0 %v7922
  %v7924 = vpop.xlane.xlu0 %7923
  %v7925 = vsel %vm1659, %v7842, 0.0
  %7926 = vadd.xlane.f32.xlu0 %v7925
  %v7927 = vpop.xlane.xlu0 %7926
  %v7928 = vsel %vm1659, %v7844, 0.0
  %7929 = vadd.xlane.f32.xlu0 %v7928
  %v7930 = vpop.xlane.xlu0 %7929
  %v7931 = vsel %vm1659, %v7846, 0.0
  %7932 = vadd.xlane.f32.xlu0 %v7931
  %v7933 = vpop.xlane.xlu0 %7932
  %v7934 = vsel %vm1659, %v7848, 0.0
  %7935 = vadd.xlane.f32.xlu0 %v7934
  %v7936 = vpop.xlane.xlu0 %7935
  %v7937 = vsel %vm1659, %v7850, 0.0
  %7938 = vadd.xlane.f32.xlu0 %v7937
  %v7939 = vpop.xlane.xlu0 %7938
  %v7940 = vsel %vm1659, %v7852, 0.0
  %7941 = vadd.xlane.f32.xlu0 %v7940
  %v7942 = vpop.xlane.xlu0 %7941
  %v7943 = vsel %vm1659, %v7854, 0.0
  %7944 = vadd.xlane.f32.xlu0 %v7943
  %v7945 = vpop.xlane.xlu0 %7944
  %v7946 = vsel %vm1659, %v7856, 0.0
  %7947 = vadd.xlane.f32.xlu0 %v7946
  %v7948 = vpop.xlane.xlu0 %7947
  %v7949 = vsel %vm1659, %v7858, 0.0
  %7950 = vadd.xlane.f32.xlu0 %v7949
  %v7951 = vpop.xlane.xlu0 %7950
  %v7952 = vsel %vm1659, %v7860, 0.0
  %7953 = vadd.xlane.f32.xlu0 %v7952
  %v7954 = vpop.xlane.xlu0 %7953
  %v7955 = vsel %vm1659, %v7862, 0.0
  %7956 = vadd.xlane.f32.xlu0 %v7955
  %v7957 = vpop.xlane.xlu0 %7956
  %v7958 = vsel %vm1659, %v7864, 0.0
  %7959 = vadd.xlane.f32.xlu0 %v7958
  %v7960 = vpop.xlane.xlu0 %7959
  %v7962 = vsel %vm1659, %v7802, 0
  %v7965 = vsel %vm1659, %v7804, 0
  %v7968 = vsel %vm1659, %v7806, 0
  %v7971 = vsel %vm1659, %v7808, 0
  %v7974 = vsel %vm1659, %v7810, 0
  %v7977 = vsel %vm1659, %v7812, 0
  %v7980 = vsel %vm1659, %v7814, 0
  %v7983 = vsel %vm1659, %v7816, 0
  %v7986 = vsel %vm1659, %v7818, 0
  %v7989 = vsel %vm1659, %v7820, 0
  %v7992 = vsel %vm1659, %v7822, 0
  %v7995 = vsel %vm1659, %v7824, 0
  %v7998 = vsel %vm1659, %v7826, 0
  %v8001 = vsel %vm1659, %v7828, 0
  %v8004 = vsel %vm1659, %v7830, 0
  %v8007 = vsel %vm1659, %v7832, 0
  %v8010 = vsel %vm1659, %v7834, 0
  %v8013 = vsel %vm1659, %v7836, 0
  %v8016 = vsel %vm1659, %v7838, 0
  %v8019 = vsel %vm1659, %v7840, 0
  %v8022 = vsel %vm1659, %v7842, 0
  %v8025 = vsel %vm1659, %v7844, 0
  %v8028 = vsel %vm1659, %v7846, 0
  %v8031 = vsel %vm1659, %v7848, 0
  %v8034 = vsel %vm1659, %v7850, 0
  %v8037 = vsel %vm1659, %v7852, 0
  %v8040 = vsel %vm1659, %v7854, 0
  %v8043 = vsel %vm1659, %v7856, 0
  %v8046 = vsel %vm1659, %v7858, 0
  %v8049 = vsel %vm1659, %v7860, 0
  %v8052 = vsel %vm1659, %v7862, 0
  %v8055 = vsel %vm1659, %v7864, 0
  %8057 = vmatpush.msra.mxu0 0.0
  %8058 = vmatpush.msra.mxu0 0.0
  %8059 = vmatpush.msra.mxu0 0.0
  %8060 = vmatpush.msra.mxu0 0.0
  %8061 = vmatpush.msra.mxu0 0.0
  %8062 = vmatpush.msra.mxu0 0.0
  %8063 = vmatpush.msra.mxu0 0.0
  %8064 = vmatpush.msra.mxu0 0.0
  %8065 = vmatpush.msra.mxu0 0.0
  %8066 = vmatpush.msra.mxu0 0.0
  %8067 = vmatpush.msra.mxu0 0.0
  %8068 = vmatpush.msra.mxu0 0.0
  %8069 = vmatpush.msra.mxu0 0.0
  %8070 = vmatpush.msra.mxu0 0.0
  %8071 = vmatpush.msra.mxu0 %v57
  %8072 = vmatpush.msra.mxu0 %v53
  %8073 = vmatmul.f32.gmra.mxu0 %v7962
  %v8074 = vpop.f32.mrf.mxu0
  %v8075 = vadd.f32 0.0, %v8074
  %8076 = vmatmul.f32.gmra.mxu0 %v7965
  %v8077 = vpop.f32.mrf.mxu0
  %v8078 = vadd.f32 0.0, %v8077
  %8079 = vmatmul.f32.gmra.mxu0 %v7968
  %v8080 = vpop.f32.mrf.mxu0
  %v8081 = vadd.f32 0.0, %v8080
  %8082 = vmatmul.f32.gmra.mxu0 %v7971
  %v8083 = vpop.f32.mrf.mxu0
  %v8084 = vadd.f32 0.0, %v8083
  %8085 = vmatmul.f32.gmra.mxu0 %v7974
  %v8086 = vpop.f32.mrf.mxu0
  %v8087 = vadd.f32 0.0, %v8086
  %8088 = vmatmul.f32.gmra.mxu0 %v7977
  %v8089 = vpop.f32.mrf.mxu0
  %v8090 = vadd.f32 0.0, %v8089
  %8091 = vmatmul.f32.gmra.mxu0 %v7980
  %v8092 = vpop.f32.mrf.mxu0
  %v8093 = vadd.f32 0.0, %v8092
  %8094 = vmatmul.f32.gmra.mxu0 %v7983
  %v8095 = vpop.f32.mrf.mxu0
  %v8096 = vadd.f32 0.0, %v8095
  %8097 = vmatmul.f32.gmra.mxu0 %v7986
  %v8098 = vpop.f32.mrf.mxu0
  %v8099 = vadd.f32 0.0, %v8098
  %8100 = vmatmul.f32.gmra.mxu0 %v7989
  %v8101 = vpop.f32.mrf.mxu0
  %v8102 = vadd.f32 0.0, %v8101
  %8103 = vmatmul.f32.gmra.mxu0 %v7992
  %v8104 = vpop.f32.mrf.mxu0
  %v8105 = vadd.f32 0.0, %v8104
  %8106 = vmatmul.f32.gmra.mxu0 %v7995
  %v8107 = vpop.f32.mrf.mxu0
  %v8108 = vadd.f32 0.0, %v8107
  %8109 = vmatmul.f32.gmra.mxu0 %v7998
  %v8110 = vpop.f32.mrf.mxu0
  %v8111 = vadd.f32 0.0, %v8110
  %8112 = vmatmul.f32.gmra.mxu0 %v8001
  %v8113 = vpop.f32.mrf.mxu0
  %v8114 = vadd.f32 0.0, %v8113
  %8115 = vmatmul.f32.gmra.mxu0 %v8004
  %v8116 = vpop.f32.mrf.mxu0
  %v8117 = vadd.f32 0.0, %v8116
  %8118 = vmatmul.f32.gmra.mxu0 %v8007
  %v8119 = vpop.f32.mrf.mxu0
  %v8120 = vadd.f32 0.0, %v8119
  %8121 = vmatmul.f32.gmra.mxu0 %v8010
  %v8122 = vpop.f32.mrf.mxu0
  %v8123 = vadd.f32 0.0, %v8122
  %8124 = vmatmul.f32.gmra.mxu0 %v8013
  %v8125 = vpop.f32.mrf.mxu0
  %v8126 = vadd.f32 0.0, %v8125
  %8127 = vmatmul.f32.gmra.mxu0 %v8016
  %v8128 = vpop.f32.mrf.mxu0
  %v8129 = vadd.f32 0.0, %v8128
  %8130 = vmatmul.f32.gmra.mxu0 %v8019
  %v8131 = vpop.f32.mrf.mxu0
  %v8132 = vadd.f32 0.0, %v8131
  %8133 = vmatmul.f32.gmra.mxu0 %v8022
  %v8134 = vpop.f32.mrf.mxu0
  %v8135 = vadd.f32 0.0, %v8134
  %8136 = vmatmul.f32.gmra.mxu0 %v8025
  %v8137 = vpop.f32.mrf.mxu0
  %v8138 = vadd.f32 0.0, %v8137
  %8139 = vmatmul.f32.gmra.mxu0 %v8028
  %v8140 = vpop.f32.mrf.mxu0
  %v8141 = vadd.f32 0.0, %v8140
  %8142 = vmatmul.f32.gmra.mxu0 %v8031
  %v8143 = vpop.f32.mrf.mxu0
  %v8144 = vadd.f32 0.0, %v8143
  %8145 = vmatmul.f32.gmra.mxu0 %v8034
  %v8146 = vpop.f32.mrf.mxu0
  %v8147 = vadd.f32 0.0, %v8146
  %8148 = vmatmul.f32.gmra.mxu0 %v8037
  %v8149 = vpop.f32.mrf.mxu0
  %v8150 = vadd.f32 0.0, %v8149
  %8151 = vmatmul.f32.gmra.mxu0 %v8040
  %v8152 = vpop.f32.mrf.mxu0
  %v8153 = vadd.f32 0.0, %v8152
  %8154 = vmatmul.f32.gmra.mxu0 %v8043
  %v8155 = vpop.f32.mrf.mxu0
  %v8156 = vadd.f32 0.0, %v8155
  %8157 = vmatmul.f32.gmra.mxu0 %v8046
  %v8158 = vpop.f32.mrf.mxu0
  %v8159 = vadd.f32 0.0, %v8158
  %8160 = vmatmul.f32.gmra.mxu0 %v8049
  %v8161 = vpop.f32.mrf.mxu0
  %v8162 = vadd.f32 0.0, %v8161
  %8163 = vmatmul.f32.gmra.mxu0 %v8052
  %v8164 = vpop.f32.mrf.mxu0
  %v8165 = vadd.f32 0.0, %v8164
  %8166 = vmatmul.f32.gmra.mxu0 %v8055
  %v8167 = vpop.f32.mrf.mxu0
  %v8168 = vadd.f32 0.0, %v8167
  %8169 = vdwg.mxu0
  %v8170 = vld [vmem:[%s2] sm:$0xff]
  %v8171 = vld [vmem:[%s2 + $0x8] sm:$0xff]
  %v8172 = vld [vmem:[%s2 + $0x10] sm:$0xff]
  %v8173 = vld [vmem:[%s2 + $0x18] sm:$0xff]
  %v8174 = vld [vmem:[%s2 + $0x20] sm:$0xff]
  %v8175 = vld [vmem:[%s2 + $0x28] sm:$0xff]
  %v8176 = vld [vmem:[%s2 + $0x30] sm:$0xff]
  %v8177 = vld [vmem:[%s2 + $0x38] sm:$0xff]
  %v8178 = vld [vmem:[%s2 + $0x40] sm:$0xff]
  %v8179 = vld [vmem:[%s2 + $0x48] sm:$0xff]
  %v8180 = vld [vmem:[%s2 + $0x50] sm:$0xff]
  %v8181 = vld [vmem:[%s2 + $0x58] sm:$0xff]
  %v8182 = vld [vmem:[%s2 + $0x60] sm:$0xff]
  %v8183 = vld [vmem:[%s2 + $0x68] sm:$0xff]
  %v8184 = vld [vmem:[%s2 + $0x70] sm:$0xff]
  %v8185 = vld [vmem:[%s2 + $0x78] sm:$0xff]
  %v8186 = vld [vmem:[%s2 + $0x80] sm:$0xff]
  %v8187 = vld [vmem:[%s2 + $0x88] sm:$0xff]
  %v8188 = vld [vmem:[%s2 + $0x90] sm:$0xff]
  %v8189 = vld [vmem:[%s2 + $0x98] sm:$0xff]
  %v8190 = vld [vmem:[%s2 + $0xa0] sm:$0xff]
  %v8191 = vld [vmem:[%s2 + $0xa8] sm:$0xff]
  %v8192 = vld [vmem:[%s2 + $0xb0] sm:$0xff]
  %v8193 = vld [vmem:[%s2 + $0xb8] sm:$0xff]
  %v8194 = vld [vmem:[%s2 + $0xc0] sm:$0xff]
  %v8195 = vld [vmem:[%s2 + $0xc8] sm:$0xff]
  %v8196 = vld [vmem:[%s2 + $0xd0] sm:$0xff]
  %v8197 = vld [vmem:[%s2 + $0xd8] sm:$0xff]
  %v8198 = vld [vmem:[%s2 + $0xe0] sm:$0xff]
  %v8199 = vld [vmem:[%s2 + $0xe8] sm:$0xff]
  %v8200 = vld [vmem:[%s2 + $0xf0] sm:$0xff]
  %v8201 = vld [vmem:[%s2 + $0xf8] sm:$0xff]
  %v8202 = vmul.f32 %v8170, %v7867
  %v8203 = vmul.f32 %v8171, %v7870
  %v8204 = vmul.f32 %v8172, %v7873
  %v8205 = vmul.f32 %v8173, %v7876
  %v8206 = vmul.f32 %v8174, %v7879
  %v8207 = vmul.f32 %v8175, %v7882
  %v8208 = vmul.f32 %v8176, %v7885
  %v8209 = vmul.f32 %v8177, %v7888
  %v8210 = vmul.f32 %v8178, %v7891
  %v8211 = vmul.f32 %v8179, %v7894
  %v8212 = vmul.f32 %v8180, %v7897
  %v8213 = vmul.f32 %v8181, %v7900
  %v8214 = vmul.f32 %v8182, %v7903
  %v8215 = vmul.f32 %v8183, %v7906
  %v8216 = vmul.f32 %v8184, %v7909
  %v8217 = vmul.f32 %v8185, %v7912
  %v8218 = vmul.f32 %v8186, %v7915
  %v8219 = vmul.f32 %v8187, %v7918
  %v8220 = vmul.f32 %v8188, %v7921
  %v8221 = vmul.f32 %v8189, %v7924
  %v8222 = vmul.f32 %v8190, %v7927
  %v8223 = vmul.f32 %v8191, %v7930
  %v8224 = vmul.f32 %v8192, %v7933
  %v8225 = vmul.f32 %v8193, %v7936
  %v8226 = vmul.f32 %v8194, %v7939
  %v8227 = vmul.f32 %v8195, %v7942
  %v8228 = vmul.f32 %v8196, %v7945
  %v8229 = vmul.f32 %v8197, %v7948
  %v8230 = vmul.f32 %v8198, %v7951
  %v8231 = vmul.f32 %v8199, %v7954
  %v8232 = vmul.f32 %v8200, %v7957
  %v8233 = vmul.f32 %v8201, %v7960
  %8235 = vset.pattern.permute.xlu0 0
  %8236 = vperm.xlu0 %8235, %v8202
  %v8237 = vpop.permute.xlu0 %8236
  %8240 = vset.pattern.permute.xlu0 0
  %8241 = vperm.xlu0 %8240, %v8203
  %v8242 = vpop.permute.xlu0 %8241
  %8245 = vset.pattern.permute.xlu0 0
  %8246 = vperm.xlu0 %8245, %v8204
  %v8247 = vpop.permute.xlu0 %8246
  %8250 = vset.pattern.permute.xlu0 0
  %8251 = vperm.xlu0 %8250, %v8205
  %v8252 = vpop.permute.xlu0 %8251
  %8255 = vset.pattern.permute.xlu0 0
  %8256 = vperm.xlu0 %8255, %v8206
  %v8257 = vpop.permute.xlu0 %8256
  %8260 = vset.pattern.permute.xlu0 0
  %8261 = vperm.xlu0 %8260, %v8207
  %v8262 = vpop.permute.xlu0 %8261
  %8265 = vset.pattern.permute.xlu0 0
  %8266 = vperm.xlu0 %8265, %v8208
  %v8267 = vpop.permute.xlu0 %8266
  %8270 = vset.pattern.permute.xlu0 0
  %8271 = vperm.xlu0 %8270, %v8209
  %v8272 = vpop.permute.xlu0 %8271
  %8275 = vset.pattern.permute.xlu0 0
  %8276 = vperm.xlu0 %8275, %v8210
  %v8277 = vpop.permute.xlu0 %8276
  %8280 = vset.pattern.permute.xlu0 0
  %8281 = vperm.xlu0 %8280, %v8211
  %v8282 = vpop.permute.xlu0 %8281
  %8285 = vset.pattern.permute.xlu0 0
  %8286 = vperm.xlu0 %8285, %v8212
  %v8287 = vpop.permute.xlu0 %8286
  %8290 = vset.pattern.permute.xlu0 0
  %8291 = vperm.xlu0 %8290, %v8213
  %v8292 = vpop.permute.xlu0 %8291
  %8295 = vset.pattern.permute.xlu0 0
  %8296 = vperm.xlu0 %8295, %v8214
  %v8297 = vpop.permute.xlu0 %8296
  %8300 = vset.pattern.permute.xlu0 0
  %8301 = vperm.xlu0 %8300, %v8215
  %v8302 = vpop.permute.xlu0 %8301
  %8305 = vset.pattern.permute.xlu0 0
  %8306 = vperm.xlu0 %8305, %v8216
  %v8307 = vpop.permute.xlu0 %8306
  %8310 = vset.pattern.permute.xlu0 0
  %8311 = vperm.xlu0 %8310, %v8217
  %v8312 = vpop.permute.xlu0 %8311
  %8315 = vset.pattern.permute.xlu0 0
  %8316 = vperm.xlu0 %8315, %v8218
  %v8317 = vpop.permute.xlu0 %8316
  %8320 = vset.pattern.permute.xlu0 0
  %8321 = vperm.xlu0 %8320, %v8219
  %v8322 = vpop.permute.xlu0 %8321
  %8325 = vset.pattern.permute.xlu0 0
  %8326 = vperm.xlu0 %8325, %v8220
  %v8327 = vpop.permute.xlu0 %8326
  %8330 = vset.pattern.permute.xlu0 0
  %8331 = vperm.xlu0 %8330, %v8221
  %v8332 = vpop.permute.xlu0 %8331
  %8335 = vset.pattern.permute.xlu0 0
  %8336 = vperm.xlu0 %8335, %v8222
  %v8337 = vpop.permute.xlu0 %8336
  %8340 = vset.pattern.permute.xlu0 0
  %8341 = vperm.xlu0 %8340, %v8223
  %v8342 = vpop.permute.xlu0 %8341
  %8345 = vset.pattern.permute.xlu0 0
  %8346 = vperm.xlu0 %8345, %v8224
  %v8347 = vpop.permute.xlu0 %8346
  %8350 = vset.pattern.permute.xlu0 0
  %8351 = vperm.xlu0 %8350, %v8225
  %v8352 = vpop.permute.xlu0 %8351
  %8355 = vset.pattern.permute.xlu0 0
  %8356 = vperm.xlu0 %8355, %v8226
  %v8357 = vpop.permute.xlu0 %8356
  %8360 = vset.pattern.permute.xlu0 0
  %8361 = vperm.xlu0 %8360, %v8227
  %v8362 = vpop.permute.xlu0 %8361
  %8365 = vset.pattern.permute.xlu0 0
  %8366 = vperm.xlu0 %8365, %v8228
  %v8367 = vpop.permute.xlu0 %8366
  %8370 = vset.pattern.permute.xlu0 0
  %8371 = vperm.xlu0 %8370, %v8229
  %v8372 = vpop.permute.xlu0 %8371
  %8375 = vset.pattern.permute.xlu0 0
  %8376 = vperm.xlu0 %8375, %v8230
  %v8377 = vpop.permute.xlu0 %8376
  %8380 = vset.pattern.permute.xlu0 0
  %8381 = vperm.xlu0 %8380, %v8231
  %v8382 = vpop.permute.xlu0 %8381
  %8385 = vset.pattern.permute.xlu0 0
  %8386 = vperm.xlu0 %8385, %v8232
  %v8387 = vpop.permute.xlu0 %8386
  %8390 = vset.pattern.permute.xlu0 0
  %8391 = vperm.xlu0 %8390, %v8233
  %v8392 = vpop.permute.xlu0 %8391
  %vm8394 = vcmp.ge.f32.partialorder %v8237, %v8075
  %vm8395 = vcmp.ge.f32.partialorder %v8242, %v8078
  %vm8396 = vcmp.ge.f32.partialorder %v8247, %v8081
  %vm8397 = vcmp.ge.f32.partialorder %v8252, %v8084
  %vm8398 = vcmp.ge.f32.partialorder %v8257, %v8087
  %vm8399 = vcmp.ge.f32.partialorder %v8262, %v8090
  %vm8400 = vcmp.ge.f32.partialorder %v8267, %v8093
  %vm8401 = vcmp.ge.f32.partialorder %v8272, %v8096
  %vm8402 = vcmp.ge.f32.partialorder %v8277, %v8099
  %vm8403 = vcmp.ge.f32.partialorder %v8282, %v8102
  %vm8404 = vcmp.ge.f32.partialorder %v8287, %v8105
  %vm8405 = vcmp.ge.f32.partialorder %v8292, %v8108
  %vm8406 = vcmp.ge.f32.partialorder %v8297, %v8111
  %vm8407 = vcmp.ge.f32.partialorder %v8302, %v8114
  %vm8408 = vcmp.ge.f32.partialorder %v8307, %v8117
  %vm8409 = vcmp.ge.f32.partialorder %v8312, %v8120
  %vm8410 = vcmp.ge.f32.partialorder %v8317, %v8123
  %vm8411 = vcmp.ge.f32.partialorder %v8322, %v8126
  %vm8412 = vcmp.ge.f32.partialorder %v8327, %v8129
  %vm8413 = vcmp.ge.f32.partialorder %v8332, %v8132
  %vm8414 = vcmp.ge.f32.partialorder %v8337, %v8135
  %vm8415 = vcmp.ge.f32.partialorder %v8342, %v8138
  %vm8416 = vcmp.ge.f32.partialorder %v8347, %v8141
  %vm8417 = vcmp.ge.f32.partialorder %v8352, %v8144
  %vm8418 = vcmp.ge.f32.partialorder %v8357, %v8147
  %vm8419 = vcmp.ge.f32.partialorder %v8362, %v8150
  %vm8420 = vcmp.ge.f32.partialorder %v8367, %v8153
  %vm8421 = vcmp.ge.f32.partialorder %v8372, %v8156
  %vm8422 = vcmp.ge.f32.partialorder %v8377, %v8159
  %vm8423 = vcmp.ge.f32.partialorder %v8382, %v8162
  %vm8424 = vcmp.ge.f32.partialorder %v8387, %v8165
  %vm8425 = vcmp.ge.f32.partialorder %v8392, %v8168
  %v8426 = vsel %vm8394, 1, 0
  %v8427 = vsel %vm8395, 1, 0
  %v8428 = vsel %vm8396, 1, 0
  %v8429 = vsel %vm8397, 1, 0
  %v8430 = vsel %vm8398, 1, 0
  %v8431 = vsel %vm8399, 1, 0
  %v8432 = vsel %vm8400, 1, 0
  %v8433 = vsel %vm8401, 1, 0
  %v8434 = vsel %vm8402, 1, 0
  %v8435 = vsel %vm8403, 1, 0
  %v8436 = vsel %vm8404, 1, 0
  %v8437 = vsel %vm8405, 1, 0
  %v8438 = vsel %vm8406, 1, 0
  %v8439 = vsel %vm8407, 1, 0
  %v8440 = vsel %vm8408, 1, 0
  %v8441 = vsel %vm8409, 1, 0
  %v8442 = vsel %vm8410, 1, 0
  %v8443 = vsel %vm8411, 1, 0
  %v8444 = vsel %vm8412, 1, 0
  %v8445 = vsel %vm8413, 1, 0
  %v8446 = vsel %vm8414, 1, 0
  %v8447 = vsel %vm8415, 1, 0
  %v8448 = vsel %vm8416, 1, 0
  %v8449 = vsel %vm8417, 1, 0
  %v8450 = vsel %vm8418, 1, 0
  %v8451 = vsel %vm8419, 1, 0
  %v8452 = vsel %vm8420, 1, 0
  %v8453 = vsel %vm8421, 1, 0
  %v8454 = vsel %vm8422, 1, 0
  %v8455 = vsel %vm8423, 1, 0
  %v8456 = vsel %vm8424, 1, 0
  %v8457 = vsel %vm8425, 1, 0
  %v8458 = vsel %vm1659, %v8426, 0
  %v8459 = vand.u32 %v8458, 65535
  %v8460 = vshrl.u32 %v8458, 16
  %v8461 = vcvt.s32.f32 %v8459
  %v8462 = vcvt.s32.f32 %v8460
  %8463 = vadd.xlane.f32.xlu0 %v8461
  %v8464 = vpop.xlane.xlu0 %8463
  %8465 = vadd.xlane.f32.xlu0 %v8462
  %v8466 = vpop.xlane.xlu0 %8465
  %v8467 = vcvt.f32.s32 %v8464
  %v8468 = vcvt.f32.s32 %v8466
  %v8469 = vshll.u32 %v8468, 16
  %v8470 = vadd.s32 %v8469, %v8467
  %v8471 = vsel %vm1659, %v8427, 0
  %v8472 = vand.u32 %v8471, 65535
  %v8473 = vshrl.u32 %v8471, 16
  %v8474 = vcvt.s32.f32 %v8472
  %v8475 = vcvt.s32.f32 %v8473
  %8476 = vadd.xlane.f32.xlu0 %v8474
  %v8477 = vpop.xlane.xlu0 %8476
  %8478 = vadd.xlane.f32.xlu0 %v8475
  %v8479 = vpop.xlane.xlu0 %8478
  %v8480 = vcvt.f32.s32 %v8477
  %v8481 = vcvt.f32.s32 %v8479
  %v8482 = vshll.u32 %v8481, 16
  %v8483 = vadd.s32 %v8482, %v8480
  %v8484 = vsel %vm1659, %v8428, 0
  %v8485 = vand.u32 %v8484, 65535
  %v8486 = vshrl.u32 %v8484, 16
  %v8487 = vcvt.s32.f32 %v8485
  %v8488 = vcvt.s32.f32 %v8486
  %8489 = vadd.xlane.f32.xlu0 %v8487
  %v8490 = vpop.xlane.xlu0 %8489
  %8491 = vadd.xlane.f32.xlu0 %v8488
  %v8492 = vpop.xlane.xlu0 %8491
  %v8493 = vcvt.f32.s32 %v8490
  %v8494 = vcvt.f32.s32 %v8492
  %v8495 = vshll.u32 %v8494, 16
  %v8496 = vadd.s32 %v8495, %v8493
  %v8497 = vsel %vm1659, %v8429, 0
  %v8498 = vand.u32 %v8497, 65535
  %v8499 = vshrl.u32 %v8497, 16
  %v8500 = vcvt.s32.f32 %v8498
  %v8501 = vcvt.s32.f32 %v8499
  %8502 = vadd.xlane.f32.xlu0 %v8500
  %v8503 = vpop.xlane.xlu0 %8502
  %8504 = vadd.xlane.f32.xlu0 %v8501
  %v8505 = vpop.xlane.xlu0 %8504
  %v8506 = vcvt.f32.s32 %v8503
  %v8507 = vcvt.f32.s32 %v8505
  %v8508 = vshll.u32 %v8507, 16
  %v8509 = vadd.s32 %v8508, %v8506
  %v8510 = vsel %vm1659, %v8430, 0
  %v8511 = vand.u32 %v8510, 65535
  %v8512 = vshrl.u32 %v8510, 16
  %v8513 = vcvt.s32.f32 %v8511
  %v8514 = vcvt.s32.f32 %v8512
  %8515 = vadd.xlane.f32.xlu0 %v8513
  %v8516 = vpop.xlane.xlu0 %8515
  %8517 = vadd.xlane.f32.xlu0 %v8514
  %v8518 = vpop.xlane.xlu0 %8517
  %v8519 = vcvt.f32.s32 %v8516
  %v8520 = vcvt.f32.s32 %v8518
  %v8521 = vshll.u32 %v8520, 16
  %v8522 = vadd.s32 %v8521, %v8519
  %v8523 = vsel %vm1659, %v8431, 0
  %v8524 = vand.u32 %v8523, 65535
  %v8525 = vshrl.u32 %v8523, 16
  %v8526 = vcvt.s32.f32 %v8524
  %v8527 = vcvt.s32.f32 %v8525
  %8528 = vadd.xlane.f32.xlu0 %v8526
  %v8529 = vpop.xlane.xlu0 %8528
  %8530 = vadd.xlane.f32.xlu0 %v8527
  %v8531 = vpop.xlane.xlu0 %8530
  %v8532 = vcvt.f32.s32 %v8529
  %v8533 = vcvt.f32.s32 %v8531
  %v8534 = vshll.u32 %v8533, 16
  %v8535 = vadd.s32 %v8534, %v8532
  %v8536 = vsel %vm1659, %v8432, 0
  %v8537 = vand.u32 %v8536, 65535
  %v8538 = vshrl.u32 %v8536, 16
  %v8539 = vcvt.s32.f32 %v8537
  %v8540 = vcvt.s32.f32 %v8538
  %8541 = vadd.xlane.f32.xlu0 %v8539
  %v8542 = vpop.xlane.xlu0 %8541
  %8543 = vadd.xlane.f32.xlu0 %v8540
  %v8544 = vpop.xlane.xlu0 %8543
  %v8545 = vcvt.f32.s32 %v8542
  %v8546 = vcvt.f32.s32 %v8544
  %v8547 = vshll.u32 %v8546, 16
  %v8548 = vadd.s32 %v8547, %v8545
  %v8549 = vsel %vm1659, %v8433, 0
  %v8550 = vand.u32 %v8549, 65535
  %v8551 = vshrl.u32 %v8549, 16
  %v8552 = vcvt.s32.f32 %v8550
  %v8553 = vcvt.s32.f32 %v8551
  %8554 = vadd.xlane.f32.xlu0 %v8552
  %v8555 = vpop.xlane.xlu0 %8554
  %8556 = vadd.xlane.f32.xlu0 %v8553
  %v8557 = vpop.xlane.xlu0 %8556
  %v8558 = vcvt.f32.s32 %v8555
  %v8559 = vcvt.f32.s32 %v8557
  %v8560 = vshll.u32 %v8559, 16
  %v8561 = vadd.s32 %v8560, %v8558
  %v8562 = vsel %vm1659, %v8434, 0
  %v8563 = vand.u32 %v8562, 65535
  %v8564 = vshrl.u32 %v8562, 16
  %v8565 = vcvt.s32.f32 %v8563
  %v8566 = vcvt.s32.f32 %v8564
  %8567 = vadd.xlane.f32.xlu0 %v8565
  %v8568 = vpop.xlane.xlu0 %8567
  %8569 = vadd.xlane.f32.xlu0 %v8566
  %v8570 = vpop.xlane.xlu0 %8569
  %v8571 = vcvt.f32.s32 %v8568
  %v8572 = vcvt.f32.s32 %v8570
  %v8573 = vshll.u32 %v8572, 16
  %v8574 = vadd.s32 %v8573, %v8571
  %v8575 = vsel %vm1659, %v8435, 0
  %v8576 = vand.u32 %v8575, 65535
  %v8577 = vshrl.u32 %v8575, 16
  %v8578 = vcvt.s32.f32 %v8576
  %v8579 = vcvt.s32.f32 %v8577
  %8580 = vadd.xlane.f32.xlu0 %v8578
  %v8581 = vpop.xlane.xlu0 %8580
  %8582 = vadd.xlane.f32.xlu0 %v8579
  %v8583 = vpop.xlane.xlu0 %8582
  %v8584 = vcvt.f32.s32 %v8581
  %v8585 = vcvt.f32.s32 %v8583
  %v8586 = vshll.u32 %v8585, 16
  %v8587 = vadd.s32 %v8586, %v8584
  %v8588 = vsel %vm1659, %v8436, 0
  %v8589 = vand.u32 %v8588, 65535
  %v8590 = vshrl.u32 %v8588, 16
  %v8591 = vcvt.s32.f32 %v8589
  %v8592 = vcvt.s32.f32 %v8590
  %8593 = vadd.xlane.f32.xlu0 %v8591
  %v8594 = vpop.xlane.xlu0 %8593
  %8595 = vadd.xlane.f32.xlu0 %v8592
  %v8596 = vpop.xlane.xlu0 %8595
  %v8597 = vcvt.f32.s32 %v8594
  %v8598 = vcvt.f32.s32 %v8596
  %v8599 = vshll.u32 %v8598, 16
  %v8600 = vadd.s32 %v8599, %v8597
  %v8601 = vsel %vm1659, %v8437, 0
  %v8602 = vand.u32 %v8601, 65535
  %v8603 = vshrl.u32 %v8601, 16
  %v8604 = vcvt.s32.f32 %v8602
  %v8605 = vcvt.s32.f32 %v8603
  %8606 = vadd.xlane.f32.xlu0 %v8604
  %v8607 = vpop.xlane.xlu0 %8606
  %8608 = vadd.xlane.f32.xlu0 %v8605
  %v8609 = vpop.xlane.xlu0 %8608
  %v8610 = vcvt.f32.s32 %v8607
  %v8611 = vcvt.f32.s32 %v8609
  %v8612 = vshll.u32 %v8611, 16
  %v8613 = vadd.s32 %v8612, %v8610
  %v8614 = vsel %vm1659, %v8438, 0
  %v8615 = vand.u32 %v8614, 65535
  %v8616 = vshrl.u32 %v8614, 16
  %v8617 = vcvt.s32.f32 %v8615
  %v8618 = vcvt.s32.f32 %v8616
  %8619 = vadd.xlane.f32.xlu0 %v8617
  %v8620 = vpop.xlane.xlu0 %8619
  %8621 = vadd.xlane.f32.xlu0 %v8618
  %v8622 = vpop.xlane.xlu0 %8621
  %v8623 = vcvt.f32.s32 %v8620
  %v8624 = vcvt.f32.s32 %v8622
  %v8625 = vshll.u32 %v8624, 16
  %v8626 = vadd.s32 %v8625, %v8623
  %v8627 = vsel %vm1659, %v8439, 0
  %v8628 = vand.u32 %v8627, 65535
  %v8629 = vshrl.u32 %v8627, 16
  %v8630 = vcvt.s32.f32 %v8628
  %v8631 = vcvt.s32.f32 %v8629
  %8632 = vadd.xlane.f32.xlu0 %v8630
  %v8633 = vpop.xlane.xlu0 %8632
  %8634 = vadd.xlane.f32.xlu0 %v8631
  %v8635 = vpop.xlane.xlu0 %8634
  %v8636 = vcvt.f32.s32 %v8633
  %v8637 = vcvt.f32.s32 %v8635
  %v8638 = vshll.u32 %v8637, 16
  %v8639 = vadd.s32 %v8638, %v8636
  %v8640 = vsel %vm1659, %v8440, 0
  %v8641 = vand.u32 %v8640, 65535
  %v8642 = vshrl.u32 %v8640, 16
  %v8643 = vcvt.s32.f32 %v8641
  %v8644 = vcvt.s32.f32 %v8642
  %8645 = vadd.xlane.f32.xlu0 %v8643
  %v8646 = vpop.xlane.xlu0 %8645
  %8647 = vadd.xlane.f32.xlu0 %v8644
  %v8648 = vpop.xlane.xlu0 %8647
  %v8649 = vcvt.f32.s32 %v8646
  %v8650 = vcvt.f32.s32 %v8648
  %v8651 = vshll.u32 %v8650, 16
  %v8652 = vadd.s32 %v8651, %v8649
  %v8653 = vsel %vm1659, %v8441, 0
  %v8654 = vand.u32 %v8653, 65535
  %v8655 = vshrl.u32 %v8653, 16
  %v8656 = vcvt.s32.f32 %v8654
  %v8657 = vcvt.s32.f32 %v8655
  %8658 = vadd.xlane.f32.xlu0 %v8656
  %v8659 = vpop.xlane.xlu0 %8658
  %8660 = vadd.xlane.f32.xlu0 %v8657
  %v8661 = vpop.xlane.xlu0 %8660
  %v8662 = vcvt.f32.s32 %v8659
  %v8663 = vcvt.f32.s32 %v8661
  %v8664 = vshll.u32 %v8663, 16
  %v8665 = vadd.s32 %v8664, %v8662
  %v8666 = vsel %vm1659, %v8442, 0
  %v8667 = vand.u32 %v8666, 65535
  %v8668 = vshrl.u32 %v8666, 16
  %v8669 = vcvt.s32.f32 %v8667
  %v8670 = vcvt.s32.f32 %v8668
  %8671 = vadd.xlane.f32.xlu0 %v8669
  %v8672 = vpop.xlane.xlu0 %8671
  %8673 = vadd.xlane.f32.xlu0 %v8670
  %v8674 = vpop.xlane.xlu0 %8673
  %v8675 = vcvt.f32.s32 %v8672
  %v8676 = vcvt.f32.s32 %v8674
  %v8677 = vshll.u32 %v8676, 16
  %v8678 = vadd.s32 %v8677, %v8675
  %v8679 = vsel %vm1659, %v8443, 0
  %v8680 = vand.u32 %v8679, 65535
  %v8681 = vshrl.u32 %v8679, 16
  %v8682 = vcvt.s32.f32 %v8680
  %v8683 = vcvt.s32.f32 %v8681
  %8684 = vadd.xlane.f32.xlu0 %v8682
  %v8685 = vpop.xlane.xlu0 %8684
  %8686 = vadd.xlane.f32.xlu0 %v8683
  %v8687 = vpop.xlane.xlu0 %8686
  %v8688 = vcvt.f32.s32 %v8685
  %v8689 = vcvt.f32.s32 %v8687
  %v8690 = vshll.u32 %v8689, 16
  %v8691 = vadd.s32 %v8690, %v8688
  %v8692 = vsel %vm1659, %v8444, 0
  %v8693 = vand.u32 %v8692, 65535
  %v8694 = vshrl.u32 %v8692, 16
  %v8695 = vcvt.s32.f32 %v8693
  %v8696 = vcvt.s32.f32 %v8694
  %8697 = vadd.xlane.f32.xlu0 %v8695
  %v8698 = vpop.xlane.xlu0 %8697
  %8699 = vadd.xlane.f32.xlu0 %v8696
  %v8700 = vpop.xlane.xlu0 %8699
  %v8701 = vcvt.f32.s32 %v8698
  %v8702 = vcvt.f32.s32 %v8700
  %v8703 = vshll.u32 %v8702, 16
  %v8704 = vadd.s32 %v8703, %v8701
  %v8705 = vsel %vm1659, %v8445, 0
  %v8706 = vand.u32 %v8705, 65535
  %v8707 = vshrl.u32 %v8705, 16
  %v8708 = vcvt.s32.f32 %v8706
  %v8709 = vcvt.s32.f32 %v8707
  %8710 = vadd.xlane.f32.xlu0 %v8708
  %v8711 = vpop.xlane.xlu0 %8710
  %8712 = vadd.xlane.f32.xlu0 %v8709
  %v8713 = vpop.xlane.xlu0 %8712
  %v8714 = vcvt.f32.s32 %v8711
  %v8715 = vcvt.f32.s32 %v8713
  %v8716 = vshll.u32 %v8715, 16
  %v8717 = vadd.s32 %v8716, %v8714
  %v8718 = vsel %vm1659, %v8446, 0
  %v8719 = vand.u32 %v8718, 65535
  %v8720 = vshrl.u32 %v8718, 16
  %v8721 = vcvt.s32.f32 %v8719
  %v8722 = vcvt.s32.f32 %v8720
  %8723 = vadd.xlane.f32.xlu0 %v8721
  %v8724 = vpop.xlane.xlu0 %8723
  %8725 = vadd.xlane.f32.xlu0 %v8722
  %v8726 = vpop.xlane.xlu0 %8725
  %v8727 = vcvt.f32.s32 %v8724
  %v8728 = vcvt.f32.s32 %v8726
  %v8729 = vshll.u32 %v8728, 16
  %v8730 = vadd.s32 %v8729, %v8727
  %v8731 = vsel %vm1659, %v8447, 0
  %v8732 = vand.u32 %v8731, 65535
  %v8733 = vshrl.u32 %v8731, 16
  %v8734 = vcvt.s32.f32 %v8732
  %v8735 = vcvt.s32.f32 %v8733
  %8736 = vadd.xlane.f32.xlu0 %v8734
  %v8737 = vpop.xlane.xlu0 %8736
  %8738 = vadd.xlane.f32.xlu0 %v8735
  %v8739 = vpop.xlane.xlu0 %8738
  %v8740 = vcvt.f32.s32 %v8737
  %v8741 = vcvt.f32.s32 %v8739
  %v8742 = vshll.u32 %v8741, 16
  %v8743 = vadd.s32 %v8742, %v8740
  %v8744 = vsel %vm1659, %v8448, 0
  %v8745 = vand.u32 %v8744, 65535
  %v8746 = vshrl.u32 %v8744, 16
  %v8747 = vcvt.s32.f32 %v8745
  %v8748 = vcvt.s32.f32 %v8746
  %8749 = vadd.xlane.f32.xlu0 %v8747
  %v8750 = vpop.xlane.xlu0 %8749
  %8751 = vadd.xlane.f32.xlu0 %v8748
  %v8752 = vpop.xlane.xlu0 %8751
  %v8753 = vcvt.f32.s32 %v8750
  %v8754 = vcvt.f32.s32 %v8752
  %v8755 = vshll.u32 %v8754, 16
  %v8756 = vadd.s32 %v8755, %v8753
  %v8757 = vsel %vm1659, %v8449, 0
  %v8758 = vand.u32 %v8757, 65535
  %v8759 = vshrl.u32 %v8757, 16
  %v8760 = vcvt.s32.f32 %v8758
  %v8761 = vcvt.s32.f32 %v8759
  %8762 = vadd.xlane.f32.xlu0 %v8760
  %v8763 = vpop.xlane.xlu0 %8762
  %8764 = vadd.xlane.f32.xlu0 %v8761
  %v8765 = vpop.xlane.xlu0 %8764
  %v8766 = vcvt.f32.s32 %v8763
  %v8767 = vcvt.f32.s32 %v8765
  %v8768 = vshll.u32 %v8767, 16
  %v8769 = vadd.s32 %v8768, %v8766
  %v8770 = vsel %vm1659, %v8450, 0
  %v8771 = vand.u32 %v8770, 65535
  %v8772 = vshrl.u32 %v8770, 16
  %v8773 = vcvt.s32.f32 %v8771
  %v8774 = vcvt.s32.f32 %v8772
  %8775 = vadd.xlane.f32.xlu0 %v8773
  %v8776 = vpop.xlane.xlu0 %8775
  %8777 = vadd.xlane.f32.xlu0 %v8774
  %v8778 = vpop.xlane.xlu0 %8777
  %v8779 = vcvt.f32.s32 %v8776
  %v8780 = vcvt.f32.s32 %v8778
  %v8781 = vshll.u32 %v8780, 16
  %v8782 = vadd.s32 %v8781, %v8779
  %v8783 = vsel %vm1659, %v8451, 0
  %v8784 = vand.u32 %v8783, 65535
  %v8785 = vshrl.u32 %v8783, 16
  %v8786 = vcvt.s32.f32 %v8784
  %v8787 = vcvt.s32.f32 %v8785
  %8788 = vadd.xlane.f32.xlu0 %v8786
  %v8789 = vpop.xlane.xlu0 %8788
  %8790 = vadd.xlane.f32.xlu0 %v8787
  %v8791 = vpop.xlane.xlu0 %8790
  %v8792 = vcvt.f32.s32 %v8789
  %v8793 = vcvt.f32.s32 %v8791
  %v8794 = vshll.u32 %v8793, 16
  %v8795 = vadd.s32 %v8794, %v8792
  %v8796 = vsel %vm1659, %v8452, 0
  %v8797 = vand.u32 %v8796, 65535
  %v8798 = vshrl.u32 %v8796, 16
  %v8799 = vcvt.s32.f32 %v8797
  %v8800 = vcvt.s32.f32 %v8798
  %8801 = vadd.xlane.f32.xlu0 %v8799
  %v8802 = vpop.xlane.xlu0 %8801
  %8803 = vadd.xlane.f32.xlu0 %v8800
  %v8804 = vpop.xlane.xlu0 %8803
  %v8805 = vcvt.f32.s32 %v8802
  %v8806 = vcvt.f32.s32 %v8804
  %v8807 = vshll.u32 %v8806, 16
  %v8808 = vadd.s32 %v8807, %v8805
  %v8809 = vsel %vm1659, %v8453, 0
  %v8810 = vand.u32 %v8809, 65535
  %v8811 = vshrl.u32 %v8809, 16
  %v8812 = vcvt.s32.f32 %v8810
  %v8813 = vcvt.s32.f32 %v8811
  %8814 = vadd.xlane.f32.xlu0 %v8812
  %v8815 = vpop.xlane.xlu0 %8814
  %8816 = vadd.xlane.f32.xlu0 %v8813
  %v8817 = vpop.xlane.xlu0 %8816
  %v8818 = vcvt.f32.s32 %v8815
  %v8819 = vcvt.f32.s32 %v8817
  %v8820 = vshll.u32 %v8819, 16
  %v8821 = vadd.s32 %v8820, %v8818
  %v8822 = vsel %vm1659, %v8454, 0
  %v8823 = vand.u32 %v8822, 65535
  %v8824 = vshrl.u32 %v8822, 16
  %v8825 = vcvt.s32.f32 %v8823
  %v8826 = vcvt.s32.f32 %v8824
  %8827 = vadd.xlane.f32.xlu0 %v8825
  %v8828 = vpop.xlane.xlu0 %8827
  %8829 = vadd.xlane.f32.xlu0 %v8826
  %v8830 = vpop.xlane.xlu0 %8829
  %v8831 = vcvt.f32.s32 %v8828
  %v8832 = vcvt.f32.s32 %v8830
  %v8833 = vshll.u32 %v8832, 16
  %v8834 = vadd.s32 %v8833, %v8831
  %v8835 = vsel %vm1659, %v8455, 0
  %v8836 = vand.u32 %v8835, 65535
  %v8837 = vshrl.u32 %v8835, 16
  %v8838 = vcvt.s32.f32 %v8836
  %v8839 = vcvt.s32.f32 %v8837
  %8840 = vadd.xlane.f32.xlu0 %v8838
  %v8841 = vpop.xlane.xlu0 %8840
  %8842 = vadd.xlane.f32.xlu0 %v8839
  %v8843 = vpop.xlane.xlu0 %8842
  %v8844 = vcvt.f32.s32 %v8841
  %v8845 = vcvt.f32.s32 %v8843
  %v8846 = vshll.u32 %v8845, 16
  %v8847 = vadd.s32 %v8846, %v8844
  %v8848 = vsel %vm1659, %v8456, 0
  %v8849 = vand.u32 %v8848, 65535
  %v8850 = vshrl.u32 %v8848, 16
  %v8851 = vcvt.s32.f32 %v8849
  %v8852 = vcvt.s32.f32 %v8850
  %8853 = vadd.xlane.f32.xlu0 %v8851
  %v8854 = vpop.xlane.xlu0 %8853
  %8855 = vadd.xlane.f32.xlu0 %v8852
  %v8856 = vpop.xlane.xlu0 %8855
  %v8857 = vcvt.f32.s32 %v8854
  %v8858 = vcvt.f32.s32 %v8856
  %v8859 = vshll.u32 %v8858, 16
  %v8860 = vadd.s32 %v8859, %v8857
  %v8861 = vsel %vm1659, %v8457, 0
  %v8862 = vand.u32 %v8861, 65535
  %v8863 = vshrl.u32 %v8861, 16
  %v8864 = vcvt.s32.f32 %v8862
  %v8865 = vcvt.s32.f32 %v8863
  %8866 = vadd.xlane.f32.xlu0 %v8864
  %v8867 = vpop.xlane.xlu0 %8866
  %8868 = vadd.xlane.f32.xlu0 %v8865
  %v8869 = vpop.xlane.xlu0 %8868
  %v8870 = vcvt.f32.s32 %v8867
  %v8871 = vcvt.f32.s32 %v8869
  %v8872 = vshll.u32 %v8871, 16
  %v8873 = vadd.s32 %v8872, %v8870
  %vm8874 = vcmp.lt.s32.totalorder %v8470, 15
  %v8875 = vsel %vm8874, %v8470, 15
  %vm8876 = vcmp.lt.s32.totalorder %v8483, 15
  %v8877 = vsel %vm8876, %v8483, 15
  %vm8878 = vcmp.lt.s32.totalorder %v8496, 15
  %v8879 = vsel %vm8878, %v8496, 15
  %vm8880 = vcmp.lt.s32.totalorder %v8509, 15
  %v8881 = vsel %vm8880, %v8509, 15
  %vm8882 = vcmp.lt.s32.totalorder %v8522, 15
  %v8883 = vsel %vm8882, %v8522, 15
  %vm8884 = vcmp.lt.s32.totalorder %v8535, 15
  %v8885 = vsel %vm8884, %v8535, 15
  %vm8886 = vcmp.lt.s32.totalorder %v8548, 15
  %v8887 = vsel %vm8886, %v8548, 15
  %vm8888 = vcmp.lt.s32.totalorder %v8561, 15
  %v8889 = vsel %vm8888, %v8561, 15
  %vm8890 = vcmp.lt.s32.totalorder %v8574, 15
  %v8891 = vsel %vm8890, %v8574, 15
  %vm8892 = vcmp.lt.s32.totalorder %v8587, 15
  %v8893 = vsel %vm8892, %v8587, 15
  %vm8894 = vcmp.lt.s32.totalorder %v8600, 15
  %v8895 = vsel %vm8894, %v8600, 15
  %vm8896 = vcmp.lt.s32.totalorder %v8613, 15
  %v8897 = vsel %vm8896, %v8613, 15
  %vm8898 = vcmp.lt.s32.totalorder %v8626, 15
  %v8899 = vsel %vm8898, %v8626, 15
  %vm8900 = vcmp.lt.s32.totalorder %v8639, 15
  %v8901 = vsel %vm8900, %v8639, 15
  %vm8902 = vcmp.lt.s32.totalorder %v8652, 15
  %v8903 = vsel %vm8902, %v8652, 15
  %vm8904 = vcmp.lt.s32.totalorder %v8665, 15
  %v8905 = vsel %vm8904, %v8665, 15
  %vm8906 = vcmp.lt.s32.totalorder %v8678, 15
  %v8907 = vsel %vm8906, %v8678, 15
  %vm8908 = vcmp.lt.s32.totalorder %v8691, 15
  %v8909 = vsel %vm8908, %v8691, 15
  %vm8910 = vcmp.lt.s32.totalorder %v8704, 15
  %v8911 = vsel %vm8910, %v8704, 15
  %vm8912 = vcmp.lt.s32.totalorder %v8717, 15
  %v8913 = vsel %vm8912, %v8717, 15
  %vm8914 = vcmp.lt.s32.totalorder %v8730, 15
  %v8915 = vsel %vm8914, %v8730, 15
  %vm8916 = vcmp.lt.s32.totalorder %v8743, 15
  %v8917 = vsel %vm8916, %v8743, 15
  %vm8918 = vcmp.lt.s32.totalorder %v8756, 15
  %v8919 = vsel %vm8918, %v8756, 15
  %vm8920 = vcmp.lt.s32.totalorder %v8769, 15
  %v8921 = vsel %vm8920, %v8769, 15
  %vm8922 = vcmp.lt.s32.totalorder %v8782, 15
  %v8923 = vsel %vm8922, %v8782, 15
  %vm8924 = vcmp.lt.s32.totalorder %v8795, 15
  %v8925 = vsel %vm8924, %v8795, 15
  %vm8926 = vcmp.lt.s32.totalorder %v8808, 15
  %v8927 = vsel %vm8926, %v8808, 15
  %vm8928 = vcmp.lt.s32.totalorder %v8821, 15
  %v8929 = vsel %vm8928, %v8821, 15
  %vm8930 = vcmp.lt.s32.totalorder %v8834, 15
  %v8931 = vsel %vm8930, %v8834, 15
  %vm8932 = vcmp.lt.s32.totalorder %v8847, 15
  %v8933 = vsel %vm8932, %v8847, 15
  %vm8934 = vcmp.lt.s32.totalorder %v8860, 15
  %v8935 = vsel %vm8934, %v8860, 15
  %vm8936 = vcmp.lt.s32.totalorder %v8873, 15
  %v8937 = vsel %vm8936, %v8873, 15
  %vm8938 = vcmask 7168
  %8939 = vst.msk [vmem:[%s13] sm:$0xff] %vm8938, %v8875
  %8940 = vst.msk [vmem:[%s13 + $0x8] sm:$0xff] %vm8938, %v8877
  %8941 = vst.msk [vmem:[%s13 + $0x10] sm:$0xff] %vm8938, %v8879
  %8942 = vst.msk [vmem:[%s13 + $0x18] sm:$0xff] %vm8938, %v8881
  %8943 = vst.msk [vmem:[%s13 + $0x20] sm:$0xff] %vm8938, %v8883
  %8944 = vst.msk [vmem:[%s13 + $0x28] sm:$0xff] %vm8938, %v8885
  %8945 = vst.msk [vmem:[%s13 + $0x30] sm:$0xff] %vm8938, %v8887
  %8946 = vst.msk [vmem:[%s13 + $0x38] sm:$0xff] %vm8938, %v8889
  %8947 = vst.msk [vmem:[%s13 + $0x40] sm:$0xff] %vm8938, %v8891
  %8948 = vst.msk [vmem:[%s13 + $0x48] sm:$0xff] %vm8938, %v8893
  %8949 = vst.msk [vmem:[%s13 + $0x50] sm:$0xff] %vm8938, %v8895
  %8950 = vst.msk [vmem:[%s13 + $0x58] sm:$0xff] %vm8938, %v8897
  %8951 = vst.msk [vmem:[%s13 + $0x60] sm:$0xff] %vm8938, %v8899
  %8952 = vst.msk [vmem:[%s13 + $0x68] sm:$0xff] %vm8938, %v8901
  %8953 = vst.msk [vmem:[%s13 + $0x70] sm:$0xff] %vm8938, %v8903
  %8954 = vst.msk [vmem:[%s13 + $0x78] sm:$0xff] %vm8938, %v8905
  %8955 = vst.msk [vmem:[%s13 + $0x80] sm:$0xff] %vm8938, %v8907
  %8956 = vst.msk [vmem:[%s13 + $0x88] sm:$0xff] %vm8938, %v8909
  %8957 = vst.msk [vmem:[%s13 + $0x90] sm:$0xff] %vm8938, %v8911
  %8958 = vst.msk [vmem:[%s13 + $0x98] sm:$0xff] %vm8938, %v8913
  %8959 = vst.msk [vmem:[%s13 + $0xa0] sm:$0xff] %vm8938, %v8915
  %8960 = vst.msk [vmem:[%s13 + $0xa8] sm:$0xff] %vm8938, %v8917
  %8961 = vst.msk [vmem:[%s13 + $0xb0] sm:$0xff] %vm8938, %v8919
  %8962 = vst.msk [vmem:[%s13 + $0xb8] sm:$0xff] %vm8938, %v8921
  %8963 = vst.msk [vmem:[%s13 + $0xc0] sm:$0xff] %vm8938, %v8923
  %8964 = vst.msk [vmem:[%s13 + $0xc8] sm:$0xff] %vm8938, %v8925
  %8965 = vst.msk [vmem:[%s13 + $0xd0] sm:$0xff] %vm8938, %v8927
  %8966 = vst.msk [vmem:[%s13 + $0xd8] sm:$0xff] %vm8938, %v8929
  %8967 = vst.msk [vmem:[%s13 + $0xe0] sm:$0xff] %vm8938, %v8931
  %8968 = vst.msk [vmem:[%s13 + $0xe8] sm:$0xff] %vm8938, %v8933
  %8969 = vst.msk [vmem:[%s13 + $0xf0] sm:$0xff] %vm8938, %v8935
  %8970 = vst.msk [vmem:[%s13 + $0xf8] sm:$0xff] %vm8938, %v8937
  %v8971 = vrcp.pop %v7867
  %v8972 = vmul.f32 %v7867, %v8971
  %v8973 = vsub.f32 1.0, %v8972
  %v8974 = vmul.f32 %v8971, %v8973
  %v8975 = vadd.f32 %v8971, %v8974
  %vm8976 = vweird.f32 %v7867
  %vm8977 = vweird.f32 %v8971
  %vm8978 = vmor %vm8976, %vm8977
  %v8979 = vsel %vm8978, %v8971, %v8975
  %v8980 = vand.u32 2147483647, %v7867
  %vm8981 = vcmp.eq.f32.partialorder %v8980, 8.507059e+37
  %v8982 = vand.u32 %v7867, 2147483648
  %v8983 = vor.u32 1.1754944e-38, %v8982
  %v8984 = vsel %vm8981, %v8983, %v8979
  %v8985 = vmul.f32 %v7802, %v8984
  %v8986 = vrcp.pop %v7870
  %v8987 = vmul.f32 %v7870, %v8986
  %v8988 = vsub.f32 1.0, %v8987
  %v8989 = vmul.f32 %v8986, %v8988
  %v8990 = vadd.f32 %v8986, %v8989
  %vm8991 = vweird.f32 %v7870
  %vm8992 = vweird.f32 %v8986
  %vm8993 = vmor %vm8991, %vm8992
  %v8994 = vsel %vm8993, %v8986, %v8990
  %v8995 = vand.u32 2147483647, %v7870
  %vm8996 = vcmp.eq.f32.partialorder %v8995, 8.507059e+37
  %v8997 = vand.u32 %v7870, 2147483648
  %v8998 = vor.u32 1.1754944e-38, %v8997
  %v8999 = vsel %vm8996, %v8998, %v8994
  %v9000 = vmul.f32 %v7804, %v8999
  %v9001 = vrcp.pop %v7873
  %v9002 = vmul.f32 %v7873, %v9001
  %v9003 = vsub.f32 1.0, %v9002
  %v9004 = vmul.f32 %v9001, %v9003
  %v9005 = vadd.f32 %v9001, %v9004
  %vm9006 = vweird.f32 %v7873
  %vm9007 = vweird.f32 %v9001
  %vm9008 = vmor %vm9006, %vm9007
  %v9009 = vsel %vm9008, %v9001, %v9005
  %v9010 = vand.u32 2147483647, %v7873
  %vm9011 = vcmp.eq.f32.partialorder %v9010, 8.507059e+37
  %v9012 = vand.u32 %v7873, 2147483648
  %v9013 = vor.u32 1.1754944e-38, %v9012
  %v9014 = vsel %vm9011, %v9013, %v9009
  %v9015 = vmul.f32 %v7806, %v9014
  %v9016 = vrcp.pop %v7876
  %v9017 = vmul.f32 %v7876, %v9016
  %v9018 = vsub.f32 1.0, %v9017
  %v9019 = vmul.f32 %v9016, %v9018
  %v9020 = vadd.f32 %v9016, %v9019
  %vm9021 = vweird.f32 %v7876
  %vm9022 = vweird.f32 %v9016
  %vm9023 = vmor %vm9021, %vm9022
  %v9024 = vsel %vm9023, %v9016, %v9020
  %v9025 = vand.u32 2147483647, %v7876
  %vm9026 = vcmp.eq.f32.partialorder %v9025, 8.507059e+37
  %v9027 = vand.u32 %v7876, 2147483648
  %v9028 = vor.u32 1.1754944e-38, %v9027
  %v9029 = vsel %vm9026, %v9028, %v9024
  %v9030 = vmul.f32 %v7808, %v9029
  %v9031 = vrcp.pop %v7879
  %v9032 = vmul.f32 %v7879, %v9031
  %v9033 = vsub.f32 1.0, %v9032
  %v9034 = vmul.f32 %v9031, %v9033
  %v9035 = vadd.f32 %v9031, %v9034
  %vm9036 = vweird.f32 %v7879
  %vm9037 = vweird.f32 %v9031
  %vm9038 = vmor %vm9036, %vm9037
  %v9039 = vsel %vm9038, %v9031, %v9035
  %v9040 = vand.u32 2147483647, %v7879
  %vm9041 = vcmp.eq.f32.partialorder %v9040, 8.507059e+37
  %v9042 = vand.u32 %v7879, 2147483648
  %v9043 = vor.u32 1.1754944e-38, %v9042
  %v9044 = vsel %vm9041, %v9043, %v9039
  %v9045 = vmul.f32 %v7810, %v9044
  %v9046 = vrcp.pop %v7882
  %v9047 = vmul.f32 %v7882, %v9046
  %v9048 = vsub.f32 1.0, %v9047
  %v9049 = vmul.f32 %v9046, %v9048
  %v9050 = vadd.f32 %v9046, %v9049
  %vm9051 = vweird.f32 %v7882
  %vm9052 = vweird.f32 %v9046
  %vm9053 = vmor %vm9051, %vm9052
  %v9054 = vsel %vm9053, %v9046, %v9050
  %v9055 = vand.u32 2147483647, %v7882
  %vm9056 = vcmp.eq.f32.partialorder %v9055, 8.507059e+37
  %v9057 = vand.u32 %v7882, 2147483648
  %v9058 = vor.u32 1.1754944e-38, %v9057
  %v9059 = vsel %vm9056, %v9058, %v9054
  %v9060 = vmul.f32 %v7812, %v9059
  %v9061 = vrcp.pop %v7885
  %v9062 = vmul.f32 %v7885, %v9061
  %v9063 = vsub.f32 1.0, %v9062
  %v9064 = vmul.f32 %v9061, %v9063
  %v9065 = vadd.f32 %v9061, %v9064
  %vm9066 = vweird.f32 %v7885
  %vm9067 = vweird.f32 %v9061
  %vm9068 = vmor %vm9066, %vm9067
  %v9069 = vsel %vm9068, %v9061, %v9065
  %v9070 = vand.u32 2147483647, %v7885
  %vm9071 = vcmp.eq.f32.partialorder %v9070, 8.507059e+37
  %v9072 = vand.u32 %v7885, 2147483648
  %v9073 = vor.u32 1.1754944e-38, %v9072
  %v9074 = vsel %vm9071, %v9073, %v9069
  %v9075 = vmul.f32 %v7814, %v9074
  %v9076 = vrcp.pop %v7888
  %v9077 = vmul.f32 %v7888, %v9076
  %v9078 = vsub.f32 1.0, %v9077
  %v9079 = vmul.f32 %v9076, %v9078
  %v9080 = vadd.f32 %v9076, %v9079
  %vm9081 = vweird.f32 %v7888
  %vm9082 = vweird.f32 %v9076
  %vm9083 = vmor %vm9081, %vm9082
  %v9084 = vsel %vm9083, %v9076, %v9080
  %v9085 = vand.u32 2147483647, %v7888
  %vm9086 = vcmp.eq.f32.partialorder %v9085, 8.507059e+37
  %v9087 = vand.u32 %v7888, 2147483648
  %v9088 = vor.u32 1.1754944e-38, %v9087
  %v9089 = vsel %vm9086, %v9088, %v9084
  %v9090 = vmul.f32 %v7816, %v9089
  %v9091 = vrcp.pop %v7891
  %v9092 = vmul.f32 %v7891, %v9091
  %v9093 = vsub.f32 1.0, %v9092
  %v9094 = vmul.f32 %v9091, %v9093
  %v9095 = vadd.f32 %v9091, %v9094
  %vm9096 = vweird.f32 %v7891
  %vm9097 = vweird.f32 %v9091
  %vm9098 = vmor %vm9096, %vm9097
  %v9099 = vsel %vm9098, %v9091, %v9095
  %v9100 = vand.u32 2147483647, %v7891
  %vm9101 = vcmp.eq.f32.partialorder %v9100, 8.507059e+37
  %v9102 = vand.u32 %v7891, 2147483648
  %v9103 = vor.u32 1.1754944e-38, %v9102
  %v9104 = vsel %vm9101, %v9103, %v9099
  %v9105 = vmul.f32 %v7818, %v9104
  %v9106 = vrcp.pop %v7894
  %v9107 = vmul.f32 %v7894, %v9106
  %v9108 = vsub.f32 1.0, %v9107
  %v9109 = vmul.f32 %v9106, %v9108
  %v9110 = vadd.f32 %v9106, %v9109
  %vm9111 = vweird.f32 %v7894
  %vm9112 = vweird.f32 %v9106
  %vm9113 = vmor %vm9111, %vm9112
  %v9114 = vsel %vm9113, %v9106, %v9110
  %v9115 = vand.u32 2147483647, %v7894
  %vm9116 = vcmp.eq.f32.partialorder %v9115, 8.507059e+37
  %v9117 = vand.u32 %v7894, 2147483648
  %v9118 = vor.u32 1.1754944e-38, %v9117
  %v9119 = vsel %vm9116, %v9118, %v9114
  %v9120 = vmul.f32 %v7820, %v9119
  %v9121 = vrcp.pop %v7897
  %v9122 = vmul.f32 %v7897, %v9121
  %v9123 = vsub.f32 1.0, %v9122
  %v9124 = vmul.f32 %v9121, %v9123
  %v9125 = vadd.f32 %v9121, %v9124
  %vm9126 = vweird.f32 %v7897
  %vm9127 = vweird.f32 %v9121
  %vm9128 = vmor %vm9126, %vm9127
  %v9129 = vsel %vm9128, %v9121, %v9125
  %v9130 = vand.u32 2147483647, %v7897
  %vm9131 = vcmp.eq.f32.partialorder %v9130, 8.507059e+37
  %v9132 = vand.u32 %v7897, 2147483648
  %v9133 = vor.u32 1.1754944e-38, %v9132
  %v9134 = vsel %vm9131, %v9133, %v9129
  %v9135 = vmul.f32 %v7822, %v9134
  %v9136 = vrcp.pop %v7900
  %v9137 = vmul.f32 %v7900, %v9136
  %v9138 = vsub.f32 1.0, %v9137
  %v9139 = vmul.f32 %v9136, %v9138
  %v9140 = vadd.f32 %v9136, %v9139
  %vm9141 = vweird.f32 %v7900
  %vm9142 = vweird.f32 %v9136
  %vm9143 = vmor %vm9141, %vm9142
  %v9144 = vsel %vm9143, %v9136, %v9140
  %v9145 = vand.u32 2147483647, %v7900
  %vm9146 = vcmp.eq.f32.partialorder %v9145, 8.507059e+37
  %v9147 = vand.u32 %v7900, 2147483648
  %v9148 = vor.u32 1.1754944e-38, %v9147
  %v9149 = vsel %vm9146, %v9148, %v9144
  %v9150 = vmul.f32 %v7824, %v9149
  %v9151 = vrcp.pop %v7903
  %v9152 = vmul.f32 %v7903, %v9151
  %v9153 = vsub.f32 1.0, %v9152
  %v9154 = vmul.f32 %v9151, %v9153
  %v9155 = vadd.f32 %v9151, %v9154
  %vm9156 = vweird.f32 %v7903
  %vm9157 = vweird.f32 %v9151
  %vm9158 = vmor %vm9156, %vm9157
  %v9159 = vsel %vm9158, %v9151, %v9155
  %v9160 = vand.u32 2147483647, %v7903
  %vm9161 = vcmp.eq.f32.partialorder %v9160, 8.507059e+37
  %v9162 = vand.u32 %v7903, 2147483648
  %v9163 = vor.u32 1.1754944e-38, %v9162
  %v9164 = vsel %vm9161, %v9163, %v9159
  %v9165 = vmul.f32 %v7826, %v9164
  %v9166 = vrcp.pop %v7906
  %v9167 = vmul.f32 %v7906, %v9166
  %v9168 = vsub.f32 1.0, %v9167
  %v9169 = vmul.f32 %v9166, %v9168
  %v9170 = vadd.f32 %v9166, %v9169
  %vm9171 = vweird.f32 %v7906
  %vm9172 = vweird.f32 %v9166
  %vm9173 = vmor %vm9171, %vm9172
  %v9174 = vsel %vm9173, %v9166, %v9170
  %v9175 = vand.u32 2147483647, %v7906
  %vm9176 = vcmp.eq.f32.partialorder %v9175, 8.507059e+37
  %v9177 = vand.u32 %v7906, 2147483648
  %v9178 = vor.u32 1.1754944e-38, %v9177
  %v9179 = vsel %vm9176, %v9178, %v9174
  %v9180 = vmul.f32 %v7828, %v9179
  %v9181 = vrcp.pop %v7909
  %v9182 = vmul.f32 %v7909, %v9181
  %v9183 = vsub.f32 1.0, %v9182
  %v9184 = vmul.f32 %v9181, %v9183
  %v9185 = vadd.f32 %v9181, %v9184
  %vm9186 = vweird.f32 %v7909
  %vm9187 = vweird.f32 %v9181
  %vm9188 = vmor %vm9186, %vm9187
  %v9189 = vsel %vm9188, %v9181, %v9185
  %v9190 = vand.u32 2147483647, %v7909
  %vm9191 = vcmp.eq.f32.partialorder %v9190, 8.507059e+37
  %v9192 = vand.u32 %v7909, 2147483648
  %v9193 = vor.u32 1.1754944e-38, %v9192
  %v9194 = vsel %vm9191, %v9193, %v9189
  %v9195 = vmul.f32 %v7830, %v9194
  %v9196 = vrcp.pop %v7912
  %v9197 = vmul.f32 %v7912, %v9196
  %v9198 = vsub.f32 1.0, %v9197
  %v9199 = vmul.f32 %v9196, %v9198
  %v9200 = vadd.f32 %v9196, %v9199
  %vm9201 = vweird.f32 %v7912
  %vm9202 = vweird.f32 %v9196
  %vm9203 = vmor %vm9201, %vm9202
  %v9204 = vsel %vm9203, %v9196, %v9200
  %v9205 = vand.u32 2147483647, %v7912
  %vm9206 = vcmp.eq.f32.partialorder %v9205, 8.507059e+37
  %v9207 = vand.u32 %v7912, 2147483648
  %v9208 = vor.u32 1.1754944e-38, %v9207
  %v9209 = vsel %vm9206, %v9208, %v9204
  %v9210 = vmul.f32 %v7832, %v9209
  %v9211 = vrcp.pop %v7915
  %v9212 = vmul.f32 %v7915, %v9211
  %v9213 = vsub.f32 1.0, %v9212
  %v9214 = vmul.f32 %v9211, %v9213
  %v9215 = vadd.f32 %v9211, %v9214
  %vm9216 = vweird.f32 %v7915
  %vm9217 = vweird.f32 %v9211
  %vm9218 = vmor %vm9216, %vm9217
  %v9219 = vsel %vm9218, %v9211, %v9215
  %v9220 = vand.u32 2147483647, %v7915
  %vm9221 = vcmp.eq.f32.partialorder %v9220, 8.507059e+37
  %v9222 = vand.u32 %v7915, 2147483648
  %v9223 = vor.u32 1.1754944e-38, %v9222
  %v9224 = vsel %vm9221, %v9223, %v9219
  %v9225 = vmul.f32 %v7834, %v9224
  %v9226 = vrcp.pop %v7918
  %v9227 = vmul.f32 %v7918, %v9226
  %v9228 = vsub.f32 1.0, %v9227
  %v9229 = vmul.f32 %v9226, %v9228
  %v9230 = vadd.f32 %v9226, %v9229
  %vm9231 = vweird.f32 %v7918
  %vm9232 = vweird.f32 %v9226
  %vm9233 = vmor %vm9231, %vm9232
  %v9234 = vsel %vm9233, %v9226, %v9230
  %v9235 = vand.u32 2147483647, %v7918
  %vm9236 = vcmp.eq.f32.partialorder %v9235, 8.507059e+37
  %v9237 = vand.u32 %v7918, 2147483648
  %v9238 = vor.u32 1.1754944e-38, %v9237
  %v9239 = vsel %vm9236, %v9238, %v9234
  %v9240 = vmul.f32 %v7836, %v9239
  %v9241 = vrcp.pop %v7921
  %v9242 = vmul.f32 %v7921, %v9241
  %v9243 = vsub.f32 1.0, %v9242
  %v9244 = vmul.f32 %v9241, %v9243
  %v9245 = vadd.f32 %v9241, %v9244
  %vm9246 = vweird.f32 %v7921
  %vm9247 = vweird.f32 %v9241
  %vm9248 = vmor %vm9246, %vm9247
  %v9249 = vsel %vm9248, %v9241, %v9245
  %v9250 = vand.u32 2147483647, %v7921
  %vm9251 = vcmp.eq.f32.partialorder %v9250, 8.507059e+37
  %v9252 = vand.u32 %v7921, 2147483648
  %v9253 = vor.u32 1.1754944e-38, %v9252
  %v9254 = vsel %vm9251, %v9253, %v9249
  %v9255 = vmul.f32 %v7838, %v9254
  %v9256 = vrcp.pop %v7924
  %v9257 = vmul.f32 %v7924, %v9256
  %v9258 = vsub.f32 1.0, %v9257
  %v9259 = vmul.f32 %v9256, %v9258
  %v9260 = vadd.f32 %v9256, %v9259
  %vm9261 = vweird.f32 %v7924
  %vm9262 = vweird.f32 %v9256
  %vm9263 = vmor %vm9261, %vm9262
  %v9264 = vsel %vm9263, %v9256, %v9260
  %v9265 = vand.u32 2147483647, %v7924
  %vm9266 = vcmp.eq.f32.partialorder %v9265, 8.507059e+37
  %v9267 = vand.u32 %v7924, 2147483648
  %v9268 = vor.u32 1.1754944e-38, %v9267
  %v9269 = vsel %vm9266, %v9268, %v9264
  %v9270 = vmul.f32 %v7840, %v9269
  %v9271 = vrcp.pop %v7927
  %v9272 = vmul.f32 %v7927, %v9271
  %v9273 = vsub.f32 1.0, %v9272
  %v9274 = vmul.f32 %v9271, %v9273
  %v9275 = vadd.f32 %v9271, %v9274
  %vm9276 = vweird.f32 %v7927
  %vm9277 = vweird.f32 %v9271
  %vm9278 = vmor %vm9276, %vm9277
  %v9279 = vsel %vm9278, %v9271, %v9275
  %v9280 = vand.u32 2147483647, %v7927
  %vm9281 = vcmp.eq.f32.partialorder %v9280, 8.507059e+37
  %v9282 = vand.u32 %v7927, 2147483648
  %v9283 = vor.u32 1.1754944e-38, %v9282
  %v9284 = vsel %vm9281, %v9283, %v9279
  %v9285 = vmul.f32 %v7842, %v9284
  %v9286 = vrcp.pop %v7930
  %v9287 = vmul.f32 %v7930, %v9286
  %v9288 = vsub.f32 1.0, %v9287
  %v9289 = vmul.f32 %v9286, %v9288
  %v9290 = vadd.f32 %v9286, %v9289
  %vm9291 = vweird.f32 %v7930
  %vm9292 = vweird.f32 %v9286
  %vm9293 = vmor %vm9291, %vm9292
  %v9294 = vsel %vm9293, %v9286, %v9290
  %v9295 = vand.u32 2147483647, %v7930
  %vm9296 = vcmp.eq.f32.partialorder %v9295, 8.507059e+37
  %v9297 = vand.u32 %v7930, 2147483648
  %v9298 = vor.u32 1.1754944e-38, %v9297
  %v9299 = vsel %vm9296, %v9298, %v9294
  %v9300 = vmul.f32 %v7844, %v9299
  %v9301 = vrcp.pop %v7933
  %v9302 = vmul.f32 %v7933, %v9301
  %v9303 = vsub.f32 1.0, %v9302
  %v9304 = vmul.f32 %v9301, %v9303
  %v9305 = vadd.f32 %v9301, %v9304
  %vm9306 = vweird.f32 %v7933
  %vm9307 = vweird.f32 %v9301
  %vm9308 = vmor %vm9306, %vm9307
  %v9309 = vsel %vm9308, %v9301, %v9305
  %v9310 = vand.u32 2147483647, %v7933
  %vm9311 = vcmp.eq.f32.partialorder %v9310, 8.507059e+37
  %v9312 = vand.u32 %v7933, 2147483648
  %v9313 = vor.u32 1.1754944e-38, %v9312
  %v9314 = vsel %vm9311, %v9313, %v9309
  %v9315 = vmul.f32 %v7846, %v9314
  %v9316 = vrcp.pop %v7936
  %v9317 = vmul.f32 %v7936, %v9316
  %v9318 = vsub.f32 1.0, %v9317
  %v9319 = vmul.f32 %v9316, %v9318
  %v9320 = vadd.f32 %v9316, %v9319
  %vm9321 = vweird.f32 %v7936
  %vm9322 = vweird.f32 %v9316
  %vm9323 = vmor %vm9321, %vm9322
  %v9324 = vsel %vm9323, %v9316, %v9320
  %v9325 = vand.u32 2147483647, %v7936
  %vm9326 = vcmp.eq.f32.partialorder %v9325, 8.507059e+37
  %v9327 = vand.u32 %v7936, 2147483648
  %v9328 = vor.u32 1.1754944e-38, %v9327
  %v9329 = vsel %vm9326, %v9328, %v9324
  %v9330 = vmul.f32 %v7848, %v9329
  %v9331 = vrcp.pop %v7939
  %v9332 = vmul.f32 %v7939, %v9331
  %v9333 = vsub.f32 1.0, %v9332
  %v9334 = vmul.f32 %v9331, %v9333
  %v9335 = vadd.f32 %v9331, %v9334
  %vm9336 = vweird.f32 %v7939
  %vm9337 = vweird.f32 %v9331
  %vm9338 = vmor %vm9336, %vm9337
  %v9339 = vsel %vm9338, %v9331, %v9335
  %v9340 = vand.u32 2147483647, %v7939
  %vm9341 = vcmp.eq.f32.partialorder %v9340, 8.507059e+37
  %v9342 = vand.u32 %v7939, 2147483648
  %v9343 = vor.u32 1.1754944e-38, %v9342
  %v9344 = vsel %vm9341, %v9343, %v9339
  %v9345 = vmul.f32 %v7850, %v9344
  %v9346 = vrcp.pop %v7942
  %v9347 = vmul.f32 %v7942, %v9346
  %v9348 = vsub.f32 1.0, %v9347
  %v9349 = vmul.f32 %v9346, %v9348
  %v9350 = vadd.f32 %v9346, %v9349
  %vm9351 = vweird.f32 %v7942
  %vm9352 = vweird.f32 %v9346
  %vm9353 = vmor %vm9351, %vm9352
  %v9354 = vsel %vm9353, %v9346, %v9350
  %v9355 = vand.u32 2147483647, %v7942
  %vm9356 = vcmp.eq.f32.partialorder %v9355, 8.507059e+37
  %v9357 = vand.u32 %v7942, 2147483648
  %v9358 = vor.u32 1.1754944e-38, %v9357
  %v9359 = vsel %vm9356, %v9358, %v9354
  %v9360 = vmul.f32 %v7852, %v9359
  %v9361 = vrcp.pop %v7945
  %v9362 = vmul.f32 %v7945, %v9361
  %v9363 = vsub.f32 1.0, %v9362
  %v9364 = vmul.f32 %v9361, %v9363
  %v9365 = vadd.f32 %v9361, %v9364
  %vm9366 = vweird.f32 %v7945
  %vm9367 = vweird.f32 %v9361
  %vm9368 = vmor %vm9366, %vm9367
  %v9369 = vsel %vm9368, %v9361, %v9365
  %v9370 = vand.u32 2147483647, %v7945
  %vm9371 = vcmp.eq.f32.partialorder %v9370, 8.507059e+37
  %v9372 = vand.u32 %v7945, 2147483648
  %v9373 = vor.u32 1.1754944e-38, %v9372
  %v9374 = vsel %vm9371, %v9373, %v9369
  %v9375 = vmul.f32 %v7854, %v9374
  %v9376 = vrcp.pop %v7948
  %v9377 = vmul.f32 %v7948, %v9376
  %v9378 = vsub.f32 1.0, %v9377
  %v9379 = vmul.f32 %v9376, %v9378
  %v9380 = vadd.f32 %v9376, %v9379
  %vm9381 = vweird.f32 %v7948
  %vm9382 = vweird.f32 %v9376
  %vm9383 = vmor %vm9381, %vm9382
  %v9384 = vsel %vm9383, %v9376, %v9380
  %v9385 = vand.u32 2147483647, %v7948
  %vm9386 = vcmp.eq.f32.partialorder %v9385, 8.507059e+37
  %v9387 = vand.u32 %v7948, 2147483648
  %v9388 = vor.u32 1.1754944e-38, %v9387
  %v9389 = vsel %vm9386, %v9388, %v9384
  %v9390 = vmul.f32 %v7856, %v9389
  %v9391 = vrcp.pop %v7951
  %v9392 = vmul.f32 %v7951, %v9391
  %v9393 = vsub.f32 1.0, %v9392
  %v9394 = vmul.f32 %v9391, %v9393
  %v9395 = vadd.f32 %v9391, %v9394
  %vm9396 = vweird.f32 %v7951
  %vm9397 = vweird.f32 %v9391
  %vm9398 = vmor %vm9396, %vm9397
  %v9399 = vsel %vm9398, %v9391, %v9395
  %v9400 = vand.u32 2147483647, %v7951
  %vm9401 = vcmp.eq.f32.partialorder %v9400, 8.507059e+37
  %v9402 = vand.u32 %v7951, 2147483648
  %v9403 = vor.u32 1.1754944e-38, %v9402
  %v9404 = vsel %vm9401, %v9403, %v9399
  %v9405 = vmul.f32 %v7858, %v9404
  %v9406 = vrcp.pop %v7954
  %v9407 = vmul.f32 %v7954, %v9406
  %v9408 = vsub.f32 1.0, %v9407
  %v9409 = vmul.f32 %v9406, %v9408
  %v9410 = vadd.f32 %v9406, %v9409
  %vm9411 = vweird.f32 %v7954
  %vm9412 = vweird.f32 %v9406
  %vm9413 = vmor %vm9411, %vm9412
  %v9414 = vsel %vm9413, %v9406, %v9410
  %v9415 = vand.u32 2147483647, %v7954
  %vm9416 = vcmp.eq.f32.partialorder %v9415, 8.507059e+37
  %v9417 = vand.u32 %v7954, 2147483648
  %v9418 = vor.u32 1.1754944e-38, %v9417
  %v9419 = vsel %vm9416, %v9418, %v9414
  %v9420 = vmul.f32 %v7860, %v9419
  %v9421 = vrcp.pop %v7957
  %v9422 = vmul.f32 %v7957, %v9421
  %v9423 = vsub.f32 1.0, %v9422
  %v9424 = vmul.f32 %v9421, %v9423
  %v9425 = vadd.f32 %v9421, %v9424
  %vm9426 = vweird.f32 %v7957
  %vm9427 = vweird.f32 %v9421
  %vm9428 = vmor %vm9426, %vm9427
  %v9429 = vsel %vm9428, %v9421, %v9425
  %v9430 = vand.u32 2147483647, %v7957
  %vm9431 = vcmp.eq.f32.partialorder %v9430, 8.507059e+37
  %v9432 = vand.u32 %v7957, 2147483648
  %v9433 = vor.u32 1.1754944e-38, %v9432
  %v9434 = vsel %vm9431, %v9433, %v9429
  %v9435 = vmul.f32 %v7862, %v9434
  %v9436 = vrcp.pop %v7960
  %v9437 = vmul.f32 %v7960, %v9436
  %v9438 = vsub.f32 1.0, %v9437
  %v9439 = vmul.f32 %v9436, %v9438
  %v9440 = vadd.f32 %v9436, %v9439
  %vm9441 = vweird.f32 %v7960
  %vm9442 = vweird.f32 %v9436
  %vm9443 = vmor %vm9441, %vm9442
  %v9444 = vsel %vm9443, %v9436, %v9440
  %v9445 = vand.u32 2147483647, %v7960
  %vm9446 = vcmp.eq.f32.partialorder %v9445, 8.507059e+37
  %v9447 = vand.u32 %v7960, 2147483648
  %v9448 = vor.u32 1.1754944e-38, %v9447
  %v9449 = vsel %vm9446, %v9448, %v9444
  %v9450 = vmul.f32 %v7864, %v9449
  %9451 = vst.msk [vmem:[%s14] sm:$0xff] %vm1659, %v8985
  %9452 = vst.msk [vmem:[%s14 + $0x8] sm:$0xff] %vm1659, %v9000
  %9453 = vst.msk [vmem:[%s14 + $0x10] sm:$0xff] %vm1659, %v9015
  %9454 = vst.msk [vmem:[%s14 + $0x18] sm:$0xff] %vm1659, %v9030
  %9455 = vst.msk [vmem:[%s14 + $0x20] sm:$0xff] %vm1659, %v9045
  %9456 = vst.msk [vmem:[%s14 + $0x28] sm:$0xff] %vm1659, %v9060
  %9457 = vst.msk [vmem:[%s14 + $0x30] sm:$0xff] %vm1659, %v9075
  %9458 = vst.msk [vmem:[%s14 + $0x38] sm:$0xff] %vm1659, %v9090
  %9459 = vst.msk [vmem:[%s14 + $0x40] sm:$0xff] %vm1659, %v9105
  %9460 = vst.msk [vmem:[%s14 + $0x48] sm:$0xff] %vm1659, %v9120
  %9461 = vst.msk [vmem:[%s14 + $0x50] sm:$0xff] %vm1659, %v9135
  %9462 = vst.msk [vmem:[%s14 + $0x58] sm:$0xff] %vm1659, %v9150
  %9463 = vst.msk [vmem:[%s14 + $0x60] sm:$0xff] %vm1659, %v9165
  %9464 = vst.msk [vmem:[%s14 + $0x68] sm:$0xff] %vm1659, %v9180
  %9465 = vst.msk [vmem:[%s14 + $0x70] sm:$0xff] %vm1659, %v9195
  %9466 = vst.msk [vmem:[%s14 + $0x78] sm:$0xff] %vm1659, %v9210
  %9467 = vst.msk [vmem:[%s14 + $0x80] sm:$0xff] %vm1659, %v9225
  %9468 = vst.msk [vmem:[%s14 + $0x88] sm:$0xff] %vm1659, %v9240
  %9469 = vst.msk [vmem:[%s14 + $0x90] sm:$0xff] %vm1659, %v9255
  %9470 = vst.msk [vmem:[%s14 + $0x98] sm:$0xff] %vm1659, %v9270
  %9471 = vst.msk [vmem:[%s14 + $0xa0] sm:$0xff] %vm1659, %v9285
  %9472 = vst.msk [vmem:[%s14 + $0xa8] sm:$0xff] %vm1659, %v9300
  %9473 = vst.msk [vmem:[%s14 + $0xb0] sm:$0xff] %vm1659, %v9315
  %9474 = vst.msk [vmem:[%s14 + $0xb8] sm:$0xff] %vm1659, %v9330
  %9475 = vst.msk [vmem:[%s14 + $0xc0] sm:$0xff] %vm1659, %v9345
  %9476 = vst.msk [vmem:[%s14 + $0xc8] sm:$0xff] %vm1659, %v9360
  %9477 = vst.msk [vmem:[%s14 + $0xd0] sm:$0xff] %vm1659, %v9375
  %9478 = vst.msk [vmem:[%s14 + $0xd8] sm:$0xff] %vm1659, %v9390
  %9479 = vst.msk [vmem:[%s14 + $0xe0] sm:$0xff] %vm1659, %v9405
  %9480 = vst.msk [vmem:[%s14 + $0xe8] sm:$0xff] %vm1659, %v9420
  %9481 = vst.msk [vmem:[%s14 + $0xf0] sm:$0xff] %vm1659, %v9435
  %9482 = vst.msk [vmem:[%s14 + $0xf8] sm:$0xff] %vm1659, %v9450
  // Predicated region
  $region54: #{tpu_custom_call.1} parent=0 // pred_check
    _
  $region55: #{tpu_custom_call.1} parent=0 // pred_check_branch
    %9484 = sbr.rel (0) target = $region57
  $region56: #{tpu_custom_call.1} parent=0 // pred_region
    _
  $region57: #{tpu_custom_call.1} parent=0 // pred_fallthru
    _
  // Predicated region
  $region58: #{tpu_custom_call.1} parent=0 // pred_check
    _
  $region59: #{tpu_custom_call.1} parent=0 // pred_check_branch
    %9486 = sbr.rel (0) target = $region61
  $region60: #{tpu_custom_call.1} parent=0 // pred_region
    _
  $region61: #{tpu_custom_call.1} parent=0 // pred_fallthru
    _
  // Predicated region
  $region62: #{tpu_custom_call.1} parent=0 // pred_check
    _
  $region63: #{tpu_custom_call.1} parent=0 // pred_check_branch
    %9488 = sbr.rel (0) target = $region65
  $region64: #{tpu_custom_call.1} parent=0 // pred_region
    _
  $region65: #{tpu_custom_call.1} parent=0 // pred_fallthru
    _
  // Predicated region
  $region66: #{tpu_custom_call.1} parent=0 // pred_check
    _
  $region67: #{tpu_custom_call.1} parent=0 // pred_check_branch
    %9490 = sbr.rel (0) target = $region69
  $region68: #{tpu_custom_call.1} parent=0 // pred_region
    _
  $region69: #{tpu_custom_call.1} parent=0 // pred_fallthru
    _

</llo_original>
